<compile_context>
chip_gen: v7x
topology: tpu7x:2x2x1
jax: 0.10.0
libtpu: 0.0.40
codegen_flags: <defaults>
</compile_context>

<pallas_src>
import functools

import jax
import jax.numpy as jnp
from jax import lax
from jax.experimental import pallas as pl
from jax.experimental.pallas import tpu as pltpu


def _round_up(n, m):
    return ((n + m - 1) // m) * m


# ------------------------------ Fused encoder kernel ------------------------------
def _encoder_kernel(x_ref, wih1_ref, whh1_ref, b1_ref,
                    wih2_ref, whh2_ref, b2_ref,
                    wln_ref, bln_ref,
                    y_ref, h2_ref, c2_ref,
                    pre1_sc, outs1_sc, pre2_sc,
                    *, T, Bp, Hp1, H2):
    """Fused 2-layer LSTM + Linear head.

    x_ref:    (T*Bp, Dp)    time-major, batch-padded, flattened input
    wih1_ref: (Dp, 4*Hp1)   layer-1 input->gate weights (gate-padded to 128 lanes)
    whh1_ref: (Hp1, 4*Hp1)  layer-1 hidden->gate weights (gate-padded)
    b1_ref:   (1, 4*Hp1)    layer-1 bias (b_ih+b_hh, gate-padded, zeros elsewhere)
    wih2_ref: (Hp1, 4*H2)   layer-2 input->gate weights (rows >= H1 are zero)
    whh2_ref: (H2, 4*H2)    layer-2 hidden->gate weights
    b2_ref:   (1, 4*H2)
    wln_ref:  (H2, 1), bln_ref: (1, 1)
    y_ref:    (Bp, 1)       Linear(h2) — the module's out[:, -1, :]
    h2_ref/c2_ref: (Bp, H2) final LSTM2 state
    pre1_sc:  (T*Bp, 4*Hp1) hoisted layer-1 input projection
    outs1_sc: (T*Bp, Hp1)   layer-1 hidden outputs (consumed by layer 2, VMEM only)
    pre2_sc:  (T*Bp, 4*H2)  hoisted layer-2 input projection
    """
    f32 = jnp.float32

    # ---- Layer 1: hoist the non-recurrent input projection (one MXU matmul) ----
    wih1 = wih1_ref[...]
    pre1_sc[...] = (
        jnp.dot(x_ref[...].astype(wih1.dtype), wih1, preferred_element_type=f32)
        + b1_ref[...]
    )

    whh1 = whh1_ref[...]

    def step1(t, carry):
        h, c = carry
        row = t * Bp  # Bp == 8 -> sublane-aligned dynamic slice
        gates = pre1_sc[pl.ds(row, Bp), :] + jnp.dot(
            h.astype(whh1.dtype), whh1, preferred_element_type=f32)
        # PyTorch gate order (i, f, g, o); each gate is a 128-lane-aligned block.
        i_g = jax.nn.sigmoid(gates[:, 0 * Hp1:1 * Hp1])
        f_g = jax.nn.sigmoid(gates[:, 1 * Hp1:2 * Hp1])
        g_g = jnp.tanh(gates[:, 2 * Hp1:3 * Hp1])
        o_g = jax.nn.sigmoid(gates[:, 3 * Hp1:4 * Hp1])
        c = f_g * c + i_g * g_g          # padded lanes stay exactly 0
        h = o_g * jnp.tanh(c)
        outs1_sc[pl.ds(row, Bp), :] = h
        return (h, c)

    z1 = jnp.zeros((Bp, Hp1), f32)
    _ = lax.fori_loop(0, T, step1, (z1, z1), unroll=True)

    # ---- Layer 2: batched input projection over all T from VMEM-resident outs1 ----
    wih2 = wih2_ref[...]
    pre2_sc[...] = (
        jnp.dot(outs1_sc[...].astype(wih2.dtype), wih2, preferred_element_type=f32)
        + b2_ref[...]
    )

    whh2 = whh2_ref[...]

    def step2(t, carry):
        h, c = carry
        row = t * Bp
        gates = pre2_sc[pl.ds(row, Bp), :] + jnp.dot(
            h.astype(whh2.dtype), whh2, preferred_element_type=f32)
        i_g = jax.nn.sigmoid(gates[:, 0 * H2:1 * H2])
        f_g = jax.nn.sigmoid(gates[:, 1 * H2:2 * H2])
        g_g = jnp.tanh(gates[:, 2 * H2:3 * H2])
        o_g = jax.nn.sigmoid(gates[:, 3 * H2:4 * H2])
        c = f_g * c + i_g * g_g
        h = o_g * jnp.tanh(c)
        return (h, c)      # per-step outputs of layer 2 are never stored (dead)

    z2 = jnp.zeros((Bp, H2), f32)
    h2, c2 = lax.fori_loop(0, T, step2, (z2, z2), unroll=True)

    # ---- Fused Linear(256 -> 1) head: ln(out2)[:, -1, :] == ln(h2) ----
    wln = wln_ref[...]
    y_ref[...] = jnp.dot(h2.astype(wln.dtype), wln,
                         preferred_element_type=f32) + bln_ref[...]
    h2_ref[...] = h2
    c2_ref[...] = c2


# --------------------------------- Wrapper ---------------------------------
@jax.jit
def encoder_forward(x, kp):
    """x: [B, T, input_size] (batch-first, like torch). Returns (out_last[B,1], (h, c))."""
    B, T, D = x.shape
    Dp = kp["w_ih1"].shape[0]
    Hp1 = kp["w_hh1"].shape[0]
    H2 = kp["w_hh2"].shape[0]
    Bp = _round_up(max(B, 8), 8)          # pad batch to a full sublane

    # time-major, batch- and feature-padded, flattened to [T*Bp, Dp]
    xp = jnp.zeros((T, Bp, Dp), jnp.float32)
    xp = xp.at[:, :B, :D].set(jnp.transpose(x, (1, 0, 2)).astype(jnp.float32))
    x2d = xp.reshape(T * Bp, Dp).astype(kp["w_ih1"].dtype)

    kernel = functools.partial(_encoder_kernel, T=T, Bp=Bp, Hp1=Hp1, H2=H2)
    y, h2, c2 = pl.pallas_call(
        kernel,
        out_shape=(
            jax.ShapeDtypeStruct((Bp, 1), jnp.float32),
            jax.ShapeDtypeStruct((Bp, H2), jnp.float32),
            jax.ShapeDtypeStruct((Bp, H2), jnp.float32),
        ),
        scratch_shapes=[
            pltpu.VMEM((T * Bp, 4 * Hp1), jnp.float32),   # hoisted layer-1 x-proj
            pltpu.VMEM((T * Bp, Hp1), jnp.float32),       # layer-1 hidden outputs
            pltpu.VMEM((T * Bp, 4 * H2), jnp.float32),    # hoisted layer-2 x-proj
        ],
    )(x2d, kp["w_ih1"], kp["w_hh1"], kp["b1"],
      kp["w_ih2"], kp["w_hh2"], kp["b2"],
      kp["w_ln"], kp["b_ln"])

    # torch returns (h, c) with a leading num_layers dim.
    return y[:B], (h2[None, :B, :], c2[None, :B, :])


# ----------------------------- Parameter handling -----------------------------
def init_torch_params(key, input_size, hidden_size, hidden2=256):
    """Torch-shaped parameters with torch-style uniform(-1/sqrt(H), 1/sqrt(H)) init."""
    def uni(k, shape, bound):
        return jax.random.uniform(k, shape, jnp.float32, -bound, bound)

    ks = jax.random.split(key, 10)
    k1 = 1.0 / (hidden_size ** 0.5)
    k2 = 1.0 / (hidden2 ** 0.5)
    H, H2 = hidden_size, hidden2
    return dict(
        w_ih1=uni(ks[0], (4 * H, input_size), k1),
        w_hh1=uni(ks[1], (4 * H, H), k1),
        b_ih1=uni(ks[2], (4 * H,), k1),
        b_hh1=uni(ks[3], (4 * H,), k1),
        w_ih2=uni(ks[4], (4 * H2, H), k2),
        w_hh2=uni(ks[5], (4 * H2, H2), k2),
        b_ih2=uni(ks[6], (4 * H2,), k2),
        b_hh2=uni(ks[7], (4 * H2,), k2),
        w_ln=uni(ks[8], (1, H2), k2),
        b_ln=uni(ks[9], (1,), k2),
    )


def prepare_params(tp, input_size, hidden_size, hidden2=256,
                   matmul_dtype=jnp.float32):
    """Transpose / merge / lane-pad torch-shaped params into the kernel layout."""
    H, H2 = hidden_size, hidden2
    Dp = _round_up(input_size, 8)
    Hp1 = _round_up(H, 128)           # each layer-1 gate gets its own 128-lane block
    assert H2 % 128 == 0

    def pad_gate_cols(w_t, h, hp):    # (rows, 4h) -> (rows, 4hp); gate g at [g*hp : g*hp+h]
        out = jnp.zeros((w_t.shape[0], 4 * hp), w_t.dtype)
        for g in range(4):
            out = out.at[:, g * hp:g * hp + h].set(w_t[:, g * h:(g + 1) * h])
        return out

    w_ih1 = jnp.zeros((Dp, 4 * Hp1), jnp.float32)
    w_ih1 = w_ih1.at[:input_size].set(pad_gate_cols(tp["w_ih1"].T, H, Hp1))
    w_hh1 = jnp.zeros((Hp1, 4 * Hp1), jnp.float32)
    w_hh1 = w_hh1.at[:H].set(pad_gate_cols(tp["w_hh1"].T, H, Hp1))
    b1 = pad_gate_cols((tp["b_ih1"] + tp["b_hh1"]).reshape(1, 4 * H), H, Hp1)

    w_ih2 = jnp.zeros((Hp1, 4 * H2), jnp.float32).at[:H].set(tp["w_ih2"].T)
    w_hh2 = tp["w_hh2"].T
    b2 = (tp["b_ih2"] + tp["b_hh2"]).reshape(1, 4 * H2)

    w_ln = tp["w_ln"].T               # (H2, 1)
    b_ln = tp["b_ln"].reshape(1, 1)

    md = matmul_dtype
    return dict(
        w_ih1=w_ih1.astype(md), w_hh1=w_hh1.astype(md), b1=b1.astype(jnp.float32),
        w_ih2=w_ih2.astype(md), w_hh2=w_hh2.astype(md), b2=b2.astype(jnp.float32),
        w_ln=w_ln.astype(md), b_ln=b_ln.astype(jnp.float32),
    )


# ------------------------------ Pure-JAX reference ----------------------------
def _lstm_ref(x_tm, w_ih, w_hh, b_ih, b_hh):
    H = w_hh.shape[1]
    B = x_tm.shape[1]

    def step(carry, x_t):
        h, c = carry
        gates = x_t @ w_ih.T + h @ w_hh.T + b_ih + b_hh
        i = jax.nn.sigmoid(gates[:, 0 * H:1 * H])
        f = jax.nn.sigmoid(gates[:, 1 * H:2 * H])
        g = jnp.tanh(gates[:, 2 * H:3 * H])
        o = jax.nn.sigmoid(gates[:, 3 * H:4 * H])
        c = f * c + i * g
        h = o * jnp.tanh(c)
        return (h, c), h

    init = (jnp.zeros((B, H), jnp.float32), jnp.zeros((B, H), jnp.float32))
    (h, c), outs = lax.scan(step, init, x_tm)
    return outs, h, c


def encoder_ref(x, tp):
    x_tm = jnp.transpose(x, (1, 0, 2))
    o1, _, _ = _lstm_ref(x_tm, tp["w_ih1"], tp["w_hh1"], tp["b_ih1"], tp["b_hh1"])
    o2, h2, c2 = _lstm_ref(o1, tp["w_ih2"], tp["w_hh2"], tp["b_ih2"], tp["b_hh2"])
    y = h2 @ tp["w_ln"].T + tp["b_ln"]
    return y, (h2[None], c2[None])


# ----------------------------------- Main --------------------------------------
if __name__ == "__main__":
    B, T, INPUT_SIZE, HIDDEN = 2, 8, 4, 32

    key = jax.random.PRNGKey(0)
    k_x, k_p = jax.random.split(key)
    x = jax.random.normal(k_x, (B, T, INPUT_SIZE), dtype=jnp.float32)

    torch_params = init_torch_params(k_p, INPUT_SIZE, HIDDEN)
    # Default f32 matmuls (exact vs reference). On v6e/v7x pass
    # matmul_dtype=jnp.bfloat16 for MXU-native weights (elementwise math stays f32).
    kernel_params = prepare_params(torch_params, INPUT_SIZE, HIDDEN)

    y_last, (h, c) = encoder_forward(x, kernel_params)
    jax.block_until_ready((y_last, h, c))

    # sanity-check against pure-JAX reference
    y_ref, (h_ref, c_ref) = encoder_ref(x, torch_params)
    assert y_last.shape == (B, 1) and h.shape == (1, B, 256) and c.shape == (1, B, 256)
    assert jnp.allclose(y_last, y_ref, atol=1e-4, rtol=1e-4)
    assert jnp.allclose(h, h_ref, atol=1e-4, rtol=1e-4)
    assert jnp.allclose(c, c_ref, atol=1e-4, rtol=1e-4)

    print("KERNEL_OK")
</pallas_src>

<mosaic_0001>
module attributes {stable_mosaic.version = 11 : i64} {
  func.func @_encoder_kernel(%arg0: memref<64x8xf32, #tpu.memory_space<vmem>>, %arg1: memref<8x512xf32, #tpu.memory_space<vmem>>, %arg2: memref<128x512xf32, #tpu.memory_space<vmem>>, %arg3: memref<1x512xf32, #tpu.memory_space<vmem>>, %arg4: memref<128x1024xf32, #tpu.memory_space<vmem>>, %arg5: memref<256x1024xf32, #tpu.memory_space<vmem>>, %arg6: memref<1x1024xf32, #tpu.memory_space<vmem>>, %arg7: memref<256x1xf32, #tpu.memory_space<vmem>>, %arg8: memref<1x1xf32, #tpu.memory_space<vmem>>, %arg9: memref<8x1xf32, #tpu.memory_space<vmem>>, %arg10: memref<8x256xf32, #tpu.memory_space<vmem>>, %arg11: memref<8x256xf32, #tpu.memory_space<vmem>>, %arg12: memref<64x512xf32, #tpu.memory_space<vmem>>, %arg13: memref<64x128xf32, #tpu.memory_space<vmem>>, %arg14: memref<64x1024xf32, #tpu.memory_space<vmem>>) attributes {dimension_semantics = [], scalar_prefetch = 0 : i64, scratch_operands = 3 : i64, tpu.core_type = #tpu.core_type<tc>} {
    %c0 = arith.constant 0 : index
    %c0_0 = arith.constant 0 : index
    %0 = vector.load %arg1[%c0, %c0_0] : memref<8x512xf32, #tpu.memory_space<vmem>>, vector<8x512xf32>
    %c0_1 = arith.constant 0 : index
    %c0_2 = arith.constant 0 : index
    %1 = vector.load %arg0[%c0_1, %c0_2] : memref<64x8xf32, #tpu.memory_space<vmem>>, vector<64x8xf32>
    %cst = arith.constant dense<0.000000e+00> : vector<64x512xf32>
    %2 = tpu.matmul %1, %0, %cst {dimension_numbers = #tpu.dot_dimension_numbers<[1], [0], [0], [1], [0, 0, 1, 1], [], []>} : vector<64x8xf32>, vector<8x512xf32>, vector<64x512xf32> -> vector<64x512xf32>
    %c0_3 = arith.constant 0 : index
    %c0_4 = arith.constant 0 : index
    %3 = vector.load %arg3[%c0_3, %c0_4] : memref<1x512xf32, #tpu.memory_space<vmem>>, vector<1x512xf32>
    %4 = vector.broadcast %3 : vector<1x512xf32> to vector<64x512xf32>
    %5 = arith.addf %2, %4 : vector<64x512xf32>
    %c0_5 = arith.constant 0 : index
    %c0_6 = arith.constant 0 : index
    %6 = vector.load %arg12[%c0_5, %c0_6] : memref<64x512xf32, #tpu.memory_space<vmem>>, vector<64x512xf32>
    tpu.vector_store %arg12[%c0_5, %c0_6], %5 {strides = array<i32>} : memref<64x512xf32, #tpu.memory_space<vmem>>, vector<64x512xf32>,
    %c0_7 = arith.constant 0 : index
    %c0_8 = arith.constant 0 : index
    %7 = vector.load %arg2[%c0_7, %c0_8] : memref<128x512xf32, #tpu.memory_space<vmem>>, vector<128x512xf32>
    %cst_9 = arith.constant 0.000000e+00 : f32
    %8 = vector.broadcast %cst_9 : f32 to vector<8x128xf32>
    %c0_i32 = arith.constant 0 : i32
    %c8_i32 = arith.constant 8 : i32
    %9 = arith.muli %c0_i32, %c8_i32 : i32
    %10 = arith.index_cast %9 : i32 to index
    %c0_10 = arith.constant 0 : index
    %11 = vector.load %arg12[%10, %c0_10] : memref<64x512xf32, #tpu.memory_space<vmem>>, vector<8x512xf32>
    %cst_11 = arith.constant dense<0.000000e+00> : vector<8x512xf32>
    %12 = tpu.matmul %8, %7, %cst_11 {dimension_numbers = #tpu.dot_dimension_numbers<[1], [0], [0], [1], [0, 0, 1, 1], [], []>} : vector<8x128xf32>, vector<128x512xf32>, vector<8x512xf32> -> vector<8x512xf32>
    %13 = arith.addf %11, %12 : vector<8x512xf32>
    %14 = vector.extract_strided_slice %13 {offsets = [0, 0], sizes = [8, 128], strides = [1, 1]} : vector<8x512xf32> to vector<8x128xf32>
    %15 = arith.negf %14 : vector<8x128xf32>
    %16 = math.exp %15 : vector<8x128xf32>
    %cst_12 = arith.constant 1.000000e+00 : f32
    %17 = vector.broadcast %cst_12 : f32 to vector<8x128xf32>
    %18 = arith.addf %17, %16 : vector<8x128xf32>
    %19 = arith.divf %17, %18 : vector<8x128xf32>
    %20 = vector.extract_strided_slice %13 {offsets = [0, 128], sizes = [8, 128], strides = [1, 1]} : vector<8x512xf32> to vector<8x128xf32>
    %21 = arith.negf %20 : vector<8x128xf32>
    %22 = math.exp %21 : vector<8x128xf32>
    %cst_13 = arith.constant 1.000000e+00 : f32
    %23 = vector.broadcast %cst_13 : f32 to vector<8x128xf32>
    %24 = arith.addf %23, %22 : vector<8x128xf32>
    %25 = arith.divf %23, %24 : vector<8x128xf32>
    %26 = vector.extract_strided_slice %13 {offsets = [0, 256], sizes = [8, 128], strides = [1, 1]} : vector<8x512xf32> to vector<8x128xf32>
    %27 = math.tanh %26 : vector<8x128xf32>
    %28 = vector.extract_strided_slice %13 {offsets = [0, 384], sizes = [8, 128], strides = [1, 1]} : vector<8x512xf32> to vector<8x128xf32>
    %29 = arith.negf %28 : vector<8x128xf32>
    %30 = math.exp %29 : vector<8x128xf32>
    %cst_14 = arith.constant 1.000000e+00 : f32
    %31 = vector.broadcast %cst_14 : f32 to vector<8x128xf32>
    %32 = arith.addf %31, %30 : vector<8x128xf32>
    %33 = arith.divf %31, %32 : vector<8x128xf32>
    %34 = arith.mulf %25, %8 : vector<8x128xf32>
    %35 = arith.mulf %19, %27 : vector<8x128xf32>
    %36 = arith.addf %34, %35 : vector<8x128xf32>
    %37 = math.tanh %36 : vector<8x128xf32>
    %38 = arith.mulf %33, %37 : vector<8x128xf32>
    %39 = arith.index_cast %9 : i32 to index
    %c0_15 = arith.constant 0 : index
    %40 = vector.load %arg13[%39, %c0_15] : memref<64x128xf32, #tpu.memory_space<vmem>>, vector<8x128xf32>
    tpu.vector_store %arg13[%39, %c0_15], %38 {strides = array<i32>} : memref<64x128xf32, #tpu.memory_space<vmem>>, vector<8x128xf32>,
    %c1_i32 = arith.constant 1 : i32
    %c8_i32_16 = arith.constant 8 : i32
    %41 = arith.muli %c1_i32, %c8_i32_16 : i32
    %42 = arith.index_cast %41 : i32 to index
    %c0_17 = arith.constant 0 : index
    %43 = vector.load %arg12[%42, %c0_17] : memref<64x512xf32, #tpu.memory_space<vmem>>, vector<8x512xf32>
    %cst_18 = arith.constant dense<0.000000e+00> : vector<8x512xf32>
    %44 = tpu.matmul %38, %7, %cst_18 {dimension_numbers = #tpu.dot_dimension_numbers<[1], [0], [0], [1], [0, 0, 1, 1], [], []>} : vector<8x128xf32>, vector<128x512xf32>, vector<8x512xf32> -> vector<8x512xf32>
    %45 = arith.addf %43, %44 : vector<8x512xf32>
    %46 = vector.extract_strided_slice %45 {offsets = [0, 0], sizes = [8, 128], strides = [1, 1]} : vector<8x512xf32> to vector<8x128xf32>
    %47 = arith.negf %46 : vector<8x128xf32>
    %48 = math.exp %47 : vector<8x128xf32>
    %cst_19 = arith.constant 1.000000e+00 : f32
    %49 = vector.broadcast %cst_19 : f32 to vector<8x128xf32>
    %50 = arith.addf %49, %48 : vector<8x128xf32>
    %51 = arith.divf %49, %50 : vector<8x128xf32>
    %52 = vector.extract_strided_slice %45 {offsets = [0, 128], sizes = [8, 128], strides = [1, 1]} : vector<8x512xf32> to vector<8x128xf32>
    %53 = arith.negf %52 : vector<8x128xf32>
    %54 = math.exp %53 : vector<8x128xf32>
    %cst_20 = arith.constant 1.000000e+00 : f32
    %55 = vector.broadcast %cst_20 : f32 to vector<8x128xf32>
    %56 = arith.addf %55, %54 : vector<8x128xf32>
    %57 = arith.divf %55, %56 : vector<8x128xf32>
    %58 = vector.extract_strided_slice %45 {offsets = [0, 256], sizes = [8, 128], strides = [1, 1]} : vector<8x512xf32> to vector<8x128xf32>
    %59 = math.tanh %58 : vector<8x128xf32>
    %60 = vector.extract_strided_slice %45 {offsets = [0, 384], sizes = [8, 128], strides = [1, 1]} : vector<8x512xf32> to vector<8x128xf32>
    %61 = arith.negf %60 : vector<8x128xf32>
    %62 = math.exp %61 : vector<8x128xf32>
    %cst_21 = arith.constant 1.000000e+00 : f32
    %63 = vector.broadcast %cst_21 : f32 to vector<8x128xf32>
    %64 = arith.addf %63, %62 : vector<8x128xf32>
    %65 = arith.divf %63, %64 : vector<8x128xf32>
    %66 = arith.mulf %57, %36 : vector<8x128xf32>
    %67 = arith.mulf %51, %59 : vector<8x128xf32>
    %68 = arith.addf %66, %67 : vector<8x128xf32>
    %69 = math.tanh %68 : vector<8x128xf32>
    %70 = arith.mulf %65, %69 : vector<8x128xf32>
    %71 = arith.index_cast %41 : i32 to index
    %c0_22 = arith.constant 0 : index
    %72 = vector.load %arg13[%71, %c0_22] : memref<64x128xf32, #tpu.memory_space<vmem>>, vector<8x128xf32>
    tpu.vector_store %arg13[%71, %c0_22], %70 {strides = array<i32>} : memref<64x128xf32, #tpu.memory_space<vmem>>, vector<8x128xf32>,
    %c2_i32 = arith.constant 2 : i32
    %c8_i32_23 = arith.constant 8 : i32
    %73 = arith.muli %c2_i32, %c8_i32_23 : i32
    %74 = arith.index_cast %73 : i32 to index
    %c0_24 = arith.constant 0 : index
    %75 = vector.load %arg12[%74, %c0_24] : memref<64x512xf32, #tpu.memory_space<vmem>>, vector<8x512xf32>
    %cst_25 = arith.constant dense<0.000000e+00> : vector<8x512xf32>
    %76 = tpu.matmul %70, %7, %cst_25 {dimension_numbers = #tpu.dot_dimension_numbers<[1], [0], [0], [1], [0, 0, 1, 1], [], []>} : vector<8x128xf32>, vector<128x512xf32>, vector<8x512xf32> -> vector<8x512xf32>
    %77 = arith.addf %75, %76 : vector<8x512xf32>
    %78 = vector.extract_strided_slice %77 {offsets = [0, 0], sizes = [8, 128], strides = [1, 1]} : vector<8x512xf32> to vector<8x128xf32>
    %79 = arith.negf %78 : vector<8x128xf32>
    %80 = math.exp %79 : vector<8x128xf32>
    %cst_26 = arith.constant 1.000000e+00 : f32
    %81 = vector.broadcast %cst_26 : f32 to vector<8x128xf32>
    %82 = arith.addf %81, %80 : vector<8x128xf32>
    %83 = arith.divf %81, %82 : vector<8x128xf32>
    %84 = vector.extract_strided_slice %77 {offsets = [0, 128], sizes = [8, 128], strides = [1, 1]} : vector<8x512xf32> to vector<8x128xf32>
    %85 = arith.negf %84 : vector<8x128xf32>
    %86 = math.exp %85 : vector<8x128xf32>
    %cst_27 = arith.constant 1.000000e+00 : f32
    %87 = vector.broadcast %cst_27 : f32 to vector<8x128xf32>
    %88 = arith.addf %87, %86 : vector<8x128xf32>
    %89 = arith.divf %87, %88 : vector<8x128xf32>
    %90 = vector.extract_strided_slice %77 {offsets = [0, 256], sizes = [8, 128], strides = [1, 1]} : vector<8x512xf32> to vector<8x128xf32>
    %91 = math.tanh %90 : vector<8x128xf32>
    %92 = vector.extract_strided_slice %77 {offsets = [0, 384], sizes = [8, 128], strides = [1, 1]} : vector<8x512xf32> to vector<8x128xf32>
    %93 = arith.negf %92 : vector<8x128xf32>
    %94 = math.exp %93 : vector<8x128xf32>
    %cst_28 = arith.constant 1.000000e+00 : f32
    %95 = vector.broadcast %cst_28 : f32 to vector<8x128xf32>
    %96 = arith.addf %95, %94 : vector<8x128xf32>
    %97 = arith.divf %95, %96 : vector<8x128xf32>
    %98 = arith.mulf %89, %68 : vector<8x128xf32>
    %99 = arith.mulf %83, %91 : vector<8x128xf32>
    %100 = arith.addf %98, %99 : vector<8x128xf32>
    %101 = math.tanh %100 : vector<8x128xf32>
    %102 = arith.mulf %97, %101 : vector<8x128xf32>
    %103 = arith.index_cast %73 : i32 to index
    %c0_29 = arith.constant 0 : index
    %104 = vector.load %arg13[%103, %c0_29] : memref<64x128xf32, #tpu.memory_space<vmem>>, vector<8x128xf32>
    tpu.vector_store %arg13[%103, %c0_29], %102 {strides = array<i32>} : memref<64x128xf32, #tpu.memory_space<vmem>>, vector<8x128xf32>,
    %c3_i32 = arith.constant 3 : i32
    %c8_i32_30 = arith.constant 8 : i32
    %105 = arith.muli %c3_i32, %c8_i32_30 : i32
    %106 = arith.index_cast %105 : i32 to index
    %c0_31 = arith.constant 0 : index
    %107 = vector.load %arg12[%106, %c0_31] : memref<64x512xf32, #tpu.memory_space<vmem>>, vector<8x512xf32>
    %cst_32 = arith.constant dense<0.000000e+00> : vector<8x512xf32>
    %108 = tpu.matmul %102, %7, %cst_32 {dimension_numbers = #tpu.dot_dimension_numbers<[1], [0], [0], [1], [0, 0, 1, 1], [], []>} : vector<8x128xf32>, vector<128x512xf32>, vector<8x512xf32> -> vector<8x512xf32>
    %109 = arith.addf %107, %108 : vector<8x512xf32>
    %110 = vector.extract_strided_slice %109 {offsets = [0, 0], sizes = [8, 128], strides = [1, 1]} : vector<8x512xf32> to vector<8x128xf32>
    %111 = arith.negf %110 : vector<8x128xf32>
    %112 = math.exp %111 : vector<8x128xf32>
    %cst_33 = arith.constant 1.000000e+00 : f32
    %113 = vector.broadcast %cst_33 : f32 to vector<8x128xf32>
    %114 = arith.addf %113, %112 : vector<8x128xf32>
    %115 = arith.divf %113, %114 : vector<8x128xf32>
    %116 = vector.extract_strided_slice %109 {offsets = [0, 128], sizes = [8, 128], strides = [1, 1]} : vector<8x512xf32> to vector<8x128xf32>
    %117 = arith.negf %116 : vector<8x128xf32>
    %118 = math.exp %117 : vector<8x128xf32>
    %cst_34 = arith.constant 1.000000e+00 : f32
    %119 = vector.broadcast %cst_34 : f32 to vector<8x128xf32>
    %120 = arith.addf %119, %118 : vector<8x128xf32>
    %121 = arith.divf %119, %120 : vector<8x128xf32>
    %122 = vector.extract_strided_slice %109 {offsets = [0, 256], sizes = [8, 128], strides = [1, 1]} : vector<8x512xf32> to vector<8x128xf32>
    %123 = math.tanh %122 : vector<8x128xf32>
    %124 = vector.extract_strided_slice %109 {offsets = [0, 384], sizes = [8, 128], strides = [1, 1]} : vector<8x512xf32> to vector<8x128xf32>
    %125 = arith.negf %124 : vector<8x128xf32>
    %126 = math.exp %125 : vector<8x128xf32>
    %cst_35 = arith.constant 1.000000e+00 : f32
    %127 = vector.broadcast %cst_35 : f32 to vector<8x128xf32>
    %128 = arith.addf %127, %126 : vector<8x128xf32>
    %129 = arith.divf %127, %128 : vector<8x128xf32>
    %130 = arith.mulf %121, %100 : vector<8x128xf32>
    %131 = arith.mulf %115, %123 : vector<8x128xf32>
    %132 = arith.addf %130, %131 : vector<8x128xf32>
    %133 = math.tanh %132 : vector<8x128xf32>
    %134 = arith.mulf %129, %133 : vector<8x128xf32>
    %135 = arith.index_cast %105 : i32 to index
    %c0_36 = arith.constant 0 : index
    %136 = vector.load %arg13[%135, %c0_36] : memref<64x128xf32, #tpu.memory_space<vmem>>, vector<8x128xf32>
    tpu.vector_store %arg13[%135, %c0_36], %134 {strides = array<i32>} : memref<64x128xf32, #tpu.memory_space<vmem>>, vector<8x128xf32>,
    %c4_i32 = arith.constant 4 : i32
    %c8_i32_37 = arith.constant 8 : i32
    %137 = arith.muli %c4_i32, %c8_i32_37 : i32
    %138 = arith.index_cast %137 : i32 to index
    %c0_38 = arith.constant 0 : index
    %139 = vector.load %arg12[%138, %c0_38] : memref<64x512xf32, #tpu.memory_space<vmem>>, vector<8x512xf32>
    %cst_39 = arith.constant dense<0.000000e+00> : vector<8x512xf32>
    %140 = tpu.matmul %134, %7, %cst_39 {dimension_numbers = #tpu.dot_dimension_numbers<[1], [0], [0], [1], [0, 0, 1, 1], [], []>} : vector<8x128xf32>, vector<128x512xf32>, vector<8x512xf32> -> vector<8x512xf32>
    %141 = arith.addf %139, %140 : vector<8x512xf32>
    %142 = vector.extract_strided_slice %141 {offsets = [0, 0], sizes = [8, 128], strides = [1, 1]} : vector<8x512xf32> to vector<8x128xf32>
    %143 = arith.negf %142 : vector<8x128xf32>
    %144 = math.exp %143 : vector<8x128xf32>
    %cst_40 = arith.constant 1.000000e+00 : f32
    %145 = vector.broadcast %cst_40 : f32 to vector<8x128xf32>
    %146 = arith.addf %145, %144 : vector<8x128xf32>
    %147 = arith.divf %145, %146 : vector<8x128xf32>
    %148 = vector.extract_strided_slice %141 {offsets = [0, 128], sizes = [8, 128], strides = [1, 1]} : vector<8x512xf32> to vector<8x128xf32>
    %149 = arith.negf %148 : vector<8x128xf32>
    %150 = math.exp %149 : vector<8x128xf32>
    %cst_41 = arith.constant 1.000000e+00 : f32
    %151 = vector.broadcast %cst_41 : f32 to vector<8x128xf32>
    %152 = arith.addf %151, %150 : vector<8x128xf32>
    %153 = arith.divf %151, %152 : vector<8x128xf32>
    %154 = vector.extract_strided_slice %141 {offsets = [0, 256], sizes = [8, 128], strides = [1, 1]} : vector<8x512xf32> to vector<8x128xf32>
    %155 = math.tanh %154 : vector<8x128xf32>
    %156 = vector.extract_strided_slice %141 {offsets = [0, 384], sizes = [8, 128], strides = [1, 1]} : vector<8x512xf32> to vector<8x128xf32>
    %157 = arith.negf %156 : vector<8x128xf32>
    %158 = math.exp %157 : vector<8x128xf32>
    %cst_42 = arith.constant 1.000000e+00 : f32
    %159 = vector.broadcast %cst_42 : f32 to vector<8x128xf32>
    %160 = arith.addf %159, %158 : vector<8x128xf32>
    %161 = arith.divf %159, %160 : vector<8x128xf32>
    %162 = arith.mulf %153, %132 : vector<8x128xf32>
    %163 = arith.mulf %147, %155 : vector<8x128xf32>
    %164 = arith.addf %162, %163 : vector<8x128xf32>
    %165 = math.tanh %164 : vector<8x128xf32>
    %166 = arith.mulf %161, %165 : vector<8x128xf32>
    %167 = arith.index_cast %137 : i32 to index
    %c0_43 = arith.constant 0 : index
    %168 = vector.load %arg13[%167, %c0_43] : memref<64x128xf32, #tpu.memory_space<vmem>>, vector<8x128xf32>
    tpu.vector_store %arg13[%167, %c0_43], %166 {strides = array<i32>} : memref<64x128xf32, #tpu.memory_space<vmem>>, vector<8x128xf32>,
    %c5_i32 = arith.constant 5 : i32
    %c8_i32_44 = arith.constant 8 : i32
    %169 = arith.muli %c5_i32, %c8_i32_44 : i32
    %170 = arith.index_cast %169 : i32 to index
    %c0_45 = arith.constant 0 : index
    %171 = vector.load %arg12[%170, %c0_45] : memref<64x512xf32, #tpu.memory_space<vmem>>, vector<8x512xf32>
    %cst_46 = arith.constant dense<0.000000e+00> : vector<8x512xf32>
    %172 = tpu.matmul %166, %7, %cst_46 {dimension_numbers = #tpu.dot_dimension_numbers<[1], [0], [0], [1], [0, 0, 1, 1], [], []>} : vector<8x128xf32>, vector<128x512xf32>, vector<8x512xf32> -> vector<8x512xf32>
    %173 = arith.addf %171, %172 : vector<8x512xf32>
    %174 = vector.extract_strided_slice %173 {offsets = [0, 0], sizes = [8, 128], strides = [1, 1]} : vector<8x512xf32> to vector<8x128xf32>
    %175 = arith.negf %174 : vector<8x128xf32>
    %176 = math.exp %175 : vector<8x128xf32>
    %cst_47 = arith.constant 1.000000e+00 : f32
    %177 = vector.broadcast %cst_47 : f32 to vector<8x128xf32>
    %178 = arith.addf %177, %176 : vector<8x128xf32>
    %179 = arith.divf %177, %178 : vector<8x128xf32>
    %180 = vector.extract_strided_slice %173 {offsets = [0, 128], sizes = [8, 128], strides = [1, 1]} : vector<8x512xf32> to vector<8x128xf32>
    %181 = arith.negf %180 : vector<8x128xf32>
    %182 = math.exp %181 : vector<8x128xf32>
    %cst_48 = arith.constant 1.000000e+00 : f32
    %183 = vector.broadcast %cst_48 : f32 to vector<8x128xf32>
    %184 = arith.addf %183, %182 : vector<8x128xf32>
    %185 = arith.divf %183, %184 : vector<8x128xf32>
    %186 = vector.extract_strided_slice %173 {offsets = [0, 256], sizes = [8, 128], strides = [1, 1]} : vector<8x512xf32> to vector<8x128xf32>
    %187 = math.tanh %186 : vector<8x128xf32>
    %188 = vector.extract_strided_slice %173 {offsets = [0, 384], sizes = [8, 128], strides = [1, 1]} : vector<8x512xf32> to vector<8x128xf32>
    %189 = arith.negf %188 : vector<8x128xf32>
    %190 = math.exp %189 : vector<8x128xf32>
    %cst_49 = arith.constant 1.000000e+00 : f32
    %191 = vector.broadcast %cst_49 : f32 to vector<8x128xf32>
    %192 = arith.addf %191, %190 : vector<8x128xf32>
    %193 = arith.divf %191, %192 : vector<8x128xf32>
    %194 = arith.mulf %185, %164 : vector<8x128xf32>
    %195 = arith.mulf %179, %187 : vector<8x128xf32>
    %196 = arith.addf %194, %195 : vector<8x128xf32>
    %197 = math.tanh %196 : vector<8x128xf32>
    %198 = arith.mulf %193, %197 : vector<8x128xf32>
    %199 = arith.index_cast %169 : i32 to index
    %c0_50 = arith.constant 0 : index
    %200 = vector.load %arg13[%199, %c0_50] : memref<64x128xf32, #tpu.memory_space<vmem>>, vector<8x128xf32>
    tpu.vector_store %arg13[%199, %c0_50], %198 {strides = array<i32>} : memref<64x128xf32, #tpu.memory_space<vmem>>, vector<8x128xf32>,
    %c6_i32 = arith.constant 6 : i32
    %c8_i32_51 = arith.constant 8 : i32
    %201 = arith.muli %c6_i32, %c8_i32_51 : i32
    %202 = arith.index_cast %201 : i32 to index
    %c0_52 = arith.constant 0 : index
    %203 = vector.load %arg12[%202, %c0_52] : memref<64x512xf32, #tpu.memory_space<vmem>>, vector<8x512xf32>
    %cst_53 = arith.constant dense<0.000000e+00> : vector<8x512xf32>
    %204 = tpu.matmul %198, %7, %cst_53 {dimension_numbers = #tpu.dot_dimension_numbers<[1], [0], [0], [1], [0, 0, 1, 1], [], []>} : vector<8x128xf32>, vector<128x512xf32>, vector<8x512xf32> -> vector<8x512xf32>
    %205 = arith.addf %203, %204 : vector<8x512xf32>
    %206 = vector.extract_strided_slice %205 {offsets = [0, 0], sizes = [8, 128], strides = [1, 1]} : vector<8x512xf32> to vector<8x128xf32>
    %207 = arith.negf %206 : vector<8x128xf32>
    %208 = math.exp %207 : vector<8x128xf32>
    %cst_54 = arith.constant 1.000000e+00 : f32
    %209 = vector.broadcast %cst_54 : f32 to vector<8x128xf32>
    %210 = arith.addf %209, %208 : vector<8x128xf32>
    %211 = arith.divf %209, %210 : vector<8x128xf32>
    %212 = vector.extract_strided_slice %205 {offsets = [0, 128], sizes = [8, 128], strides = [1, 1]} : vector<8x512xf32> to vector<8x128xf32>
    %213 = arith.negf %212 : vector<8x128xf32>
    %214 = math.exp %213 : vector<8x128xf32>
    %cst_55 = arith.constant 1.000000e+00 : f32
    %215 = vector.broadcast %cst_55 : f32 to vector<8x128xf32>
    %216 = arith.addf %215, %214 : vector<8x128xf32>
    %217 = arith.divf %215, %216 : vector<8x128xf32>
    %218 = vector.extract_strided_slice %205 {offsets = [0, 256], sizes = [8, 128], strides = [1, 1]} : vector<8x512xf32> to vector<8x128xf32>
    %219 = math.tanh %218 : vector<8x128xf32>
    %220 = vector.extract_strided_slice %205 {offsets = [0, 384], sizes = [8, 128], strides = [1, 1]} : vector<8x512xf32> to vector<8x128xf32>
    %221 = arith.negf %220 : vector<8x128xf32>
    %222 = math.exp %221 : vector<8x128xf32>
    %cst_56 = arith.constant 1.000000e+00 : f32
    %223 = vector.broadcast %cst_56 : f32 to vector<8x128xf32>
    %224 = arith.addf %223, %222 : vector<8x128xf32>
    %225 = arith.divf %223, %224 : vector<8x128xf32>
    %226 = arith.mulf %217, %196 : vector<8x128xf32>
    %227 = arith.mulf %211, %219 : vector<8x128xf32>
    %228 = arith.addf %226, %227 : vector<8x128xf32>
    %229 = math.tanh %228 : vector<8x128xf32>
    %230 = arith.mulf %225, %229 : vector<8x128xf32>
    %231 = arith.index_cast %201 : i32 to index
    %c0_57 = arith.constant 0 : index
    %232 = vector.load %arg13[%231, %c0_57] : memref<64x128xf32, #tpu.memory_space<vmem>>, vector<8x128xf32>
    tpu.vector_store %arg13[%231, %c0_57], %230 {strides = array<i32>} : memref<64x128xf32, #tpu.memory_space<vmem>>, vector<8x128xf32>,
    %c7_i32 = arith.constant 7 : i32
    %c8_i32_58 = arith.constant 8 : i32
    %233 = arith.muli %c7_i32, %c8_i32_58 : i32
    %234 = arith.index_cast %233 : i32 to index
    %c0_59 = arith.constant 0 : index
    %235 = vector.load %arg12[%234, %c0_59] : memref<64x512xf32, #tpu.memory_space<vmem>>, vector<8x512xf32>
    %cst_60 = arith.constant dense<0.000000e+00> : vector<8x512xf32>
    %236 = tpu.matmul %230, %7, %cst_60 {dimension_numbers = #tpu.dot_dimension_numbers<[1], [0], [0], [1], [0, 0, 1, 1], [], []>} : vector<8x128xf32>, vector<128x512xf32>, vector<8x512xf32> -> vector<8x512xf32>
    %237 = arith.addf %235, %236 : vector<8x512xf32>
    %238 = vector.extract_strided_slice %237 {offsets = [0, 0], sizes = [8, 128], strides = [1, 1]} : vector<8x512xf32> to vector<8x128xf32>
    %239 = arith.negf %238 : vector<8x128xf32>
    %240 = math.exp %239 : vector<8x128xf32>
    %cst_61 = arith.constant 1.000000e+00 : f32
    %241 = vector.broadcast %cst_61 : f32 to vector<8x128xf32>
    %242 = arith.addf %241, %240 : vector<8x128xf32>
    %243 = arith.divf %241, %242 : vector<8x128xf32>
    %244 = vector.extract_strided_slice %237 {offsets = [0, 128], sizes = [8, 128], strides = [1, 1]} : vector<8x512xf32> to vector<8x128xf32>
    %245 = arith.negf %244 : vector<8x128xf32>
    %246 = math.exp %245 : vector<8x128xf32>
    %cst_62 = arith.constant 1.000000e+00 : f32
    %247 = vector.broadcast %cst_62 : f32 to vector<8x128xf32>
    %248 = arith.addf %247, %246 : vector<8x128xf32>
    %249 = arith.divf %247, %248 : vector<8x128xf32>
    %250 = vector.extract_strided_slice %237 {offsets = [0, 256], sizes = [8, 128], strides = [1, 1]} : vector<8x512xf32> to vector<8x128xf32>
    %251 = math.tanh %250 : vector<8x128xf32>
    %252 = vector.extract_strided_slice %237 {offsets = [0, 384], sizes = [8, 128], strides = [1, 1]} : vector<8x512xf32> to vector<8x128xf32>
    %253 = arith.negf %252 : vector<8x128xf32>
    %254 = math.exp %253 : vector<8x128xf32>
    %cst_63 = arith.constant 1.000000e+00 : f32
    %255 = vector.broadcast %cst_63 : f32 to vector<8x128xf32>
    %256 = arith.addf %255, %254 : vector<8x128xf32>
    %257 = arith.divf %255, %256 : vector<8x128xf32>
    %258 = arith.mulf %249, %228 : vector<8x128xf32>
    %259 = arith.mulf %243, %251 : vector<8x128xf32>
    %260 = arith.addf %258, %259 : vector<8x128xf32>
    %261 = math.tanh %260 : vector<8x128xf32>
    %262 = arith.mulf %257, %261 : vector<8x128xf32>
    %263 = arith.index_cast %233 : i32 to index
    %c0_64 = arith.constant 0 : index
    %264 = vector.load %arg13[%263, %c0_64] : memref<64x128xf32, #tpu.memory_space<vmem>>, vector<8x128xf32>
    tpu.vector_store %arg13[%263, %c0_64], %262 {strides = array<i32>} : memref<64x128xf32, #tpu.memory_space<vmem>>, vector<8x128xf32>,
    %c8_i32_65 = arith.constant 8 : i32
    %c0_66 = arith.constant 0 : index
    %c0_67 = arith.constant 0 : index
    %265 = vector.load %arg4[%c0_66, %c0_67] : memref<128x1024xf32, #tpu.memory_space<vmem>>, vector<128x1024xf32>
    %c0_68 = arith.constant 0 : index
    %c0_69 = arith.constant 0 : index
    %266 = vector.load %arg13[%c0_68, %c0_69] : memref<64x128xf32, #tpu.memory_space<vmem>>, vector<64x128xf32>
    %cst_70 = arith.constant dense<0.000000e+00> : vector<64x1024xf32>
    %267 = tpu.matmul %266, %265, %cst_70 {dimension_numbers = #tpu.dot_dimension_numbers<[1], [0], [0], [1], [0, 0, 1, 1], [], []>} : vector<64x128xf32>, vector<128x1024xf32>, vector<64x1024xf32> -> vector<64x1024xf32>
    %c0_71 = arith.constant 0 : index
    %c0_72 = arith.constant 0 : index
    %268 = vector.load %arg6[%c0_71, %c0_72] : memref<1x1024xf32, #tpu.memory_space<vmem>>, vector<1x1024xf32>
    %269 = vector.broadcast %268 : vector<1x1024xf32> to vector<64x1024xf32>
    %270 = arith.addf %267, %269 : vector<64x1024xf32>
    %c0_73 = arith.constant 0 : index
    %c0_74 = arith.constant 0 : index
    %271 = vector.load %arg14[%c0_73, %c0_74] : memref<64x1024xf32, #tpu.memory_space<vmem>>, vector<64x1024xf32>
    tpu.vector_store %arg14[%c0_73, %c0_74], %270 {strides = array<i32>} : memref<64x1024xf32, #tpu.memory_space<vmem>>, vector<64x1024xf32>,
    %c0_75 = arith.constant 0 : index
    %c0_76 = arith.constant 0 : index
    %272 = vector.load %arg5[%c0_75, %c0_76] : memref<256x1024xf32, #tpu.memory_space<vmem>>, vector<256x1024xf32>
    %cst_77 = arith.constant 0.000000e+00 : f32
    %273 = vector.broadcast %cst_77 : f32 to vector<8x256xf32>
    %c0_i32_78 = arith.constant 0 : i32
    %c8_i32_79 = arith.constant 8 : i32
    %274 = arith.muli %c0_i32_78, %c8_i32_79 : i32
    %275 = arith.index_cast %274 : i32 to index
    %c0_80 = arith.constant 0 : index
    %276 = vector.load %arg14[%275, %c0_80] : memref<64x1024xf32, #tpu.memory_space<vmem>>, vector<8x1024xf32>
    %cst_81 = arith.constant dense<0.000000e+00> : vector<8x1024xf32>
    %277 = tpu.matmul %273, %272, %cst_81 {dimension_numbers = #tpu.dot_dimension_numbers<[1], [0], [0], [1], [0, 0, 1, 1], [], []>} : vector<8x256xf32>, vector<256x1024xf32>, vector<8x1024xf32> -> vector<8x1024xf32>
    %278 = arith.addf %276, %277 : vector<8x1024xf32>
    %279 = vector.extract_strided_slice %278 {offsets = [0, 0], sizes = [8, 256], strides = [1, 1]} : vector<8x1024xf32> to vector<8x256xf32>
    %280 = arith.negf %279 : vector<8x256xf32>
    %281 = math.exp %280 : vector<8x256xf32>
    %cst_82 = arith.constant 1.000000e+00 : f32
    %282 = vector.broadcast %cst_82 : f32 to vector<8x256xf32>
    %283 = arith.addf %282, %281 : vector<8x256xf32>
    %284 = arith.divf %282, %283 : vector<8x256xf32>
    %285 = vector.extract_strided_slice %278 {offsets = [0, 256], sizes = [8, 256], strides = [1, 1]} : vector<8x1024xf32> to vector<8x256xf32>
    %286 = arith.negf %285 : vector<8x256xf32>
    %287 = math.exp %286 : vector<8x256xf32>
    %cst_83 = arith.constant 1.000000e+00 : f32
    %288 = vector.broadcast %cst_83 : f32 to vector<8x256xf32>
    %289 = arith.addf %288, %287 : vector<8x256xf32>
    %290 = arith.divf %288, %289 : vector<8x256xf32>
    %291 = vector.extract_strided_slice %278 {offsets = [0, 512], sizes = [8, 256], strides = [1, 1]} : vector<8x1024xf32> to vector<8x256xf32>
    %292 = math.tanh %291 : vector<8x256xf32>
    %293 = vector.extract_strided_slice %278 {offsets = [0, 768], sizes = [8, 256], strides = [1, 1]} : vector<8x1024xf32> to vector<8x256xf32>
    %294 = arith.negf %293 : vector<8x256xf32>
    %295 = math.exp %294 : vector<8x256xf32>
    %cst_84 = arith.constant 1.000000e+00 : f32
    %296 = vector.broadcast %cst_84 : f32 to vector<8x256xf32>
    %297 = arith.addf %296, %295 : vector<8x256xf32>
    %298 = arith.divf %296, %297 : vector<8x256xf32>
    %299 = arith.mulf %290, %273 : vector<8x256xf32>
    %300 = arith.mulf %284, %292 : vector<8x256xf32>
    %301 = arith.addf %299, %300 : vector<8x256xf32>
    %302 = math.tanh %301 : vector<8x256xf32>
    %303 = arith.mulf %298, %302 : vector<8x256xf32>
    %c1_i32_85 = arith.constant 1 : i32
    %c8_i32_86 = arith.constant 8 : i32
    %304 = arith.muli %c1_i32_85, %c8_i32_86 : i32
    %305 = arith.index_cast %304 : i32 to index
    %c0_87 = arith.constant 0 : index
    %306 = vector.load %arg14[%305, %c0_87] : memref<64x1024xf32, #tpu.memory_space<vmem>>, vector<8x1024xf32>
    %cst_88 = arith.constant dense<0.000000e+00> : vector<8x1024xf32>
    %307 = tpu.matmul %303, %272, %cst_88 {dimension_numbers = #tpu.dot_dimension_numbers<[1], [0], [0], [1], [0, 0, 1, 1], [], []>} : vector<8x256xf32>, vector<256x1024xf32>, vector<8x1024xf32> -> vector<8x1024xf32>
    %308 = arith.addf %306, %307 : vector<8x1024xf32>
    %309 = vector.extract_strided_slice %308 {offsets = [0, 0], sizes = [8, 256], strides = [1, 1]} : vector<8x1024xf32> to vector<8x256xf32>
    %310 = arith.negf %309 : vector<8x256xf32>
    %311 = math.exp %310 : vector<8x256xf32>
    %cst_89 = arith.constant 1.000000e+00 : f32
    %312 = vector.broadcast %cst_89 : f32 to vector<8x256xf32>
    %313 = arith.addf %312, %311 : vector<8x256xf32>
    %314 = arith.divf %312, %313 : vector<8x256xf32>
    %315 = vector.extract_strided_slice %308 {offsets = [0, 256], sizes = [8, 256], strides = [1, 1]} : vector<8x1024xf32> to vector<8x256xf32>
    %316 = arith.negf %315 : vector<8x256xf32>
    %317 = math.exp %316 : vector<8x256xf32>
    %cst_90 = arith.constant 1.000000e+00 : f32
    %318 = vector.broadcast %cst_90 : f32 to vector<8x256xf32>
    %319 = arith.addf %318, %317 : vector<8x256xf32>
    %320 = arith.divf %318, %319 : vector<8x256xf32>
    %321 = vector.extract_strided_slice %308 {offsets = [0, 512], sizes = [8, 256], strides = [1, 1]} : vector<8x1024xf32> to vector<8x256xf32>
    %322 = math.tanh %321 : vector<8x256xf32>
    %323 = vector.extract_strided_slice %308 {offsets = [0, 768], sizes = [8, 256], strides = [1, 1]} : vector<8x1024xf32> to vector<8x256xf32>
    %324 = arith.negf %323 : vector<8x256xf32>
    %325 = math.exp %324 : vector<8x256xf32>
    %cst_91 = arith.constant 1.000000e+00 : f32
    %326 = vector.broadcast %cst_91 : f32 to vector<8x256xf32>
    %327 = arith.addf %326, %325 : vector<8x256xf32>
    %328 = arith.divf %326, %327 : vector<8x256xf32>
    %329 = arith.mulf %320, %301 : vector<8x256xf32>
    %330 = arith.mulf %314, %322 : vector<8x256xf32>
    %331 = arith.addf %329, %330 : vector<8x256xf32>
    %332 = math.tanh %331 : vector<8x256xf32>
    %333 = arith.mulf %328, %332 : vector<8x256xf32>
    %c2_i32_92 = arith.constant 2 : i32
    %c8_i32_93 = arith.constant 8 : i32
    %334 = arith.muli %c2_i32_92, %c8_i32_93 : i32
    %335 = arith.index_cast %334 : i32 to index
    %c0_94 = arith.constant 0 : index
    %336 = vector.load %arg14[%335, %c0_94] : memref<64x1024xf32, #tpu.memory_space<vmem>>, vector<8x1024xf32>
    %cst_95 = arith.constant dense<0.000000e+00> : vector<8x1024xf32>
    %337 = tpu.matmul %333, %272, %cst_95 {dimension_numbers = #tpu.dot_dimension_numbers<[1], [0], [0], [1], [0, 0, 1, 1], [], []>} : vector<8x256xf32>, vector<256x1024xf32>, vector<8x1024xf32> -> vector<8x1024xf32>
    %338 = arith.addf %336, %337 : vector<8x1024xf32>
    %339 = vector.extract_strided_slice %338 {offsets = [0, 0], sizes = [8, 256], strides = [1, 1]} : vector<8x1024xf32> to vector<8x256xf32>
    %340 = arith.negf %339 : vector<8x256xf32>
    %341 = math.exp %340 : vector<8x256xf32>
    %cst_96 = arith.constant 1.000000e+00 : f32
    %342 = vector.broadcast %cst_96 : f32 to vector<8x256xf32>
    %343 = arith.addf %342, %341 : vector<8x256xf32>
    %344 = arith.divf %342, %343 : vector<8x256xf32>
    %345 = vector.extract_strided_slice %338 {offsets = [0, 256], sizes = [8, 256], strides = [1, 1]} : vector<8x1024xf32> to vector<8x256xf32>
    %346 = arith.negf %345 : vector<8x256xf32>
    %347 = math.exp %346 : vector<8x256xf32>
    %cst_97 = arith.constant 1.000000e+00 : f32
    %348 = vector.broadcast %cst_97 : f32 to vector<8x256xf32>
    %349 = arith.addf %348, %347 : vector<8x256xf32>
    %350 = arith.divf %348, %349 : vector<8x256xf32>
    %351 = vector.extract_strided_slice %338 {offsets = [0, 512], sizes = [8, 256], strides = [1, 1]} : vector<8x1024xf32> to vector<8x256xf32>
    %352 = math.tanh %351 : vector<8x256xf32>
    %353 = vector.extract_strided_slice %338 {offsets = [0, 768], sizes = [8, 256], strides = [1, 1]} : vector<8x1024xf32> to vector<8x256xf32>
    %354 = arith.negf %353 : vector<8x256xf32>
    %355 = math.exp %354 : vector<8x256xf32>
    %cst_98 = arith.constant 1.000000e+00 : f32
    %356 = vector.broadcast %cst_98 : f32 to vector<8x256xf32>
    %357 = arith.addf %356, %355 : vector<8x256xf32>
    %358 = arith.divf %356, %357 : vector<8x256xf32>
    %359 = arith.mulf %350, %331 : vector<8x256xf32>
    %360 = arith.mulf %344, %352 : vector<8x256xf32>
    %361 = arith.addf %359, %360 : vector<8x256xf32>
    %362 = math.tanh %361 : vector<8x256xf32>
    %363 = arith.mulf %358, %362 : vector<8x256xf32>
    %c3_i32_99 = arith.constant 3 : i32
    %c8_i32_100 = arith.constant 8 : i32
    %364 = arith.muli %c3_i32_99, %c8_i32_100 : i32
    %365 = arith.index_cast %364 : i32 to index
    %c0_101 = arith.constant 0 : index
    %366 = vector.load %arg14[%365, %c0_101] : memref<64x1024xf32, #tpu.memory_space<vmem>>, vector<8x1024xf32>
    %cst_102 = arith.constant dense<0.000000e+00> : vector<8x1024xf32>
    %367 = tpu.matmul %363, %272, %cst_102 {dimension_numbers = #tpu.dot_dimension_numbers<[1], [0], [0], [1], [0, 0, 1, 1], [], []>} : vector<8x256xf32>, vector<256x1024xf32>, vector<8x1024xf32> -> vector<8x1024xf32>
    %368 = arith.addf %366, %367 : vector<8x1024xf32>
    %369 = vector.extract_strided_slice %368 {offsets = [0, 0], sizes = [8, 256], strides = [1, 1]} : vector<8x1024xf32> to vector<8x256xf32>
    %370 = arith.negf %369 : vector<8x256xf32>
    %371 = math.exp %370 : vector<8x256xf32>
    %cst_103 = arith.constant 1.000000e+00 : f32
    %372 = vector.broadcast %cst_103 : f32 to vector<8x256xf32>
    %373 = arith.addf %372, %371 : vector<8x256xf32>
    %374 = arith.divf %372, %373 : vector<8x256xf32>
    %375 = vector.extract_strided_slice %368 {offsets = [0, 256], sizes = [8, 256], strides = [1, 1]} : vector<8x1024xf32> to vector<8x256xf32>
    %376 = arith.negf %375 : vector<8x256xf32>
    %377 = math.exp %376 : vector<8x256xf32>
    %cst_104 = arith.constant 1.000000e+00 : f32
    %378 = vector.broadcast %cst_104 : f32 to vector<8x256xf32>
    %379 = arith.addf %378, %377 : vector<8x256xf32>
    %380 = arith.divf %378, %379 : vector<8x256xf32>
    %381 = vector.extract_strided_slice %368 {offsets = [0, 512], sizes = [8, 256], strides = [1, 1]} : vector<8x1024xf32> to vector<8x256xf32>
    %382 = math.tanh %381 : vector<8x256xf32>
    %383 = vector.extract_strided_slice %368 {offsets = [0, 768], sizes = [8, 256], strides = [1, 1]} : vector<8x1024xf32> to vector<8x256xf32>
    %384 = arith.negf %383 : vector<8x256xf32>
    %385 = math.exp %384 : vector<8x256xf32>
    %cst_105 = arith.constant 1.000000e+00 : f32
    %386 = vector.broadcast %cst_105 : f32 to vector<8x256xf32>
    %387 = arith.addf %386, %385 : vector<8x256xf32>
    %388 = arith.divf %386, %387 : vector<8x256xf32>
    %389 = arith.mulf %380, %361 : vector<8x256xf32>
    %390 = arith.mulf %374, %382 : vector<8x256xf32>
    %391 = arith.addf %389, %390 : vector<8x256xf32>
    %392 = math.tanh %391 : vector<8x256xf32>
    %393 = arith.mulf %388, %392 : vector<8x256xf32>
    %c4_i32_106 = arith.constant 4 : i32
    %c8_i32_107 = arith.constant 8 : i32
    %394 = arith.muli %c4_i32_106, %c8_i32_107 : i32
    %395 = arith.index_cast %394 : i32 to index
    %c0_108 = arith.constant 0 : index
    %396 = vector.load %arg14[%395, %c0_108] : memref<64x1024xf32, #tpu.memory_space<vmem>>, vector<8x1024xf32>
    %cst_109 = arith.constant dense<0.000000e+00> : vector<8x1024xf32>
    %397 = tpu.matmul %393, %272, %cst_109 {dimension_numbers = #tpu.dot_dimension_numbers<[1], [0], [0], [1], [0, 0, 1, 1], [], []>} : vector<8x256xf32>, vector<256x1024xf32>, vector<8x1024xf32> -> vector<8x1024xf32>
    %398 = arith.addf %396, %397 : vector<8x1024xf32>
    %399 = vector.extract_strided_slice %398 {offsets = [0, 0], sizes = [8, 256], strides = [1, 1]} : vector<8x1024xf32> to vector<8x256xf32>
    %400 = arith.negf %399 : vector<8x256xf32>
    %401 = math.exp %400 : vector<8x256xf32>
    %cst_110 = arith.constant 1.000000e+00 : f32
    %402 = vector.broadcast %cst_110 : f32 to vector<8x256xf32>
    %403 = arith.addf %402, %401 : vector<8x256xf32>
    %404 = arith.divf %402, %403 : vector<8x256xf32>
    %405 = vector.extract_strided_slice %398 {offsets = [0, 256], sizes = [8, 256], strides = [1, 1]} : vector<8x1024xf32> to vector<8x256xf32>
    %406 = arith.negf %405 : vector<8x256xf32>
    %407 = math.exp %406 : vector<8x256xf32>
    %cst_111 = arith.constant 1.000000e+00 : f32
    %408 = vector.broadcast %cst_111 : f32 to vector<8x256xf32>
    %409 = arith.addf %408, %407 : vector<8x256xf32>
    %410 = arith.divf %408, %409 : vector<8x256xf32>
    %411 = vector.extract_strided_slice %398 {offsets = [0, 512], sizes = [8, 256], strides = [1, 1]} : vector<8x1024xf32> to vector<8x256xf32>
    %412 = math.tanh %411 : vector<8x256xf32>
    %413 = vector.extract_strided_slice %398 {offsets = [0, 768], sizes = [8, 256], strides = [1, 1]} : vector<8x1024xf32> to vector<8x256xf32>
    %414 = arith.negf %413 : vector<8x256xf32>
    %415 = math.exp %414 : vector<8x256xf32>
    %cst_112 = arith.constant 1.000000e+00 : f32
    %416 = vector.broadcast %cst_112 : f32 to vector<8x256xf32>
    %417 = arith.addf %416, %415 : vector<8x256xf32>
    %418 = arith.divf %416, %417 : vector<8x256xf32>
    %419 = arith.mulf %410, %391 : vector<8x256xf32>
    %420 = arith.mulf %404, %412 : vector<8x256xf32>
    %421 = arith.addf %419, %420 : vector<8x256xf32>
    %422 = math.tanh %421 : vector<8x256xf32>
    %423 = arith.mulf %418, %422 : vector<8x256xf32>
    %c5_i32_113 = arith.constant 5 : i32
    %c8_i32_114 = arith.constant 8 : i32
    %424 = arith.muli %c5_i32_113, %c8_i32_114 : i32
    %425 = arith.index_cast %424 : i32 to index
    %c0_115 = arith.constant 0 : index
    %426 = vector.load %arg14[%425, %c0_115] : memref<64x1024xf32, #tpu.memory_space<vmem>>, vector<8x1024xf32>
    %cst_116 = arith.constant dense<0.000000e+00> : vector<8x1024xf32>
    %427 = tpu.matmul %423, %272, %cst_116 {dimension_numbers = #tpu.dot_dimension_numbers<[1], [0], [0], [1], [0, 0, 1, 1], [], []>} : vector<8x256xf32>, vector<256x1024xf32>, vector<8x1024xf32> -> vector<8x1024xf32>
    %428 = arith.addf %426, %427 : vector<8x1024xf32>
    %429 = vector.extract_strided_slice %428 {offsets = [0, 0], sizes = [8, 256], strides = [1, 1]} : vector<8x1024xf32> to vector<8x256xf32>
    %430 = arith.negf %429 : vector<8x256xf32>
    %431 = math.exp %430 : vector<8x256xf32>
    %cst_117 = arith.constant 1.000000e+00 : f32
    %432 = vector.broadcast %cst_117 : f32 to vector<8x256xf32>
    %433 = arith.addf %432, %431 : vector<8x256xf32>
    %434 = arith.divf %432, %433 : vector<8x256xf32>
    %435 = vector.extract_strided_slice %428 {offsets = [0, 256], sizes = [8, 256], strides = [1, 1]} : vector<8x1024xf32> to vector<8x256xf32>
    %436 = arith.negf %435 : vector<8x256xf32>
    %437 = math.exp %436 : vector<8x256xf32>
    %cst_118 = arith.constant 1.000000e+00 : f32
    %438 = vector.broadcast %cst_118 : f32 to vector<8x256xf32>
    %439 = arith.addf %438, %437 : vector<8x256xf32>
    %440 = arith.divf %438, %439 : vector<8x256xf32>
    %441 = vector.extract_strided_slice %428 {offsets = [0, 512], sizes = [8, 256], strides = [1, 1]} : vector<8x1024xf32> to vector<8x256xf32>
    %442 = math.tanh %441 : vector<8x256xf32>
    %443 = vector.extract_strided_slice %428 {offsets = [0, 768], sizes = [8, 256], strides = [1, 1]} : vector<8x1024xf32> to vector<8x256xf32>
    %444 = arith.negf %443 : vector<8x256xf32>
    %445 = math.exp %444 : vector<8x256xf32>
    %cst_119 = arith.constant 1.000000e+00 : f32
    %446 = vector.broadcast %cst_119 : f32 to vector<8x256xf32>
    %447 = arith.addf %446, %445 : vector<8x256xf32>
    %448 = arith.divf %446, %447 : vector<8x256xf32>
    %449 = arith.mulf %440, %421 : vector<8x256xf32>
    %450 = arith.mulf %434, %442 : vector<8x256xf32>
    %451 = arith.addf %449, %450 : vector<8x256xf32>
    %452 = math.tanh %451 : vector<8x256xf32>
    %453 = arith.mulf %448, %452 : vector<8x256xf32>
    %c6_i32_120 = arith.constant 6 : i32
    %c8_i32_121 = arith.constant 8 : i32
    %454 = arith.muli %c6_i32_120, %c8_i32_121 : i32
    %455 = arith.index_cast %454 : i32 to index
    %c0_122 = arith.constant 0 : index
    %456 = vector.load %arg14[%455, %c0_122] : memref<64x1024xf32, #tpu.memory_space<vmem>>, vector<8x1024xf32>
    %cst_123 = arith.constant dense<0.000000e+00> : vector<8x1024xf32>
    %457 = tpu.matmul %453, %272, %cst_123 {dimension_numbers = #tpu.dot_dimension_numbers<[1], [0], [0], [1], [0, 0, 1, 1], [], []>} : vector<8x256xf32>, vector<256x1024xf32>, vector<8x1024xf32> -> vector<8x1024xf32>
    %458 = arith.addf %456, %457 : vector<8x1024xf32>
    %459 = vector.extract_strided_slice %458 {offsets = [0, 0], sizes = [8, 256], strides = [1, 1]} : vector<8x1024xf32> to vector<8x256xf32>
    %460 = arith.negf %459 : vector<8x256xf32>
    %461 = math.exp %460 : vector<8x256xf32>
    %cst_124 = arith.constant 1.000000e+00 : f32
    %462 = vector.broadcast %cst_124 : f32 to vector<8x256xf32>
    %463 = arith.addf %462, %461 : vector<8x256xf32>
    %464 = arith.divf %462, %463 : vector<8x256xf32>
    %465 = vector.extract_strided_slice %458 {offsets = [0, 256], sizes = [8, 256], strides = [1, 1]} : vector<8x1024xf32> to vector<8x256xf32>
    %466 = arith.negf %465 : vector<8x256xf32>
    %467 = math.exp %466 : vector<8x256xf32>
    %cst_125 = arith.constant 1.000000e+00 : f32
    %468 = vector.broadcast %cst_125 : f32 to vector<8x256xf32>
    %469 = arith.addf %468, %467 : vector<8x256xf32>
    %470 = arith.divf %468, %469 : vector<8x256xf32>
    %471 = vector.extract_strided_slice %458 {offsets = [0, 512], sizes = [8, 256], strides = [1, 1]} : vector<8x1024xf32> to vector<8x256xf32>
    %472 = math.tanh %471 : vector<8x256xf32>
    %473 = vector.extract_strided_slice %458 {offsets = [0, 768], sizes = [8, 256], strides = [1, 1]} : vector<8x1024xf32> to vector<8x256xf32>
    %474 = arith.negf %473 : vector<8x256xf32>
    %475 = math.exp %474 : vector<8x256xf32>
    %cst_126 = arith.constant 1.000000e+00 : f32
    %476 = vector.broadcast %cst_126 : f32 to vector<8x256xf32>
    %477 = arith.addf %476, %475 : vector<8x256xf32>
    %478 = arith.divf %476, %477 : vector<8x256xf32>
    %479 = arith.mulf %470, %451 : vector<8x256xf32>
    %480 = arith.mulf %464, %472 : vector<8x256xf32>
    %481 = arith.addf %479, %480 : vector<8x256xf32>
    %482 = math.tanh %481 : vector<8x256xf32>
    %483 = arith.mulf %478, %482 : vector<8x256xf32>
    %c7_i32_127 = arith.constant 7 : i32
    %c8_i32_128 = arith.constant 8 : i32
    %484 = arith.muli %c7_i32_127, %c8_i32_128 : i32
    %485 = arith.index_cast %484 : i32 to index
    %c0_129 = arith.constant 0 : index
    %486 = vector.load %arg14[%485, %c0_129] : memref<64x1024xf32, #tpu.memory_space<vmem>>, vector<8x1024xf32>
    %cst_130 = arith.constant dense<0.000000e+00> : vector<8x1024xf32>
    %487 = tpu.matmul %483, %272, %cst_130 {dimension_numbers = #tpu.dot_dimension_numbers<[1], [0], [0], [1], [0, 0, 1, 1], [], []>} : vector<8x256xf32>, vector<256x1024xf32>, vector<8x1024xf32> -> vector<8x1024xf32>
    %488 = arith.addf %486, %487 : vector<8x1024xf32>
    %489 = vector.extract_strided_slice %488 {offsets = [0, 0], sizes = [8, 256], strides = [1, 1]} : vector<8x1024xf32> to vector<8x256xf32>
    %490 = arith.negf %489 : vector<8x256xf32>
    %491 = math.exp %490 : vector<8x256xf32>
    %cst_131 = arith.constant 1.000000e+00 : f32
    %492 = vector.broadcast %cst_131 : f32 to vector<8x256xf32>
    %493 = arith.addf %492, %491 : vector<8x256xf32>
    %494 = arith.divf %492, %493 : vector<8x256xf32>
    %495 = vector.extract_strided_slice %488 {offsets = [0, 256], sizes = [8, 256], strides = [1, 1]} : vector<8x1024xf32> to vector<8x256xf32>
    %496 = arith.negf %495 : vector<8x256xf32>
    %497 = math.exp %496 : vector<8x256xf32>
    %cst_132 = arith.constant 1.000000e+00 : f32
    %498 = vector.broadcast %cst_132 : f32 to vector<8x256xf32>
    %499 = arith.addf %498, %497 : vector<8x256xf32>
    %500 = arith.divf %498, %499 : vector<8x256xf32>
    %501 = vector.extract_strided_slice %488 {offsets = [0, 512], sizes = [8, 256], strides = [1, 1]} : vector<8x1024xf32> to vector<8x256xf32>
    %502 = math.tanh %501 : vector<8x256xf32>
    %503 = vector.extract_strided_slice %488 {offsets = [0, 768], sizes = [8, 256], strides = [1, 1]} : vector<8x1024xf32> to vector<8x256xf32>
    %504 = arith.negf %503 : vector<8x256xf32>
    %505 = math.exp %504 : vector<8x256xf32>
    %cst_133 = arith.constant 1.000000e+00 : f32
    %506 = vector.broadcast %cst_133 : f32 to vector<8x256xf32>
    %507 = arith.addf %506, %505 : vector<8x256xf32>
    %508 = arith.divf %506, %507 : vector<8x256xf32>
    %509 = arith.mulf %500, %481 : vector<8x256xf32>
    %510 = arith.mulf %494, %502 : vector<8x256xf32>
    %511 = arith.addf %509, %510 : vector<8x256xf32>
    %512 = math.tanh %511 : vector<8x256xf32>
    %513 = arith.mulf %508, %512 : vector<8x256xf32>
    %c8_i32_134 = arith.constant 8 : i32
    %c0_135 = arith.constant 0 : index
    %c0_136 = arith.constant 0 : index
    %514 = vector.load %arg7[%c0_135, %c0_136] : memref<256x1xf32, #tpu.memory_space<vmem>>, vector<256x1xf32>
    %cst_137 = arith.constant dense<0.000000e+00> : vector<8x1xf32>
    %515 = tpu.matmul %513, %514, %cst_137 {dimension_numbers = #tpu.dot_dimension_numbers<[1], [0], [0], [1], [0, 0, 1, 1], [], []>} : vector<8x256xf32>, vector<256x1xf32>, vector<8x1xf32> -> vector<8x1xf32>
    %c0_138 = arith.constant 0 : index
    %c0_139 = arith.constant 0 : index
    %516 = vector.load %arg8[%c0_138, %c0_139] : memref<1x1xf32, #tpu.memory_space<vmem>>, vector<1x1xf32>
    %517 = vector.broadcast %516 : vector<1x1xf32> to vector<8x1xf32>
    %518 = arith.addf %515, %517 : vector<8x1xf32>
    %c0_140 = arith.constant 0 : index
    %c0_141 = arith.constant 0 : index
    %519 = vector.load %arg9[%c0_140, %c0_141] : memref<8x1xf32, #tpu.memory_space<vmem>>, vector<8x1xf32>
    tpu.vector_store %arg9[%c0_140, %c0_141], %518 {strides = array<i32>} : memref<8x1xf32, #tpu.memory_space<vmem>>, vector<8x1xf32>,
    %c0_142 = arith.constant 0 : index
    %c0_143 = arith.constant 0 : index
    %520 = vector.load %arg10[%c0_142, %c0_143] : memref<8x256xf32, #tpu.memory_space<vmem>>, vector<8x256xf32>
    tpu.vector_store %arg10[%c0_142, %c0_143], %513 {strides = array<i32>} : memref<8x256xf32, #tpu.memory_space<vmem>>, vector<8x256xf32>,
    %c0_144 = arith.constant 0 : index
    %c0_145 = arith.constant 0 : index
    %521 = vector.load %arg11[%c0_144, %c0_145] : memref<8x256xf32, #tpu.memory_space<vmem>>, vector<8x256xf32>
    tpu.vector_store %arg11[%c0_144, %c0_145], %511 {strides = array<i32>} : memref<8x256xf32, #tpu.memory_space<vmem>>, vector<8x256xf32>,
    return
  }
}

</mosaic_0001>

<llo_original>
// kernel: encoder_forward.1
$region0: #{encoder_forward.1}
  #allocation0 [shape = 'u32[]', space=smem, size = 0x4, offset = 0x4, fixed_abs, tag = 'smem constant byte address 0x4 - core index']
  #allocation1 [shape = 'u32[144,128]{1,0:T(1,128)}', space=vmem, size = 0x12000, scoped, tag = 'internal scratch']
  #allocation2 [shape = 'f32[64,512]{1,0:T(8,128)}', space=vmem, size = 0x20000, scoped, tag = 'scratch operand']
  #allocation3 [shape = 'f32[64,128]{1,0:T(8,128)}', space=vmem, size = 0x8000, scoped, tag = 'scratch operand']
  #allocation4 [shape = 'f32[64,1024]{1,0:T(8,128)}', space=vmem, size = 0x40000, scoped, tag = 'scratch operand']
  #allocation5 [shape = 'f32[1,1]{1,0:T(1,128)S(1)}', space=vmem, size = 0x200, scoped, tag = 'scoped memory for encoder_forward.1']
  %s0 = inlined_call_operand.vmem [shape: f32[64,8], index: 0, kind: input, shape index: {}]
  %s1 = inlined_call_operand.vmem [shape: f32[8,512], index: 1, kind: input, shape index: {}]
  %s2 = inlined_call_operand.hbm [shape: f32[128,512], index: 2, kind: input, shape index: {}]
  %s3 = inlined_call_operand.vmem [shape: f32[1,512], index: 3, kind: input, shape index: {}]
  %s4 = inlined_call_operand.hbm [shape: f32[128,1024], index: 4, kind: input, shape index: {}]
  %s5 = inlined_call_operand.hbm [shape: f32[256,1024], index: 5, kind: input, shape index: {}]
  %s6 = inlined_call_operand.vmem [shape: f32[1,1024], index: 6, kind: input, shape index: {}]
  %s7 = inlined_call_operand.vmem [shape: f32[256,1], index: 7, kind: input, shape index: {}]
  %s8 = inlined_call_operand.<no memory space> [shape: f32[1,1], index: 8, kind: input, shape index: {}]
  %s9 = inlined_call_operand.vmem [shape: f32[8,1], index: 9, kind: output, shape index: {0}]
  %s10 = inlined_call_operand.vmem [shape: f32[8,256], index: 10, kind: output, shape index: {1}]
  %s11 = inlined_call_operand.vmem [shape: f32[8,256], index: 11, kind: output, shape index: {2}]
  %12 = xla_tuple %s9, %s10, %s11
  %s13 = sld [smem:[#allocation0]]
  $region74: #{encoder_forward.1} parent=0
    _
  %s15 = ssub.s32 1, %s13
  %s16 = scalar_select 0, %s15, %s13
  %v17 = vstv %s8
  %18 = vst [vmem:[#allocation5] sm:$0x1] %v17
  $region1: #{encoder_forward.1} parent=0
    #allocation6 [shape = 'u8[262144]{0}', space=vmem, size = 0x40000, scoped, tag = 'input window, operand 2, single buffered']
    #allocation7 [shape = 's32[1]{0}', space=sflag, size = 0x4, scoped, tag = 'scoped memory for encoder_forward.1']
    #allocation8 [shape = 'u8[524288]{0}', space=vmem, size = 0x80000, scoped, tag = 'input window, operand 4, single buffered']
    #allocation9 [shape = 's32[1]{0}', space=sflag, size = 0x4, scoped, tag = 'scoped memory for encoder_forward.1']
    #allocation10 [shape = 'u8[1048576]{0}', space=vmem, size = 0x100000, scoped, tag = 'input window, operand 5, single buffered']
    %19 = vsyncpa [#allocation7], 0
    %20 = vsyncpa [#allocation9], 0
    // Predicated region
    $region2: #{encoder_forward.1} parent=1 // pred_check
      _
    $region3: #{encoder_forward.1} parent=1 // pred_check_branch
      %22 = sbr.rel (0) target = $region5
    $region4: #{encoder_forward.1} parent=1 // pred_region
      _
    $region5: #{encoder_forward.1} parent=1 // pred_fallthru
      _
    // Predicated region
    $region6: #{encoder_forward.1} parent=1 // pred_check
      _
    $region7: #{encoder_forward.1} parent=1 // pred_check_branch
      %24 = sbr.rel (0) target = $region9
    $region8: #{encoder_forward.1} parent=1 // pred_region
      _
    $region9: #{encoder_forward.1} parent=1 // pred_fallthru
      _
    // Predicated region
    $region10: #{encoder_forward.1} parent=1 // pred_check
      _
    $region11: #{encoder_forward.1} parent=1 // pred_check_branch
      %26 = sbr.rel (0) target = $region13
    $region12: #{encoder_forward.1} parent=1 // pred_region
      %s28 = ssub.s32 8192, 8192
      %29 = vsyncadd [#allocation7], %s28
      %s30 = sshll.u32 [#allocation6], 4
      %s31 = int_to_ptr.vmem [resolvable:$true] %s30
      %36 = dma.hbm_to_vmem [thread:$0]  %s2, 8192, %s31, [#allocation7], 512, 512, 32
    $region13: #{encoder_forward.1} parent=1 // pred_fallthru
      _
    // Predicated region
    $region14: #{encoder_forward.1} parent=1 // pred_check
      _
    $region15: #{encoder_forward.1} parent=1 // pred_check_branch
      %38 = sbr.rel (0) target = $region17
    $region16: #{encoder_forward.1} parent=1 // pred_region
      _
    $region17: #{encoder_forward.1} parent=1 // pred_fallthru
      _
    // Predicated region
    $region18: #{encoder_forward.1} parent=1 // pred_check
      _
    $region19: #{encoder_forward.1} parent=1 // pred_check_branch
      %40 = sbr.rel (0) target = $region21
    $region20: #{encoder_forward.1} parent=1 // pred_region
      %s42 = ssub.s32 16384, 16384
      %43 = vsyncadd [#allocation9], %s42
      %s44 = sshll.u32 [#allocation8], 4
      %s45 = int_to_ptr.vmem [resolvable:$true] %s44
      %50 = dma.hbm_to_vmem [thread:$0]  %s4, 16384, %s45, [#allocation9], 1024, 1024, 64
    $region21: #{encoder_forward.1} parent=1 // pred_fallthru
      _
    // Predicated region
    $region22: #{encoder_forward.1} parent=1 // pred_check
      _
    $region23: #{encoder_forward.1} parent=1 // pred_check_branch
      %52 = sbr.rel (0) target = $region25
    $region24: #{encoder_forward.1} parent=1 // pred_region
      %s54 = ssub.s32 32768, 32768
      %55 = vsyncadd [#allocation9], %s54
      %s56 = sshll.u32 [#allocation10], 4
      %s57 = int_to_ptr.vmem [resolvable:$true] %s56
      %62 = dma.hbm_to_vmem [thread:$0]  %s5, 32768, %s57, [#allocation9], 1024, 1024, 64
    $region25: #{encoder_forward.1} parent=1 // pred_fallthru
      _
    // Predicated region
    $region26: #{encoder_forward.1} parent=1 // pred_check
      _
    $region27: #{encoder_forward.1} parent=1 // pred_check_branch
      %64 = sbr.rel (0) target = $region29
    $region28: #{encoder_forward.1} parent=1 // pred_region
      _
    $region29: #{encoder_forward.1} parent=1 // pred_fallthru
      _
    // Predicated region
    $region30: #{encoder_forward.1} parent=1 // pred_check
      _
    $region31: #{encoder_forward.1} parent=1 // pred_check_branch
      %66 = sbr.rel (0) target = $region33
    $region32: #{encoder_forward.1} parent=1 // pred_region
      _
    $region33: #{encoder_forward.1} parent=1 // pred_fallthru
      _
    // Predicated region
    $region34: #{encoder_forward.1} parent=1 // pred_check
      _
    $region35: #{encoder_forward.1} parent=1 // pred_check_branch
      %68 = sbr.rel (0) target = $region37
    $region36: #{encoder_forward.1} parent=1 // pred_region
      _
    $region37: #{encoder_forward.1} parent=1 // pred_fallthru
      _
    // Predicated region
    $region38: #{encoder_forward.1} parent=1 // pred_check
      _
    $region39: #{encoder_forward.1} parent=1 // pred_check_branch
      %70 = sbr.rel (0) target = $region41
    $region40: #{encoder_forward.1} parent=1 // pred_region
      %71 = dma.done [#allocation7], 8192
    $region41: #{encoder_forward.1} parent=1 // pred_fallthru
      _
    // Predicated region
    $region42: #{encoder_forward.1} parent=1 // pred_check
      _
    $region43: #{encoder_forward.1} parent=1 // pred_check_branch
      %73 = sbr.rel (0) target = $region45
    $region44: #{encoder_forward.1} parent=1 // pred_region
      %74 = dma.done [#allocation9], 16384
    $region45: #{encoder_forward.1} parent=1 // pred_fallthru
      _
    // Predicated region
    $region46: #{encoder_forward.1} parent=1 // pred_check
      _
    $region47: #{encoder_forward.1} parent=1 // pred_check_branch
      %76 = sbr.rel (0) target = $region49
    $region48: #{encoder_forward.1} parent=1 // pred_region
      %77 = dma.done [#allocation9], 32768
    $region49: #{encoder_forward.1} parent=1 // pred_fallthru
      _
    %v78 = vld [vmem:[%s1] sm:$0xff]
    %v79 = vld [vmem:[%s1 + $0x8] sm:$0xff]
    %v80 = vld [vmem:[%s1 + $0x10] sm:$0xff]
    %v81 = vld [vmem:[%s1 + $0x18] sm:$0xff]
    %v82 = vld [vmem:[%s0] sm:$0xff]
    %v83 = vld [vmem:[%s0 + $0x8] sm:$0xff]
    %v84 = vld [vmem:[%s0 + $0x10] sm:$0xff]
    %v85 = vld [vmem:[%s0 + $0x18] sm:$0xff]
    %v86 = vld [vmem:[%s0 + $0x20] sm:$0xff]
    %v87 = vld [vmem:[%s0 + $0x28] sm:$0xff]
    %v88 = vld [vmem:[%s0 + $0x30] sm:$0xff]
    %v89 = vld [vmem:[%s0 + $0x38] sm:$0xff]
    %v90 = vld [vmem:[%s3] sm:$0xf]
    %v92 = vlaneseq
    %v93 = vshrl.u32 %v92, 7
    %v94 = vsub.s32 0, %v93
    %v95 = vrot.slane %v90, %v94
    %v96 = vlaneseq
    %v97 = vshrl.u32 %v96, 7
    %v98 = vsub.s32 1, %v97
    %v99 = vrot.slane %v90, %v98
    %v100 = vlaneseq
    %v101 = vshrl.u32 %v100, 7
    %v102 = vsub.s32 2, %v101
    %v103 = vrot.slane %v90, %v102
    %v104 = vlaneseq
    %v105 = vshrl.u32 %v104, 7
    %v106 = vsub.s32 3, %v105
    %v107 = vrot.slane %v90, %v106
    %vm112 = vcmask 64512
    %v114 = vsel %vm112, %v82, 0
    %v117 = vsel %vm112, %v83, 0
    %v120 = vsel %vm112, %v84, 0
    %v123 = vsel %vm112, %v85, 0
    %v126 = vsel %vm112, %v86, 0
    %v129 = vsel %vm112, %v87, 0
    %v132 = vsel %vm112, %v88, 0
    %v135 = vsel %vm112, %v89, 0
    %137 = vmatprep.subr.mxu0 %v79
    %138 = vmatpush1.msra.mxu0 %v78
    %139 = vmatprep.subr.mxu0 0.0
    %140 = vmatpush1.msra.mxu0 0.0
    %141 = vmatprep.subr.mxu0 0.0
    %142 = vmatpush1.msra.mxu0 0.0
    %143 = vmatprep.subr.mxu0 0.0
    %144 = vmatpush1.msra.mxu0 0.0
    %145 = vmatprep.subr.mxu0 0.0
    %146 = vmatpush1.msra.mxu0 0.0
    %147 = vmatprep.subr.mxu0 0.0
    %148 = vmatpush1.msra.mxu0 0.0
    %149 = vmatprep.subr.mxu0 0.0
    %150 = vmatpush1.msra.mxu0 0.0
    %151 = vmatprep.subr.mxu0 0.0
    %152 = vmatpush1.msra.mxu0 0.0
    %153 = vmatprep.subr.mxu0 0.0
    %154 = vmatpush1.msra.mxu0 0.0
    %155 = vmatprep.subr.mxu0 0.0
    %156 = vmatpush1.msra.mxu0 0.0
    %157 = vmatprep.subr.mxu0 0.0
    %158 = vmatpush1.msra.mxu0 0.0
    %159 = vmatprep.subr.mxu0 0.0
    %160 = vmatpush1.msra.mxu0 0.0
    %161 = vmatprep.subr.mxu0 0.0
    %162 = vmatpush1.msra.mxu0 0.0
    %163 = vmatprep.subr.mxu0 0.0
    %164 = vmatpush1.msra.mxu0 0.0
    %165 = vmatprep.subr.mxu0 0.0
    %166 = vmatpush1.msra.mxu0 0.0
    %167 = vmatprep.subr.mxu0 0.0
    %168 = vmatpush1.msra.mxu0 0.0
    %169 = vmatprep.subr.mxu0 0.0
    %170 = vmatpush1.msra.mxu0 0.0
    %171 = vmatprep.subr.mxu0 0.0
    %172 = vmatpush1.msra.mxu0 0.0
    %173 = vmatprep.subr.mxu0 0.0
    %174 = vmatpush1.msra.mxu0 0.0
    %175 = vmatprep.subr.mxu0 0.0
    %176 = vmatpush1.msra.mxu0 0.0
    %177 = vmatprep.subr.mxu0 0.0
    %178 = vmatpush1.msra.mxu0 0.0
    %179 = vmatprep.subr.mxu0 0.0
    %180 = vmatpush1.msra.mxu0 0.0
    %181 = vmatprep.subr.mxu0 0.0
    %182 = vmatpush1.msra.mxu0 0.0
    %183 = vmatprep.subr.mxu0 0.0
    %184 = vmatpush1.msra.mxu0 0.0
    %185 = vmatprep.subr.mxu0 0.0
    %186 = vmatpush1.msra.mxu0 0.0
    %187 = vmatprep.subr.mxu0 0.0
    %188 = vmatpush1.msra.mxu0 0.0
    %189 = vmatprep.subr.mxu0 0.0
    %190 = vmatpush1.msra.mxu0 0.0
    %191 = vmatprep.subr.mxu0 0.0
    %192 = vmatpush1.msra.mxu0 0.0
    %193 = vmatprep.subr.mxu0 0.0
    %194 = vmatpush1.msra.mxu0 0.0
    %195 = vmatprep.subr.mxu0 0.0
    %196 = vmatpush1.msra.mxu0 0.0
    %197 = vmatprep.subr.mxu0 0.0
    %198 = vmatpush1.msra.mxu0 0.0
    %199 = vmatprep.subr.mxu0 0.0
    %200 = vmatpush1.msra.mxu0 0.0
    %201 = vmatprep.mubr.f32.mxu0 0.0
    %202 = vmatmul.mubr.f32.gmra.mrb[0].mxu0 %v114
    %v203 = vpop.f32.mrb[0].mxu0
    %v204 = vadd.f32 %v95, %v203
    %v205 = vpop.f32.mrb[0].mxu0
    %v206 = vadd.f32 %v99, %v205
    %207 = vmatprep.mubr.f32.mxu0 0.0
    %208 = vmatmul.mubr.f32.gmra.mrb[0].mxu0 %v117
    %v209 = vpop.f32.mrb[0].mxu0
    %v210 = vadd.f32 %v95, %v209
    %v211 = vpop.f32.mrb[0].mxu0
    %v212 = vadd.f32 %v99, %v211
    %213 = vmatprep.mubr.f32.mxu0 0.0
    %214 = vmatmul.mubr.f32.gmra.mrb[0].mxu0 %v120
    %v215 = vpop.f32.mrb[0].mxu0
    %v216 = vadd.f32 %v95, %v215
    %v217 = vpop.f32.mrb[0].mxu0
    %v218 = vadd.f32 %v99, %v217
    %219 = vmatprep.mubr.f32.mxu0 0.0
    %220 = vmatmul.mubr.f32.gmra.mrb[0].mxu0 %v123
    %v221 = vpop.f32.mrb[0].mxu0
    %v222 = vadd.f32 %v95, %v221
    %v223 = vpop.f32.mrb[0].mxu0
    %v224 = vadd.f32 %v99, %v223
    %225 = vmatprep.mubr.f32.mxu0 0.0
    %226 = vmatmul.mubr.f32.gmra.mrb[0].mxu0 %v126
    %v227 = vpop.f32.mrb[0].mxu0
    %v228 = vadd.f32 %v95, %v227
    %v229 = vpop.f32.mrb[0].mxu0
    %v230 = vadd.f32 %v99, %v229
    %231 = vmatprep.mubr.f32.mxu0 0.0
    %232 = vmatmul.mubr.f32.gmra.mrb[0].mxu0 %v129
    %v233 = vpop.f32.mrb[0].mxu0
    %v234 = vadd.f32 %v95, %v233
    %v235 = vpop.f32.mrb[0].mxu0
    %v236 = vadd.f32 %v99, %v235
    %237 = vmatprep.mubr.f32.mxu0 0.0
    %238 = vmatmul.mubr.f32.gmra.mrb[0].mxu0 %v132
    %v239 = vpop.f32.mrb[0].mxu0
    %v240 = vadd.f32 %v95, %v239
    %v241 = vpop.f32.mrb[0].mxu0
    %v242 = vadd.f32 %v99, %v241
    %243 = vmatprep.mubr.f32.mxu0 0.0
    %244 = vmatmul.mubr.f32.gmra.mrb[0].mxu0 %v135
    %v245 = vpop.f32.mrb[0].mxu0
    %v246 = vadd.f32 %v95, %v245
    %v247 = vpop.f32.mrb[0].mxu0
    %v248 = vadd.f32 %v99, %v247
    %249 = vdwg.mxu0
    %250 = vmatprep.subr.mxu0 %v81
    %251 = vmatpush1.msra.mxu0 %v80
    %252 = vmatprep.subr.mxu0 0.0
    %253 = vmatpush1.msra.mxu0 0.0
    %254 = vmatprep.subr.mxu0 0.0
    %255 = vmatpush1.msra.mxu0 0.0
    %256 = vmatprep.subr.mxu0 0.0
    %257 = vmatpush1.msra.mxu0 0.0
    %258 = vmatprep.subr.mxu0 0.0
    %259 = vmatpush1.msra.mxu0 0.0
    %260 = vmatprep.subr.mxu0 0.0
    %261 = vmatpush1.msra.mxu0 0.0
    %262 = vmatprep.subr.mxu0 0.0
    %263 = vmatpush1.msra.mxu0 0.0
    %264 = vmatprep.subr.mxu0 0.0
    %265 = vmatpush1.msra.mxu0 0.0
    %266 = vmatprep.subr.mxu0 0.0
    %267 = vmatpush1.msra.mxu0 0.0
    %268 = vmatprep.subr.mxu0 0.0
    %269 = vmatpush1.msra.mxu0 0.0
    %270 = vmatprep.subr.mxu0 0.0
    %271 = vmatpush1.msra.mxu0 0.0
    %272 = vmatprep.subr.mxu0 0.0
    %273 = vmatpush1.msra.mxu0 0.0
    %274 = vmatprep.subr.mxu0 0.0
    %275 = vmatpush1.msra.mxu0 0.0
    %276 = vmatprep.subr.mxu0 0.0
    %277 = vmatpush1.msra.mxu0 0.0
    %278 = vmatprep.subr.mxu0 0.0
    %279 = vmatpush1.msra.mxu0 0.0
    %280 = vmatprep.subr.mxu0 0.0
    %281 = vmatpush1.msra.mxu0 0.0
    %282 = vmatprep.subr.mxu0 0.0
    %283 = vmatpush1.msra.mxu0 0.0
    %284 = vmatprep.subr.mxu0 0.0
    %285 = vmatpush1.msra.mxu0 0.0
    %286 = vmatprep.subr.mxu0 0.0
    %287 = vmatpush1.msra.mxu0 0.0
    %288 = vmatprep.subr.mxu0 0.0
    %289 = vmatpush1.msra.mxu0 0.0
    %290 = vmatprep.subr.mxu0 0.0
    %291 = vmatpush1.msra.mxu0 0.0
    %292 = vmatprep.subr.mxu0 0.0
    %293 = vmatpush1.msra.mxu0 0.0
    %294 = vmatprep.subr.mxu0 0.0
    %295 = vmatpush1.msra.mxu0 0.0
    %296 = vmatprep.subr.mxu0 0.0
    %297 = vmatpush1.msra.mxu0 0.0
    %298 = vmatprep.subr.mxu0 0.0
    %299 = vmatpush1.msra.mxu0 0.0
    %300 = vmatprep.subr.mxu0 0.0
    %301 = vmatpush1.msra.mxu0 0.0
    %302 = vmatprep.subr.mxu0 0.0
    %303 = vmatpush1.msra.mxu0 0.0
    %304 = vmatprep.subr.mxu0 0.0
    %305 = vmatpush1.msra.mxu0 0.0
    %306 = vmatprep.subr.mxu0 0.0
    %307 = vmatpush1.msra.mxu0 0.0
    %308 = vmatprep.subr.mxu0 0.0
    %309 = vmatpush1.msra.mxu0 0.0
    %310 = vmatprep.subr.mxu0 0.0
    %311 = vmatpush1.msra.mxu0 0.0
    %312 = vmatprep.subr.mxu0 0.0
    %313 = vmatpush1.msra.mxu0 0.0
    %314 = vmatprep.mubr.f32.mxu0 0.0
    %315 = vmatmul.mubr.f32.gmra.mrb[0].mxu0 %v114
    %v316 = vpop.f32.mrb[0].mxu0
    %v317 = vadd.f32 %v103, %v316
    %v318 = vpop.f32.mrb[0].mxu0
    %v319 = vadd.f32 %v107, %v318
    %320 = vmatprep.mubr.f32.mxu0 0.0
    %321 = vmatmul.mubr.f32.gmra.mrb[0].mxu0 %v117
    %v322 = vpop.f32.mrb[0].mxu0
    %v323 = vadd.f32 %v103, %v322
    %v324 = vpop.f32.mrb[0].mxu0
    %v325 = vadd.f32 %v107, %v324
    %326 = vmatprep.mubr.f32.mxu0 0.0
    %327 = vmatmul.mubr.f32.gmra.mrb[0].mxu0 %v120
    %v328 = vpop.f32.mrb[0].mxu0
    %v329 = vadd.f32 %v103, %v328
    %v330 = vpop.f32.mrb[0].mxu0
    %v331 = vadd.f32 %v107, %v330
    %332 = vmatprep.mubr.f32.mxu0 0.0
    %333 = vmatmul.mubr.f32.gmra.mrb[0].mxu0 %v123
    %v334 = vpop.f32.mrb[0].mxu0
    %v335 = vadd.f32 %v103, %v334
    %v336 = vpop.f32.mrb[0].mxu0
    %v337 = vadd.f32 %v107, %v336
    %338 = vmatprep.mubr.f32.mxu0 0.0
    %339 = vmatmul.mubr.f32.gmra.mrb[0].mxu0 %v126
    %v340 = vpop.f32.mrb[0].mxu0
    %v341 = vadd.f32 %v103, %v340
    %v342 = vpop.f32.mrb[0].mxu0
    %v343 = vadd.f32 %v107, %v342
    %344 = vmatprep.mubr.f32.mxu0 0.0
    %345 = vmatmul.mubr.f32.gmra.mrb[0].mxu0 %v129
    %v346 = vpop.f32.mrb[0].mxu0
    %v347 = vadd.f32 %v103, %v346
    %v348 = vpop.f32.mrb[0].mxu0
    %v349 = vadd.f32 %v107, %v348
    %350 = vmatprep.mubr.f32.mxu0 0.0
    %351 = vmatmul.mubr.f32.gmra.mrb[0].mxu0 %v132
    %v352 = vpop.f32.mrb[0].mxu0
    %v353 = vadd.f32 %v103, %v352
    %v354 = vpop.f32.mrb[0].mxu0
    %v355 = vadd.f32 %v107, %v354
    %356 = vmatprep.mubr.f32.mxu0 0.0
    %357 = vmatmul.mubr.f32.gmra.mrb[0].mxu0 %v135
    %v358 = vpop.f32.mrb[0].mxu0
    %v359 = vadd.f32 %v103, %v358
    %v360 = vpop.f32.mrb[0].mxu0
    %v361 = vadd.f32 %v107, %v360
    %362 = vdwg.mxu0
    %363 = vst [vmem:[#allocation2] sm:$0xff] %v204
    %364 = vst [vmem:[#allocation2 + $0x8] sm:$0xff] %v206
    %365 = vst [vmem:[#allocation2 + $0x10] sm:$0xff] %v317
    %366 = vst [vmem:[#allocation2 + $0x18] sm:$0xff] %v319
    %367 = vst [vmem:[#allocation2 + $0x20] sm:$0xff] %v210
    %368 = vst [vmem:[#allocation2 + $0x28] sm:$0xff] %v212
    %369 = vst [vmem:[#allocation2 + $0x30] sm:$0xff] %v323
    %370 = vst [vmem:[#allocation2 + $0x38] sm:$0xff] %v325
    %371 = vst [vmem:[#allocation2 + $0x40] sm:$0xff] %v216
    %372 = vst [vmem:[#allocation2 + $0x48] sm:$0xff] %v218
    %373 = vst [vmem:[#allocation2 + $0x50] sm:$0xff] %v329
    %374 = vst [vmem:[#allocation2 + $0x58] sm:$0xff] %v331
    %375 = vst [vmem:[#allocation2 + $0x60] sm:$0xff] %v222
    %376 = vst [vmem:[#allocation2 + $0x68] sm:$0xff] %v224
    %377 = vst [vmem:[#allocation2 + $0x70] sm:$0xff] %v335
    %378 = vst [vmem:[#allocation2 + $0x78] sm:$0xff] %v337
    %379 = vst [vmem:[#allocation2 + $0x80] sm:$0xff] %v228
    %380 = vst [vmem:[#allocation2 + $0x88] sm:$0xff] %v230
    %381 = vst [vmem:[#allocation2 + $0x90] sm:$0xff] %v341
    %382 = vst [vmem:[#allocation2 + $0x98] sm:$0xff] %v343
    %383 = vst [vmem:[#allocation2 + $0xa0] sm:$0xff] %v234
    %384 = vst [vmem:[#allocation2 + $0xa8] sm:$0xff] %v236
    %385 = vst [vmem:[#allocation2 + $0xb0] sm:$0xff] %v347
    %386 = vst [vmem:[#allocation2 + $0xb8] sm:$0xff] %v349
    %387 = vst [vmem:[#allocation2 + $0xc0] sm:$0xff] %v240
    %388 = vst [vmem:[#allocation2 + $0xc8] sm:$0xff] %v242
    %389 = vst [vmem:[#allocation2 + $0xd0] sm:$0xff] %v353
    %390 = vst [vmem:[#allocation2 + $0xd8] sm:$0xff] %v355
    %391 = vst [vmem:[#allocation2 + $0xe0] sm:$0xff] %v246
    %392 = vst [vmem:[#allocation2 + $0xe8] sm:$0xff] %v248
    %393 = vst [vmem:[#allocation2 + $0xf0] sm:$0xff] %v359
    %394 = vst [vmem:[#allocation2 + $0xf8] sm:$0xff] %v361
    %v395 = vld [vmem:[#allocation6] sm:$0xff]
    %v396 = vld [vmem:[#allocation6 + $0x8] sm:$0xff]
    %v397 = vld [vmem:[#allocation6 + $0x10] sm:$0xff]
    %v398 = vld [vmem:[#allocation6 + $0x18] sm:$0xff]
    %v399 = vld [vmem:[#allocation6 + $0x20] sm:$0xff]
    %v400 = vld [vmem:[#allocation6 + $0x28] sm:$0xff]
    %v401 = vld [vmem:[#allocation6 + $0x30] sm:$0xff]
    %v402 = vld [vmem:[#allocation6 + $0x38] sm:$0xff]
    %v403 = vld [vmem:[#allocation6 + $0x40] sm:$0xff]
    %v404 = vld [vmem:[#allocation6 + $0x48] sm:$0xff]
    %v405 = vld [vmem:[#allocation6 + $0x50] sm:$0xff]
    %v406 = vld [vmem:[#allocation6 + $0x58] sm:$0xff]
    %v407 = vld [vmem:[#allocation6 + $0x60] sm:$0xff]
    %v408 = vld [vmem:[#allocation6 + $0x68] sm:$0xff]
    %v409 = vld [vmem:[#allocation6 + $0x70] sm:$0xff]
    %v410 = vld [vmem:[#allocation6 + $0x78] sm:$0xff]
    %v411 = vld [vmem:[#allocation6 + $0x80] sm:$0xff]
    %v412 = vld [vmem:[#allocation6 + $0x88] sm:$0xff]
    %v413 = vld [vmem:[#allocation6 + $0x90] sm:$0xff]
    %v414 = vld [vmem:[#allocation6 + $0x98] sm:$0xff]
    %v415 = vld [vmem:[#allocation6 + $0xa0] sm:$0xff]
    %v416 = vld [vmem:[#allocation6 + $0xa8] sm:$0xff]
    %v417 = vld [vmem:[#allocation6 + $0xb0] sm:$0xff]
    %v418 = vld [vmem:[#allocation6 + $0xb8] sm:$0xff]
    %v419 = vld [vmem:[#allocation6 + $0xc0] sm:$0xff]
    %v420 = vld [vmem:[#allocation6 + $0xc8] sm:$0xff]
    %v421 = vld [vmem:[#allocation6 + $0xd0] sm:$0xff]
    %v422 = vld [vmem:[#allocation6 + $0xd8] sm:$0xff]
    %v423 = vld [vmem:[#allocation6 + $0xe0] sm:$0xff]
    %v424 = vld [vmem:[#allocation6 + $0xe8] sm:$0xff]
    %v425 = vld [vmem:[#allocation6 + $0xf0] sm:$0xff]
    %v426 = vld [vmem:[#allocation6 + $0xf8] sm:$0xff]
    %v427 = vld [vmem:[#allocation6 + $0x100] sm:$0xff]
    %v428 = vld [vmem:[#allocation6 + $0x108] sm:$0xff]
    %v429 = vld [vmem:[#allocation6 + $0x110] sm:$0xff]
    %v430 = vld [vmem:[#allocation6 + $0x118] sm:$0xff]
    %v431 = vld [vmem:[#allocation6 + $0x120] sm:$0xff]
    %v432 = vld [vmem:[#allocation6 + $0x128] sm:$0xff]
    %v433 = vld [vmem:[#allocation6 + $0x130] sm:$0xff]
    %v434 = vld [vmem:[#allocation6 + $0x138] sm:$0xff]
    %v435 = vld [vmem:[#allocation6 + $0x140] sm:$0xff]
    %v436 = vld [vmem:[#allocation6 + $0x148] sm:$0xff]
    %v437 = vld [vmem:[#allocation6 + $0x150] sm:$0xff]
    %v438 = vld [vmem:[#allocation6 + $0x158] sm:$0xff]
    %v439 = vld [vmem:[#allocation6 + $0x160] sm:$0xff]
    %v440 = vld [vmem:[#allocation6 + $0x168] sm:$0xff]
    %v441 = vld [vmem:[#allocation6 + $0x170] sm:$0xff]
    %v442 = vld [vmem:[#allocation6 + $0x178] sm:$0xff]
    %v443 = vld [vmem:[#allocation6 + $0x180] sm:$0xff]
    %v444 = vld [vmem:[#allocation6 + $0x188] sm:$0xff]
    %v445 = vld [vmem:[#allocation6 + $0x190] sm:$0xff]
    %v446 = vld [vmem:[#allocation6 + $0x198] sm:$0xff]
    %v447 = vld [vmem:[#allocation6 + $0x1a0] sm:$0xff]
    %v448 = vld [vmem:[#allocation6 + $0x1a8] sm:$0xff]
    %v449 = vld [vmem:[#allocation6 + $0x1b0] sm:$0xff]
    %v450 = vld [vmem:[#allocation6 + $0x1b8] sm:$0xff]
    %v451 = vld [vmem:[#allocation6 + $0x1c0] sm:$0xff]
    %v452 = vld [vmem:[#allocation6 + $0x1c8] sm:$0xff]
    %v453 = vld [vmem:[#allocation6 + $0x1d0] sm:$0xff]
    %v454 = vld [vmem:[#allocation6 + $0x1d8] sm:$0xff]
    %v455 = vld [vmem:[#allocation6 + $0x1e0] sm:$0xff]
    %v456 = vld [vmem:[#allocation6 + $0x1e8] sm:$0xff]
    %v457 = vld [vmem:[#allocation6 + $0x1f0] sm:$0xff]
    %v458 = vld [vmem:[#allocation6 + $0x1f8] sm:$0xff]
    %v459 = vld [vmem:[#allocation2] sm:$0xff]
    %v460 = vld [vmem:[#allocation2 + $0x8] sm:$0xff]
    %v461 = vld [vmem:[#allocation2 + $0x10] sm:$0xff]
    %v462 = vld [vmem:[#allocation2 + $0x18] sm:$0xff]
    %463 = vmatprep.subr.mxu0 %v396
    %464 = vmatpush1.msra.mxu0 %v395
    %465 = vmatprep.subr.mxu0 %v400
    %466 = vmatpush1.msra.mxu0 %v399
    %467 = vmatprep.subr.mxu0 %v404
    %468 = vmatpush1.msra.mxu0 %v403
    %469 = vmatprep.subr.mxu0 %v408
    %470 = vmatpush1.msra.mxu0 %v407
    %471 = vmatprep.subr.mxu0 %v412
    %472 = vmatpush1.msra.mxu0 %v411
    %473 = vmatprep.subr.mxu0 %v416
    %474 = vmatpush1.msra.mxu0 %v415
    %475 = vmatprep.subr.mxu0 %v420
    %476 = vmatpush1.msra.mxu0 %v419
    %477 = vmatprep.subr.mxu0 %v424
    %478 = vmatpush1.msra.mxu0 %v423
    %479 = vmatprep.subr.mxu0 %v428
    %480 = vmatpush1.msra.mxu0 %v427
    %481 = vmatprep.subr.mxu0 %v432
    %482 = vmatpush1.msra.mxu0 %v431
    %483 = vmatprep.subr.mxu0 %v436
    %484 = vmatpush1.msra.mxu0 %v435
    %485 = vmatprep.subr.mxu0 %v440
    %486 = vmatpush1.msra.mxu0 %v439
    %487 = vmatprep.subr.mxu0 %v444
    %488 = vmatpush1.msra.mxu0 %v443
    %489 = vmatprep.subr.mxu0 %v448
    %490 = vmatpush1.msra.mxu0 %v447
    %491 = vmatprep.subr.mxu0 %v452
    %492 = vmatpush1.msra.mxu0 %v451
    %493 = vmatprep.subr.mxu0 %v456
    %494 = vmatpush1.msra.mxu0 %v455
    %495 = vmatprep.subr.mxu0 0.0
    %496 = vmatpush1.msra.mxu0 0.0
    %497 = vmatprep.subr.mxu0 0.0
    %498 = vmatpush1.msra.mxu0 0.0
    %499 = vmatprep.subr.mxu0 0.0
    %500 = vmatpush1.msra.mxu0 0.0
    %501 = vmatprep.subr.mxu0 0.0
    %502 = vmatpush1.msra.mxu0 0.0
    %503 = vmatprep.subr.mxu0 0.0
    %504 = vmatpush1.msra.mxu0 0.0
    %505 = vmatprep.subr.mxu0 0.0
    %506 = vmatpush1.msra.mxu0 0.0
    %507 = vmatprep.subr.mxu0 0.0
    %508 = vmatpush1.msra.mxu0 0.0
    %509 = vmatprep.subr.mxu0 0.0
    %510 = vmatpush1.msra.mxu0 0.0
    %511 = vmatprep.subr.mxu0 0.0
    %512 = vmatpush1.msra.mxu0 0.0
    %513 = vmatprep.subr.mxu0 0.0
    %514 = vmatpush1.msra.mxu0 0.0
    %515 = vmatprep.subr.mxu0 0.0
    %516 = vmatpush1.msra.mxu0 0.0
    %517 = vmatprep.subr.mxu0 0.0
    %518 = vmatpush1.msra.mxu0 0.0
    %519 = vmatprep.subr.mxu0 0.0
    %520 = vmatpush1.msra.mxu0 0.0
    %521 = vmatprep.subr.mxu0 0.0
    %522 = vmatpush1.msra.mxu0 0.0
    %523 = vmatprep.subr.mxu0 0.0
    %524 = vmatpush1.msra.mxu0 0.0
    %525 = vmatprep.subr.mxu0 0.0
    %526 = vmatpush1.msra.mxu0 0.0
    %527 = vmatprep.mubr.f32.mxu0 0.0
    %528 = vmatmul.mubr.f32.gmra.mrb[0].mxu0 0.0
    %v529 = vpop.f32.mrb[0].mxu0
    %v530 = vadd.f32 0.0, %v529
    %v531 = vpop.f32.mrb[0].mxu0
    %v532 = vadd.f32 0.0, %v531
    %533 = vdwg.mxu0
    %534 = vmatprep.subr.mxu0 %v398
    %535 = vmatpush1.msra.mxu0 %v397
    %536 = vmatprep.subr.mxu0 %v402
    %537 = vmatpush1.msra.mxu0 %v401
    %538 = vmatprep.subr.mxu0 %v406
    %539 = vmatpush1.msra.mxu0 %v405
    %540 = vmatprep.subr.mxu0 %v410
    %541 = vmatpush1.msra.mxu0 %v409
    %542 = vmatprep.subr.mxu0 %v414
    %543 = vmatpush1.msra.mxu0 %v413
    %544 = vmatprep.subr.mxu0 %v418
    %545 = vmatpush1.msra.mxu0 %v417
    %546 = vmatprep.subr.mxu0 %v422
    %547 = vmatpush1.msra.mxu0 %v421
    %548 = vmatprep.subr.mxu0 %v426
    %549 = vmatpush1.msra.mxu0 %v425
    %550 = vmatprep.subr.mxu0 %v430
    %551 = vmatpush1.msra.mxu0 %v429
    %552 = vmatprep.subr.mxu0 %v434
    %553 = vmatpush1.msra.mxu0 %v433
    %554 = vmatprep.subr.mxu0 %v438
    %555 = vmatpush1.msra.mxu0 %v437
    %556 = vmatprep.subr.mxu0 %v442
    %557 = vmatpush1.msra.mxu0 %v441
    %558 = vmatprep.subr.mxu0 %v446
    %559 = vmatpush1.msra.mxu0 %v445
    %560 = vmatprep.subr.mxu0 %v450
    %561 = vmatpush1.msra.mxu0 %v449
    %562 = vmatprep.subr.mxu0 %v454
    %563 = vmatpush1.msra.mxu0 %v453
    %564 = vmatprep.subr.mxu0 %v458
    %565 = vmatpush1.msra.mxu0 %v457
    %566 = vmatprep.subr.mxu0 0.0
    %567 = vmatpush1.msra.mxu0 0.0
    %568 = vmatprep.subr.mxu0 0.0
    %569 = vmatpush1.msra.mxu0 0.0
    %570 = vmatprep.subr.mxu0 0.0
    %571 = vmatpush1.msra.mxu0 0.0
    %572 = vmatprep.subr.mxu0 0.0
    %573 = vmatpush1.msra.mxu0 0.0
    %574 = vmatprep.subr.mxu0 0.0
    %575 = vmatpush1.msra.mxu0 0.0
    %576 = vmatprep.subr.mxu0 0.0
    %577 = vmatpush1.msra.mxu0 0.0
    %578 = vmatprep.subr.mxu0 0.0
    %579 = vmatpush1.msra.mxu0 0.0
    %580 = vmatprep.subr.mxu0 0.0
    %581 = vmatpush1.msra.mxu0 0.0
    %582 = vmatprep.subr.mxu0 0.0
    %583 = vmatpush1.msra.mxu0 0.0
    %584 = vmatprep.subr.mxu0 0.0
    %585 = vmatpush1.msra.mxu0 0.0
    %586 = vmatprep.subr.mxu0 0.0
    %587 = vmatpush1.msra.mxu0 0.0
    %588 = vmatprep.subr.mxu0 0.0
    %589 = vmatpush1.msra.mxu0 0.0
    %590 = vmatprep.subr.mxu0 0.0
    %591 = vmatpush1.msra.mxu0 0.0
    %592 = vmatprep.subr.mxu0 0.0
    %593 = vmatpush1.msra.mxu0 0.0
    %594 = vmatprep.subr.mxu0 0.0
    %595 = vmatpush1.msra.mxu0 0.0
    %596 = vmatprep.subr.mxu0 0.0
    %597 = vmatpush1.msra.mxu0 0.0
    %598 = vmatprep.mubr.f32.mxu0 0.0
    %599 = vmatmul.mubr.f32.gmra.mrb[0].mxu0 0.0
    %v600 = vpop.f32.mrb[0].mxu0
    %v601 = vadd.f32 0.0, %v600
    %v602 = vpop.f32.mrb[0].mxu0
    %v603 = vadd.f32 0.0, %v602
    %604 = vdwg.mxu0
    %v605 = vadd.f32 %v459, %v530
    %v606 = vadd.f32 %v460, %v532
    %v607 = vadd.f32 %v461, %v601
    %v608 = vadd.f32 %v462, %v603
    %v609 = vxor.u32 %v605, 2147483648
    %v610 = vmul.f32 %v609, 1.442695
    %v611 = vpow.pop %v610
    %v612 = vadd.f32 %v611, 1.0
    %v613 = vrcp.pop %v612
    %v614 = vmul.f32 1.0, %v613
    %v615 = vxor.u32 %v606, 2147483648
    %v616 = vmul.f32 %v615, 1.442695
    %v617 = vpow.pop %v616
    %v618 = vadd.f32 %v617, 1.0
    %v619 = vrcp.pop %v618
    %v620 = vmul.f32 1.0, %v619
    %v621 = vtanh.pop %v607
    %v622 = vxor.u32 %v608, 2147483648
    %v623 = vmul.f32 %v622, 1.442695
    %v624 = vpow.pop %v623
    %v625 = vadd.f32 %v624, 1.0
    %v626 = vrcp.pop %v625
    %v627 = vmul.f32 1.0, %v626
    %v628 = vmul.f32 %v620, 0.0
    %v629 = vmul.f32 %v614, %v621
    %v630 = vadd.f32 %v628, %v629
    %v631 = vtanh.pop %v630
    %v632 = vmul.f32 %v627, %v631
    %633 = vst [vmem:[#allocation3] sm:$0xff] %v632
    %v634 = vld [vmem:[#allocation2 + $0x20] sm:$0xff]
    %v635 = vld [vmem:[#allocation2 + $0x28] sm:$0xff]
    %v636 = vld [vmem:[#allocation2 + $0x30] sm:$0xff]
    %v637 = vld [vmem:[#allocation2 + $0x38] sm:$0xff]
    %638 = vmatprep.subr.mxu0 %v396
    %639 = vmatpush1.msra.mxu0 %v395
    %640 = vmatprep.subr.mxu0 %v400
    %641 = vmatpush1.msra.mxu0 %v399
    %642 = vmatprep.subr.mxu0 %v404
    %643 = vmatpush1.msra.mxu0 %v403
    %644 = vmatprep.subr.mxu0 %v408
    %645 = vmatpush1.msra.mxu0 %v407
    %646 = vmatprep.subr.mxu0 %v412
    %647 = vmatpush1.msra.mxu0 %v411
    %648 = vmatprep.subr.mxu0 %v416
    %649 = vmatpush1.msra.mxu0 %v415
    %650 = vmatprep.subr.mxu0 %v420
    %651 = vmatpush1.msra.mxu0 %v419
    %652 = vmatprep.subr.mxu0 %v424
    %653 = vmatpush1.msra.mxu0 %v423
    %654 = vmatprep.subr.mxu0 %v428
    %655 = vmatpush1.msra.mxu0 %v427
    %656 = vmatprep.subr.mxu0 %v432
    %657 = vmatpush1.msra.mxu0 %v431
    %658 = vmatprep.subr.mxu0 %v436
    %659 = vmatpush1.msra.mxu0 %v435
    %660 = vmatprep.subr.mxu0 %v440
    %661 = vmatpush1.msra.mxu0 %v439
    %662 = vmatprep.subr.mxu0 %v444
    %663 = vmatpush1.msra.mxu0 %v443
    %664 = vmatprep.subr.mxu0 %v448
    %665 = vmatpush1.msra.mxu0 %v447
    %666 = vmatprep.subr.mxu0 %v452
    %667 = vmatpush1.msra.mxu0 %v451
    %668 = vmatprep.subr.mxu0 %v456
    %669 = vmatpush1.msra.mxu0 %v455
    %670 = vmatprep.subr.mxu0 0.0
    %671 = vmatpush1.msra.mxu0 0.0
    %672 = vmatprep.subr.mxu0 0.0
    %673 = vmatpush1.msra.mxu0 0.0
    %674 = vmatprep.subr.mxu0 0.0
    %675 = vmatpush1.msra.mxu0 0.0
    %676 = vmatprep.subr.mxu0 0.0
    %677 = vmatpush1.msra.mxu0 0.0
    %678 = vmatprep.subr.mxu0 0.0
    %679 = vmatpush1.msra.mxu0 0.0
    %680 = vmatprep.subr.mxu0 0.0
    %681 = vmatpush1.msra.mxu0 0.0
    %682 = vmatprep.subr.mxu0 0.0
    %683 = vmatpush1.msra.mxu0 0.0
    %684 = vmatprep.subr.mxu0 0.0
    %685 = vmatpush1.msra.mxu0 0.0
    %686 = vmatprep.subr.mxu0 0.0
    %687 = vmatpush1.msra.mxu0 0.0
    %688 = vmatprep.subr.mxu0 0.0
    %689 = vmatpush1.msra.mxu0 0.0
    %690 = vmatprep.subr.mxu0 0.0
    %691 = vmatpush1.msra.mxu0 0.0
    %692 = vmatprep.subr.mxu0 0.0
    %693 = vmatpush1.msra.mxu0 0.0
    %694 = vmatprep.subr.mxu0 0.0
    %695 = vmatpush1.msra.mxu0 0.0
    %696 = vmatprep.subr.mxu0 0.0
    %697 = vmatpush1.msra.mxu0 0.0
    %698 = vmatprep.subr.mxu0 0.0
    %699 = vmatpush1.msra.mxu0 0.0
    %700 = vmatprep.subr.mxu0 0.0
    %701 = vmatpush1.msra.mxu0 0.0
    %702 = vmatprep.mubr.f32.mxu0 0.0
    %703 = vmatmul.mubr.f32.gmra.mrb[0].mxu0 %v632
    %v704 = vpop.f32.mrb[0].mxu0
    %v705 = vadd.f32 0.0, %v704
    %v706 = vpop.f32.mrb[0].mxu0
    %v707 = vadd.f32 0.0, %v706
    %708 = vdwg.mxu0
    %709 = vmatprep.subr.mxu0 %v398
    %710 = vmatpush1.msra.mxu0 %v397
    %711 = vmatprep.subr.mxu0 %v402
    %712 = vmatpush1.msra.mxu0 %v401
    %713 = vmatprep.subr.mxu0 %v406
    %714 = vmatpush1.msra.mxu0 %v405
    %715 = vmatprep.subr.mxu0 %v410
    %716 = vmatpush1.msra.mxu0 %v409
    %717 = vmatprep.subr.mxu0 %v414
    %718 = vmatpush1.msra.mxu0 %v413
    %719 = vmatprep.subr.mxu0 %v418
    %720 = vmatpush1.msra.mxu0 %v417
    %721 = vmatprep.subr.mxu0 %v422
    %722 = vmatpush1.msra.mxu0 %v421
    %723 = vmatprep.subr.mxu0 %v426
    %724 = vmatpush1.msra.mxu0 %v425
    %725 = vmatprep.subr.mxu0 %v430
    %726 = vmatpush1.msra.mxu0 %v429
    %727 = vmatprep.subr.mxu0 %v434
    %728 = vmatpush1.msra.mxu0 %v433
    %729 = vmatprep.subr.mxu0 %v438
    %730 = vmatpush1.msra.mxu0 %v437
    %731 = vmatprep.subr.mxu0 %v442
    %732 = vmatpush1.msra.mxu0 %v441
    %733 = vmatprep.subr.mxu0 %v446
    %734 = vmatpush1.msra.mxu0 %v445
    %735 = vmatprep.subr.mxu0 %v450
    %736 = vmatpush1.msra.mxu0 %v449
    %737 = vmatprep.subr.mxu0 %v454
    %738 = vmatpush1.msra.mxu0 %v453
    %739 = vmatprep.subr.mxu0 %v458
    %740 = vmatpush1.msra.mxu0 %v457
    %741 = vmatprep.subr.mxu0 0.0
    %742 = vmatpush1.msra.mxu0 0.0
    %743 = vmatprep.subr.mxu0 0.0
    %744 = vmatpush1.msra.mxu0 0.0
    %745 = vmatprep.subr.mxu0 0.0
    %746 = vmatpush1.msra.mxu0 0.0
    %747 = vmatprep.subr.mxu0 0.0
    %748 = vmatpush1.msra.mxu0 0.0
    %749 = vmatprep.subr.mxu0 0.0
    %750 = vmatpush1.msra.mxu0 0.0
    %751 = vmatprep.subr.mxu0 0.0
    %752 = vmatpush1.msra.mxu0 0.0
    %753 = vmatprep.subr.mxu0 0.0
    %754 = vmatpush1.msra.mxu0 0.0
    %755 = vmatprep.subr.mxu0 0.0
    %756 = vmatpush1.msra.mxu0 0.0
    %757 = vmatprep.subr.mxu0 0.0
    %758 = vmatpush1.msra.mxu0 0.0
    %759 = vmatprep.subr.mxu0 0.0
    %760 = vmatpush1.msra.mxu0 0.0
    %761 = vmatprep.subr.mxu0 0.0
    %762 = vmatpush1.msra.mxu0 0.0
    %763 = vmatprep.subr.mxu0 0.0
    %764 = vmatpush1.msra.mxu0 0.0
    %765 = vmatprep.subr.mxu0 0.0
    %766 = vmatpush1.msra.mxu0 0.0
    %767 = vmatprep.subr.mxu0 0.0
    %768 = vmatpush1.msra.mxu0 0.0
    %769 = vmatprep.subr.mxu0 0.0
    %770 = vmatpush1.msra.mxu0 0.0
    %771 = vmatprep.subr.mxu0 0.0
    %772 = vmatpush1.msra.mxu0 0.0
    %773 = vmatprep.mubr.f32.mxu0 0.0
    %774 = vmatmul.mubr.f32.gmra.mrb[0].mxu0 %v632
    %v775 = vpop.f32.mrb[0].mxu0
    %v776 = vadd.f32 0.0, %v775
    %v777 = vpop.f32.mrb[0].mxu0
    %v778 = vadd.f32 0.0, %v777
    %779 = vdwg.mxu0
    %v780 = vadd.f32 %v634, %v705
    %v781 = vadd.f32 %v635, %v707
    %v782 = vadd.f32 %v636, %v776
    %v783 = vadd.f32 %v637, %v778
    %v784 = vxor.u32 %v780, 2147483648
    %v785 = vmul.f32 %v784, 1.442695
    %v786 = vpow.pop %v785
    %v787 = vadd.f32 %v786, 1.0
    %v788 = vrcp.pop %v787
    %v789 = vmul.f32 1.0, %v788
    %v790 = vxor.u32 %v781, 2147483648
    %v791 = vmul.f32 %v790, 1.442695
    %v792 = vpow.pop %v791
    %v793 = vadd.f32 %v792, 1.0
    %v794 = vrcp.pop %v793
    %v795 = vmul.f32 1.0, %v794
    %v796 = vtanh.pop %v782
    %v797 = vxor.u32 %v783, 2147483648
    %v798 = vmul.f32 %v797, 1.442695
    %v799 = vpow.pop %v798
    %v800 = vadd.f32 %v799, 1.0
    %v801 = vrcp.pop %v800
    %v802 = vmul.f32 1.0, %v801
    %v803 = vmul.f32 %v795, %v630
    %v804 = vmul.f32 %v789, %v796
    %v805 = vadd.f32 %v803, %v804
    %v806 = vtanh.pop %v805
    %v807 = vmul.f32 %v802, %v806
    %808 = vst [vmem:[#allocation3 + $0x8] sm:$0xff] %v807
    %v809 = vld [vmem:[#allocation2 + $0x40] sm:$0xff]
    %v810 = vld [vmem:[#allocation2 + $0x48] sm:$0xff]
    %v811 = vld [vmem:[#allocation2 + $0x50] sm:$0xff]
    %v812 = vld [vmem:[#allocation2 + $0x58] sm:$0xff]
    %813 = vmatprep.subr.mxu0 %v396
    %814 = vmatpush1.msra.mxu0 %v395
    %815 = vmatprep.subr.mxu0 %v400
    %816 = vmatpush1.msra.mxu0 %v399
    %817 = vmatprep.subr.mxu0 %v404
    %818 = vmatpush1.msra.mxu0 %v403
    %819 = vmatprep.subr.mxu0 %v408
    %820 = vmatpush1.msra.mxu0 %v407
    %821 = vmatprep.subr.mxu0 %v412
    %822 = vmatpush1.msra.mxu0 %v411
    %823 = vmatprep.subr.mxu0 %v416
    %824 = vmatpush1.msra.mxu0 %v415
    %825 = vmatprep.subr.mxu0 %v420
    %826 = vmatpush1.msra.mxu0 %v419
    %827 = vmatprep.subr.mxu0 %v424
    %828 = vmatpush1.msra.mxu0 %v423
    %829 = vmatprep.subr.mxu0 %v428
    %830 = vmatpush1.msra.mxu0 %v427
    %831 = vmatprep.subr.mxu0 %v432
    %832 = vmatpush1.msra.mxu0 %v431
    %833 = vmatprep.subr.mxu0 %v436
    %834 = vmatpush1.msra.mxu0 %v435
    %835 = vmatprep.subr.mxu0 %v440
    %836 = vmatpush1.msra.mxu0 %v439
    %837 = vmatprep.subr.mxu0 %v444
    %838 = vmatpush1.msra.mxu0 %v443
    %839 = vmatprep.subr.mxu0 %v448
    %840 = vmatpush1.msra.mxu0 %v447
    %841 = vmatprep.subr.mxu0 %v452
    %842 = vmatpush1.msra.mxu0 %v451
    %843 = vmatprep.subr.mxu0 %v456
    %844 = vmatpush1.msra.mxu0 %v455
    %845 = vmatprep.subr.mxu0 0.0
    %846 = vmatpush1.msra.mxu0 0.0
    %847 = vmatprep.subr.mxu0 0.0
    %848 = vmatpush1.msra.mxu0 0.0
    %849 = vmatprep.subr.mxu0 0.0
    %850 = vmatpush1.msra.mxu0 0.0
    %851 = vmatprep.subr.mxu0 0.0
    %852 = vmatpush1.msra.mxu0 0.0
    %853 = vmatprep.subr.mxu0 0.0
    %854 = vmatpush1.msra.mxu0 0.0
    %855 = vmatprep.subr.mxu0 0.0
    %856 = vmatpush1.msra.mxu0 0.0
    %857 = vmatprep.subr.mxu0 0.0
    %858 = vmatpush1.msra.mxu0 0.0
    %859 = vmatprep.subr.mxu0 0.0
    %860 = vmatpush1.msra.mxu0 0.0
    %861 = vmatprep.subr.mxu0 0.0
    %862 = vmatpush1.msra.mxu0 0.0
    %863 = vmatprep.subr.mxu0 0.0
    %864 = vmatpush1.msra.mxu0 0.0
    %865 = vmatprep.subr.mxu0 0.0
    %866 = vmatpush1.msra.mxu0 0.0
    %867 = vmatprep.subr.mxu0 0.0
    %868 = vmatpush1.msra.mxu0 0.0
    %869 = vmatprep.subr.mxu0 0.0
    %870 = vmatpush1.msra.mxu0 0.0
    %871 = vmatprep.subr.mxu0 0.0
    %872 = vmatpush1.msra.mxu0 0.0
    %873 = vmatprep.subr.mxu0 0.0
    %874 = vmatpush1.msra.mxu0 0.0
    %875 = vmatprep.subr.mxu0 0.0
    %876 = vmatpush1.msra.mxu0 0.0
    %877 = vmatprep.mubr.f32.mxu0 0.0
    %878 = vmatmul.mubr.f32.gmra.mrb[0].mxu0 %v807
    %v879 = vpop.f32.mrb[0].mxu0
    %v880 = vadd.f32 0.0, %v879
    %v881 = vpop.f32.mrb[0].mxu0
    %v882 = vadd.f32 0.0, %v881
    %883 = vdwg.mxu0
    %884 = vmatprep.subr.mxu0 %v398
    %885 = vmatpush1.msra.mxu0 %v397
    %886 = vmatprep.subr.mxu0 %v402
    %887 = vmatpush1.msra.mxu0 %v401
    %888 = vmatprep.subr.mxu0 %v406
    %889 = vmatpush1.msra.mxu0 %v405
    %890 = vmatprep.subr.mxu0 %v410
    %891 = vmatpush1.msra.mxu0 %v409
    %892 = vmatprep.subr.mxu0 %v414
    %893 = vmatpush1.msra.mxu0 %v413
    %894 = vmatprep.subr.mxu0 %v418
    %895 = vmatpush1.msra.mxu0 %v417
    %896 = vmatprep.subr.mxu0 %v422
    %897 = vmatpush1.msra.mxu0 %v421
    %898 = vmatprep.subr.mxu0 %v426
    %899 = vmatpush1.msra.mxu0 %v425
    %900 = vmatprep.subr.mxu0 %v430
    %901 = vmatpush1.msra.mxu0 %v429
    %902 = vmatprep.subr.mxu0 %v434
    %903 = vmatpush1.msra.mxu0 %v433
    %904 = vmatprep.subr.mxu0 %v438
    %905 = vmatpush1.msra.mxu0 %v437
    %906 = vmatprep.subr.mxu0 %v442
    %907 = vmatpush1.msra.mxu0 %v441
    %908 = vmatprep.subr.mxu0 %v446
    %909 = vmatpush1.msra.mxu0 %v445
    %910 = vmatprep.subr.mxu0 %v450
    %911 = vmatpush1.msra.mxu0 %v449
    %912 = vmatprep.subr.mxu0 %v454
    %913 = vmatpush1.msra.mxu0 %v453
    %914 = vmatprep.subr.mxu0 %v458
    %915 = vmatpush1.msra.mxu0 %v457
    %916 = vmatprep.subr.mxu0 0.0
    %917 = vmatpush1.msra.mxu0 0.0
    %918 = vmatprep.subr.mxu0 0.0
    %919 = vmatpush1.msra.mxu0 0.0
    %920 = vmatprep.subr.mxu0 0.0
    %921 = vmatpush1.msra.mxu0 0.0
    %922 = vmatprep.subr.mxu0 0.0
    %923 = vmatpush1.msra.mxu0 0.0
    %924 = vmatprep.subr.mxu0 0.0
    %925 = vmatpush1.msra.mxu0 0.0
    %926 = vmatprep.subr.mxu0 0.0
    %927 = vmatpush1.msra.mxu0 0.0
    %928 = vmatprep.subr.mxu0 0.0
    %929 = vmatpush1.msra.mxu0 0.0
    %930 = vmatprep.subr.mxu0 0.0
    %931 = vmatpush1.msra.mxu0 0.0
    %932 = vmatprep.subr.mxu0 0.0
    %933 = vmatpush1.msra.mxu0 0.0
    %934 = vmatprep.subr.mxu0 0.0
    %935 = vmatpush1.msra.mxu0 0.0
    %936 = vmatprep.subr.mxu0 0.0
    %937 = vmatpush1.msra.mxu0 0.0
    %938 = vmatprep.subr.mxu0 0.0
    %939 = vmatpush1.msra.mxu0 0.0
    %940 = vmatprep.subr.mxu0 0.0
    %941 = vmatpush1.msra.mxu0 0.0
    %942 = vmatprep.subr.mxu0 0.0
    %943 = vmatpush1.msra.mxu0 0.0
    %944 = vmatprep.subr.mxu0 0.0
    %945 = vmatpush1.msra.mxu0 0.0
    %946 = vmatprep.subr.mxu0 0.0
    %947 = vmatpush1.msra.mxu0 0.0
    %948 = vmatprep.mubr.f32.mxu0 0.0
    %949 = vmatmul.mubr.f32.gmra.mrb[0].mxu0 %v807
    %v950 = vpop.f32.mrb[0].mxu0
    %v951 = vadd.f32 0.0, %v950
    %v952 = vpop.f32.mrb[0].mxu0
    %v953 = vadd.f32 0.0, %v952
    %954 = vdwg.mxu0
    %v955 = vadd.f32 %v809, %v880
    %v956 = vadd.f32 %v810, %v882
    %v957 = vadd.f32 %v811, %v951
    %v958 = vadd.f32 %v812, %v953
    %v959 = vxor.u32 %v955, 2147483648
    %v960 = vmul.f32 %v959, 1.442695
    %v961 = vpow.pop %v960
    %v962 = vadd.f32 %v961, 1.0
    %v963 = vrcp.pop %v962
    %v964 = vmul.f32 1.0, %v963
    %v965 = vxor.u32 %v956, 2147483648
    %v966 = vmul.f32 %v965, 1.442695
    %v967 = vpow.pop %v966
    %v968 = vadd.f32 %v967, 1.0
    %v969 = vrcp.pop %v968
    %v970 = vmul.f32 1.0, %v969
    %v971 = vtanh.pop %v957
    %v972 = vxor.u32 %v958, 2147483648
    %v973 = vmul.f32 %v972, 1.442695
    %v974 = vpow.pop %v973
    %v975 = vadd.f32 %v974, 1.0
    %v976 = vrcp.pop %v975
    %v977 = vmul.f32 1.0, %v976
    %v978 = vmul.f32 %v970, %v805
    %v979 = vmul.f32 %v964, %v971
    %v980 = vadd.f32 %v978, %v979
    %v981 = vtanh.pop %v980
    %v982 = vmul.f32 %v977, %v981
    %983 = vst [vmem:[#allocation3 + $0x10] sm:$0xff] %v982
    %v984 = vld [vmem:[#allocation2 + $0x60] sm:$0xff]
    %v985 = vld [vmem:[#allocation2 + $0x68] sm:$0xff]
    %v986 = vld [vmem:[#allocation2 + $0x70] sm:$0xff]
    %v987 = vld [vmem:[#allocation2 + $0x78] sm:$0xff]
    %988 = vmatprep.subr.mxu0 %v396
    %989 = vmatpush1.msra.mxu0 %v395
    %990 = vmatprep.subr.mxu0 %v400
    %991 = vmatpush1.msra.mxu0 %v399
    %992 = vmatprep.subr.mxu0 %v404
    %993 = vmatpush1.msra.mxu0 %v403
    %994 = vmatprep.subr.mxu0 %v408
    %995 = vmatpush1.msra.mxu0 %v407
    %996 = vmatprep.subr.mxu0 %v412
    %997 = vmatpush1.msra.mxu0 %v411
    %998 = vmatprep.subr.mxu0 %v416
    %999 = vmatpush1.msra.mxu0 %v415
    %1000 = vmatprep.subr.mxu0 %v420
    %1001 = vmatpush1.msra.mxu0 %v419
    %1002 = vmatprep.subr.mxu0 %v424
    %1003 = vmatpush1.msra.mxu0 %v423
    %1004 = vmatprep.subr.mxu0 %v428
    %1005 = vmatpush1.msra.mxu0 %v427
    %1006 = vmatprep.subr.mxu0 %v432
    %1007 = vmatpush1.msra.mxu0 %v431
    %1008 = vmatprep.subr.mxu0 %v436
    %1009 = vmatpush1.msra.mxu0 %v435
    %1010 = vmatprep.subr.mxu0 %v440
    %1011 = vmatpush1.msra.mxu0 %v439
    %1012 = vmatprep.subr.mxu0 %v444
    %1013 = vmatpush1.msra.mxu0 %v443
    %1014 = vmatprep.subr.mxu0 %v448
    %1015 = vmatpush1.msra.mxu0 %v447
    %1016 = vmatprep.subr.mxu0 %v452
    %1017 = vmatpush1.msra.mxu0 %v451
    %1018 = vmatprep.subr.mxu0 %v456
    %1019 = vmatpush1.msra.mxu0 %v455
    %1020 = vmatprep.subr.mxu0 0.0
    %1021 = vmatpush1.msra.mxu0 0.0
    %1022 = vmatprep.subr.mxu0 0.0
    %1023 = vmatpush1.msra.mxu0 0.0
    %1024 = vmatprep.subr.mxu0 0.0
    %1025 = vmatpush1.msra.mxu0 0.0
    %1026 = vmatprep.subr.mxu0 0.0
    %1027 = vmatpush1.msra.mxu0 0.0
    %1028 = vmatprep.subr.mxu0 0.0
    %1029 = vmatpush1.msra.mxu0 0.0
    %1030 = vmatprep.subr.mxu0 0.0
    %1031 = vmatpush1.msra.mxu0 0.0
    %1032 = vmatprep.subr.mxu0 0.0
    %1033 = vmatpush1.msra.mxu0 0.0
    %1034 = vmatprep.subr.mxu0 0.0
    %1035 = vmatpush1.msra.mxu0 0.0
    %1036 = vmatprep.subr.mxu0 0.0
    %1037 = vmatpush1.msra.mxu0 0.0
    %1038 = vmatprep.subr.mxu0 0.0
    %1039 = vmatpush1.msra.mxu0 0.0
    %1040 = vmatprep.subr.mxu0 0.0
    %1041 = vmatpush1.msra.mxu0 0.0
    %1042 = vmatprep.subr.mxu0 0.0
    %1043 = vmatpush1.msra.mxu0 0.0
    %1044 = vmatprep.subr.mxu0 0.0
    %1045 = vmatpush1.msra.mxu0 0.0
    %1046 = vmatprep.subr.mxu0 0.0
    %1047 = vmatpush1.msra.mxu0 0.0
    %1048 = vmatprep.subr.mxu0 0.0
    %1049 = vmatpush1.msra.mxu0 0.0
    %1050 = vmatprep.subr.mxu0 0.0
    %1051 = vmatpush1.msra.mxu0 0.0
    %1052 = vmatprep.mubr.f32.mxu0 0.0
    %1053 = vmatmul.mubr.f32.gmra.mrb[0].mxu0 %v982
    %v1054 = vpop.f32.mrb[0].mxu0
    %v1055 = vadd.f32 0.0, %v1054
    %v1056 = vpop.f32.mrb[0].mxu0
    %v1057 = vadd.f32 0.0, %v1056
    %1058 = vdwg.mxu0
    %1059 = vmatprep.subr.mxu0 %v398
    %1060 = vmatpush1.msra.mxu0 %v397
    %1061 = vmatprep.subr.mxu0 %v402
    %1062 = vmatpush1.msra.mxu0 %v401
    %1063 = vmatprep.subr.mxu0 %v406
    %1064 = vmatpush1.msra.mxu0 %v405
    %1065 = vmatprep.subr.mxu0 %v410
    %1066 = vmatpush1.msra.mxu0 %v409
    %1067 = vmatprep.subr.mxu0 %v414
    %1068 = vmatpush1.msra.mxu0 %v413
    %1069 = vmatprep.subr.mxu0 %v418
    %1070 = vmatpush1.msra.mxu0 %v417
    %1071 = vmatprep.subr.mxu0 %v422
    %1072 = vmatpush1.msra.mxu0 %v421
    %1073 = vmatprep.subr.mxu0 %v426
    %1074 = vmatpush1.msra.mxu0 %v425
    %1075 = vmatprep.subr.mxu0 %v430
    %1076 = vmatpush1.msra.mxu0 %v429
    %1077 = vmatprep.subr.mxu0 %v434
    %1078 = vmatpush1.msra.mxu0 %v433
    %1079 = vmatprep.subr.mxu0 %v438
    %1080 = vmatpush1.msra.mxu0 %v437
    %1081 = vmatprep.subr.mxu0 %v442
    %1082 = vmatpush1.msra.mxu0 %v441
    %1083 = vmatprep.subr.mxu0 %v446
    %1084 = vmatpush1.msra.mxu0 %v445
    %1085 = vmatprep.subr.mxu0 %v450
    %1086 = vmatpush1.msra.mxu0 %v449
    %1087 = vmatprep.subr.mxu0 %v454
    %1088 = vmatpush1.msra.mxu0 %v453
    %1089 = vmatprep.subr.mxu0 %v458
    %1090 = vmatpush1.msra.mxu0 %v457
    %1091 = vmatprep.subr.mxu0 0.0
    %1092 = vmatpush1.msra.mxu0 0.0
    %1093 = vmatprep.subr.mxu0 0.0
    %1094 = vmatpush1.msra.mxu0 0.0
    %1095 = vmatprep.subr.mxu0 0.0
    %1096 = vmatpush1.msra.mxu0 0.0
    %1097 = vmatprep.subr.mxu0 0.0
    %1098 = vmatpush1.msra.mxu0 0.0
    %1099 = vmatprep.subr.mxu0 0.0
    %1100 = vmatpush1.msra.mxu0 0.0
    %1101 = vmatprep.subr.mxu0 0.0
    %1102 = vmatpush1.msra.mxu0 0.0
    %1103 = vmatprep.subr.mxu0 0.0
    %1104 = vmatpush1.msra.mxu0 0.0
    %1105 = vmatprep.subr.mxu0 0.0
    %1106 = vmatpush1.msra.mxu0 0.0
    %1107 = vmatprep.subr.mxu0 0.0
    %1108 = vmatpush1.msra.mxu0 0.0
    %1109 = vmatprep.subr.mxu0 0.0
    %1110 = vmatpush1.msra.mxu0 0.0
    %1111 = vmatprep.subr.mxu0 0.0
    %1112 = vmatpush1.msra.mxu0 0.0
    %1113 = vmatprep.subr.mxu0 0.0
    %1114 = vmatpush1.msra.mxu0 0.0
    %1115 = vmatprep.subr.mxu0 0.0
    %1116 = vmatpush1.msra.mxu0 0.0
    %1117 = vmatprep.subr.mxu0 0.0
    %1118 = vmatpush1.msra.mxu0 0.0
    %1119 = vmatprep.subr.mxu0 0.0
    %1120 = vmatpush1.msra.mxu0 0.0
    %1121 = vmatprep.subr.mxu0 0.0
    %1122 = vmatpush1.msra.mxu0 0.0
    %1123 = vmatprep.mubr.f32.mxu0 0.0
    %1124 = vmatmul.mubr.f32.gmra.mrb[0].mxu0 %v982
    %v1125 = vpop.f32.mrb[0].mxu0
    %v1126 = vadd.f32 0.0, %v1125
    %v1127 = vpop.f32.mrb[0].mxu0
    %v1128 = vadd.f32 0.0, %v1127
    %1129 = vdwg.mxu0
    %v1130 = vadd.f32 %v984, %v1055
    %v1131 = vadd.f32 %v985, %v1057
    %v1132 = vadd.f32 %v986, %v1126
    %v1133 = vadd.f32 %v987, %v1128
    %v1134 = vxor.u32 %v1130, 2147483648
    %v1135 = vmul.f32 %v1134, 1.442695
    %v1136 = vpow.pop %v1135
    %v1137 = vadd.f32 %v1136, 1.0
    %v1138 = vrcp.pop %v1137
    %v1139 = vmul.f32 1.0, %v1138
    %v1140 = vxor.u32 %v1131, 2147483648
    %v1141 = vmul.f32 %v1140, 1.442695
    %v1142 = vpow.pop %v1141
    %v1143 = vadd.f32 %v1142, 1.0
    %v1144 = vrcp.pop %v1143
    %v1145 = vmul.f32 1.0, %v1144
    %v1146 = vtanh.pop %v1132
    %v1147 = vxor.u32 %v1133, 2147483648
    %v1148 = vmul.f32 %v1147, 1.442695
    %v1149 = vpow.pop %v1148
    %v1150 = vadd.f32 %v1149, 1.0
    %v1151 = vrcp.pop %v1150
    %v1152 = vmul.f32 1.0, %v1151
    %v1153 = vmul.f32 %v1145, %v980
    %v1154 = vmul.f32 %v1139, %v1146
    %v1155 = vadd.f32 %v1153, %v1154
    %v1156 = vtanh.pop %v1155
    %v1157 = vmul.f32 %v1152, %v1156
    %1158 = vst [vmem:[#allocation3 + $0x18] sm:$0xff] %v1157
    %v1159 = vld [vmem:[#allocation2 + $0x80] sm:$0xff]
    %v1160 = vld [vmem:[#allocation2 + $0x88] sm:$0xff]
    %v1161 = vld [vmem:[#allocation2 + $0x90] sm:$0xff]
    %v1162 = vld [vmem:[#allocation2 + $0x98] sm:$0xff]
    %1163 = vmatprep.subr.mxu0 %v396
    %1164 = vmatpush1.msra.mxu0 %v395
    %1165 = vmatprep.subr.mxu0 %v400
    %1166 = vmatpush1.msra.mxu0 %v399
    %1167 = vmatprep.subr.mxu0 %v404
    %1168 = vmatpush1.msra.mxu0 %v403
    %1169 = vmatprep.subr.mxu0 %v408
    %1170 = vmatpush1.msra.mxu0 %v407
    %1171 = vmatprep.subr.mxu0 %v412
    %1172 = vmatpush1.msra.mxu0 %v411
    %1173 = vmatprep.subr.mxu0 %v416
    %1174 = vmatpush1.msra.mxu0 %v415
    %1175 = vmatprep.subr.mxu0 %v420
    %1176 = vmatpush1.msra.mxu0 %v419
    %1177 = vmatprep.subr.mxu0 %v424
    %1178 = vmatpush1.msra.mxu0 %v423
    %1179 = vmatprep.subr.mxu0 %v428
    %1180 = vmatpush1.msra.mxu0 %v427
    %1181 = vmatprep.subr.mxu0 %v432
    %1182 = vmatpush1.msra.mxu0 %v431
    %1183 = vmatprep.subr.mxu0 %v436
    %1184 = vmatpush1.msra.mxu0 %v435
    %1185 = vmatprep.subr.mxu0 %v440
    %1186 = vmatpush1.msra.mxu0 %v439
    %1187 = vmatprep.subr.mxu0 %v444
    %1188 = vmatpush1.msra.mxu0 %v443
    %1189 = vmatprep.subr.mxu0 %v448
    %1190 = vmatpush1.msra.mxu0 %v447
    %1191 = vmatprep.subr.mxu0 %v452
    %1192 = vmatpush1.msra.mxu0 %v451
    %1193 = vmatprep.subr.mxu0 %v456
    %1194 = vmatpush1.msra.mxu0 %v455
    %1195 = vmatprep.subr.mxu0 0.0
    %1196 = vmatpush1.msra.mxu0 0.0
    %1197 = vmatprep.subr.mxu0 0.0
    %1198 = vmatpush1.msra.mxu0 0.0
    %1199 = vmatprep.subr.mxu0 0.0
    %1200 = vmatpush1.msra.mxu0 0.0
    %1201 = vmatprep.subr.mxu0 0.0
    %1202 = vmatpush1.msra.mxu0 0.0
    %1203 = vmatprep.subr.mxu0 0.0
    %1204 = vmatpush1.msra.mxu0 0.0
    %1205 = vmatprep.subr.mxu0 0.0
    %1206 = vmatpush1.msra.mxu0 0.0
    %1207 = vmatprep.subr.mxu0 0.0
    %1208 = vmatpush1.msra.mxu0 0.0
    %1209 = vmatprep.subr.mxu0 0.0
    %1210 = vmatpush1.msra.mxu0 0.0
    %1211 = vmatprep.subr.mxu0 0.0
    %1212 = vmatpush1.msra.mxu0 0.0
    %1213 = vmatprep.subr.mxu0 0.0
    %1214 = vmatpush1.msra.mxu0 0.0
    %1215 = vmatprep.subr.mxu0 0.0
    %1216 = vmatpush1.msra.mxu0 0.0
    %1217 = vmatprep.subr.mxu0 0.0
    %1218 = vmatpush1.msra.mxu0 0.0
    %1219 = vmatprep.subr.mxu0 0.0
    %1220 = vmatpush1.msra.mxu0 0.0
    %1221 = vmatprep.subr.mxu0 0.0
    %1222 = vmatpush1.msra.mxu0 0.0
    %1223 = vmatprep.subr.mxu0 0.0
    %1224 = vmatpush1.msra.mxu0 0.0
    %1225 = vmatprep.subr.mxu0 0.0
    %1226 = vmatpush1.msra.mxu0 0.0
    %1227 = vmatprep.mubr.f32.mxu0 0.0
    %1228 = vmatmul.mubr.f32.gmra.mrb[0].mxu0 %v1157
    %v1229 = vpop.f32.mrb[0].mxu0
    %v1230 = vadd.f32 0.0, %v1229
    %v1231 = vpop.f32.mrb[0].mxu0
    %v1232 = vadd.f32 0.0, %v1231
    %1233 = vdwg.mxu0
    %1234 = vmatprep.subr.mxu0 %v398
    %1235 = vmatpush1.msra.mxu0 %v397
    %1236 = vmatprep.subr.mxu0 %v402
    %1237 = vmatpush1.msra.mxu0 %v401
    %1238 = vmatprep.subr.mxu0 %v406
    %1239 = vmatpush1.msra.mxu0 %v405
    %1240 = vmatprep.subr.mxu0 %v410
    %1241 = vmatpush1.msra.mxu0 %v409
    %1242 = vmatprep.subr.mxu0 %v414
    %1243 = vmatpush1.msra.mxu0 %v413
    %1244 = vmatprep.subr.mxu0 %v418
    %1245 = vmatpush1.msra.mxu0 %v417
    %1246 = vmatprep.subr.mxu0 %v422
    %1247 = vmatpush1.msra.mxu0 %v421
    %1248 = vmatprep.subr.mxu0 %v426
    %1249 = vmatpush1.msra.mxu0 %v425
    %1250 = vmatprep.subr.mxu0 %v430
    %1251 = vmatpush1.msra.mxu0 %v429
    %1252 = vmatprep.subr.mxu0 %v434
    %1253 = vmatpush1.msra.mxu0 %v433
    %1254 = vmatprep.subr.mxu0 %v438
    %1255 = vmatpush1.msra.mxu0 %v437
    %1256 = vmatprep.subr.mxu0 %v442
    %1257 = vmatpush1.msra.mxu0 %v441
    %1258 = vmatprep.subr.mxu0 %v446
    %1259 = vmatpush1.msra.mxu0 %v445
    %1260 = vmatprep.subr.mxu0 %v450
    %1261 = vmatpush1.msra.mxu0 %v449
    %1262 = vmatprep.subr.mxu0 %v454
    %1263 = vmatpush1.msra.mxu0 %v453
    %1264 = vmatprep.subr.mxu0 %v458
    %1265 = vmatpush1.msra.mxu0 %v457
    %1266 = vmatprep.subr.mxu0 0.0
    %1267 = vmatpush1.msra.mxu0 0.0
    %1268 = vmatprep.subr.mxu0 0.0
    %1269 = vmatpush1.msra.mxu0 0.0
    %1270 = vmatprep.subr.mxu0 0.0
    %1271 = vmatpush1.msra.mxu0 0.0
    %1272 = vmatprep.subr.mxu0 0.0
    %1273 = vmatpush1.msra.mxu0 0.0
    %1274 = vmatprep.subr.mxu0 0.0
    %1275 = vmatpush1.msra.mxu0 0.0
    %1276 = vmatprep.subr.mxu0 0.0
    %1277 = vmatpush1.msra.mxu0 0.0
    %1278 = vmatprep.subr.mxu0 0.0
    %1279 = vmatpush1.msra.mxu0 0.0
    %1280 = vmatprep.subr.mxu0 0.0
    %1281 = vmatpush1.msra.mxu0 0.0
    %1282 = vmatprep.subr.mxu0 0.0
    %1283 = vmatpush1.msra.mxu0 0.0
    %1284 = vmatprep.subr.mxu0 0.0
    %1285 = vmatpush1.msra.mxu0 0.0
    %1286 = vmatprep.subr.mxu0 0.0
    %1287 = vmatpush1.msra.mxu0 0.0
    %1288 = vmatprep.subr.mxu0 0.0
    %1289 = vmatpush1.msra.mxu0 0.0
    %1290 = vmatprep.subr.mxu0 0.0
    %1291 = vmatpush1.msra.mxu0 0.0
    %1292 = vmatprep.subr.mxu0 0.0
    %1293 = vmatpush1.msra.mxu0 0.0
    %1294 = vmatprep.subr.mxu0 0.0
    %1295 = vmatpush1.msra.mxu0 0.0
    %1296 = vmatprep.subr.mxu0 0.0
    %1297 = vmatpush1.msra.mxu0 0.0
    %1298 = vmatprep.mubr.f32.mxu0 0.0
    %1299 = vmatmul.mubr.f32.gmra.mrb[0].mxu0 %v1157
    %v1300 = vpop.f32.mrb[0].mxu0
    %v1301 = vadd.f32 0.0, %v1300
    %v1302 = vpop.f32.mrb[0].mxu0
    %v1303 = vadd.f32 0.0, %v1302
    %1304 = vdwg.mxu0
    %v1305 = vadd.f32 %v1159, %v1230
    %v1306 = vadd.f32 %v1160, %v1232
    %v1307 = vadd.f32 %v1161, %v1301
    %v1308 = vadd.f32 %v1162, %v1303
    %v1309 = vxor.u32 %v1305, 2147483648
    %v1310 = vmul.f32 %v1309, 1.442695
    %v1311 = vpow.pop %v1310
    %v1312 = vadd.f32 %v1311, 1.0
    %v1313 = vrcp.pop %v1312
    %v1314 = vmul.f32 1.0, %v1313
    %v1315 = vxor.u32 %v1306, 2147483648
    %v1316 = vmul.f32 %v1315, 1.442695
    %v1317 = vpow.pop %v1316
    %v1318 = vadd.f32 %v1317, 1.0
    %v1319 = vrcp.pop %v1318
    %v1320 = vmul.f32 1.0, %v1319
    %v1321 = vtanh.pop %v1307
    %v1322 = vxor.u32 %v1308, 2147483648
    %v1323 = vmul.f32 %v1322, 1.442695
    %v1324 = vpow.pop %v1323
    %v1325 = vadd.f32 %v1324, 1.0
    %v1326 = vrcp.pop %v1325
    %v1327 = vmul.f32 1.0, %v1326
    %v1328 = vmul.f32 %v1320, %v1155
    %v1329 = vmul.f32 %v1314, %v1321
    %v1330 = vadd.f32 %v1328, %v1329
    %v1331 = vtanh.pop %v1330
    %v1332 = vmul.f32 %v1327, %v1331
    %1333 = vst [vmem:[#allocation3 + $0x20] sm:$0xff] %v1332
    %v1334 = vld [vmem:[#allocation2 + $0xa0] sm:$0xff]
    %v1335 = vld [vmem:[#allocation2 + $0xa8] sm:$0xff]
    %v1336 = vld [vmem:[#allocation2 + $0xb0] sm:$0xff]
    %v1337 = vld [vmem:[#allocation2 + $0xb8] sm:$0xff]
    %1338 = vmatprep.subr.mxu0 %v396
    %1339 = vmatpush1.msra.mxu0 %v395
    %1340 = vmatprep.subr.mxu0 %v400
    %1341 = vmatpush1.msra.mxu0 %v399
    %1342 = vmatprep.subr.mxu0 %v404
    %1343 = vmatpush1.msra.mxu0 %v403
    %1344 = vmatprep.subr.mxu0 %v408
    %1345 = vmatpush1.msra.mxu0 %v407
    %1346 = vmatprep.subr.mxu0 %v412
    %1347 = vmatpush1.msra.mxu0 %v411
    %1348 = vmatprep.subr.mxu0 %v416
    %1349 = vmatpush1.msra.mxu0 %v415
    %1350 = vmatprep.subr.mxu0 %v420
    %1351 = vmatpush1.msra.mxu0 %v419
    %1352 = vmatprep.subr.mxu0 %v424
    %1353 = vmatpush1.msra.mxu0 %v423
    %1354 = vmatprep.subr.mxu0 %v428
    %1355 = vmatpush1.msra.mxu0 %v427
    %1356 = vmatprep.subr.mxu0 %v432
    %1357 = vmatpush1.msra.mxu0 %v431
    %1358 = vmatprep.subr.mxu0 %v436
    %1359 = vmatpush1.msra.mxu0 %v435
    %1360 = vmatprep.subr.mxu0 %v440
    %1361 = vmatpush1.msra.mxu0 %v439
    %1362 = vmatprep.subr.mxu0 %v444
    %1363 = vmatpush1.msra.mxu0 %v443
    %1364 = vmatprep.subr.mxu0 %v448
    %1365 = vmatpush1.msra.mxu0 %v447
    %1366 = vmatprep.subr.mxu0 %v452
    %1367 = vmatpush1.msra.mxu0 %v451
    %1368 = vmatprep.subr.mxu0 %v456
    %1369 = vmatpush1.msra.mxu0 %v455
    %1370 = vmatprep.subr.mxu0 0.0
    %1371 = vmatpush1.msra.mxu0 0.0
    %1372 = vmatprep.subr.mxu0 0.0
    %1373 = vmatpush1.msra.mxu0 0.0
    %1374 = vmatprep.subr.mxu0 0.0
    %1375 = vmatpush1.msra.mxu0 0.0
    %1376 = vmatprep.subr.mxu0 0.0
    %1377 = vmatpush1.msra.mxu0 0.0
    %1378 = vmatprep.subr.mxu0 0.0
    %1379 = vmatpush1.msra.mxu0 0.0
    %1380 = vmatprep.subr.mxu0 0.0
    %1381 = vmatpush1.msra.mxu0 0.0
    %1382 = vmatprep.subr.mxu0 0.0
    %1383 = vmatpush1.msra.mxu0 0.0
    %1384 = vmatprep.subr.mxu0 0.0
    %1385 = vmatpush1.msra.mxu0 0.0
    %1386 = vmatprep.subr.mxu0 0.0
    %1387 = vmatpush1.msra.mxu0 0.0
    %1388 = vmatprep.subr.mxu0 0.0
    %1389 = vmatpush1.msra.mxu0 0.0
    %1390 = vmatprep.subr.mxu0 0.0
    %1391 = vmatpush1.msra.mxu0 0.0
    %1392 = vmatprep.subr.mxu0 0.0
    %1393 = vmatpush1.msra.mxu0 0.0
    %1394 = vmatprep.subr.mxu0 0.0
    %1395 = vmatpush1.msra.mxu0 0.0
    %1396 = vmatprep.subr.mxu0 0.0
    %1397 = vmatpush1.msra.mxu0 0.0
    %1398 = vmatprep.subr.mxu0 0.0
    %1399 = vmatpush1.msra.mxu0 0.0
    %1400 = vmatprep.subr.mxu0 0.0
    %1401 = vmatpush1.msra.mxu0 0.0
    %1402 = vmatprep.mubr.f32.mxu0 0.0
    %1403 = vmatmul.mubr.f32.gmra.mrb[0].mxu0 %v1332
    %v1404 = vpop.f32.mrb[0].mxu0
    %v1405 = vadd.f32 0.0, %v1404
    %v1406 = vpop.f32.mrb[0].mxu0
    %v1407 = vadd.f32 0.0, %v1406
    %1408 = vdwg.mxu0
    %1409 = vmatprep.subr.mxu0 %v398
    %1410 = vmatpush1.msra.mxu0 %v397
    %1411 = vmatprep.subr.mxu0 %v402
    %1412 = vmatpush1.msra.mxu0 %v401
    %1413 = vmatprep.subr.mxu0 %v406
    %1414 = vmatpush1.msra.mxu0 %v405
    %1415 = vmatprep.subr.mxu0 %v410
    %1416 = vmatpush1.msra.mxu0 %v409
    %1417 = vmatprep.subr.mxu0 %v414
    %1418 = vmatpush1.msra.mxu0 %v413
    %1419 = vmatprep.subr.mxu0 %v418
    %1420 = vmatpush1.msra.mxu0 %v417
    %1421 = vmatprep.subr.mxu0 %v422
    %1422 = vmatpush1.msra.mxu0 %v421
    %1423 = vmatprep.subr.mxu0 %v426
    %1424 = vmatpush1.msra.mxu0 %v425
    %1425 = vmatprep.subr.mxu0 %v430
    %1426 = vmatpush1.msra.mxu0 %v429
    %1427 = vmatprep.subr.mxu0 %v434
    %1428 = vmatpush1.msra.mxu0 %v433
    %1429 = vmatprep.subr.mxu0 %v438
    %1430 = vmatpush1.msra.mxu0 %v437
    %1431 = vmatprep.subr.mxu0 %v442
    %1432 = vmatpush1.msra.mxu0 %v441
    %1433 = vmatprep.subr.mxu0 %v446
    %1434 = vmatpush1.msra.mxu0 %v445
    %1435 = vmatprep.subr.mxu0 %v450
    %1436 = vmatpush1.msra.mxu0 %v449
    %1437 = vmatprep.subr.mxu0 %v454
    %1438 = vmatpush1.msra.mxu0 %v453
    %1439 = vmatprep.subr.mxu0 %v458
    %1440 = vmatpush1.msra.mxu0 %v457
    %1441 = vmatprep.subr.mxu0 0.0
    %1442 = vmatpush1.msra.mxu0 0.0
    %1443 = vmatprep.subr.mxu0 0.0
    %1444 = vmatpush1.msra.mxu0 0.0
    %1445 = vmatprep.subr.mxu0 0.0
    %1446 = vmatpush1.msra.mxu0 0.0
    %1447 = vmatprep.subr.mxu0 0.0
    %1448 = vmatpush1.msra.mxu0 0.0
    %1449 = vmatprep.subr.mxu0 0.0
    %1450 = vmatpush1.msra.mxu0 0.0
    %1451 = vmatprep.subr.mxu0 0.0
    %1452 = vmatpush1.msra.mxu0 0.0
    %1453 = vmatprep.subr.mxu0 0.0
    %1454 = vmatpush1.msra.mxu0 0.0
    %1455 = vmatprep.subr.mxu0 0.0
    %1456 = vmatpush1.msra.mxu0 0.0
    %1457 = vmatprep.subr.mxu0 0.0
    %1458 = vmatpush1.msra.mxu0 0.0
    %1459 = vmatprep.subr.mxu0 0.0
    %1460 = vmatpush1.msra.mxu0 0.0
    %1461 = vmatprep.subr.mxu0 0.0
    %1462 = vmatpush1.msra.mxu0 0.0
    %1463 = vmatprep.subr.mxu0 0.0
    %1464 = vmatpush1.msra.mxu0 0.0
    %1465 = vmatprep.subr.mxu0 0.0
    %1466 = vmatpush1.msra.mxu0 0.0
    %1467 = vmatprep.subr.mxu0 0.0
    %1468 = vmatpush1.msra.mxu0 0.0
    %1469 = vmatprep.subr.mxu0 0.0
    %1470 = vmatpush1.msra.mxu0 0.0
    %1471 = vmatprep.subr.mxu0 0.0
    %1472 = vmatpush1.msra.mxu0 0.0
    %1473 = vmatprep.mubr.f32.mxu0 0.0
    %1474 = vmatmul.mubr.f32.gmra.mrb[0].mxu0 %v1332
    %v1475 = vpop.f32.mrb[0].mxu0
    %v1476 = vadd.f32 0.0, %v1475
    %v1477 = vpop.f32.mrb[0].mxu0
    %v1478 = vadd.f32 0.0, %v1477
    %1479 = vdwg.mxu0
    %v1480 = vadd.f32 %v1334, %v1405
    %v1481 = vadd.f32 %v1335, %v1407
    %v1482 = vadd.f32 %v1336, %v1476
    %v1483 = vadd.f32 %v1337, %v1478
    %v1484 = vxor.u32 %v1480, 2147483648
    %v1485 = vmul.f32 %v1484, 1.442695
    %v1486 = vpow.pop %v1485
    %v1487 = vadd.f32 %v1486, 1.0
    %v1488 = vrcp.pop %v1487
    %v1489 = vmul.f32 1.0, %v1488
    %v1490 = vxor.u32 %v1481, 2147483648
    %v1491 = vmul.f32 %v1490, 1.442695
    %v1492 = vpow.pop %v1491
    %v1493 = vadd.f32 %v1492, 1.0
    %v1494 = vrcp.pop %v1493
    %v1495 = vmul.f32 1.0, %v1494
    %v1496 = vtanh.pop %v1482
    %v1497 = vxor.u32 %v1483, 2147483648
    %v1498 = vmul.f32 %v1497, 1.442695
    %v1499 = vpow.pop %v1498
    %v1500 = vadd.f32 %v1499, 1.0
    %v1501 = vrcp.pop %v1500
    %v1502 = vmul.f32 1.0, %v1501
    %v1503 = vmul.f32 %v1495, %v1330
    %v1504 = vmul.f32 %v1489, %v1496
    %v1505 = vadd.f32 %v1503, %v1504
    %v1506 = vtanh.pop %v1505
    %v1507 = vmul.f32 %v1502, %v1506
    %1508 = vst [vmem:[#allocation3 + $0x28] sm:$0xff] %v1507
    %v1509 = vld [vmem:[#allocation2 + $0xc0] sm:$0xff]
    %v1510 = vld [vmem:[#allocation2 + $0xc8] sm:$0xff]
    %v1511 = vld [vmem:[#allocation2 + $0xd0] sm:$0xff]
    %v1512 = vld [vmem:[#allocation2 + $0xd8] sm:$0xff]
    %1513 = vmatprep.subr.mxu0 %v396
    %1514 = vmatpush1.msra.mxu0 %v395
    %1515 = vmatprep.subr.mxu0 %v400
    %1516 = vmatpush1.msra.mxu0 %v399
    %1517 = vmatprep.subr.mxu0 %v404
    %1518 = vmatpush1.msra.mxu0 %v403
    %1519 = vmatprep.subr.mxu0 %v408
    %1520 = vmatpush1.msra.mxu0 %v407
    %1521 = vmatprep.subr.mxu0 %v412
    %1522 = vmatpush1.msra.mxu0 %v411
    %1523 = vmatprep.subr.mxu0 %v416
    %1524 = vmatpush1.msra.mxu0 %v415
    %1525 = vmatprep.subr.mxu0 %v420
    %1526 = vmatpush1.msra.mxu0 %v419
    %1527 = vmatprep.subr.mxu0 %v424
    %1528 = vmatpush1.msra.mxu0 %v423
    %1529 = vmatprep.subr.mxu0 %v428
    %1530 = vmatpush1.msra.mxu0 %v427
    %1531 = vmatprep.subr.mxu0 %v432
    %1532 = vmatpush1.msra.mxu0 %v431
    %1533 = vmatprep.subr.mxu0 %v436
    %1534 = vmatpush1.msra.mxu0 %v435
    %1535 = vmatprep.subr.mxu0 %v440
    %1536 = vmatpush1.msra.mxu0 %v439
    %1537 = vmatprep.subr.mxu0 %v444
    %1538 = vmatpush1.msra.mxu0 %v443
    %1539 = vmatprep.subr.mxu0 %v448
    %1540 = vmatpush1.msra.mxu0 %v447
    %1541 = vmatprep.subr.mxu0 %v452
    %1542 = vmatpush1.msra.mxu0 %v451
    %1543 = vmatprep.subr.mxu0 %v456
    %1544 = vmatpush1.msra.mxu0 %v455
    %1545 = vmatprep.subr.mxu0 0.0
    %1546 = vmatpush1.msra.mxu0 0.0
    %1547 = vmatprep.subr.mxu0 0.0
    %1548 = vmatpush1.msra.mxu0 0.0
    %1549 = vmatprep.subr.mxu0 0.0
    %1550 = vmatpush1.msra.mxu0 0.0
    %1551 = vmatprep.subr.mxu0 0.0
    %1552 = vmatpush1.msra.mxu0 0.0
    %1553 = vmatprep.subr.mxu0 0.0
    %1554 = vmatpush1.msra.mxu0 0.0
    %1555 = vmatprep.subr.mxu0 0.0
    %1556 = vmatpush1.msra.mxu0 0.0
    %1557 = vmatprep.subr.mxu0 0.0
    %1558 = vmatpush1.msra.mxu0 0.0
    %1559 = vmatprep.subr.mxu0 0.0
    %1560 = vmatpush1.msra.mxu0 0.0
    %1561 = vmatprep.subr.mxu0 0.0
    %1562 = vmatpush1.msra.mxu0 0.0
    %1563 = vmatprep.subr.mxu0 0.0
    %1564 = vmatpush1.msra.mxu0 0.0
    %1565 = vmatprep.subr.mxu0 0.0
    %1566 = vmatpush1.msra.mxu0 0.0
    %1567 = vmatprep.subr.mxu0 0.0
    %1568 = vmatpush1.msra.mxu0 0.0
    %1569 = vmatprep.subr.mxu0 0.0
    %1570 = vmatpush1.msra.mxu0 0.0
    %1571 = vmatprep.subr.mxu0 0.0
    %1572 = vmatpush1.msra.mxu0 0.0
    %1573 = vmatprep.subr.mxu0 0.0
    %1574 = vmatpush1.msra.mxu0 0.0
    %1575 = vmatprep.subr.mxu0 0.0
    %1576 = vmatpush1.msra.mxu0 0.0
    %1577 = vmatprep.mubr.f32.mxu0 0.0
    %1578 = vmatmul.mubr.f32.gmra.mrb[0].mxu0 %v1507
    %v1579 = vpop.f32.mrb[0].mxu0
    %v1580 = vadd.f32 0.0, %v1579
    %v1581 = vpop.f32.mrb[0].mxu0
    %v1582 = vadd.f32 0.0, %v1581
    %1583 = vdwg.mxu0
    %1584 = vmatprep.subr.mxu0 %v398
    %1585 = vmatpush1.msra.mxu0 %v397
    %1586 = vmatprep.subr.mxu0 %v402
    %1587 = vmatpush1.msra.mxu0 %v401
    %1588 = vmatprep.subr.mxu0 %v406
    %1589 = vmatpush1.msra.mxu0 %v405
    %1590 = vmatprep.subr.mxu0 %v410
    %1591 = vmatpush1.msra.mxu0 %v409
    %1592 = vmatprep.subr.mxu0 %v414
    %1593 = vmatpush1.msra.mxu0 %v413
    %1594 = vmatprep.subr.mxu0 %v418
    %1595 = vmatpush1.msra.mxu0 %v417
    %1596 = vmatprep.subr.mxu0 %v422
    %1597 = vmatpush1.msra.mxu0 %v421
    %1598 = vmatprep.subr.mxu0 %v426
    %1599 = vmatpush1.msra.mxu0 %v425
    %1600 = vmatprep.subr.mxu0 %v430
    %1601 = vmatpush1.msra.mxu0 %v429
    %1602 = vmatprep.subr.mxu0 %v434
    %1603 = vmatpush1.msra.mxu0 %v433
    %1604 = vmatprep.subr.mxu0 %v438
    %1605 = vmatpush1.msra.mxu0 %v437
    %1606 = vmatprep.subr.mxu0 %v442
    %1607 = vmatpush1.msra.mxu0 %v441
    %1608 = vmatprep.subr.mxu0 %v446
    %1609 = vmatpush1.msra.mxu0 %v445
    %1610 = vmatprep.subr.mxu0 %v450
    %1611 = vmatpush1.msra.mxu0 %v449
    %1612 = vmatprep.subr.mxu0 %v454
    %1613 = vmatpush1.msra.mxu0 %v453
    %1614 = vmatprep.subr.mxu0 %v458
    %1615 = vmatpush1.msra.mxu0 %v457
    %1616 = vmatprep.subr.mxu0 0.0
    %1617 = vmatpush1.msra.mxu0 0.0
    %1618 = vmatprep.subr.mxu0 0.0
    %1619 = vmatpush1.msra.mxu0 0.0
    %1620 = vmatprep.subr.mxu0 0.0
    %1621 = vmatpush1.msra.mxu0 0.0
    %1622 = vmatprep.subr.mxu0 0.0
    %1623 = vmatpush1.msra.mxu0 0.0
    %1624 = vmatprep.subr.mxu0 0.0
    %1625 = vmatpush1.msra.mxu0 0.0
    %1626 = vmatprep.subr.mxu0 0.0
    %1627 = vmatpush1.msra.mxu0 0.0
    %1628 = vmatprep.subr.mxu0 0.0
    %1629 = vmatpush1.msra.mxu0 0.0
    %1630 = vmatprep.subr.mxu0 0.0
    %1631 = vmatpush1.msra.mxu0 0.0
    %1632 = vmatprep.subr.mxu0 0.0
    %1633 = vmatpush1.msra.mxu0 0.0
    %1634 = vmatprep.subr.mxu0 0.0
    %1635 = vmatpush1.msra.mxu0 0.0
    %1636 = vmatprep.subr.mxu0 0.0
    %1637 = vmatpush1.msra.mxu0 0.0
    %1638 = vmatprep.subr.mxu0 0.0
    %1639 = vmatpush1.msra.mxu0 0.0
    %1640 = vmatprep.subr.mxu0 0.0
    %1641 = vmatpush1.msra.mxu0 0.0
    %1642 = vmatprep.subr.mxu0 0.0
    %1643 = vmatpush1.msra.mxu0 0.0
    %1644 = vmatprep.subr.mxu0 0.0
    %1645 = vmatpush1.msra.mxu0 0.0
    %1646 = vmatprep.subr.mxu0 0.0
    %1647 = vmatpush1.msra.mxu0 0.0
    %1648 = vmatprep.mubr.f32.mxu0 0.0
    %1649 = vmatmul.mubr.f32.gmra.mrb[0].mxu0 %v1507
    %v1650 = vpop.f32.mrb[0].mxu0
    %v1651 = vadd.f32 0.0, %v1650
    %v1652 = vpop.f32.mrb[0].mxu0
    %v1653 = vadd.f32 0.0, %v1652
    %1654 = vdwg.mxu0
    %v1655 = vadd.f32 %v1509, %v1580
    %v1656 = vadd.f32 %v1510, %v1582
    %v1657 = vadd.f32 %v1511, %v1651
    %v1658 = vadd.f32 %v1512, %v1653
    %v1659 = vxor.u32 %v1655, 2147483648
    %v1660 = vmul.f32 %v1659, 1.442695
    %v1661 = vpow.pop %v1660
    %v1662 = vadd.f32 %v1661, 1.0
    %v1663 = vrcp.pop %v1662
    %v1664 = vmul.f32 1.0, %v1663
    %v1665 = vxor.u32 %v1656, 2147483648
    %v1666 = vmul.f32 %v1665, 1.442695
    %v1667 = vpow.pop %v1666
    %v1668 = vadd.f32 %v1667, 1.0
    %v1669 = vrcp.pop %v1668
    %v1670 = vmul.f32 1.0, %v1669
    %v1671 = vtanh.pop %v1657
    %v1672 = vxor.u32 %v1658, 2147483648
    %v1673 = vmul.f32 %v1672, 1.442695
    %v1674 = vpow.pop %v1673
    %v1675 = vadd.f32 %v1674, 1.0
    %v1676 = vrcp.pop %v1675
    %v1677 = vmul.f32 1.0, %v1676
    %v1678 = vmul.f32 %v1670, %v1505
    %v1679 = vmul.f32 %v1664, %v1671
    %v1680 = vadd.f32 %v1678, %v1679
    %v1681 = vtanh.pop %v1680
    %v1682 = vmul.f32 %v1677, %v1681
    %1683 = vst [vmem:[#allocation3 + $0x30] sm:$0xff] %v1682
    %v1684 = vld [vmem:[#allocation2 + $0xe0] sm:$0xff]
    %v1685 = vld [vmem:[#allocation2 + $0xe8] sm:$0xff]
    %v1686 = vld [vmem:[#allocation2 + $0xf0] sm:$0xff]
    %v1687 = vld [vmem:[#allocation2 + $0xf8] sm:$0xff]
    %1688 = vmatprep.subr.mxu0 %v396
    %1689 = vmatpush1.msra.mxu0 %v395
    %1690 = vmatprep.subr.mxu0 %v400
    %1691 = vmatpush1.msra.mxu0 %v399
    %1692 = vmatprep.subr.mxu0 %v404
    %1693 = vmatpush1.msra.mxu0 %v403
    %1694 = vmatprep.subr.mxu0 %v408
    %1695 = vmatpush1.msra.mxu0 %v407
    %1696 = vmatprep.subr.mxu0 %v412
    %1697 = vmatpush1.msra.mxu0 %v411
    %1698 = vmatprep.subr.mxu0 %v416
    %1699 = vmatpush1.msra.mxu0 %v415
    %1700 = vmatprep.subr.mxu0 %v420
    %1701 = vmatpush1.msra.mxu0 %v419
    %1702 = vmatprep.subr.mxu0 %v424
    %1703 = vmatpush1.msra.mxu0 %v423
    %1704 = vmatprep.subr.mxu0 %v428
    %1705 = vmatpush1.msra.mxu0 %v427
    %1706 = vmatprep.subr.mxu0 %v432
    %1707 = vmatpush1.msra.mxu0 %v431
    %1708 = vmatprep.subr.mxu0 %v436
    %1709 = vmatpush1.msra.mxu0 %v435
    %1710 = vmatprep.subr.mxu0 %v440
    %1711 = vmatpush1.msra.mxu0 %v439
    %1712 = vmatprep.subr.mxu0 %v444
    %1713 = vmatpush1.msra.mxu0 %v443
    %1714 = vmatprep.subr.mxu0 %v448
    %1715 = vmatpush1.msra.mxu0 %v447
    %1716 = vmatprep.subr.mxu0 %v452
    %1717 = vmatpush1.msra.mxu0 %v451
    %1718 = vmatprep.subr.mxu0 %v456
    %1719 = vmatpush1.msra.mxu0 %v455
    %1720 = vmatprep.subr.mxu0 0.0
    %1721 = vmatpush1.msra.mxu0 0.0
    %1722 = vmatprep.subr.mxu0 0.0
    %1723 = vmatpush1.msra.mxu0 0.0
    %1724 = vmatprep.subr.mxu0 0.0
    %1725 = vmatpush1.msra.mxu0 0.0
    %1726 = vmatprep.subr.mxu0 0.0
    %1727 = vmatpush1.msra.mxu0 0.0
    %1728 = vmatprep.subr.mxu0 0.0
    %1729 = vmatpush1.msra.mxu0 0.0
    %1730 = vmatprep.subr.mxu0 0.0
    %1731 = vmatpush1.msra.mxu0 0.0
    %1732 = vmatprep.subr.mxu0 0.0
    %1733 = vmatpush1.msra.mxu0 0.0
    %1734 = vmatprep.subr.mxu0 0.0
    %1735 = vmatpush1.msra.mxu0 0.0
    %1736 = vmatprep.subr.mxu0 0.0
    %1737 = vmatpush1.msra.mxu0 0.0
    %1738 = vmatprep.subr.mxu0 0.0
    %1739 = vmatpush1.msra.mxu0 0.0
    %1740 = vmatprep.subr.mxu0 0.0
    %1741 = vmatpush1.msra.mxu0 0.0
    %1742 = vmatprep.subr.mxu0 0.0
    %1743 = vmatpush1.msra.mxu0 0.0
    %1744 = vmatprep.subr.mxu0 0.0
    %1745 = vmatpush1.msra.mxu0 0.0
    %1746 = vmatprep.subr.mxu0 0.0
    %1747 = vmatpush1.msra.mxu0 0.0
    %1748 = vmatprep.subr.mxu0 0.0
    %1749 = vmatpush1.msra.mxu0 0.0
    %1750 = vmatprep.subr.mxu0 0.0
    %1751 = vmatpush1.msra.mxu0 0.0
    %1752 = vmatprep.mubr.f32.mxu0 0.0
    %1753 = vmatmul.mubr.f32.gmra.mrb[0].mxu0 %v1682
    %v1754 = vpop.f32.mrb[0].mxu0
    %v1755 = vadd.f32 0.0, %v1754
    %v1756 = vpop.f32.mrb[0].mxu0
    %v1757 = vadd.f32 0.0, %v1756
    %1758 = vdwg.mxu0
    %1759 = vmatprep.subr.mxu0 %v398
    %1760 = vmatpush1.msra.mxu0 %v397
    %1761 = vmatprep.subr.mxu0 %v402
    %1762 = vmatpush1.msra.mxu0 %v401
    %1763 = vmatprep.subr.mxu0 %v406
    %1764 = vmatpush1.msra.mxu0 %v405
    %1765 = vmatprep.subr.mxu0 %v410
    %1766 = vmatpush1.msra.mxu0 %v409
    %1767 = vmatprep.subr.mxu0 %v414
    %1768 = vmatpush1.msra.mxu0 %v413
    %1769 = vmatprep.subr.mxu0 %v418
    %1770 = vmatpush1.msra.mxu0 %v417
    %1771 = vmatprep.subr.mxu0 %v422
    %1772 = vmatpush1.msra.mxu0 %v421
    %1773 = vmatprep.subr.mxu0 %v426
    %1774 = vmatpush1.msra.mxu0 %v425
    %1775 = vmatprep.subr.mxu0 %v430
    %1776 = vmatpush1.msra.mxu0 %v429
    %1777 = vmatprep.subr.mxu0 %v434
    %1778 = vmatpush1.msra.mxu0 %v433
    %1779 = vmatprep.subr.mxu0 %v438
    %1780 = vmatpush1.msra.mxu0 %v437
    %1781 = vmatprep.subr.mxu0 %v442
    %1782 = vmatpush1.msra.mxu0 %v441
    %1783 = vmatprep.subr.mxu0 %v446
    %1784 = vmatpush1.msra.mxu0 %v445
    %1785 = vmatprep.subr.mxu0 %v450
    %1786 = vmatpush1.msra.mxu0 %v449
    %1787 = vmatprep.subr.mxu0 %v454
    %1788 = vmatpush1.msra.mxu0 %v453
    %1789 = vmatprep.subr.mxu0 %v458
    %1790 = vmatpush1.msra.mxu0 %v457
    %1791 = vmatprep.subr.mxu0 0.0
    %1792 = vmatpush1.msra.mxu0 0.0
    %1793 = vmatprep.subr.mxu0 0.0
    %1794 = vmatpush1.msra.mxu0 0.0
    %1795 = vmatprep.subr.mxu0 0.0
    %1796 = vmatpush1.msra.mxu0 0.0
    %1797 = vmatprep.subr.mxu0 0.0
    %1798 = vmatpush1.msra.mxu0 0.0
    %1799 = vmatprep.subr.mxu0 0.0
    %1800 = vmatpush1.msra.mxu0 0.0
    %1801 = vmatprep.subr.mxu0 0.0
    %1802 = vmatpush1.msra.mxu0 0.0
    %1803 = vmatprep.subr.mxu0 0.0
    %1804 = vmatpush1.msra.mxu0 0.0
    %1805 = vmatprep.subr.mxu0 0.0
    %1806 = vmatpush1.msra.mxu0 0.0
    %1807 = vmatprep.subr.mxu0 0.0
    %1808 = vmatpush1.msra.mxu0 0.0
    %1809 = vmatprep.subr.mxu0 0.0
    %1810 = vmatpush1.msra.mxu0 0.0
    %1811 = vmatprep.subr.mxu0 0.0
    %1812 = vmatpush1.msra.mxu0 0.0
    %1813 = vmatprep.subr.mxu0 0.0
    %1814 = vmatpush1.msra.mxu0 0.0
    %1815 = vmatprep.subr.mxu0 0.0
    %1816 = vmatpush1.msra.mxu0 0.0
    %1817 = vmatprep.subr.mxu0 0.0
    %1818 = vmatpush1.msra.mxu0 0.0
    %1819 = vmatprep.subr.mxu0 0.0
    %1820 = vmatpush1.msra.mxu0 0.0
    %1821 = vmatprep.subr.mxu0 0.0
    %1822 = vmatpush1.msra.mxu0 0.0
    %1823 = vmatprep.mubr.f32.mxu0 0.0
    %1824 = vmatmul.mubr.f32.gmra.mrb[0].mxu0 %v1682
    %v1825 = vpop.f32.mrb[0].mxu0
    %v1826 = vadd.f32 0.0, %v1825
    %v1827 = vpop.f32.mrb[0].mxu0
    %v1828 = vadd.f32 0.0, %v1827
    %1829 = vdwg.mxu0
    %v1830 = vadd.f32 %v1684, %v1755
    %v1831 = vadd.f32 %v1685, %v1757
    %v1832 = vadd.f32 %v1686, %v1826
    %v1833 = vadd.f32 %v1687, %v1828
    %v1834 = vxor.u32 %v1830, 2147483648
    %v1835 = vmul.f32 %v1834, 1.442695
    %v1836 = vpow.pop %v1835
    %v1837 = vadd.f32 %v1836, 1.0
    %v1838 = vrcp.pop %v1837
    %v1839 = vmul.f32 1.0, %v1838
    %v1840 = vxor.u32 %v1831, 2147483648
    %v1841 = vmul.f32 %v1840, 1.442695
    %v1842 = vpow.pop %v1841
    %v1843 = vadd.f32 %v1842, 1.0
    %v1844 = vrcp.pop %v1843
    %v1845 = vmul.f32 1.0, %v1844
    %v1846 = vtanh.pop %v1832
    %v1847 = vxor.u32 %v1833, 2147483648
    %v1848 = vmul.f32 %v1847, 1.442695
    %v1849 = vpow.pop %v1848
    %v1850 = vadd.f32 %v1849, 1.0
    %v1851 = vrcp.pop %v1850
    %v1852 = vmul.f32 1.0, %v1851
    %v1853 = vmul.f32 %v1845, %v1680
    %v1854 = vmul.f32 %v1839, %v1846
    %v1855 = vadd.f32 %v1853, %v1854
    %v1856 = vtanh.pop %v1855
    %v1857 = vmul.f32 %v1852, %v1856
    %1858 = vst [vmem:[#allocation3 + $0x38] sm:$0xff] %v1857
    %v1859 = vld [vmem:[#allocation8] sm:$0xff]
    %v1860 = vld [vmem:[#allocation8 + $0x8] sm:$0xff]
    %v1861 = vld [vmem:[#allocation8 + $0x10] sm:$0xff]
    %v1862 = vld [vmem:[#allocation8 + $0x18] sm:$0xff]
    %v1863 = vld [vmem:[#allocation8 + $0x20] sm:$0xff]
    %v1864 = vld [vmem:[#allocation8 + $0x28] sm:$0xff]
    %v1865 = vld [vmem:[#allocation8 + $0x30] sm:$0xff]
    %v1866 = vld [vmem:[#allocation8 + $0x38] sm:$0xff]
    %v1867 = vld [vmem:[#allocation8 + $0x40] sm:$0xff]
    %v1868 = vld [vmem:[#allocation8 + $0x48] sm:$0xff]
    %v1869 = vld [vmem:[#allocation8 + $0x50] sm:$0xff]
    %v1870 = vld [vmem:[#allocation8 + $0x58] sm:$0xff]
    %v1871 = vld [vmem:[#allocation8 + $0x60] sm:$0xff]
    %v1872 = vld [vmem:[#allocation8 + $0x68] sm:$0xff]
    %v1873 = vld [vmem:[#allocation8 + $0x70] sm:$0xff]
    %v1874 = vld [vmem:[#allocation8 + $0x78] sm:$0xff]
    %v1875 = vld [vmem:[#allocation8 + $0x80] sm:$0xff]
    %v1876 = vld [vmem:[#allocation8 + $0x88] sm:$0xff]
    %v1877 = vld [vmem:[#allocation8 + $0x90] sm:$0xff]
    %v1878 = vld [vmem:[#allocation8 + $0x98] sm:$0xff]
    %v1879 = vld [vmem:[#allocation8 + $0xa0] sm:$0xff]
    %v1880 = vld [vmem:[#allocation8 + $0xa8] sm:$0xff]
    %v1881 = vld [vmem:[#allocation8 + $0xb0] sm:$0xff]
    %v1882 = vld [vmem:[#allocation8 + $0xb8] sm:$0xff]
    %v1883 = vld [vmem:[#allocation8 + $0xc0] sm:$0xff]
    %v1884 = vld [vmem:[#allocation8 + $0xc8] sm:$0xff]
    %v1885 = vld [vmem:[#allocation8 + $0xd0] sm:$0xff]
    %v1886 = vld [vmem:[#allocation8 + $0xd8] sm:$0xff]
    %v1887 = vld [vmem:[#allocation8 + $0xe0] sm:$0xff]
    %v1888 = vld [vmem:[#allocation8 + $0xe8] sm:$0xff]
    %v1889 = vld [vmem:[#allocation8 + $0xf0] sm:$0xff]
    %v1890 = vld [vmem:[#allocation8 + $0xf8] sm:$0xff]
    %v1891 = vld [vmem:[#allocation8 + $0x100] sm:$0xff]
    %v1892 = vld [vmem:[#allocation8 + $0x108] sm:$0xff]
    %v1893 = vld [vmem:[#allocation8 + $0x110] sm:$0xff]
    %v1894 = vld [vmem:[#allocation8 + $0x118] sm:$0xff]
    %v1895 = vld [vmem:[#allocation8 + $0x120] sm:$0xff]
    %v1896 = vld [vmem:[#allocation8 + $0x128] sm:$0xff]
    %v1897 = vld [vmem:[#allocation8 + $0x130] sm:$0xff]
    %v1898 = vld [vmem:[#allocation8 + $0x138] sm:$0xff]
    %v1899 = vld [vmem:[#allocation8 + $0x140] sm:$0xff]
    %v1900 = vld [vmem:[#allocation8 + $0x148] sm:$0xff]
    %v1901 = vld [vmem:[#allocation8 + $0x150] sm:$0xff]
    %v1902 = vld [vmem:[#allocation8 + $0x158] sm:$0xff]
    %v1903 = vld [vmem:[#allocation8 + $0x160] sm:$0xff]
    %v1904 = vld [vmem:[#allocation8 + $0x168] sm:$0xff]
    %v1905 = vld [vmem:[#allocation8 + $0x170] sm:$0xff]
    %v1906 = vld [vmem:[#allocation8 + $0x178] sm:$0xff]
    %v1907 = vld [vmem:[#allocation8 + $0x180] sm:$0xff]
    %v1908 = vld [vmem:[#allocation8 + $0x188] sm:$0xff]
    %v1909 = vld [vmem:[#allocation8 + $0x190] sm:$0xff]
    %v1910 = vld [vmem:[#allocation8 + $0x198] sm:$0xff]
    %v1911 = vld [vmem:[#allocation8 + $0x1a0] sm:$0xff]
    %v1912 = vld [vmem:[#allocation8 + $0x1a8] sm:$0xff]
    %v1913 = vld [vmem:[#allocation8 + $0x1b0] sm:$0xff]
    %v1914 = vld [vmem:[#allocation8 + $0x1b8] sm:$0xff]
    %v1915 = vld [vmem:[#allocation8 + $0x1c0] sm:$0xff]
    %v1916 = vld [vmem:[#allocation8 + $0x1c8] sm:$0xff]
    %v1917 = vld [vmem:[#allocation8 + $0x1d0] sm:$0xff]
    %v1918 = vld [vmem:[#allocation8 + $0x1d8] sm:$0xff]
    %v1919 = vld [vmem:[#allocation8 + $0x1e0] sm:$0xff]
    %v1920 = vld [vmem:[#allocation8 + $0x1e8] sm:$0xff]
    %v1921 = vld [vmem:[#allocation8 + $0x1f0] sm:$0xff]
    %v1922 = vld [vmem:[#allocation8 + $0x1f8] sm:$0xff]
    %v1923 = vld [vmem:[#allocation8 + $0x200] sm:$0xff]
    %v1924 = vld [vmem:[#allocation8 + $0x208] sm:$0xff]
    %v1925 = vld [vmem:[#allocation8 + $0x210] sm:$0xff]
    %v1926 = vld [vmem:[#allocation8 + $0x218] sm:$0xff]
    %v1927 = vld [vmem:[#allocation8 + $0x220] sm:$0xff]
    %v1928 = vld [vmem:[#allocation8 + $0x228] sm:$0xff]
    %v1929 = vld [vmem:[#allocation8 + $0x230] sm:$0xff]
    %v1930 = vld [vmem:[#allocation8 + $0x238] sm:$0xff]
    %v1931 = vld [vmem:[#allocation8 + $0x240] sm:$0xff]
    %v1932 = vld [vmem:[#allocation8 + $0x248] sm:$0xff]
    %v1933 = vld [vmem:[#allocation8 + $0x250] sm:$0xff]
    %v1934 = vld [vmem:[#allocation8 + $0x258] sm:$0xff]
    %v1935 = vld [vmem:[#allocation8 + $0x260] sm:$0xff]
    %v1936 = vld [vmem:[#allocation8 + $0x268] sm:$0xff]
    %v1937 = vld [vmem:[#allocation8 + $0x270] sm:$0xff]
    %v1938 = vld [vmem:[#allocation8 + $0x278] sm:$0xff]
    %v1939 = vld [vmem:[#allocation8 + $0x280] sm:$0xff]
    %v1940 = vld [vmem:[#allocation8 + $0x288] sm:$0xff]
    %v1941 = vld [vmem:[#allocation8 + $0x290] sm:$0xff]
    %v1942 = vld [vmem:[#allocation8 + $0x298] sm:$0xff]
    %v1943 = vld [vmem:[#allocation8 + $0x2a0] sm:$0xff]
    %v1944 = vld [vmem:[#allocation8 + $0x2a8] sm:$0xff]
    %v1945 = vld [vmem:[#allocation8 + $0x2b0] sm:$0xff]
    %v1946 = vld [vmem:[#allocation8 + $0x2b8] sm:$0xff]
    %v1947 = vld [vmem:[#allocation8 + $0x2c0] sm:$0xff]
    %v1948 = vld [vmem:[#allocation8 + $0x2c8] sm:$0xff]
    %v1949 = vld [vmem:[#allocation8 + $0x2d0] sm:$0xff]
    %v1950 = vld [vmem:[#allocation8 + $0x2d8] sm:$0xff]
    %v1951 = vld [vmem:[#allocation8 + $0x2e0] sm:$0xff]
    %v1952 = vld [vmem:[#allocation8 + $0x2e8] sm:$0xff]
    %v1953 = vld [vmem:[#allocation8 + $0x2f0] sm:$0xff]
    %v1954 = vld [vmem:[#allocation8 + $0x2f8] sm:$0xff]
    %v1955 = vld [vmem:[#allocation8 + $0x300] sm:$0xff]
    %v1956 = vld [vmem:[#allocation8 + $0x308] sm:$0xff]
    %v1957 = vld [vmem:[#allocation8 + $0x310] sm:$0xff]
    %v1958 = vld [vmem:[#allocation8 + $0x318] sm:$0xff]
    %v1959 = vld [vmem:[#allocation8 + $0x320] sm:$0xff]
    %v1960 = vld [vmem:[#allocation8 + $0x328] sm:$0xff]
    %v1961 = vld [vmem:[#allocation8 + $0x330] sm:$0xff]
    %v1962 = vld [vmem:[#allocation8 + $0x338] sm:$0xff]
    %v1963 = vld [vmem:[#allocation8 + $0x340] sm:$0xff]
    %v1964 = vld [vmem:[#allocation8 + $0x348] sm:$0xff]
    %v1965 = vld [vmem:[#allocation8 + $0x350] sm:$0xff]
    %v1966 = vld [vmem:[#allocation8 + $0x358] sm:$0xff]
    %v1967 = vld [vmem:[#allocation8 + $0x360] sm:$0xff]
    %v1968 = vld [vmem:[#allocation8 + $0x368] sm:$0xff]
    %v1969 = vld [vmem:[#allocation8 + $0x370] sm:$0xff]
    %v1970 = vld [vmem:[#allocation8 + $0x378] sm:$0xff]
    %v1971 = vld [vmem:[#allocation8 + $0x380] sm:$0xff]
    %v1972 = vld [vmem:[#allocation8 + $0x388] sm:$0xff]
    %v1973 = vld [vmem:[#allocation8 + $0x390] sm:$0xff]
    %v1974 = vld [vmem:[#allocation8 + $0x398] sm:$0xff]
    %v1975 = vld [vmem:[#allocation8 + $0x3a0] sm:$0xff]
    %v1976 = vld [vmem:[#allocation8 + $0x3a8] sm:$0xff]
    %v1977 = vld [vmem:[#allocation8 + $0x3b0] sm:$0xff]
    %v1978 = vld [vmem:[#allocation8 + $0x3b8] sm:$0xff]
    %v1979 = vld [vmem:[#allocation8 + $0x3c0] sm:$0xff]
    %v1980 = vld [vmem:[#allocation8 + $0x3c8] sm:$0xff]
    %v1981 = vld [vmem:[#allocation8 + $0x3d0] sm:$0xff]
    %v1982 = vld [vmem:[#allocation8 + $0x3d8] sm:$0xff]
    %v1983 = vld [vmem:[#allocation8 + $0x3e0] sm:$0xff]
    %v1984 = vld [vmem:[#allocation8 + $0x3e8] sm:$0xff]
    %v1985 = vld [vmem:[#allocation8 + $0x3f0] sm:$0xff]
    %v1986 = vld [vmem:[#allocation8 + $0x3f8] sm:$0xff]
    %v1987 = vld [vmem:[#allocation3] sm:$0xff]
    %v1988 = vld [vmem:[#allocation3 + $0x8] sm:$0xff]
    %v1989 = vld [vmem:[#allocation3 + $0x10] sm:$0xff]
    %v1990 = vld [vmem:[#allocation3 + $0x18] sm:$0xff]
    %v1991 = vld [vmem:[#allocation3 + $0x20] sm:$0xff]
    %v1992 = vld [vmem:[#allocation3 + $0x28] sm:$0xff]
    %v1993 = vld [vmem:[#allocation3 + $0x30] sm:$0xff]
    %v1994 = vld [vmem:[#allocation3 + $0x38] sm:$0xff]
    %v1995 = vld [vmem:[%s6] sm:$0xff]
    %v1997 = vlaneseq
    %v1998 = vshrl.u32 %v1997, 7
    %v1999 = vsub.s32 0, %v1998
    %v2000 = vrot.slane %v1995, %v1999
    %v2001 = vlaneseq
    %v2002 = vshrl.u32 %v2001, 7
    %v2003 = vsub.s32 1, %v2002
    %v2004 = vrot.slane %v1995, %v2003
    %v2005 = vlaneseq
    %v2006 = vshrl.u32 %v2005, 7
    %v2007 = vsub.s32 2, %v2006
    %v2008 = vrot.slane %v1995, %v2007
    %v2009 = vlaneseq
    %v2010 = vshrl.u32 %v2009, 7
    %v2011 = vsub.s32 3, %v2010
    %v2012 = vrot.slane %v1995, %v2011
    %v2013 = vlaneseq
    %v2014 = vshrl.u32 %v2013, 7
    %v2015 = vsub.s32 4, %v2014
    %v2016 = vrot.slane %v1995, %v2015
    %v2017 = vlaneseq
    %v2018 = vshrl.u32 %v2017, 7
    %v2019 = vsub.s32 5, %v2018
    %v2020 = vrot.slane %v1995, %v2019
    %v2021 = vlaneseq
    %v2022 = vshrl.u32 %v2021, 7
    %v2023 = vsub.s32 6, %v2022
    %v2024 = vrot.slane %v1995, %v2023
    %v2025 = vlaneseq
    %v2026 = vshrl.u32 %v2025, 7
    %v2027 = vsub.s32 7, %v2026
    %v2028 = vrot.slane %v1995, %v2027
    %2037 = vmatprep.subr.mxu0 %v1860
    %2038 = vmatpush1.msra.mxu0 %v1859
    %2039 = vmatprep.subr.mxu0 %v1868
    %2040 = vmatpush1.msra.mxu0 %v1867
    %2041 = vmatprep.subr.mxu0 %v1876
    %2042 = vmatpush1.msra.mxu0 %v1875
    %2043 = vmatprep.subr.mxu0 %v1884
    %2044 = vmatpush1.msra.mxu0 %v1883
    %2045 = vmatprep.subr.mxu0 %v1892
    %2046 = vmatpush1.msra.mxu0 %v1891
    %2047 = vmatprep.subr.mxu0 %v1900
    %2048 = vmatpush1.msra.mxu0 %v1899
    %2049 = vmatprep.subr.mxu0 %v1908
    %2050 = vmatpush1.msra.mxu0 %v1907
    %2051 = vmatprep.subr.mxu0 %v1916
    %2052 = vmatpush1.msra.mxu0 %v1915
    %2053 = vmatprep.subr.mxu0 %v1924
    %2054 = vmatpush1.msra.mxu0 %v1923
    %2055 = vmatprep.subr.mxu0 %v1932
    %2056 = vmatpush1.msra.mxu0 %v1931
    %2057 = vmatprep.subr.mxu0 %v1940
    %2058 = vmatpush1.msra.mxu0 %v1939
    %2059 = vmatprep.subr.mxu0 %v1948
    %2060 = vmatpush1.msra.mxu0 %v1947
    %2061 = vmatprep.subr.mxu0 %v1956
    %2062 = vmatpush1.msra.mxu0 %v1955
    %2063 = vmatprep.subr.mxu0 %v1964
    %2064 = vmatpush1.msra.mxu0 %v1963
    %2065 = vmatprep.subr.mxu0 %v1972
    %2066 = vmatpush1.msra.mxu0 %v1971
    %2067 = vmatprep.subr.mxu0 %v1980
    %2068 = vmatpush1.msra.mxu0 %v1979
    %2069 = vmatprep.subr.mxu0 0.0
    %2070 = vmatpush1.msra.mxu0 0.0
    %2071 = vmatprep.subr.mxu0 0.0
    %2072 = vmatpush1.msra.mxu0 0.0
    %2073 = vmatprep.subr.mxu0 0.0
    %2074 = vmatpush1.msra.mxu0 0.0
    %2075 = vmatprep.subr.mxu0 0.0
    %2076 = vmatpush1.msra.mxu0 0.0
    %2077 = vmatprep.subr.mxu0 0.0
    %2078 = vmatpush1.msra.mxu0 0.0
    %2079 = vmatprep.subr.mxu0 0.0
    %2080 = vmatpush1.msra.mxu0 0.0
    %2081 = vmatprep.subr.mxu0 0.0
    %2082 = vmatpush1.msra.mxu0 0.0
    %2083 = vmatprep.subr.mxu0 0.0
    %2084 = vmatpush1.msra.mxu0 0.0
    %2085 = vmatprep.subr.mxu0 0.0
    %2086 = vmatpush1.msra.mxu0 0.0
    %2087 = vmatprep.subr.mxu0 0.0
    %2088 = vmatpush1.msra.mxu0 0.0
    %2089 = vmatprep.subr.mxu0 0.0
    %2090 = vmatpush1.msra.mxu0 0.0
    %2091 = vmatprep.subr.mxu0 0.0
    %2092 = vmatpush1.msra.mxu0 0.0
    %2093 = vmatprep.subr.mxu0 0.0
    %2094 = vmatpush1.msra.mxu0 0.0
    %2095 = vmatprep.subr.mxu0 0.0
    %2096 = vmatpush1.msra.mxu0 0.0
    %2097 = vmatprep.subr.mxu0 0.0
    %2098 = vmatpush1.msra.mxu0 0.0
    %2099 = vmatprep.subr.mxu0 0.0
    %2100 = vmatpush1.msra.mxu0 0.0
    %2101 = vmatprep.mubr.f32.mxu0 0.0
    %2102 = vmatmul.mubr.f32.gmra.mrb[0].mxu0 %v1987
    %v2103 = vpop.f32.mrb[0].mxu0
    %v2104 = vadd.f32 %v2000, %v2103
    %v2105 = vpop.f32.mrb[0].mxu0
    %v2106 = vadd.f32 %v2004, %v2105
    %2107 = vmatprep.mubr.f32.mxu0 0.0
    %2108 = vmatmul.mubr.f32.gmra.mrb[0].mxu0 %v1988
    %v2109 = vpop.f32.mrb[0].mxu0
    %v2110 = vadd.f32 %v2000, %v2109
    %v2111 = vpop.f32.mrb[0].mxu0
    %v2112 = vadd.f32 %v2004, %v2111
    %2113 = vmatprep.mubr.f32.mxu0 0.0
    %2114 = vmatmul.mubr.f32.gmra.mrb[0].mxu0 %v1989
    %v2115 = vpop.f32.mrb[0].mxu0
    %v2116 = vadd.f32 %v2000, %v2115
    %v2117 = vpop.f32.mrb[0].mxu0
    %v2118 = vadd.f32 %v2004, %v2117
    %2119 = vmatprep.mubr.f32.mxu0 0.0
    %2120 = vmatmul.mubr.f32.gmra.mrb[0].mxu0 %v1990
    %v2121 = vpop.f32.mrb[0].mxu0
    %v2122 = vadd.f32 %v2000, %v2121
    %v2123 = vpop.f32.mrb[0].mxu0
    %v2124 = vadd.f32 %v2004, %v2123
    %2125 = vmatprep.mubr.f32.mxu0 0.0
    %2126 = vmatmul.mubr.f32.gmra.mrb[0].mxu0 %v1991
    %v2127 = vpop.f32.mrb[0].mxu0
    %v2128 = vadd.f32 %v2000, %v2127
    %v2129 = vpop.f32.mrb[0].mxu0
    %v2130 = vadd.f32 %v2004, %v2129
    %2131 = vmatprep.mubr.f32.mxu0 0.0
    %2132 = vmatmul.mubr.f32.gmra.mrb[0].mxu0 %v1992
    %v2133 = vpop.f32.mrb[0].mxu0
    %v2134 = vadd.f32 %v2000, %v2133
    %v2135 = vpop.f32.mrb[0].mxu0
    %v2136 = vadd.f32 %v2004, %v2135
    %2137 = vmatprep.mubr.f32.mxu0 0.0
    %2138 = vmatmul.mubr.f32.gmra.mrb[0].mxu0 %v1993
    %v2139 = vpop.f32.mrb[0].mxu0
    %v2140 = vadd.f32 %v2000, %v2139
    %v2141 = vpop.f32.mrb[0].mxu0
    %v2142 = vadd.f32 %v2004, %v2141
    %2143 = vmatprep.mubr.f32.mxu0 0.0
    %2144 = vmatmul.mubr.f32.gmra.mrb[0].mxu0 %v1994
    %v2145 = vpop.f32.mrb[0].mxu0
    %v2146 = vadd.f32 %v2000, %v2145
    %v2147 = vpop.f32.mrb[0].mxu0
    %v2148 = vadd.f32 %v2004, %v2147
    %2149 = vdwg.mxu0
    %2150 = vmatprep.subr.mxu0 %v1862
    %2151 = vmatpush1.msra.mxu0 %v1861
    %2152 = vmatprep.subr.mxu0 %v1870
    %2153 = vmatpush1.msra.mxu0 %v1869
    %2154 = vmatprep.subr.mxu0 %v1878
    %2155 = vmatpush1.msra.mxu0 %v1877
    %2156 = vmatprep.subr.mxu0 %v1886
    %2157 = vmatpush1.msra.mxu0 %v1885
    %2158 = vmatprep.subr.mxu0 %v1894
    %2159 = vmatpush1.msra.mxu0 %v1893
    %2160 = vmatprep.subr.mxu0 %v1902
    %2161 = vmatpush1.msra.mxu0 %v1901
    %2162 = vmatprep.subr.mxu0 %v1910
    %2163 = vmatpush1.msra.mxu0 %v1909
    %2164 = vmatprep.subr.mxu0 %v1918
    %2165 = vmatpush1.msra.mxu0 %v1917
    %2166 = vmatprep.subr.mxu0 %v1926
    %2167 = vmatpush1.msra.mxu0 %v1925
    %2168 = vmatprep.subr.mxu0 %v1934
    %2169 = vmatpush1.msra.mxu0 %v1933
    %2170 = vmatprep.subr.mxu0 %v1942
    %2171 = vmatpush1.msra.mxu0 %v1941
    %2172 = vmatprep.subr.mxu0 %v1950
    %2173 = vmatpush1.msra.mxu0 %v1949
    %2174 = vmatprep.subr.mxu0 %v1958
    %2175 = vmatpush1.msra.mxu0 %v1957
    %2176 = vmatprep.subr.mxu0 %v1966
    %2177 = vmatpush1.msra.mxu0 %v1965
    %2178 = vmatprep.subr.mxu0 %v1974
    %2179 = vmatpush1.msra.mxu0 %v1973
    %2180 = vmatprep.subr.mxu0 %v1982
    %2181 = vmatpush1.msra.mxu0 %v1981
    %2182 = vmatprep.subr.mxu0 0.0
    %2183 = vmatpush1.msra.mxu0 0.0
    %2184 = vmatprep.subr.mxu0 0.0
    %2185 = vmatpush1.msra.mxu0 0.0
    %2186 = vmatprep.subr.mxu0 0.0
    %2187 = vmatpush1.msra.mxu0 0.0
    %2188 = vmatprep.subr.mxu0 0.0
    %2189 = vmatpush1.msra.mxu0 0.0
    %2190 = vmatprep.subr.mxu0 0.0
    %2191 = vmatpush1.msra.mxu0 0.0
    %2192 = vmatprep.subr.mxu0 0.0
    %2193 = vmatpush1.msra.mxu0 0.0
    %2194 = vmatprep.subr.mxu0 0.0
    %2195 = vmatpush1.msra.mxu0 0.0
    %2196 = vmatprep.subr.mxu0 0.0
    %2197 = vmatpush1.msra.mxu0 0.0
    %2198 = vmatprep.subr.mxu0 0.0
    %2199 = vmatpush1.msra.mxu0 0.0
    %2200 = vmatprep.subr.mxu0 0.0
    %2201 = vmatpush1.msra.mxu0 0.0
    %2202 = vmatprep.subr.mxu0 0.0
    %2203 = vmatpush1.msra.mxu0 0.0
    %2204 = vmatprep.subr.mxu0 0.0
    %2205 = vmatpush1.msra.mxu0 0.0
    %2206 = vmatprep.subr.mxu0 0.0
    %2207 = vmatpush1.msra.mxu0 0.0
    %2208 = vmatprep.subr.mxu0 0.0
    %2209 = vmatpush1.msra.mxu0 0.0
    %2210 = vmatprep.subr.mxu0 0.0
    %2211 = vmatpush1.msra.mxu0 0.0
    %2212 = vmatprep.subr.mxu0 0.0
    %2213 = vmatpush1.msra.mxu0 0.0
    %2214 = vmatprep.mubr.f32.mxu0 0.0
    %2215 = vmatmul.mubr.f32.gmra.mrb[0].mxu0 %v1987
    %v2216 = vpop.f32.mrb[0].mxu0
    %v2217 = vadd.f32 %v2008, %v2216
    %v2218 = vpop.f32.mrb[0].mxu0
    %v2219 = vadd.f32 %v2012, %v2218
    %2220 = vmatprep.mubr.f32.mxu0 0.0
    %2221 = vmatmul.mubr.f32.gmra.mrb[0].mxu0 %v1988
    %v2222 = vpop.f32.mrb[0].mxu0
    %v2223 = vadd.f32 %v2008, %v2222
    %v2224 = vpop.f32.mrb[0].mxu0
    %v2225 = vadd.f32 %v2012, %v2224
    %2226 = vmatprep.mubr.f32.mxu0 0.0
    %2227 = vmatmul.mubr.f32.gmra.mrb[0].mxu0 %v1989
    %v2228 = vpop.f32.mrb[0].mxu0
    %v2229 = vadd.f32 %v2008, %v2228
    %v2230 = vpop.f32.mrb[0].mxu0
    %v2231 = vadd.f32 %v2012, %v2230
    %2232 = vmatprep.mubr.f32.mxu0 0.0
    %2233 = vmatmul.mubr.f32.gmra.mrb[0].mxu0 %v1990
    %v2234 = vpop.f32.mrb[0].mxu0
    %v2235 = vadd.f32 %v2008, %v2234
    %v2236 = vpop.f32.mrb[0].mxu0
    %v2237 = vadd.f32 %v2012, %v2236
    %2238 = vmatprep.mubr.f32.mxu0 0.0
    %2239 = vmatmul.mubr.f32.gmra.mrb[0].mxu0 %v1991
    %v2240 = vpop.f32.mrb[0].mxu0
    %v2241 = vadd.f32 %v2008, %v2240
    %v2242 = vpop.f32.mrb[0].mxu0
    %v2243 = vadd.f32 %v2012, %v2242
    %2244 = vmatprep.mubr.f32.mxu0 0.0
    %2245 = vmatmul.mubr.f32.gmra.mrb[0].mxu0 %v1992
    %v2246 = vpop.f32.mrb[0].mxu0
    %v2247 = vadd.f32 %v2008, %v2246
    %v2248 = vpop.f32.mrb[0].mxu0
    %v2249 = vadd.f32 %v2012, %v2248
    %2250 = vmatprep.mubr.f32.mxu0 0.0
    %2251 = vmatmul.mubr.f32.gmra.mrb[0].mxu0 %v1993
    %v2252 = vpop.f32.mrb[0].mxu0
    %v2253 = vadd.f32 %v2008, %v2252
    %v2254 = vpop.f32.mrb[0].mxu0
    %v2255 = vadd.f32 %v2012, %v2254
    %2256 = vmatprep.mubr.f32.mxu0 0.0
    %2257 = vmatmul.mubr.f32.gmra.mrb[0].mxu0 %v1994
    %v2258 = vpop.f32.mrb[0].mxu0
    %v2259 = vadd.f32 %v2008, %v2258
    %v2260 = vpop.f32.mrb[0].mxu0
    %v2261 = vadd.f32 %v2012, %v2260
    %2262 = vdwg.mxu0
    %2263 = vmatprep.subr.mxu0 %v1864
    %2264 = vmatpush1.msra.mxu0 %v1863
    %2265 = vmatprep.subr.mxu0 %v1872
    %2266 = vmatpush1.msra.mxu0 %v1871
    %2267 = vmatprep.subr.mxu0 %v1880
    %2268 = vmatpush1.msra.mxu0 %v1879
    %2269 = vmatprep.subr.mxu0 %v1888
    %2270 = vmatpush1.msra.mxu0 %v1887
    %2271 = vmatprep.subr.mxu0 %v1896
    %2272 = vmatpush1.msra.mxu0 %v1895
    %2273 = vmatprep.subr.mxu0 %v1904
    %2274 = vmatpush1.msra.mxu0 %v1903
    %2275 = vmatprep.subr.mxu0 %v1912
    %2276 = vmatpush1.msra.mxu0 %v1911
    %2277 = vmatprep.subr.mxu0 %v1920
    %2278 = vmatpush1.msra.mxu0 %v1919
    %2279 = vmatprep.subr.mxu0 %v1928
    %2280 = vmatpush1.msra.mxu0 %v1927
    %2281 = vmatprep.subr.mxu0 %v1936
    %2282 = vmatpush1.msra.mxu0 %v1935
    %2283 = vmatprep.subr.mxu0 %v1944
    %2284 = vmatpush1.msra.mxu0 %v1943
    %2285 = vmatprep.subr.mxu0 %v1952
    %2286 = vmatpush1.msra.mxu0 %v1951
    %2287 = vmatprep.subr.mxu0 %v1960
    %2288 = vmatpush1.msra.mxu0 %v1959
    %2289 = vmatprep.subr.mxu0 %v1968
    %2290 = vmatpush1.msra.mxu0 %v1967
    %2291 = vmatprep.subr.mxu0 %v1976
    %2292 = vmatpush1.msra.mxu0 %v1975
    %2293 = vmatprep.subr.mxu0 %v1984
    %2294 = vmatpush1.msra.mxu0 %v1983
    %2295 = vmatprep.subr.mxu0 0.0
    %2296 = vmatpush1.msra.mxu0 0.0
    %2297 = vmatprep.subr.mxu0 0.0
    %2298 = vmatpush1.msra.mxu0 0.0
    %2299 = vmatprep.subr.mxu0 0.0
    %2300 = vmatpush1.msra.mxu0 0.0
    %2301 = vmatprep.subr.mxu0 0.0
    %2302 = vmatpush1.msra.mxu0 0.0
    %2303 = vmatprep.subr.mxu0 0.0
    %2304 = vmatpush1.msra.mxu0 0.0
    %2305 = vmatprep.subr.mxu0 0.0
    %2306 = vmatpush1.msra.mxu0 0.0
    %2307 = vmatprep.subr.mxu0 0.0
    %2308 = vmatpush1.msra.mxu0 0.0
    %2309 = vmatprep.subr.mxu0 0.0
    %2310 = vmatpush1.msra.mxu0 0.0
    %2311 = vmatprep.subr.mxu0 0.0
    %2312 = vmatpush1.msra.mxu0 0.0
    %2313 = vmatprep.subr.mxu0 0.0
    %2314 = vmatpush1.msra.mxu0 0.0
    %2315 = vmatprep.subr.mxu0 0.0
    %2316 = vmatpush1.msra.mxu0 0.0
    %2317 = vmatprep.subr.mxu0 0.0
    %2318 = vmatpush1.msra.mxu0 0.0
    %2319 = vmatprep.subr.mxu0 0.0
    %2320 = vmatpush1.msra.mxu0 0.0
    %2321 = vmatprep.subr.mxu0 0.0
    %2322 = vmatpush1.msra.mxu0 0.0
    %2323 = vmatprep.subr.mxu0 0.0
    %2324 = vmatpush1.msra.mxu0 0.0
    %2325 = vmatprep.subr.mxu0 0.0
    %2326 = vmatpush1.msra.mxu0 0.0
    %2327 = vmatprep.mubr.f32.mxu0 0.0
    %2328 = vmatmul.mubr.f32.gmra.mrb[0].mxu0 %v1987
    %v2329 = vpop.f32.mrb[0].mxu0
    %v2330 = vadd.f32 %v2016, %v2329
    %v2331 = vpop.f32.mrb[0].mxu0
    %v2332 = vadd.f32 %v2020, %v2331
    %2333 = vmatprep.mubr.f32.mxu0 0.0
    %2334 = vmatmul.mubr.f32.gmra.mrb[0].mxu0 %v1988
    %v2335 = vpop.f32.mrb[0].mxu0
    %v2336 = vadd.f32 %v2016, %v2335
    %v2337 = vpop.f32.mrb[0].mxu0
    %v2338 = vadd.f32 %v2020, %v2337
    %2339 = vmatprep.mubr.f32.mxu0 0.0
    %2340 = vmatmul.mubr.f32.gmra.mrb[0].mxu0 %v1989
    %v2341 = vpop.f32.mrb[0].mxu0
    %v2342 = vadd.f32 %v2016, %v2341
    %v2343 = vpop.f32.mrb[0].mxu0
    %v2344 = vadd.f32 %v2020, %v2343
    %2345 = vmatprep.mubr.f32.mxu0 0.0
    %2346 = vmatmul.mubr.f32.gmra.mrb[0].mxu0 %v1990
    %v2347 = vpop.f32.mrb[0].mxu0
    %v2348 = vadd.f32 %v2016, %v2347
    %v2349 = vpop.f32.mrb[0].mxu0
    %v2350 = vadd.f32 %v2020, %v2349
    %2351 = vmatprep.mubr.f32.mxu0 0.0
    %2352 = vmatmul.mubr.f32.gmra.mrb[0].mxu0 %v1991
    %v2353 = vpop.f32.mrb[0].mxu0
    %v2354 = vadd.f32 %v2016, %v2353
    %v2355 = vpop.f32.mrb[0].mxu0
    %v2356 = vadd.f32 %v2020, %v2355
    %2357 = vmatprep.mubr.f32.mxu0 0.0
    %2358 = vmatmul.mubr.f32.gmra.mrb[0].mxu0 %v1992
    %v2359 = vpop.f32.mrb[0].mxu0
    %v2360 = vadd.f32 %v2016, %v2359
    %v2361 = vpop.f32.mrb[0].mxu0
    %v2362 = vadd.f32 %v2020, %v2361
    %2363 = vmatprep.mubr.f32.mxu0 0.0
    %2364 = vmatmul.mubr.f32.gmra.mrb[0].mxu0 %v1993
    %v2365 = vpop.f32.mrb[0].mxu0
    %v2366 = vadd.f32 %v2016, %v2365
    %v2367 = vpop.f32.mrb[0].mxu0
    %v2368 = vadd.f32 %v2020, %v2367
    %2369 = vmatprep.mubr.f32.mxu0 0.0
    %2370 = vmatmul.mubr.f32.gmra.mrb[0].mxu0 %v1994
    %v2371 = vpop.f32.mrb[0].mxu0
    %v2372 = vadd.f32 %v2016, %v2371
    %v2373 = vpop.f32.mrb[0].mxu0
    %v2374 = vadd.f32 %v2020, %v2373
    %2375 = vdwg.mxu0
    %2376 = vmatprep.subr.mxu0 %v1866
    %2377 = vmatpush1.msra.mxu0 %v1865
    %2378 = vmatprep.subr.mxu0 %v1874
    %2379 = vmatpush1.msra.mxu0 %v1873
    %2380 = vmatprep.subr.mxu0 %v1882
    %2381 = vmatpush1.msra.mxu0 %v1881
    %2382 = vmatprep.subr.mxu0 %v1890
    %2383 = vmatpush1.msra.mxu0 %v1889
    %2384 = vmatprep.subr.mxu0 %v1898
    %2385 = vmatpush1.msra.mxu0 %v1897
    %2386 = vmatprep.subr.mxu0 %v1906
    %2387 = vmatpush1.msra.mxu0 %v1905
    %2388 = vmatprep.subr.mxu0 %v1914
    %2389 = vmatpush1.msra.mxu0 %v1913
    %2390 = vmatprep.subr.mxu0 %v1922
    %2391 = vmatpush1.msra.mxu0 %v1921
    %2392 = vmatprep.subr.mxu0 %v1930
    %2393 = vmatpush1.msra.mxu0 %v1929
    %2394 = vmatprep.subr.mxu0 %v1938
    %2395 = vmatpush1.msra.mxu0 %v1937
    %2396 = vmatprep.subr.mxu0 %v1946
    %2397 = vmatpush1.msra.mxu0 %v1945
    %2398 = vmatprep.subr.mxu0 %v1954
    %2399 = vmatpush1.msra.mxu0 %v1953
    %2400 = vmatprep.subr.mxu0 %v1962
    %2401 = vmatpush1.msra.mxu0 %v1961
    %2402 = vmatprep.subr.mxu0 %v1970
    %2403 = vmatpush1.msra.mxu0 %v1969
    %2404 = vmatprep.subr.mxu0 %v1978
    %2405 = vmatpush1.msra.mxu0 %v1977
    %2406 = vmatprep.subr.mxu0 %v1986
    %2407 = vmatpush1.msra.mxu0 %v1985
    %2408 = vmatprep.subr.mxu0 0.0
    %2409 = vmatpush1.msra.mxu0 0.0
    %2410 = vmatprep.subr.mxu0 0.0
    %2411 = vmatpush1.msra.mxu0 0.0
    %2412 = vmatprep.subr.mxu0 0.0
    %2413 = vmatpush1.msra.mxu0 0.0
    %2414 = vmatprep.subr.mxu0 0.0
    %2415 = vmatpush1.msra.mxu0 0.0
    %2416 = vmatprep.subr.mxu0 0.0
    %2417 = vmatpush1.msra.mxu0 0.0
    %2418 = vmatprep.subr.mxu0 0.0
    %2419 = vmatpush1.msra.mxu0 0.0
    %2420 = vmatprep.subr.mxu0 0.0
    %2421 = vmatpush1.msra.mxu0 0.0
    %2422 = vmatprep.subr.mxu0 0.0
    %2423 = vmatpush1.msra.mxu0 0.0
    %2424 = vmatprep.subr.mxu0 0.0
    %2425 = vmatpush1.msra.mxu0 0.0
    %2426 = vmatprep.subr.mxu0 0.0
    %2427 = vmatpush1.msra.mxu0 0.0
    %2428 = vmatprep.subr.mxu0 0.0
    %2429 = vmatpush1.msra.mxu0 0.0
    %2430 = vmatprep.subr.mxu0 0.0
    %2431 = vmatpush1.msra.mxu0 0.0
    %2432 = vmatprep.subr.mxu0 0.0
    %2433 = vmatpush1.msra.mxu0 0.0
    %2434 = vmatprep.subr.mxu0 0.0
    %2435 = vmatpush1.msra.mxu0 0.0
    %2436 = vmatprep.subr.mxu0 0.0
    %2437 = vmatpush1.msra.mxu0 0.0
    %2438 = vmatprep.subr.mxu0 0.0
    %2439 = vmatpush1.msra.mxu0 0.0
    %2440 = vmatprep.mubr.f32.mxu0 0.0
    %2441 = vmatmul.mubr.f32.gmra.mrb[0].mxu0 %v1987
    %v2442 = vpop.f32.mrb[0].mxu0
    %v2443 = vadd.f32 %v2024, %v2442
    %v2444 = vpop.f32.mrb[0].mxu0
    %v2445 = vadd.f32 %v2028, %v2444
    %2446 = vmatprep.mubr.f32.mxu0 0.0
    %2447 = vmatmul.mubr.f32.gmra.mrb[0].mxu0 %v1988
    %v2448 = vpop.f32.mrb[0].mxu0
    %v2449 = vadd.f32 %v2024, %v2448
    %v2450 = vpop.f32.mrb[0].mxu0
    %v2451 = vadd.f32 %v2028, %v2450
    %2452 = vmatprep.mubr.f32.mxu0 0.0
    %2453 = vmatmul.mubr.f32.gmra.mrb[0].mxu0 %v1989
    %v2454 = vpop.f32.mrb[0].mxu0
    %v2455 = vadd.f32 %v2024, %v2454
    %v2456 = vpop.f32.mrb[0].mxu0
    %v2457 = vadd.f32 %v2028, %v2456
    %2458 = vmatprep.mubr.f32.mxu0 0.0
    %2459 = vmatmul.mubr.f32.gmra.mrb[0].mxu0 %v1990
    %v2460 = vpop.f32.mrb[0].mxu0
    %v2461 = vadd.f32 %v2024, %v2460
    %v2462 = vpop.f32.mrb[0].mxu0
    %v2463 = vadd.f32 %v2028, %v2462
    %2464 = vmatprep.mubr.f32.mxu0 0.0
    %2465 = vmatmul.mubr.f32.gmra.mrb[0].mxu0 %v1991
    %v2466 = vpop.f32.mrb[0].mxu0
    %v2467 = vadd.f32 %v2024, %v2466
    %v2468 = vpop.f32.mrb[0].mxu0
    %v2469 = vadd.f32 %v2028, %v2468
    %2470 = vmatprep.mubr.f32.mxu0 0.0
    %2471 = vmatmul.mubr.f32.gmra.mrb[0].mxu0 %v1992
    %v2472 = vpop.f32.mrb[0].mxu0
    %v2473 = vadd.f32 %v2024, %v2472
    %v2474 = vpop.f32.mrb[0].mxu0
    %v2475 = vadd.f32 %v2028, %v2474
    %2476 = vmatprep.mubr.f32.mxu0 0.0
    %2477 = vmatmul.mubr.f32.gmra.mrb[0].mxu0 %v1993
    %v2478 = vpop.f32.mrb[0].mxu0
    %v2479 = vadd.f32 %v2024, %v2478
    %v2480 = vpop.f32.mrb[0].mxu0
    %v2481 = vadd.f32 %v2028, %v2480
    %2482 = vmatprep.mubr.f32.mxu0 0.0
    %2483 = vmatmul.mubr.f32.gmra.mrb[0].mxu0 %v1994
    %v2484 = vpop.f32.mrb[0].mxu0
    %v2485 = vadd.f32 %v2024, %v2484
    %v2486 = vpop.f32.mrb[0].mxu0
    %v2487 = vadd.f32 %v2028, %v2486
    %2488 = vdwg.mxu0
    %2489 = vst [vmem:[#allocation4] sm:$0xff] %v2104
    %2490 = vst [vmem:[#allocation4 + $0x8] sm:$0xff] %v2106
    %2491 = vst [vmem:[#allocation4 + $0x10] sm:$0xff] %v2217
    %2492 = vst [vmem:[#allocation4 + $0x18] sm:$0xff] %v2219
    %2493 = vst [vmem:[#allocation4 + $0x20] sm:$0xff] %v2330
    %2494 = vst [vmem:[#allocation4 + $0x28] sm:$0xff] %v2332
    %2495 = vst [vmem:[#allocation4 + $0x30] sm:$0xff] %v2443
    %2496 = vst [vmem:[#allocation4 + $0x38] sm:$0xff] %v2445
    %2497 = vst [vmem:[#allocation4 + $0x40] sm:$0xff] %v2110
    %2498 = vst [vmem:[#allocation4 + $0x48] sm:$0xff] %v2112
    %2499 = vst [vmem:[#allocation4 + $0x50] sm:$0xff] %v2223
    %2500 = vst [vmem:[#allocation4 + $0x58] sm:$0xff] %v2225
    %2501 = vst [vmem:[#allocation4 + $0x60] sm:$0xff] %v2336
    %2502 = vst [vmem:[#allocation4 + $0x68] sm:$0xff] %v2338
    %2503 = vst [vmem:[#allocation4 + $0x70] sm:$0xff] %v2449
    %2504 = vst [vmem:[#allocation4 + $0x78] sm:$0xff] %v2451
    %2505 = vst [vmem:[#allocation4 + $0x80] sm:$0xff] %v2116
    %2506 = vst [vmem:[#allocation4 + $0x88] sm:$0xff] %v2118
    %2507 = vst [vmem:[#allocation4 + $0x90] sm:$0xff] %v2229
    %2508 = vst [vmem:[#allocation4 + $0x98] sm:$0xff] %v2231
    %2509 = vst [vmem:[#allocation4 + $0xa0] sm:$0xff] %v2342
    %2510 = vst [vmem:[#allocation4 + $0xa8] sm:$0xff] %v2344
    %2511 = vst [vmem:[#allocation4 + $0xb0] sm:$0xff] %v2455
    %2512 = vst [vmem:[#allocation4 + $0xb8] sm:$0xff] %v2457
    %2513 = vst [vmem:[#allocation4 + $0xc0] sm:$0xff] %v2122
    %2514 = vst [vmem:[#allocation4 + $0xc8] sm:$0xff] %v2124
    %2515 = vst [vmem:[#allocation4 + $0xd0] sm:$0xff] %v2235
    %2516 = vst [vmem:[#allocation4 + $0xd8] sm:$0xff] %v2237
    %2517 = vst [vmem:[#allocation4 + $0xe0] sm:$0xff] %v2348
    %2518 = vst [vmem:[#allocation4 + $0xe8] sm:$0xff] %v2350
    %2519 = vst [vmem:[#allocation4 + $0xf0] sm:$0xff] %v2461
    %2520 = vst [vmem:[#allocation4 + $0xf8] sm:$0xff] %v2463
    %2521 = vst [vmem:[#allocation4 + $0x100] sm:$0xff] %v2128
    %2522 = vst [vmem:[#allocation4 + $0x108] sm:$0xff] %v2130
    %2523 = vst [vmem:[#allocation4 + $0x110] sm:$0xff] %v2241
    %2524 = vst [vmem:[#allocation4 + $0x118] sm:$0xff] %v2243
    %2525 = vst [vmem:[#allocation4 + $0x120] sm:$0xff] %v2354
    %2526 = vst [vmem:[#allocation4 + $0x128] sm:$0xff] %v2356
    %2527 = vst [vmem:[#allocation4 + $0x130] sm:$0xff] %v2467
    %2528 = vst [vmem:[#allocation4 + $0x138] sm:$0xff] %v2469
    %2529 = vst [vmem:[#allocation4 + $0x140] sm:$0xff] %v2134
    %2530 = vst [vmem:[#allocation4 + $0x148] sm:$0xff] %v2136
    %2531 = vst [vmem:[#allocation4 + $0x150] sm:$0xff] %v2247
    %2532 = vst [vmem:[#allocation4 + $0x158] sm:$0xff] %v2249
    %2533 = vst [vmem:[#allocation4 + $0x160] sm:$0xff] %v2360
    %2534 = vst [vmem:[#allocation4 + $0x168] sm:$0xff] %v2362
    %2535 = vst [vmem:[#allocation4 + $0x170] sm:$0xff] %v2473
    %2536 = vst [vmem:[#allocation4 + $0x178] sm:$0xff] %v2475
    %2537 = vst [vmem:[#allocation4 + $0x180] sm:$0xff] %v2140
    %2538 = vst [vmem:[#allocation4 + $0x188] sm:$0xff] %v2142
    %2539 = vst [vmem:[#allocation4 + $0x190] sm:$0xff] %v2253
    %2540 = vst [vmem:[#allocation4 + $0x198] sm:$0xff] %v2255
    %2541 = vst [vmem:[#allocation4 + $0x1a0] sm:$0xff] %v2366
    %2542 = vst [vmem:[#allocation4 + $0x1a8] sm:$0xff] %v2368
    %2543 = vst [vmem:[#allocation4 + $0x1b0] sm:$0xff] %v2479
    %2544 = vst [vmem:[#allocation4 + $0x1b8] sm:$0xff] %v2481
    %2545 = vst [vmem:[#allocation4 + $0x1c0] sm:$0xff] %v2146
    %2546 = vst [vmem:[#allocation4 + $0x1c8] sm:$0xff] %v2148
    %2547 = vst [vmem:[#allocation4 + $0x1d0] sm:$0xff] %v2259
    %2548 = vst [vmem:[#allocation4 + $0x1d8] sm:$0xff] %v2261
    %2549 = vst [vmem:[#allocation4 + $0x1e0] sm:$0xff] %v2372
    %2550 = vst [vmem:[#allocation4 + $0x1e8] sm:$0xff] %v2374
    %2551 = vst [vmem:[#allocation4 + $0x1f0] sm:$0xff] %v2485
    %2552 = vst [vmem:[#allocation4 + $0x1f8] sm:$0xff] %v2487
    %v2553 = vld [vmem:[#allocation10] sm:$0xff]
    %v2554 = vld [vmem:[#allocation10 + $0x8] sm:$0xff]
    %v2555 = vld [vmem:[#allocation10 + $0x10] sm:$0xff]
    %v2556 = vld [vmem:[#allocation10 + $0x18] sm:$0xff]
    %v2557 = vld [vmem:[#allocation10 + $0x20] sm:$0xff]
    %v2558 = vld [vmem:[#allocation10 + $0x28] sm:$0xff]
    %v2559 = vld [vmem:[#allocation10 + $0x30] sm:$0xff]
    %v2560 = vld [vmem:[#allocation10 + $0x38] sm:$0xff]
    %v2561 = vld [vmem:[#allocation10 + $0x40] sm:$0xff]
    %v2562 = vld [vmem:[#allocation10 + $0x48] sm:$0xff]
    %v2563 = vld [vmem:[#allocation10 + $0x50] sm:$0xff]
    %v2564 = vld [vmem:[#allocation10 + $0x58] sm:$0xff]
    %v2565 = vld [vmem:[#allocation10 + $0x60] sm:$0xff]
    %v2566 = vld [vmem:[#allocation10 + $0x68] sm:$0xff]
    %v2567 = vld [vmem:[#allocation10 + $0x70] sm:$0xff]
    %v2568 = vld [vmem:[#allocation10 + $0x78] sm:$0xff]
    %v2569 = vld [vmem:[#allocation10 + $0x80] sm:$0xff]
    %v2570 = vld [vmem:[#allocation10 + $0x88] sm:$0xff]
    %v2571 = vld [vmem:[#allocation10 + $0x90] sm:$0xff]
    %v2572 = vld [vmem:[#allocation10 + $0x98] sm:$0xff]
    %v2573 = vld [vmem:[#allocation10 + $0xa0] sm:$0xff]
    %v2574 = vld [vmem:[#allocation10 + $0xa8] sm:$0xff]
    %v2575 = vld [vmem:[#allocation10 + $0xb0] sm:$0xff]
    %v2576 = vld [vmem:[#allocation10 + $0xb8] sm:$0xff]
    %v2577 = vld [vmem:[#allocation10 + $0xc0] sm:$0xff]
    %v2578 = vld [vmem:[#allocation10 + $0xc8] sm:$0xff]
    %v2579 = vld [vmem:[#allocation10 + $0xd0] sm:$0xff]
    %v2580 = vld [vmem:[#allocation10 + $0xd8] sm:$0xff]
    %v2581 = vld [vmem:[#allocation10 + $0xe0] sm:$0xff]
    %v2582 = vld [vmem:[#allocation10 + $0xe8] sm:$0xff]
    %v2583 = vld [vmem:[#allocation10 + $0xf0] sm:$0xff]
    %v2584 = vld [vmem:[#allocation10 + $0xf8] sm:$0xff]
    %v2585 = vld [vmem:[#allocation10 + $0x100] sm:$0xff]
    %v2586 = vld [vmem:[#allocation10 + $0x108] sm:$0xff]
    %v2587 = vld [vmem:[#allocation10 + $0x110] sm:$0xff]
    %v2588 = vld [vmem:[#allocation10 + $0x118] sm:$0xff]
    %v2589 = vld [vmem:[#allocation10 + $0x120] sm:$0xff]
    %v2590 = vld [vmem:[#allocation10 + $0x128] sm:$0xff]
    %v2591 = vld [vmem:[#allocation10 + $0x130] sm:$0xff]
    %v2592 = vld [vmem:[#allocation10 + $0x138] sm:$0xff]
    %v2593 = vld [vmem:[#allocation10 + $0x140] sm:$0xff]
    %v2594 = vld [vmem:[#allocation10 + $0x148] sm:$0xff]
    %v2595 = vld [vmem:[#allocation10 + $0x150] sm:$0xff]
    %v2596 = vld [vmem:[#allocation10 + $0x158] sm:$0xff]
    %v2597 = vld [vmem:[#allocation10 + $0x160] sm:$0xff]
    %v2598 = vld [vmem:[#allocation10 + $0x168] sm:$0xff]
    %v2599 = vld [vmem:[#allocation10 + $0x170] sm:$0xff]
    %v2600 = vld [vmem:[#allocation10 + $0x178] sm:$0xff]
    %v2601 = vld [vmem:[#allocation10 + $0x180] sm:$0xff]
    %v2602 = vld [vmem:[#allocation10 + $0x188] sm:$0xff]
    %v2603 = vld [vmem:[#allocation10 + $0x190] sm:$0xff]
    %v2604 = vld [vmem:[#allocation10 + $0x198] sm:$0xff]
    %v2605 = vld [vmem:[#allocation10 + $0x1a0] sm:$0xff]
    %v2606 = vld [vmem:[#allocation10 + $0x1a8] sm:$0xff]
    %v2607 = vld [vmem:[#allocation10 + $0x1b0] sm:$0xff]
    %v2608 = vld [vmem:[#allocation10 + $0x1b8] sm:$0xff]
    %v2609 = vld [vmem:[#allocation10 + $0x1c0] sm:$0xff]
    %v2610 = vld [vmem:[#allocation10 + $0x1c8] sm:$0xff]
    %v2611 = vld [vmem:[#allocation10 + $0x1d0] sm:$0xff]
    %v2612 = vld [vmem:[#allocation10 + $0x1d8] sm:$0xff]
    %v2613 = vld [vmem:[#allocation10 + $0x1e0] sm:$0xff]
    %v2614 = vld [vmem:[#allocation10 + $0x1e8] sm:$0xff]
    %v2615 = vld [vmem:[#allocation10 + $0x1f0] sm:$0xff]
    %v2616 = vld [vmem:[#allocation10 + $0x1f8] sm:$0xff]
    %v2617 = vld [vmem:[#allocation10 + $0x200] sm:$0xff]
    %v2618 = vld [vmem:[#allocation10 + $0x208] sm:$0xff]
    %v2619 = vld [vmem:[#allocation10 + $0x210] sm:$0xff]
    %v2620 = vld [vmem:[#allocation10 + $0x218] sm:$0xff]
    %v2621 = vld [vmem:[#allocation10 + $0x220] sm:$0xff]
    %v2622 = vld [vmem:[#allocation10 + $0x228] sm:$0xff]
    %v2623 = vld [vmem:[#allocation10 + $0x230] sm:$0xff]
    %v2624 = vld [vmem:[#allocation10 + $0x238] sm:$0xff]
    %v2625 = vld [vmem:[#allocation10 + $0x240] sm:$0xff]
    %v2626 = vld [vmem:[#allocation10 + $0x248] sm:$0xff]
    %v2627 = vld [vmem:[#allocation10 + $0x250] sm:$0xff]
    %v2628 = vld [vmem:[#allocation10 + $0x258] sm:$0xff]
    %v2629 = vld [vmem:[#allocation10 + $0x260] sm:$0xff]
    %v2630 = vld [vmem:[#allocation10 + $0x268] sm:$0xff]
    %v2631 = vld [vmem:[#allocation10 + $0x270] sm:$0xff]
    %v2632 = vld [vmem:[#allocation10 + $0x278] sm:$0xff]
    %v2633 = vld [vmem:[#allocation10 + $0x280] sm:$0xff]
    %v2634 = vld [vmem:[#allocation10 + $0x288] sm:$0xff]
    %v2635 = vld [vmem:[#allocation10 + $0x290] sm:$0xff]
    %v2636 = vld [vmem:[#allocation10 + $0x298] sm:$0xff]
    %v2637 = vld [vmem:[#allocation10 + $0x2a0] sm:$0xff]
    %v2638 = vld [vmem:[#allocation10 + $0x2a8] sm:$0xff]
    %v2639 = vld [vmem:[#allocation10 + $0x2b0] sm:$0xff]
    %v2640 = vld [vmem:[#allocation10 + $0x2b8] sm:$0xff]
    %v2641 = vld [vmem:[#allocation10 + $0x2c0] sm:$0xff]
    %v2642 = vld [vmem:[#allocation10 + $0x2c8] sm:$0xff]
    %v2643 = vld [vmem:[#allocation10 + $0x2d0] sm:$0xff]
    %v2644 = vld [vmem:[#allocation10 + $0x2d8] sm:$0xff]
    %v2645 = vld [vmem:[#allocation10 + $0x2e0] sm:$0xff]
    %v2646 = vld [vmem:[#allocation10 + $0x2e8] sm:$0xff]
    %v2647 = vld [vmem:[#allocation10 + $0x2f0] sm:$0xff]
    %v2648 = vld [vmem:[#allocation10 + $0x2f8] sm:$0xff]
    %v2649 = vld [vmem:[#allocation10 + $0x300] sm:$0xff]
    %v2650 = vld [vmem:[#allocation10 + $0x308] sm:$0xff]
    %v2651 = vld [vmem:[#allocation10 + $0x310] sm:$0xff]
    %v2652 = vld [vmem:[#allocation10 + $0x318] sm:$0xff]
    %v2653 = vld [vmem:[#allocation10 + $0x320] sm:$0xff]
    %v2654 = vld [vmem:[#allocation10 + $0x328] sm:$0xff]
    %v2655 = vld [vmem:[#allocation10 + $0x330] sm:$0xff]
    %v2656 = vld [vmem:[#allocation10 + $0x338] sm:$0xff]
    %v2657 = vld [vmem:[#allocation10 + $0x340] sm:$0xff]
    %v2658 = vld [vmem:[#allocation10 + $0x348] sm:$0xff]
    %v2659 = vld [vmem:[#allocation10 + $0x350] sm:$0xff]
    %v2660 = vld [vmem:[#allocation10 + $0x358] sm:$0xff]
    %v2661 = vld [vmem:[#allocation10 + $0x360] sm:$0xff]
    %v2662 = vld [vmem:[#allocation10 + $0x368] sm:$0xff]
    %v2663 = vld [vmem:[#allocation10 + $0x370] sm:$0xff]
    %v2664 = vld [vmem:[#allocation10 + $0x378] sm:$0xff]
    %v2665 = vld [vmem:[#allocation10 + $0x380] sm:$0xff]
    %v2666 = vld [vmem:[#allocation10 + $0x388] sm:$0xff]
    %v2667 = vld [vmem:[#allocation10 + $0x390] sm:$0xff]
    %v2668 = vld [vmem:[#allocation10 + $0x398] sm:$0xff]
    %v2669 = vld [vmem:[#allocation10 + $0x3a0] sm:$0xff]
    %v2670 = vld [vmem:[#allocation10 + $0x3a8] sm:$0xff]
    %v2671 = vld [vmem:[#allocation10 + $0x3b0] sm:$0xff]
    %v2672 = vld [vmem:[#allocation10 + $0x3b8] sm:$0xff]
    %v2673 = vld [vmem:[#allocation10 + $0x3c0] sm:$0xff]
    %v2674 = vld [vmem:[#allocation10 + $0x3c8] sm:$0xff]
    %v2675 = vld [vmem:[#allocation10 + $0x3d0] sm:$0xff]
    %v2676 = vld [vmem:[#allocation10 + $0x3d8] sm:$0xff]
    %v2677 = vld [vmem:[#allocation10 + $0x3e0] sm:$0xff]
    %v2678 = vld [vmem:[#allocation10 + $0x3e8] sm:$0xff]
    %v2679 = vld [vmem:[#allocation10 + $0x3f0] sm:$0xff]
    %v2680 = vld [vmem:[#allocation10 + $0x3f8] sm:$0xff]
    %v2681 = vld [vmem:[#allocation10 + $0x400] sm:$0xff]
    %v2682 = vld [vmem:[#allocation10 + $0x408] sm:$0xff]
    %v2683 = vld [vmem:[#allocation10 + $0x410] sm:$0xff]
    %v2684 = vld [vmem:[#allocation10 + $0x418] sm:$0xff]
    %v2685 = vld [vmem:[#allocation10 + $0x420] sm:$0xff]
    %v2686 = vld [vmem:[#allocation10 + $0x428] sm:$0xff]
    %v2687 = vld [vmem:[#allocation10 + $0x430] sm:$0xff]
    %v2688 = vld [vmem:[#allocation10 + $0x438] sm:$0xff]
    %v2689 = vld [vmem:[#allocation10 + $0x440] sm:$0xff]
    %v2690 = vld [vmem:[#allocation10 + $0x448] sm:$0xff]
    %v2691 = vld [vmem:[#allocation10 + $0x450] sm:$0xff]
    %v2692 = vld [vmem:[#allocation10 + $0x458] sm:$0xff]
    %v2693 = vld [vmem:[#allocation10 + $0x460] sm:$0xff]
    %v2694 = vld [vmem:[#allocation10 + $0x468] sm:$0xff]
    %v2695 = vld [vmem:[#allocation10 + $0x470] sm:$0xff]
    %v2696 = vld [vmem:[#allocation10 + $0x478] sm:$0xff]
    %v2697 = vld [vmem:[#allocation10 + $0x480] sm:$0xff]
    %v2698 = vld [vmem:[#allocation10 + $0x488] sm:$0xff]
    %v2699 = vld [vmem:[#allocation10 + $0x490] sm:$0xff]
    %v2700 = vld [vmem:[#allocation10 + $0x498] sm:$0xff]
    %v2701 = vld [vmem:[#allocation10 + $0x4a0] sm:$0xff]
    %v2702 = vld [vmem:[#allocation10 + $0x4a8] sm:$0xff]
    %v2703 = vld [vmem:[#allocation10 + $0x4b0] sm:$0xff]
    %v2704 = vld [vmem:[#allocation10 + $0x4b8] sm:$0xff]
    %v2705 = vld [vmem:[#allocation10 + $0x4c0] sm:$0xff]
    %v2706 = vld [vmem:[#allocation10 + $0x4c8] sm:$0xff]
    %v2707 = vld [vmem:[#allocation10 + $0x4d0] sm:$0xff]
    %v2708 = vld [vmem:[#allocation10 + $0x4d8] sm:$0xff]
    %v2709 = vld [vmem:[#allocation10 + $0x4e0] sm:$0xff]
    %v2710 = vld [vmem:[#allocation10 + $0x4e8] sm:$0xff]
    %v2711 = vld [vmem:[#allocation10 + $0x4f0] sm:$0xff]
    %v2712 = vld [vmem:[#allocation10 + $0x4f8] sm:$0xff]
    %v2713 = vld [vmem:[#allocation10 + $0x500] sm:$0xff]
    %v2714 = vld [vmem:[#allocation10 + $0x508] sm:$0xff]
    %v2715 = vld [vmem:[#allocation10 + $0x510] sm:$0xff]
    %v2716 = vld [vmem:[#allocation10 + $0x518] sm:$0xff]
    %v2717 = vld [vmem:[#allocation10 + $0x520] sm:$0xff]
    %v2718 = vld [vmem:[#allocation10 + $0x528] sm:$0xff]
    %v2719 = vld [vmem:[#allocation10 + $0x530] sm:$0xff]
    %v2720 = vld [vmem:[#allocation10 + $0x538] sm:$0xff]
    %v2721 = vld [vmem:[#allocation10 + $0x540] sm:$0xff]
    %v2722 = vld [vmem:[#allocation10 + $0x548] sm:$0xff]
    %v2723 = vld [vmem:[#allocation10 + $0x550] sm:$0xff]
    %v2724 = vld [vmem:[#allocation10 + $0x558] sm:$0xff]
    %v2725 = vld [vmem:[#allocation10 + $0x560] sm:$0xff]
    %v2726 = vld [vmem:[#allocation10 + $0x568] sm:$0xff]
    %v2727 = vld [vmem:[#allocation10 + $0x570] sm:$0xff]
    %v2728 = vld [vmem:[#allocation10 + $0x578] sm:$0xff]
    %v2729 = vld [vmem:[#allocation10 + $0x580] sm:$0xff]
    %v2730 = vld [vmem:[#allocation10 + $0x588] sm:$0xff]
    %v2731 = vld [vmem:[#allocation10 + $0x590] sm:$0xff]
    %v2732 = vld [vmem:[#allocation10 + $0x598] sm:$0xff]
    %v2733 = vld [vmem:[#allocation10 + $0x5a0] sm:$0xff]
    %v2734 = vld [vmem:[#allocation10 + $0x5a8] sm:$0xff]
    %v2735 = vld [vmem:[#allocation10 + $0x5b0] sm:$0xff]
    %v2736 = vld [vmem:[#allocation10 + $0x5b8] sm:$0xff]
    %v2737 = vld [vmem:[#allocation10 + $0x5c0] sm:$0xff]
    %v2738 = vld [vmem:[#allocation10 + $0x5c8] sm:$0xff]
    %v2739 = vld [vmem:[#allocation10 + $0x5d0] sm:$0xff]
    %v2740 = vld [vmem:[#allocation10 + $0x5d8] sm:$0xff]
    %v2741 = vld [vmem:[#allocation10 + $0x5e0] sm:$0xff]
    %v2742 = vld [vmem:[#allocation10 + $0x5e8] sm:$0xff]
    %v2743 = vld [vmem:[#allocation10 + $0x5f0] sm:$0xff]
    %v2744 = vld [vmem:[#allocation10 + $0x5f8] sm:$0xff]
    %v2745 = vld [vmem:[#allocation10 + $0x600] sm:$0xff]
    %v2746 = vld [vmem:[#allocation10 + $0x608] sm:$0xff]
    %v2747 = vld [vmem:[#allocation10 + $0x610] sm:$0xff]
    %v2748 = vld [vmem:[#allocation10 + $0x618] sm:$0xff]
    %v2749 = vld [vmem:[#allocation10 + $0x620] sm:$0xff]
    %v2750 = vld [vmem:[#allocation10 + $0x628] sm:$0xff]
    %v2751 = vld [vmem:[#allocation10 + $0x630] sm:$0xff]
    %v2752 = vld [vmem:[#allocation10 + $0x638] sm:$0xff]
    %v2753 = vld [vmem:[#allocation10 + $0x640] sm:$0xff]
    %v2754 = vld [vmem:[#allocation10 + $0x648] sm:$0xff]
    %v2755 = vld [vmem:[#allocation10 + $0x650] sm:$0xff]
    %v2756 = vld [vmem:[#allocation10 + $0x658] sm:$0xff]
    %v2757 = vld [vmem:[#allocation10 + $0x660] sm:$0xff]
    %v2758 = vld [vmem:[#allocation10 + $0x668] sm:$0xff]
    %v2759 = vld [vmem:[#allocation10 + $0x670] sm:$0xff]
    %v2760 = vld [vmem:[#allocation10 + $0x678] sm:$0xff]
    %v2761 = vld [vmem:[#allocation10 + $0x680] sm:$0xff]
    %v2762 = vld [vmem:[#allocation10 + $0x688] sm:$0xff]
    %v2763 = vld [vmem:[#allocation10 + $0x690] sm:$0xff]
    %v2764 = vld [vmem:[#allocation10 + $0x698] sm:$0xff]
    %v2765 = vld [vmem:[#allocation10 + $0x6a0] sm:$0xff]
    %v2766 = vld [vmem:[#allocation10 + $0x6a8] sm:$0xff]
    %v2767 = vld [vmem:[#allocation10 + $0x6b0] sm:$0xff]
    %v2768 = vld [vmem:[#allocation10 + $0x6b8] sm:$0xff]
    %v2769 = vld [vmem:[#allocation10 + $0x6c0] sm:$0xff]
    %v2770 = vld [vmem:[#allocation10 + $0x6c8] sm:$0xff]
    %v2771 = vld [vmem:[#allocation10 + $0x6d0] sm:$0xff]
    %v2772 = vld [vmem:[#allocation10 + $0x6d8] sm:$0xff]
    %v2773 = vld [vmem:[#allocation10 + $0x6e0] sm:$0xff]
    %v2774 = vld [vmem:[#allocation10 + $0x6e8] sm:$0xff]
    %v2775 = vld [vmem:[#allocation10 + $0x6f0] sm:$0xff]
    %v2776 = vld [vmem:[#allocation10 + $0x6f8] sm:$0xff]
    %v2777 = vld [vmem:[#allocation10 + $0x700] sm:$0xff]
    %v2778 = vld [vmem:[#allocation10 + $0x708] sm:$0xff]
    %v2779 = vld [vmem:[#allocation10 + $0x710] sm:$0xff]
    %v2780 = vld [vmem:[#allocation10 + $0x718] sm:$0xff]
    %v2781 = vld [vmem:[#allocation10 + $0x720] sm:$0xff]
    %v2782 = vld [vmem:[#allocation10 + $0x728] sm:$0xff]
    %v2783 = vld [vmem:[#allocation10 + $0x730] sm:$0xff]
    %v2784 = vld [vmem:[#allocation10 + $0x738] sm:$0xff]
    %v2785 = vld [vmem:[#allocation10 + $0x740] sm:$0xff]
    %v2786 = vld [vmem:[#allocation10 + $0x748] sm:$0xff]
    %v2787 = vld [vmem:[#allocation10 + $0x750] sm:$0xff]
    %v2788 = vld [vmem:[#allocation10 + $0x758] sm:$0xff]
    %v2789 = vld [vmem:[#allocation10 + $0x760] sm:$0xff]
    %v2790 = vld [vmem:[#allocation10 + $0x768] sm:$0xff]
    %v2791 = vld [vmem:[#allocation10 + $0x770] sm:$0xff]
    %v2792 = vld [vmem:[#allocation10 + $0x778] sm:$0xff]
    %v2793 = vld [vmem:[#allocation10 + $0x780] sm:$0xff]
    %v2794 = vld [vmem:[#allocation10 + $0x788] sm:$0xff]
    %v2795 = vld [vmem:[#allocation10 + $0x790] sm:$0xff]
    %v2796 = vld [vmem:[#allocation10 + $0x798] sm:$0xff]
    %v2797 = vld [vmem:[#allocation10 + $0x7a0] sm:$0xff]
    %v2798 = vld [vmem:[#allocation10 + $0x7a8] sm:$0xff]
    %v2799 = vld [vmem:[#allocation10 + $0x7b0] sm:$0xff]
    %v2800 = vld [vmem:[#allocation10 + $0x7b8] sm:$0xff]
    %v2801 = vld [vmem:[#allocation10 + $0x7c0] sm:$0xff]
    %v2802 = vld [vmem:[#allocation10 + $0x7c8] sm:$0xff]
    %v2803 = vld [vmem:[#allocation10 + $0x7d0] sm:$0xff]
    %v2804 = vld [vmem:[#allocation10 + $0x7d8] sm:$0xff]
    %v2805 = vld [vmem:[#allocation10 + $0x7e0] sm:$0xff]
    %v2806 = vld [vmem:[#allocation10 + $0x7e8] sm:$0xff]
    %v2807 = vld [vmem:[#allocation10 + $0x7f0] sm:$0xff]
    %v2808 = vld [vmem:[#allocation10 + $0x7f8] sm:$0xff]
    %v2809 = vld [vmem:[#allocation4] sm:$0xff]
    %v2810 = vld [vmem:[#allocation4 + $0x8] sm:$0xff]
    %v2811 = vld [vmem:[#allocation4 + $0x10] sm:$0xff]
    %v2812 = vld [vmem:[#allocation4 + $0x18] sm:$0xff]
    %v2813 = vld [vmem:[#allocation4 + $0x20] sm:$0xff]
    %v2814 = vld [vmem:[#allocation4 + $0x28] sm:$0xff]
    %v2815 = vld [vmem:[#allocation4 + $0x30] sm:$0xff]
    %v2816 = vld [vmem:[#allocation4 + $0x38] sm:$0xff]
    %2817 = vmatprep.subr.mxu0 %v2554
    %2818 = vmatpush1.msra.mxu0 %v2553
    %2819 = vmatprep.subr.mxu0 %v2562
    %2820 = vmatpush1.msra.mxu0 %v2561
    %2821 = vmatprep.subr.mxu0 %v2570
    %2822 = vmatpush1.msra.mxu0 %v2569
    %2823 = vmatprep.subr.mxu0 %v2578
    %2824 = vmatpush1.msra.mxu0 %v2577
    %2825 = vmatprep.subr.mxu0 %v2586
    %2826 = vmatpush1.msra.mxu0 %v2585
    %2827 = vmatprep.subr.mxu0 %v2594
    %2828 = vmatpush1.msra.mxu0 %v2593
    %2829 = vmatprep.subr.mxu0 %v2602
    %2830 = vmatpush1.msra.mxu0 %v2601
    %2831 = vmatprep.subr.mxu0 %v2610
    %2832 = vmatpush1.msra.mxu0 %v2609
    %2833 = vmatprep.subr.mxu0 %v2618
    %2834 = vmatpush1.msra.mxu0 %v2617
    %2835 = vmatprep.subr.mxu0 %v2626
    %2836 = vmatpush1.msra.mxu0 %v2625
    %2837 = vmatprep.subr.mxu0 %v2634
    %2838 = vmatpush1.msra.mxu0 %v2633
    %2839 = vmatprep.subr.mxu0 %v2642
    %2840 = vmatpush1.msra.mxu0 %v2641
    %2841 = vmatprep.subr.mxu0 %v2650
    %2842 = vmatpush1.msra.mxu0 %v2649
    %2843 = vmatprep.subr.mxu0 %v2658
    %2844 = vmatpush1.msra.mxu0 %v2657
    %2845 = vmatprep.subr.mxu0 %v2666
    %2846 = vmatpush1.msra.mxu0 %v2665
    %2847 = vmatprep.subr.mxu0 %v2674
    %2848 = vmatpush1.msra.mxu0 %v2673
    %2849 = vmatprep.subr.mxu0 %v2682
    %2850 = vmatpush1.msra.mxu0 %v2681
    %2851 = vmatprep.subr.mxu0 %v2690
    %2852 = vmatpush1.msra.mxu0 %v2689
    %2853 = vmatprep.subr.mxu0 %v2698
    %2854 = vmatpush1.msra.mxu0 %v2697
    %2855 = vmatprep.subr.mxu0 %v2706
    %2856 = vmatpush1.msra.mxu0 %v2705
    %2857 = vmatprep.subr.mxu0 %v2714
    %2858 = vmatpush1.msra.mxu0 %v2713
    %2859 = vmatprep.subr.mxu0 %v2722
    %2860 = vmatpush1.msra.mxu0 %v2721
    %2861 = vmatprep.subr.mxu0 %v2730
    %2862 = vmatpush1.msra.mxu0 %v2729
    %2863 = vmatprep.subr.mxu0 %v2738
    %2864 = vmatpush1.msra.mxu0 %v2737
    %2865 = vmatprep.subr.mxu0 %v2746
    %2866 = vmatpush1.msra.mxu0 %v2745
    %2867 = vmatprep.subr.mxu0 %v2754
    %2868 = vmatpush1.msra.mxu0 %v2753
    %2869 = vmatprep.subr.mxu0 %v2762
    %2870 = vmatpush1.msra.mxu0 %v2761
    %2871 = vmatprep.subr.mxu0 %v2770
    %2872 = vmatpush1.msra.mxu0 %v2769
    %2873 = vmatprep.subr.mxu0 %v2778
    %2874 = vmatpush1.msra.mxu0 %v2777
    %2875 = vmatprep.subr.mxu0 %v2786
    %2876 = vmatpush1.msra.mxu0 %v2785
    %2877 = vmatprep.subr.mxu0 %v2794
    %2878 = vmatpush1.msra.mxu0 %v2793
    %2879 = vmatprep.subr.mxu0 %v2802
    %2880 = vmatpush1.msra.mxu0 %v2801
    %2881 = vmatprep.mubr.f32.mxu0 0.0
    %2882 = vmatmul.mubr.f32.gmra.mrb[0].mxu0 0.0
    %v2883 = vpop.f32.mrb[0].mxu0
    %v2884 = vadd.f32 0.0, %v2883
    %v2885 = vpop.f32.mrb[0].mxu0
    %v2886 = vadd.f32 0.0, %v2885
    %2887 = vdwg.mxu0
    %2888 = vmatprep.subr.mxu0 %v2556
    %2889 = vmatpush1.msra.mxu0 %v2555
    %2890 = vmatprep.subr.mxu0 %v2564
    %2891 = vmatpush1.msra.mxu0 %v2563
    %2892 = vmatprep.subr.mxu0 %v2572
    %2893 = vmatpush1.msra.mxu0 %v2571
    %2894 = vmatprep.subr.mxu0 %v2580
    %2895 = vmatpush1.msra.mxu0 %v2579
    %2896 = vmatprep.subr.mxu0 %v2588
    %2897 = vmatpush1.msra.mxu0 %v2587
    %2898 = vmatprep.subr.mxu0 %v2596
    %2899 = vmatpush1.msra.mxu0 %v2595
    %2900 = vmatprep.subr.mxu0 %v2604
    %2901 = vmatpush1.msra.mxu0 %v2603
    %2902 = vmatprep.subr.mxu0 %v2612
    %2903 = vmatpush1.msra.mxu0 %v2611
    %2904 = vmatprep.subr.mxu0 %v2620
    %2905 = vmatpush1.msra.mxu0 %v2619
    %2906 = vmatprep.subr.mxu0 %v2628
    %2907 = vmatpush1.msra.mxu0 %v2627
    %2908 = vmatprep.subr.mxu0 %v2636
    %2909 = vmatpush1.msra.mxu0 %v2635
    %2910 = vmatprep.subr.mxu0 %v2644
    %2911 = vmatpush1.msra.mxu0 %v2643
    %2912 = vmatprep.subr.mxu0 %v2652
    %2913 = vmatpush1.msra.mxu0 %v2651
    %2914 = vmatprep.subr.mxu0 %v2660
    %2915 = vmatpush1.msra.mxu0 %v2659
    %2916 = vmatprep.subr.mxu0 %v2668
    %2917 = vmatpush1.msra.mxu0 %v2667
    %2918 = vmatprep.subr.mxu0 %v2676
    %2919 = vmatpush1.msra.mxu0 %v2675
    %2920 = vmatprep.subr.mxu0 %v2684
    %2921 = vmatpush1.msra.mxu0 %v2683
    %2922 = vmatprep.subr.mxu0 %v2692
    %2923 = vmatpush1.msra.mxu0 %v2691
    %2924 = vmatprep.subr.mxu0 %v2700
    %2925 = vmatpush1.msra.mxu0 %v2699
    %2926 = vmatprep.subr.mxu0 %v2708
    %2927 = vmatpush1.msra.mxu0 %v2707
    %2928 = vmatprep.subr.mxu0 %v2716
    %2929 = vmatpush1.msra.mxu0 %v2715
    %2930 = vmatprep.subr.mxu0 %v2724
    %2931 = vmatpush1.msra.mxu0 %v2723
    %2932 = vmatprep.subr.mxu0 %v2732
    %2933 = vmatpush1.msra.mxu0 %v2731
    %2934 = vmatprep.subr.mxu0 %v2740
    %2935 = vmatpush1.msra.mxu0 %v2739
    %2936 = vmatprep.subr.mxu0 %v2748
    %2937 = vmatpush1.msra.mxu0 %v2747
    %2938 = vmatprep.subr.mxu0 %v2756
    %2939 = vmatpush1.msra.mxu0 %v2755
    %2940 = vmatprep.subr.mxu0 %v2764
    %2941 = vmatpush1.msra.mxu0 %v2763
    %2942 = vmatprep.subr.mxu0 %v2772
    %2943 = vmatpush1.msra.mxu0 %v2771
    %2944 = vmatprep.subr.mxu0 %v2780
    %2945 = vmatpush1.msra.mxu0 %v2779
    %2946 = vmatprep.subr.mxu0 %v2788
    %2947 = vmatpush1.msra.mxu0 %v2787
    %2948 = vmatprep.subr.mxu0 %v2796
    %2949 = vmatpush1.msra.mxu0 %v2795
    %2950 = vmatprep.subr.mxu0 %v2804
    %2951 = vmatpush1.msra.mxu0 %v2803
    %2952 = vmatprep.mubr.f32.mxu0 0.0
    %2953 = vmatmul.mubr.f32.gmra.mrb[0].mxu0 0.0
    %v2954 = vpop.f32.mrb[0].mxu0
    %v2955 = vadd.f32 0.0, %v2954
    %v2956 = vpop.f32.mrb[0].mxu0
    %v2957 = vadd.f32 0.0, %v2956
    %2958 = vdwg.mxu0
    %2959 = vmatprep.subr.mxu0 %v2558
    %2960 = vmatpush1.msra.mxu0 %v2557
    %2961 = vmatprep.subr.mxu0 %v2566
    %2962 = vmatpush1.msra.mxu0 %v2565
    %2963 = vmatprep.subr.mxu0 %v2574
    %2964 = vmatpush1.msra.mxu0 %v2573
    %2965 = vmatprep.subr.mxu0 %v2582
    %2966 = vmatpush1.msra.mxu0 %v2581
    %2967 = vmatprep.subr.mxu0 %v2590
    %2968 = vmatpush1.msra.mxu0 %v2589
    %2969 = vmatprep.subr.mxu0 %v2598
    %2970 = vmatpush1.msra.mxu0 %v2597
    %2971 = vmatprep.subr.mxu0 %v2606
    %2972 = vmatpush1.msra.mxu0 %v2605
    %2973 = vmatprep.subr.mxu0 %v2614
    %2974 = vmatpush1.msra.mxu0 %v2613
    %2975 = vmatprep.subr.mxu0 %v2622
    %2976 = vmatpush1.msra.mxu0 %v2621
    %2977 = vmatprep.subr.mxu0 %v2630
    %2978 = vmatpush1.msra.mxu0 %v2629
    %2979 = vmatprep.subr.mxu0 %v2638
    %2980 = vmatpush1.msra.mxu0 %v2637
    %2981 = vmatprep.subr.mxu0 %v2646
    %2982 = vmatpush1.msra.mxu0 %v2645
    %2983 = vmatprep.subr.mxu0 %v2654
    %2984 = vmatpush1.msra.mxu0 %v2653
    %2985 = vmatprep.subr.mxu0 %v2662
    %2986 = vmatpush1.msra.mxu0 %v2661
    %2987 = vmatprep.subr.mxu0 %v2670
    %2988 = vmatpush1.msra.mxu0 %v2669
    %2989 = vmatprep.subr.mxu0 %v2678
    %2990 = vmatpush1.msra.mxu0 %v2677
    %2991 = vmatprep.subr.mxu0 %v2686
    %2992 = vmatpush1.msra.mxu0 %v2685
    %2993 = vmatprep.subr.mxu0 %v2694
    %2994 = vmatpush1.msra.mxu0 %v2693
    %2995 = vmatprep.subr.mxu0 %v2702
    %2996 = vmatpush1.msra.mxu0 %v2701
    %2997 = vmatprep.subr.mxu0 %v2710
    %2998 = vmatpush1.msra.mxu0 %v2709
    %2999 = vmatprep.subr.mxu0 %v2718
    %3000 = vmatpush1.msra.mxu0 %v2717
    %3001 = vmatprep.subr.mxu0 %v2726
    %3002 = vmatpush1.msra.mxu0 %v2725
    %3003 = vmatprep.subr.mxu0 %v2734
    %3004 = vmatpush1.msra.mxu0 %v2733
    %3005 = vmatprep.subr.mxu0 %v2742
    %3006 = vmatpush1.msra.mxu0 %v2741
    %3007 = vmatprep.subr.mxu0 %v2750
    %3008 = vmatpush1.msra.mxu0 %v2749
    %3009 = vmatprep.subr.mxu0 %v2758
    %3010 = vmatpush1.msra.mxu0 %v2757
    %3011 = vmatprep.subr.mxu0 %v2766
    %3012 = vmatpush1.msra.mxu0 %v2765
    %3013 = vmatprep.subr.mxu0 %v2774
    %3014 = vmatpush1.msra.mxu0 %v2773
    %3015 = vmatprep.subr.mxu0 %v2782
    %3016 = vmatpush1.msra.mxu0 %v2781
    %3017 = vmatprep.subr.mxu0 %v2790
    %3018 = vmatpush1.msra.mxu0 %v2789
    %3019 = vmatprep.subr.mxu0 %v2798
    %3020 = vmatpush1.msra.mxu0 %v2797
    %3021 = vmatprep.subr.mxu0 %v2806
    %3022 = vmatpush1.msra.mxu0 %v2805
    %3023 = vmatprep.mubr.f32.mxu0 0.0
    %3024 = vmatmul.mubr.f32.gmra.mrb[0].mxu0 0.0
    %v3025 = vpop.f32.mrb[0].mxu0
    %v3026 = vadd.f32 0.0, %v3025
    %v3027 = vpop.f32.mrb[0].mxu0
    %v3028 = vadd.f32 0.0, %v3027
    %3029 = vdwg.mxu0
    %3030 = vmatprep.subr.mxu0 %v2560
    %3031 = vmatpush1.msra.mxu0 %v2559
    %3032 = vmatprep.subr.mxu0 %v2568
    %3033 = vmatpush1.msra.mxu0 %v2567
    %3034 = vmatprep.subr.mxu0 %v2576
    %3035 = vmatpush1.msra.mxu0 %v2575
    %3036 = vmatprep.subr.mxu0 %v2584
    %3037 = vmatpush1.msra.mxu0 %v2583
    %3038 = vmatprep.subr.mxu0 %v2592
    %3039 = vmatpush1.msra.mxu0 %v2591
    %3040 = vmatprep.subr.mxu0 %v2600
    %3041 = vmatpush1.msra.mxu0 %v2599
    %3042 = vmatprep.subr.mxu0 %v2608
    %3043 = vmatpush1.msra.mxu0 %v2607
    %3044 = vmatprep.subr.mxu0 %v2616
    %3045 = vmatpush1.msra.mxu0 %v2615
    %3046 = vmatprep.subr.mxu0 %v2624
    %3047 = vmatpush1.msra.mxu0 %v2623
    %3048 = vmatprep.subr.mxu0 %v2632
    %3049 = vmatpush1.msra.mxu0 %v2631
    %3050 = vmatprep.subr.mxu0 %v2640
    %3051 = vmatpush1.msra.mxu0 %v2639
    %3052 = vmatprep.subr.mxu0 %v2648
    %3053 = vmatpush1.msra.mxu0 %v2647
    %3054 = vmatprep.subr.mxu0 %v2656
    %3055 = vmatpush1.msra.mxu0 %v2655
    %3056 = vmatprep.subr.mxu0 %v2664
    %3057 = vmatpush1.msra.mxu0 %v2663
    %3058 = vmatprep.subr.mxu0 %v2672
    %3059 = vmatpush1.msra.mxu0 %v2671
    %3060 = vmatprep.subr.mxu0 %v2680
    %3061 = vmatpush1.msra.mxu0 %v2679
    %3062 = vmatprep.subr.mxu0 %v2688
    %3063 = vmatpush1.msra.mxu0 %v2687
    %3064 = vmatprep.subr.mxu0 %v2696
    %3065 = vmatpush1.msra.mxu0 %v2695
    %3066 = vmatprep.subr.mxu0 %v2704
    %3067 = vmatpush1.msra.mxu0 %v2703
    %3068 = vmatprep.subr.mxu0 %v2712
    %3069 = vmatpush1.msra.mxu0 %v2711
    %3070 = vmatprep.subr.mxu0 %v2720
    %3071 = vmatpush1.msra.mxu0 %v2719
    %3072 = vmatprep.subr.mxu0 %v2728
    %3073 = vmatpush1.msra.mxu0 %v2727
    %3074 = vmatprep.subr.mxu0 %v2736
    %3075 = vmatpush1.msra.mxu0 %v2735
    %3076 = vmatprep.subr.mxu0 %v2744
    %3077 = vmatpush1.msra.mxu0 %v2743
    %3078 = vmatprep.subr.mxu0 %v2752
    %3079 = vmatpush1.msra.mxu0 %v2751
    %3080 = vmatprep.subr.mxu0 %v2760
    %3081 = vmatpush1.msra.mxu0 %v2759
    %3082 = vmatprep.subr.mxu0 %v2768
    %3083 = vmatpush1.msra.mxu0 %v2767
    %3084 = vmatprep.subr.mxu0 %v2776
    %3085 = vmatpush1.msra.mxu0 %v2775
    %3086 = vmatprep.subr.mxu0 %v2784
    %3087 = vmatpush1.msra.mxu0 %v2783
    %3088 = vmatprep.subr.mxu0 %v2792
    %3089 = vmatpush1.msra.mxu0 %v2791
    %3090 = vmatprep.subr.mxu0 %v2800
    %3091 = vmatpush1.msra.mxu0 %v2799
    %3092 = vmatprep.subr.mxu0 %v2808
    %3093 = vmatpush1.msra.mxu0 %v2807
    %3094 = vmatprep.mubr.f32.mxu0 0.0
    %3095 = vmatmul.mubr.f32.gmra.mrb[0].mxu0 0.0
    %v3096 = vpop.f32.mrb[0].mxu0
    %v3097 = vadd.f32 0.0, %v3096
    %v3098 = vpop.f32.mrb[0].mxu0
    %v3099 = vadd.f32 0.0, %v3098
    %3100 = vdwg.mxu0
    %v3101 = vadd.f32 %v2809, %v2884
    %v3102 = vadd.f32 %v2810, %v2886
    %v3103 = vadd.f32 %v2811, %v2955
    %v3104 = vadd.f32 %v2812, %v2957
    %v3105 = vadd.f32 %v2813, %v3026
    %v3106 = vadd.f32 %v2814, %v3028
    %v3107 = vadd.f32 %v2815, %v3097
    %v3108 = vadd.f32 %v2816, %v3099
    %v3109 = vxor.u32 %v3101, 2147483648
    %v3110 = vxor.u32 %v3102, 2147483648
    %v3111 = vmul.f32 %v3109, 1.442695
    %v3112 = vpow.pop %v3111
    %v3113 = vmul.f32 %v3110, 1.442695
    %v3114 = vpow.pop %v3113
    %v3115 = vadd.f32 %v3112, 1.0
    %v3116 = vadd.f32 %v3114, 1.0
    %v3117 = vrcp.pop %v3115
    %v3118 = vmul.f32 1.0, %v3117
    %v3119 = vrcp.pop %v3116
    %v3120 = vmul.f32 1.0, %v3119
    %v3121 = vxor.u32 %v3103, 2147483648
    %v3122 = vxor.u32 %v3104, 2147483648
    %v3123 = vmul.f32 %v3121, 1.442695
    %v3124 = vpow.pop %v3123
    %v3125 = vmul.f32 %v3122, 1.442695
    %v3126 = vpow.pop %v3125
    %v3127 = vadd.f32 %v3124, 1.0
    %v3128 = vadd.f32 %v3126, 1.0
    %v3129 = vrcp.pop %v3127
    %v3130 = vmul.f32 1.0, %v3129
    %v3131 = vrcp.pop %v3128
    %v3132 = vmul.f32 1.0, %v3131
    %v3133 = vtanh.pop %v3105
    %v3134 = vtanh.pop %v3106
    %v3135 = vxor.u32 %v3107, 2147483648
    %v3136 = vxor.u32 %v3108, 2147483648
    %v3137 = vmul.f32 %v3135, 1.442695
    %v3138 = vpow.pop %v3137
    %v3139 = vmul.f32 %v3136, 1.442695
    %v3140 = vpow.pop %v3139
    %v3141 = vadd.f32 %v3138, 1.0
    %v3142 = vadd.f32 %v3140, 1.0
    %v3143 = vrcp.pop %v3141
    %v3144 = vmul.f32 1.0, %v3143
    %v3145 = vrcp.pop %v3142
    %v3146 = vmul.f32 1.0, %v3145
    %v3147 = vmul.f32 %v3130, 0.0
    %v3148 = vmul.f32 %v3132, 0.0
    %v3149 = vmul.f32 %v3118, %v3133
    %v3150 = vmul.f32 %v3120, %v3134
    %v3151 = vadd.f32 %v3147, %v3149
    %v3152 = vadd.f32 %v3148, %v3150
    %v3153 = vtanh.pop %v3151
    %v3154 = vtanh.pop %v3152
    %v3155 = vmul.f32 %v3144, %v3153
    %v3156 = vmul.f32 %v3146, %v3154
    %v3157 = vld [vmem:[#allocation4 + $0x40] sm:$0xff]
    %v3158 = vld [vmem:[#allocation4 + $0x48] sm:$0xff]
    %v3159 = vld [vmem:[#allocation4 + $0x50] sm:$0xff]
    %v3160 = vld [vmem:[#allocation4 + $0x58] sm:$0xff]
    %v3161 = vld [vmem:[#allocation4 + $0x60] sm:$0xff]
    %v3162 = vld [vmem:[#allocation4 + $0x68] sm:$0xff]
    %v3163 = vld [vmem:[#allocation4 + $0x70] sm:$0xff]
    %v3164 = vld [vmem:[#allocation4 + $0x78] sm:$0xff]
    %3165 = vmatprep.subr.mxu0 %v2554
    %3166 = vmatpush1.msra.mxu0 %v2553
    %3167 = vmatprep.subr.mxu0 %v2562
    %3168 = vmatpush1.msra.mxu0 %v2561
    %3169 = vmatprep.subr.mxu0 %v2570
    %3170 = vmatpush1.msra.mxu0 %v2569
    %3171 = vmatprep.subr.mxu0 %v2578
    %3172 = vmatpush1.msra.mxu0 %v2577
    %3173 = vmatprep.subr.mxu0 %v2586
    %3174 = vmatpush1.msra.mxu0 %v2585
    %3175 = vmatprep.subr.mxu0 %v2594
    %3176 = vmatpush1.msra.mxu0 %v2593
    %3177 = vmatprep.subr.mxu0 %v2602
    %3178 = vmatpush1.msra.mxu0 %v2601
    %3179 = vmatprep.subr.mxu0 %v2610
    %3180 = vmatpush1.msra.mxu0 %v2609
    %3181 = vmatprep.subr.mxu0 %v2618
    %3182 = vmatpush1.msra.mxu0 %v2617
    %3183 = vmatprep.subr.mxu0 %v2626
    %3184 = vmatpush1.msra.mxu0 %v2625
    %3185 = vmatprep.subr.mxu0 %v2634
    %3186 = vmatpush1.msra.mxu0 %v2633
    %3187 = vmatprep.subr.mxu0 %v2642
    %3188 = vmatpush1.msra.mxu0 %v2641
    %3189 = vmatprep.subr.mxu0 %v2650
    %3190 = vmatpush1.msra.mxu0 %v2649
    %3191 = vmatprep.subr.mxu0 %v2658
    %3192 = vmatpush1.msra.mxu0 %v2657
    %3193 = vmatprep.subr.mxu0 %v2666
    %3194 = vmatpush1.msra.mxu0 %v2665
    %3195 = vmatprep.subr.mxu0 %v2674
    %3196 = vmatpush1.msra.mxu0 %v2673
    %3197 = vmatprep.subr.mxu0 %v2682
    %3198 = vmatpush1.msra.mxu0 %v2681
    %3199 = vmatprep.subr.mxu0 %v2690
    %3200 = vmatpush1.msra.mxu0 %v2689
    %3201 = vmatprep.subr.mxu0 %v2698
    %3202 = vmatpush1.msra.mxu0 %v2697
    %3203 = vmatprep.subr.mxu0 %v2706
    %3204 = vmatpush1.msra.mxu0 %v2705
    %3205 = vmatprep.subr.mxu0 %v2714
    %3206 = vmatpush1.msra.mxu0 %v2713
    %3207 = vmatprep.subr.mxu0 %v2722
    %3208 = vmatpush1.msra.mxu0 %v2721
    %3209 = vmatprep.subr.mxu0 %v2730
    %3210 = vmatpush1.msra.mxu0 %v2729
    %3211 = vmatprep.subr.mxu0 %v2738
    %3212 = vmatpush1.msra.mxu0 %v2737
    %3213 = vmatprep.subr.mxu0 %v2746
    %3214 = vmatpush1.msra.mxu0 %v2745
    %3215 = vmatprep.subr.mxu0 %v2754
    %3216 = vmatpush1.msra.mxu0 %v2753
    %3217 = vmatprep.subr.mxu0 %v2762
    %3218 = vmatpush1.msra.mxu0 %v2761
    %3219 = vmatprep.subr.mxu0 %v2770
    %3220 = vmatpush1.msra.mxu0 %v2769
    %3221 = vmatprep.subr.mxu0 %v2778
    %3222 = vmatpush1.msra.mxu0 %v2777
    %3223 = vmatprep.subr.mxu0 %v2786
    %3224 = vmatpush1.msra.mxu0 %v2785
    %3225 = vmatprep.subr.mxu0 %v2794
    %3226 = vmatpush1.msra.mxu0 %v2793
    %3227 = vmatprep.subr.mxu0 %v2802
    %3228 = vmatpush1.msra.mxu0 %v2801
    %3229 = vmatprep.mubr.f32.mxu0 %v3156
    %3230 = vmatmul.mubr.f32.gmra.mrb[0].mxu0 %v3155
    %v3231 = vpop.f32.mrb[0].mxu0
    %v3232 = vadd.f32 0.0, %v3231
    %v3233 = vpop.f32.mrb[0].mxu0
    %v3234 = vadd.f32 0.0, %v3233
    %3235 = vdwg.mxu0
    %3236 = vmatprep.subr.mxu0 %v2556
    %3237 = vmatpush1.msra.mxu0 %v2555
    %3238 = vmatprep.subr.mxu0 %v2564
    %3239 = vmatpush1.msra.mxu0 %v2563
    %3240 = vmatprep.subr.mxu0 %v2572
    %3241 = vmatpush1.msra.mxu0 %v2571
    %3242 = vmatprep.subr.mxu0 %v2580
    %3243 = vmatpush1.msra.mxu0 %v2579
    %3244 = vmatprep.subr.mxu0 %v2588
    %3245 = vmatpush1.msra.mxu0 %v2587
    %3246 = vmatprep.subr.mxu0 %v2596
    %3247 = vmatpush1.msra.mxu0 %v2595
    %3248 = vmatprep.subr.mxu0 %v2604
    %3249 = vmatpush1.msra.mxu0 %v2603
    %3250 = vmatprep.subr.mxu0 %v2612
    %3251 = vmatpush1.msra.mxu0 %v2611
    %3252 = vmatprep.subr.mxu0 %v2620
    %3253 = vmatpush1.msra.mxu0 %v2619
    %3254 = vmatprep.subr.mxu0 %v2628
    %3255 = vmatpush1.msra.mxu0 %v2627
    %3256 = vmatprep.subr.mxu0 %v2636
    %3257 = vmatpush1.msra.mxu0 %v2635
    %3258 = vmatprep.subr.mxu0 %v2644
    %3259 = vmatpush1.msra.mxu0 %v2643
    %3260 = vmatprep.subr.mxu0 %v2652
    %3261 = vmatpush1.msra.mxu0 %v2651
    %3262 = vmatprep.subr.mxu0 %v2660
    %3263 = vmatpush1.msra.mxu0 %v2659
    %3264 = vmatprep.subr.mxu0 %v2668
    %3265 = vmatpush1.msra.mxu0 %v2667
    %3266 = vmatprep.subr.mxu0 %v2676
    %3267 = vmatpush1.msra.mxu0 %v2675
    %3268 = vmatprep.subr.mxu0 %v2684
    %3269 = vmatpush1.msra.mxu0 %v2683
    %3270 = vmatprep.subr.mxu0 %v2692
    %3271 = vmatpush1.msra.mxu0 %v2691
    %3272 = vmatprep.subr.mxu0 %v2700
    %3273 = vmatpush1.msra.mxu0 %v2699
    %3274 = vmatprep.subr.mxu0 %v2708
    %3275 = vmatpush1.msra.mxu0 %v2707
    %3276 = vmatprep.subr.mxu0 %v2716
    %3277 = vmatpush1.msra.mxu0 %v2715
    %3278 = vmatprep.subr.mxu0 %v2724
    %3279 = vmatpush1.msra.mxu0 %v2723
    %3280 = vmatprep.subr.mxu0 %v2732
    %3281 = vmatpush1.msra.mxu0 %v2731
    %3282 = vmatprep.subr.mxu0 %v2740
    %3283 = vmatpush1.msra.mxu0 %v2739
    %3284 = vmatprep.subr.mxu0 %v2748
    %3285 = vmatpush1.msra.mxu0 %v2747
    %3286 = vmatprep.subr.mxu0 %v2756
    %3287 = vmatpush1.msra.mxu0 %v2755
    %3288 = vmatprep.subr.mxu0 %v2764
    %3289 = vmatpush1.msra.mxu0 %v2763
    %3290 = vmatprep.subr.mxu0 %v2772
    %3291 = vmatpush1.msra.mxu0 %v2771
    %3292 = vmatprep.subr.mxu0 %v2780
    %3293 = vmatpush1.msra.mxu0 %v2779
    %3294 = vmatprep.subr.mxu0 %v2788
    %3295 = vmatpush1.msra.mxu0 %v2787
    %3296 = vmatprep.subr.mxu0 %v2796
    %3297 = vmatpush1.msra.mxu0 %v2795
    %3298 = vmatprep.subr.mxu0 %v2804
    %3299 = vmatpush1.msra.mxu0 %v2803
    %3300 = vmatprep.mubr.f32.mxu0 %v3156
    %3301 = vmatmul.mubr.f32.gmra.mrb[0].mxu0 %v3155
    %v3302 = vpop.f32.mrb[0].mxu0
    %v3303 = vadd.f32 0.0, %v3302
    %v3304 = vpop.f32.mrb[0].mxu0
    %v3305 = vadd.f32 0.0, %v3304
    %3306 = vdwg.mxu0
    %3307 = vmatprep.subr.mxu0 %v2558
    %3308 = vmatpush1.msra.mxu0 %v2557
    %3309 = vmatprep.subr.mxu0 %v2566
    %3310 = vmatpush1.msra.mxu0 %v2565
    %3311 = vmatprep.subr.mxu0 %v2574
    %3312 = vmatpush1.msra.mxu0 %v2573
    %3313 = vmatprep.subr.mxu0 %v2582
    %3314 = vmatpush1.msra.mxu0 %v2581
    %3315 = vmatprep.subr.mxu0 %v2590
    %3316 = vmatpush1.msra.mxu0 %v2589
    %3317 = vmatprep.subr.mxu0 %v2598
    %3318 = vmatpush1.msra.mxu0 %v2597
    %3319 = vmatprep.subr.mxu0 %v2606
    %3320 = vmatpush1.msra.mxu0 %v2605
    %3321 = vmatprep.subr.mxu0 %v2614
    %3322 = vmatpush1.msra.mxu0 %v2613
    %3323 = vmatprep.subr.mxu0 %v2622
    %3324 = vmatpush1.msra.mxu0 %v2621
    %3325 = vmatprep.subr.mxu0 %v2630
    %3326 = vmatpush1.msra.mxu0 %v2629
    %3327 = vmatprep.subr.mxu0 %v2638
    %3328 = vmatpush1.msra.mxu0 %v2637
    %3329 = vmatprep.subr.mxu0 %v2646
    %3330 = vmatpush1.msra.mxu0 %v2645
    %3331 = vmatprep.subr.mxu0 %v2654
    %3332 = vmatpush1.msra.mxu0 %v2653
    %3333 = vmatprep.subr.mxu0 %v2662
    %3334 = vmatpush1.msra.mxu0 %v2661
    %3335 = vmatprep.subr.mxu0 %v2670
    %3336 = vmatpush1.msra.mxu0 %v2669
    %3337 = vmatprep.subr.mxu0 %v2678
    %3338 = vmatpush1.msra.mxu0 %v2677
    %3339 = vmatprep.subr.mxu0 %v2686
    %3340 = vmatpush1.msra.mxu0 %v2685
    %3341 = vmatprep.subr.mxu0 %v2694
    %3342 = vmatpush1.msra.mxu0 %v2693
    %3343 = vmatprep.subr.mxu0 %v2702
    %3344 = vmatpush1.msra.mxu0 %v2701
    %3345 = vmatprep.subr.mxu0 %v2710
    %3346 = vmatpush1.msra.mxu0 %v2709
    %3347 = vmatprep.subr.mxu0 %v2718
    %3348 = vmatpush1.msra.mxu0 %v2717
    %3349 = vmatprep.subr.mxu0 %v2726
    %3350 = vmatpush1.msra.mxu0 %v2725
    %3351 = vmatprep.subr.mxu0 %v2734
    %3352 = vmatpush1.msra.mxu0 %v2733
    %3353 = vmatprep.subr.mxu0 %v2742
    %3354 = vmatpush1.msra.mxu0 %v2741
    %3355 = vmatprep.subr.mxu0 %v2750
    %3356 = vmatpush1.msra.mxu0 %v2749
    %3357 = vmatprep.subr.mxu0 %v2758
    %3358 = vmatpush1.msra.mxu0 %v2757
    %3359 = vmatprep.subr.mxu0 %v2766
    %3360 = vmatpush1.msra.mxu0 %v2765
    %3361 = vmatprep.subr.mxu0 %v2774
    %3362 = vmatpush1.msra.mxu0 %v2773
    %3363 = vmatprep.subr.mxu0 %v2782
    %3364 = vmatpush1.msra.mxu0 %v2781
    %3365 = vmatprep.subr.mxu0 %v2790
    %3366 = vmatpush1.msra.mxu0 %v2789
    %3367 = vmatprep.subr.mxu0 %v2798
    %3368 = vmatpush1.msra.mxu0 %v2797
    %3369 = vmatprep.subr.mxu0 %v2806
    %3370 = vmatpush1.msra.mxu0 %v2805
    %3371 = vmatprep.mubr.f32.mxu0 %v3156
    %3372 = vmatmul.mubr.f32.gmra.mrb[0].mxu0 %v3155
    %v3373 = vpop.f32.mrb[0].mxu0
    %v3374 = vadd.f32 0.0, %v3373
    %v3375 = vpop.f32.mrb[0].mxu0
    %v3376 = vadd.f32 0.0, %v3375
    %3377 = vdwg.mxu0
    %3378 = vmatprep.subr.mxu0 %v2560
    %3379 = vmatpush1.msra.mxu0 %v2559
    %3380 = vmatprep.subr.mxu0 %v2568
    %3381 = vmatpush1.msra.mxu0 %v2567
    %3382 = vmatprep.subr.mxu0 %v2576
    %3383 = vmatpush1.msra.mxu0 %v2575
    %3384 = vmatprep.subr.mxu0 %v2584
    %3385 = vmatpush1.msra.mxu0 %v2583
    %3386 = vmatprep.subr.mxu0 %v2592
    %3387 = vmatpush1.msra.mxu0 %v2591
    %3388 = vmatprep.subr.mxu0 %v2600
    %3389 = vmatpush1.msra.mxu0 %v2599
    %3390 = vmatprep.subr.mxu0 %v2608
    %3391 = vmatpush1.msra.mxu0 %v2607
    %3392 = vmatprep.subr.mxu0 %v2616
    %3393 = vmatpush1.msra.mxu0 %v2615
    %3394 = vmatprep.subr.mxu0 %v2624
    %3395 = vmatpush1.msra.mxu0 %v2623
    %3396 = vmatprep.subr.mxu0 %v2632
    %3397 = vmatpush1.msra.mxu0 %v2631
    %3398 = vmatprep.subr.mxu0 %v2640
    %3399 = vmatpush1.msra.mxu0 %v2639
    %3400 = vmatprep.subr.mxu0 %v2648
    %3401 = vmatpush1.msra.mxu0 %v2647
    %3402 = vmatprep.subr.mxu0 %v2656
    %3403 = vmatpush1.msra.mxu0 %v2655
    %3404 = vmatprep.subr.mxu0 %v2664
    %3405 = vmatpush1.msra.mxu0 %v2663
    %3406 = vmatprep.subr.mxu0 %v2672
    %3407 = vmatpush1.msra.mxu0 %v2671
    %3408 = vmatprep.subr.mxu0 %v2680
    %3409 = vmatpush1.msra.mxu0 %v2679
    %3410 = vmatprep.subr.mxu0 %v2688
    %3411 = vmatpush1.msra.mxu0 %v2687
    %3412 = vmatprep.subr.mxu0 %v2696
    %3413 = vmatpush1.msra.mxu0 %v2695
    %3414 = vmatprep.subr.mxu0 %v2704
    %3415 = vmatpush1.msra.mxu0 %v2703
    %3416 = vmatprep.subr.mxu0 %v2712
    %3417 = vmatpush1.msra.mxu0 %v2711
    %3418 = vmatprep.subr.mxu0 %v2720
    %3419 = vmatpush1.msra.mxu0 %v2719
    %3420 = vmatprep.subr.mxu0 %v2728
    %3421 = vmatpush1.msra.mxu0 %v2727
    %3422 = vmatprep.subr.mxu0 %v2736
    %3423 = vmatpush1.msra.mxu0 %v2735
    %3424 = vmatprep.subr.mxu0 %v2744
    %3425 = vmatpush1.msra.mxu0 %v2743
    %3426 = vmatprep.subr.mxu0 %v2752
    %3427 = vmatpush1.msra.mxu0 %v2751
    %3428 = vmatprep.subr.mxu0 %v2760
    %3429 = vmatpush1.msra.mxu0 %v2759
    %3430 = vmatprep.subr.mxu0 %v2768
    %3431 = vmatpush1.msra.mxu0 %v2767
    %3432 = vmatprep.subr.mxu0 %v2776
    %3433 = vmatpush1.msra.mxu0 %v2775
    %3434 = vmatprep.subr.mxu0 %v2784
    %3435 = vmatpush1.msra.mxu0 %v2783
    %3436 = vmatprep.subr.mxu0 %v2792
    %3437 = vmatpush1.msra.mxu0 %v2791
    %3438 = vmatprep.subr.mxu0 %v2800
    %3439 = vmatpush1.msra.mxu0 %v2799
    %3440 = vmatprep.subr.mxu0 %v2808
    %3441 = vmatpush1.msra.mxu0 %v2807
    %3442 = vmatprep.mubr.f32.mxu0 %v3156
    %3443 = vmatmul.mubr.f32.gmra.mrb[0].mxu0 %v3155
    %v3444 = vpop.f32.mrb[0].mxu0
    %v3445 = vadd.f32 0.0, %v3444
    %v3446 = vpop.f32.mrb[0].mxu0
    %v3447 = vadd.f32 0.0, %v3446
    %3448 = vdwg.mxu0
    %v3449 = vadd.f32 %v3157, %v3232
    %v3450 = vadd.f32 %v3158, %v3234
    %v3451 = vadd.f32 %v3159, %v3303
    %v3452 = vadd.f32 %v3160, %v3305
    %v3453 = vadd.f32 %v3161, %v3374
    %v3454 = vadd.f32 %v3162, %v3376
    %v3455 = vadd.f32 %v3163, %v3445
    %v3456 = vadd.f32 %v3164, %v3447
    %v3457 = vxor.u32 %v3449, 2147483648
    %v3458 = vxor.u32 %v3450, 2147483648
    %v3459 = vmul.f32 %v3457, 1.442695
    %v3460 = vpow.pop %v3459
    %v3461 = vmul.f32 %v3458, 1.442695
    %v3462 = vpow.pop %v3461
    %v3463 = vadd.f32 %v3460, 1.0
    %v3464 = vadd.f32 %v3462, 1.0
    %v3465 = vrcp.pop %v3463
    %v3466 = vmul.f32 1.0, %v3465
    %v3467 = vrcp.pop %v3464
    %v3468 = vmul.f32 1.0, %v3467
    %v3469 = vxor.u32 %v3451, 2147483648
    %v3470 = vxor.u32 %v3452, 2147483648
    %v3471 = vmul.f32 %v3469, 1.442695
    %v3472 = vpow.pop %v3471
    %v3473 = vmul.f32 %v3470, 1.442695
    %v3474 = vpow.pop %v3473
    %v3475 = vadd.f32 %v3472, 1.0
    %v3476 = vadd.f32 %v3474, 1.0
    %v3477 = vrcp.pop %v3475
    %v3478 = vmul.f32 1.0, %v3477
    %v3479 = vrcp.pop %v3476
    %v3480 = vmul.f32 1.0, %v3479
    %v3481 = vtanh.pop %v3453
    %v3482 = vtanh.pop %v3454
    %v3483 = vxor.u32 %v3455, 2147483648
    %v3484 = vxor.u32 %v3456, 2147483648
    %v3485 = vmul.f32 %v3483, 1.442695
    %v3486 = vpow.pop %v3485
    %v3487 = vmul.f32 %v3484, 1.442695
    %v3488 = vpow.pop %v3487
    %v3489 = vadd.f32 %v3486, 1.0
    %v3490 = vadd.f32 %v3488, 1.0
    %v3491 = vrcp.pop %v3489
    %v3492 = vmul.f32 1.0, %v3491
    %v3493 = vrcp.pop %v3490
    %v3494 = vmul.f32 1.0, %v3493
    %v3495 = vmul.f32 %v3478, %v3151
    %v3496 = vmul.f32 %v3480, %v3152
    %v3497 = vmul.f32 %v3466, %v3481
    %v3498 = vmul.f32 %v3468, %v3482
    %v3499 = vadd.f32 %v3495, %v3497
    %v3500 = vadd.f32 %v3496, %v3498
    %v3501 = vtanh.pop %v3499
    %v3502 = vtanh.pop %v3500
    %v3503 = vmul.f32 %v3492, %v3501
    %v3504 = vmul.f32 %v3494, %v3502
    %v3505 = vld [vmem:[#allocation4 + $0x80] sm:$0xff]
    %v3506 = vld [vmem:[#allocation4 + $0x88] sm:$0xff]
    %v3507 = vld [vmem:[#allocation4 + $0x90] sm:$0xff]
    %v3508 = vld [vmem:[#allocation4 + $0x98] sm:$0xff]
    %v3509 = vld [vmem:[#allocation4 + $0xa0] sm:$0xff]
    %v3510 = vld [vmem:[#allocation4 + $0xa8] sm:$0xff]
    %v3511 = vld [vmem:[#allocation4 + $0xb0] sm:$0xff]
    %v3512 = vld [vmem:[#allocation4 + $0xb8] sm:$0xff]
    %3513 = vmatprep.subr.mxu0 %v2554
    %3514 = vmatpush1.msra.mxu0 %v2553
    %3515 = vmatprep.subr.mxu0 %v2562
    %3516 = vmatpush1.msra.mxu0 %v2561
    %3517 = vmatprep.subr.mxu0 %v2570
    %3518 = vmatpush1.msra.mxu0 %v2569
    %3519 = vmatprep.subr.mxu0 %v2578
    %3520 = vmatpush1.msra.mxu0 %v2577
    %3521 = vmatprep.subr.mxu0 %v2586
    %3522 = vmatpush1.msra.mxu0 %v2585
    %3523 = vmatprep.subr.mxu0 %v2594
    %3524 = vmatpush1.msra.mxu0 %v2593
    %3525 = vmatprep.subr.mxu0 %v2602
    %3526 = vmatpush1.msra.mxu0 %v2601
    %3527 = vmatprep.subr.mxu0 %v2610
    %3528 = vmatpush1.msra.mxu0 %v2609
    %3529 = vmatprep.subr.mxu0 %v2618
    %3530 = vmatpush1.msra.mxu0 %v2617
    %3531 = vmatprep.subr.mxu0 %v2626
    %3532 = vmatpush1.msra.mxu0 %v2625
    %3533 = vmatprep.subr.mxu0 %v2634
    %3534 = vmatpush1.msra.mxu0 %v2633
    %3535 = vmatprep.subr.mxu0 %v2642
    %3536 = vmatpush1.msra.mxu0 %v2641
    %3537 = vmatprep.subr.mxu0 %v2650
    %3538 = vmatpush1.msra.mxu0 %v2649
    %3539 = vmatprep.subr.mxu0 %v2658
    %3540 = vmatpush1.msra.mxu0 %v2657
    %3541 = vmatprep.subr.mxu0 %v2666
    %3542 = vmatpush1.msra.mxu0 %v2665
    %3543 = vmatprep.subr.mxu0 %v2674
    %3544 = vmatpush1.msra.mxu0 %v2673
    %3545 = vmatprep.subr.mxu0 %v2682
    %3546 = vmatpush1.msra.mxu0 %v2681
    %3547 = vmatprep.subr.mxu0 %v2690
    %3548 = vmatpush1.msra.mxu0 %v2689
    %3549 = vmatprep.subr.mxu0 %v2698
    %3550 = vmatpush1.msra.mxu0 %v2697
    %3551 = vmatprep.subr.mxu0 %v2706
    %3552 = vmatpush1.msra.mxu0 %v2705
    %3553 = vmatprep.subr.mxu0 %v2714
    %3554 = vmatpush1.msra.mxu0 %v2713
    %3555 = vmatprep.subr.mxu0 %v2722
    %3556 = vmatpush1.msra.mxu0 %v2721
    %3557 = vmatprep.subr.mxu0 %v2730
    %3558 = vmatpush1.msra.mxu0 %v2729
    %3559 = vmatprep.subr.mxu0 %v2738
    %3560 = vmatpush1.msra.mxu0 %v2737
    %3561 = vmatprep.subr.mxu0 %v2746
    %3562 = vmatpush1.msra.mxu0 %v2745
    %3563 = vmatprep.subr.mxu0 %v2754
    %3564 = vmatpush1.msra.mxu0 %v2753
    %3565 = vmatprep.subr.mxu0 %v2762
    %3566 = vmatpush1.msra.mxu0 %v2761
    %3567 = vmatprep.subr.mxu0 %v2770
    %3568 = vmatpush1.msra.mxu0 %v2769
    %3569 = vmatprep.subr.mxu0 %v2778
    %3570 = vmatpush1.msra.mxu0 %v2777
    %3571 = vmatprep.subr.mxu0 %v2786
    %3572 = vmatpush1.msra.mxu0 %v2785
    %3573 = vmatprep.subr.mxu0 %v2794
    %3574 = vmatpush1.msra.mxu0 %v2793
    %3575 = vmatprep.subr.mxu0 %v2802
    %3576 = vmatpush1.msra.mxu0 %v2801
    %3577 = vmatprep.mubr.f32.mxu0 %v3504
    %3578 = vmatmul.mubr.f32.gmra.mrb[0].mxu0 %v3503
    %v3579 = vpop.f32.mrb[0].mxu0
    %v3580 = vadd.f32 0.0, %v3579
    %v3581 = vpop.f32.mrb[0].mxu0
    %v3582 = vadd.f32 0.0, %v3581
    %3583 = vdwg.mxu0
    %3584 = vmatprep.subr.mxu0 %v2556
    %3585 = vmatpush1.msra.mxu0 %v2555
    %3586 = vmatprep.subr.mxu0 %v2564
    %3587 = vmatpush1.msra.mxu0 %v2563
    %3588 = vmatprep.subr.mxu0 %v2572
    %3589 = vmatpush1.msra.mxu0 %v2571
    %3590 = vmatprep.subr.mxu0 %v2580
    %3591 = vmatpush1.msra.mxu0 %v2579
    %3592 = vmatprep.subr.mxu0 %v2588
    %3593 = vmatpush1.msra.mxu0 %v2587
    %3594 = vmatprep.subr.mxu0 %v2596
    %3595 = vmatpush1.msra.mxu0 %v2595
    %3596 = vmatprep.subr.mxu0 %v2604
    %3597 = vmatpush1.msra.mxu0 %v2603
    %3598 = vmatprep.subr.mxu0 %v2612
    %3599 = vmatpush1.msra.mxu0 %v2611
    %3600 = vmatprep.subr.mxu0 %v2620
    %3601 = vmatpush1.msra.mxu0 %v2619
    %3602 = vmatprep.subr.mxu0 %v2628
    %3603 = vmatpush1.msra.mxu0 %v2627
    %3604 = vmatprep.subr.mxu0 %v2636
    %3605 = vmatpush1.msra.mxu0 %v2635
    %3606 = vmatprep.subr.mxu0 %v2644
    %3607 = vmatpush1.msra.mxu0 %v2643
    %3608 = vmatprep.subr.mxu0 %v2652
    %3609 = vmatpush1.msra.mxu0 %v2651
    %3610 = vmatprep.subr.mxu0 %v2660
    %3611 = vmatpush1.msra.mxu0 %v2659
    %3612 = vmatprep.subr.mxu0 %v2668
    %3613 = vmatpush1.msra.mxu0 %v2667
    %3614 = vmatprep.subr.mxu0 %v2676
    %3615 = vmatpush1.msra.mxu0 %v2675
    %3616 = vmatprep.subr.mxu0 %v2684
    %3617 = vmatpush1.msra.mxu0 %v2683
    %3618 = vmatprep.subr.mxu0 %v2692
    %3619 = vmatpush1.msra.mxu0 %v2691
    %3620 = vmatprep.subr.mxu0 %v2700
    %3621 = vmatpush1.msra.mxu0 %v2699
    %3622 = vmatprep.subr.mxu0 %v2708
    %3623 = vmatpush1.msra.mxu0 %v2707
    %3624 = vmatprep.subr.mxu0 %v2716
    %3625 = vmatpush1.msra.mxu0 %v2715
    %3626 = vmatprep.subr.mxu0 %v2724
    %3627 = vmatpush1.msra.mxu0 %v2723
    %3628 = vmatprep.subr.mxu0 %v2732
    %3629 = vmatpush1.msra.mxu0 %v2731
    %3630 = vmatprep.subr.mxu0 %v2740
    %3631 = vmatpush1.msra.mxu0 %v2739
    %3632 = vmatprep.subr.mxu0 %v2748
    %3633 = vmatpush1.msra.mxu0 %v2747
    %3634 = vmatprep.subr.mxu0 %v2756
    %3635 = vmatpush1.msra.mxu0 %v2755
    %3636 = vmatprep.subr.mxu0 %v2764
    %3637 = vmatpush1.msra.mxu0 %v2763
    %3638 = vmatprep.subr.mxu0 %v2772
    %3639 = vmatpush1.msra.mxu0 %v2771
    %3640 = vmatprep.subr.mxu0 %v2780
    %3641 = vmatpush1.msra.mxu0 %v2779
    %3642 = vmatprep.subr.mxu0 %v2788
    %3643 = vmatpush1.msra.mxu0 %v2787
    %3644 = vmatprep.subr.mxu0 %v2796
    %3645 = vmatpush1.msra.mxu0 %v2795
    %3646 = vmatprep.subr.mxu0 %v2804
    %3647 = vmatpush1.msra.mxu0 %v2803
    %3648 = vmatprep.mubr.f32.mxu0 %v3504
    %3649 = vmatmul.mubr.f32.gmra.mrb[0].mxu0 %v3503
    %v3650 = vpop.f32.mrb[0].mxu0
    %v3651 = vadd.f32 0.0, %v3650
    %v3652 = vpop.f32.mrb[0].mxu0
    %v3653 = vadd.f32 0.0, %v3652
    %3654 = vdwg.mxu0
    %3655 = vmatprep.subr.mxu0 %v2558
    %3656 = vmatpush1.msra.mxu0 %v2557
    %3657 = vmatprep.subr.mxu0 %v2566
    %3658 = vmatpush1.msra.mxu0 %v2565
    %3659 = vmatprep.subr.mxu0 %v2574
    %3660 = vmatpush1.msra.mxu0 %v2573
    %3661 = vmatprep.subr.mxu0 %v2582
    %3662 = vmatpush1.msra.mxu0 %v2581
    %3663 = vmatprep.subr.mxu0 %v2590
    %3664 = vmatpush1.msra.mxu0 %v2589
    %3665 = vmatprep.subr.mxu0 %v2598
    %3666 = vmatpush1.msra.mxu0 %v2597
    %3667 = vmatprep.subr.mxu0 %v2606
    %3668 = vmatpush1.msra.mxu0 %v2605
    %3669 = vmatprep.subr.mxu0 %v2614
    %3670 = vmatpush1.msra.mxu0 %v2613
    %3671 = vmatprep.subr.mxu0 %v2622
    %3672 = vmatpush1.msra.mxu0 %v2621
    %3673 = vmatprep.subr.mxu0 %v2630
    %3674 = vmatpush1.msra.mxu0 %v2629
    %3675 = vmatprep.subr.mxu0 %v2638
    %3676 = vmatpush1.msra.mxu0 %v2637
    %3677 = vmatprep.subr.mxu0 %v2646
    %3678 = vmatpush1.msra.mxu0 %v2645
    %3679 = vmatprep.subr.mxu0 %v2654
    %3680 = vmatpush1.msra.mxu0 %v2653
    %3681 = vmatprep.subr.mxu0 %v2662
    %3682 = vmatpush1.msra.mxu0 %v2661
    %3683 = vmatprep.subr.mxu0 %v2670
    %3684 = vmatpush1.msra.mxu0 %v2669
    %3685 = vmatprep.subr.mxu0 %v2678
    %3686 = vmatpush1.msra.mxu0 %v2677
    %3687 = vmatprep.subr.mxu0 %v2686
    %3688 = vmatpush1.msra.mxu0 %v2685
    %3689 = vmatprep.subr.mxu0 %v2694
    %3690 = vmatpush1.msra.mxu0 %v2693
    %3691 = vmatprep.subr.mxu0 %v2702
    %3692 = vmatpush1.msra.mxu0 %v2701
    %3693 = vmatprep.subr.mxu0 %v2710
    %3694 = vmatpush1.msra.mxu0 %v2709
    %3695 = vmatprep.subr.mxu0 %v2718
    %3696 = vmatpush1.msra.mxu0 %v2717
    %3697 = vmatprep.subr.mxu0 %v2726
    %3698 = vmatpush1.msra.mxu0 %v2725
    %3699 = vmatprep.subr.mxu0 %v2734
    %3700 = vmatpush1.msra.mxu0 %v2733
    %3701 = vmatprep.subr.mxu0 %v2742
    %3702 = vmatpush1.msra.mxu0 %v2741
    %3703 = vmatprep.subr.mxu0 %v2750
    %3704 = vmatpush1.msra.mxu0 %v2749
    %3705 = vmatprep.subr.mxu0 %v2758
    %3706 = vmatpush1.msra.mxu0 %v2757
    %3707 = vmatprep.subr.mxu0 %v2766
    %3708 = vmatpush1.msra.mxu0 %v2765
    %3709 = vmatprep.subr.mxu0 %v2774
    %3710 = vmatpush1.msra.mxu0 %v2773
    %3711 = vmatprep.subr.mxu0 %v2782
    %3712 = vmatpush1.msra.mxu0 %v2781
    %3713 = vmatprep.subr.mxu0 %v2790
    %3714 = vmatpush1.msra.mxu0 %v2789
    %3715 = vmatprep.subr.mxu0 %v2798
    %3716 = vmatpush1.msra.mxu0 %v2797
    %3717 = vmatprep.subr.mxu0 %v2806
    %3718 = vmatpush1.msra.mxu0 %v2805
    %3719 = vmatprep.mubr.f32.mxu0 %v3504
    %3720 = vmatmul.mubr.f32.gmra.mrb[0].mxu0 %v3503
    %v3721 = vpop.f32.mrb[0].mxu0
    %v3722 = vadd.f32 0.0, %v3721
    %v3723 = vpop.f32.mrb[0].mxu0
    %v3724 = vadd.f32 0.0, %v3723
    %3725 = vdwg.mxu0
    %3726 = vmatprep.subr.mxu0 %v2560
    %3727 = vmatpush1.msra.mxu0 %v2559
    %3728 = vmatprep.subr.mxu0 %v2568
    %3729 = vmatpush1.msra.mxu0 %v2567
    %3730 = vmatprep.subr.mxu0 %v2576
    %3731 = vmatpush1.msra.mxu0 %v2575
    %3732 = vmatprep.subr.mxu0 %v2584
    %3733 = vmatpush1.msra.mxu0 %v2583
    %3734 = vmatprep.subr.mxu0 %v2592
    %3735 = vmatpush1.msra.mxu0 %v2591
    %3736 = vmatprep.subr.mxu0 %v2600
    %3737 = vmatpush1.msra.mxu0 %v2599
    %3738 = vmatprep.subr.mxu0 %v2608
    %3739 = vmatpush1.msra.mxu0 %v2607
    %3740 = vmatprep.subr.mxu0 %v2616
    %3741 = vmatpush1.msra.mxu0 %v2615
    %3742 = vmatprep.subr.mxu0 %v2624
    %3743 = vmatpush1.msra.mxu0 %v2623
    %3744 = vmatprep.subr.mxu0 %v2632
    %3745 = vmatpush1.msra.mxu0 %v2631
    %3746 = vmatprep.subr.mxu0 %v2640
    %3747 = vmatpush1.msra.mxu0 %v2639
    %3748 = vmatprep.subr.mxu0 %v2648
    %3749 = vmatpush1.msra.mxu0 %v2647
    %3750 = vmatprep.subr.mxu0 %v2656
    %3751 = vmatpush1.msra.mxu0 %v2655
    %3752 = vmatprep.subr.mxu0 %v2664
    %3753 = vmatpush1.msra.mxu0 %v2663
    %3754 = vmatprep.subr.mxu0 %v2672
    %3755 = vmatpush1.msra.mxu0 %v2671
    %3756 = vmatprep.subr.mxu0 %v2680
    %3757 = vmatpush1.msra.mxu0 %v2679
    %3758 = vmatprep.subr.mxu0 %v2688
    %3759 = vmatpush1.msra.mxu0 %v2687
    %3760 = vmatprep.subr.mxu0 %v2696
    %3761 = vmatpush1.msra.mxu0 %v2695
    %3762 = vmatprep.subr.mxu0 %v2704
    %3763 = vmatpush1.msra.mxu0 %v2703
    %3764 = vmatprep.subr.mxu0 %v2712
    %3765 = vmatpush1.msra.mxu0 %v2711
    %3766 = vmatprep.subr.mxu0 %v2720
    %3767 = vmatpush1.msra.mxu0 %v2719
    %3768 = vmatprep.subr.mxu0 %v2728
    %3769 = vmatpush1.msra.mxu0 %v2727
    %3770 = vmatprep.subr.mxu0 %v2736
    %3771 = vmatpush1.msra.mxu0 %v2735
    %3772 = vmatprep.subr.mxu0 %v2744
    %3773 = vmatpush1.msra.mxu0 %v2743
    %3774 = vmatprep.subr.mxu0 %v2752
    %3775 = vmatpush1.msra.mxu0 %v2751
    %3776 = vmatprep.subr.mxu0 %v2760
    %3777 = vmatpush1.msra.mxu0 %v2759
    %3778 = vmatprep.subr.mxu0 %v2768
    %3779 = vmatpush1.msra.mxu0 %v2767
    %3780 = vmatprep.subr.mxu0 %v2776
    %3781 = vmatpush1.msra.mxu0 %v2775
    %3782 = vmatprep.subr.mxu0 %v2784
    %3783 = vmatpush1.msra.mxu0 %v2783
    %3784 = vmatprep.subr.mxu0 %v2792
    %3785 = vmatpush1.msra.mxu0 %v2791
    %3786 = vmatprep.subr.mxu0 %v2800
    %3787 = vmatpush1.msra.mxu0 %v2799
    %3788 = vmatprep.subr.mxu0 %v2808
    %3789 = vmatpush1.msra.mxu0 %v2807
    %3790 = vmatprep.mubr.f32.mxu0 %v3504
    %3791 = vmatmul.mubr.f32.gmra.mrb[0].mxu0 %v3503
    %v3792 = vpop.f32.mrb[0].mxu0
    %v3793 = vadd.f32 0.0, %v3792
    %v3794 = vpop.f32.mrb[0].mxu0
    %v3795 = vadd.f32 0.0, %v3794
    %3796 = vdwg.mxu0
    %v3797 = vadd.f32 %v3505, %v3580
    %v3798 = vadd.f32 %v3506, %v3582
    %v3799 = vadd.f32 %v3507, %v3651
    %v3800 = vadd.f32 %v3508, %v3653
    %v3801 = vadd.f32 %v3509, %v3722
    %v3802 = vadd.f32 %v3510, %v3724
    %v3803 = vadd.f32 %v3511, %v3793
    %v3804 = vadd.f32 %v3512, %v3795
    %v3805 = vxor.u32 %v3797, 2147483648
    %v3806 = vxor.u32 %v3798, 2147483648
    %v3807 = vmul.f32 %v3805, 1.442695
    %v3808 = vpow.pop %v3807
    %v3809 = vmul.f32 %v3806, 1.442695
    %v3810 = vpow.pop %v3809
    %v3811 = vadd.f32 %v3808, 1.0
    %v3812 = vadd.f32 %v3810, 1.0
    %v3813 = vrcp.pop %v3811
    %v3814 = vmul.f32 1.0, %v3813
    %v3815 = vrcp.pop %v3812
    %v3816 = vmul.f32 1.0, %v3815
    %v3817 = vxor.u32 %v3799, 2147483648
    %v3818 = vxor.u32 %v3800, 2147483648
    %v3819 = vmul.f32 %v3817, 1.442695
    %v3820 = vpow.pop %v3819
    %v3821 = vmul.f32 %v3818, 1.442695
    %v3822 = vpow.pop %v3821
    %v3823 = vadd.f32 %v3820, 1.0
    %v3824 = vadd.f32 %v3822, 1.0
    %v3825 = vrcp.pop %v3823
    %v3826 = vmul.f32 1.0, %v3825
    %v3827 = vrcp.pop %v3824
    %v3828 = vmul.f32 1.0, %v3827
    %v3829 = vtanh.pop %v3801
    %v3830 = vtanh.pop %v3802
    %v3831 = vxor.u32 %v3803, 2147483648
    %v3832 = vxor.u32 %v3804, 2147483648
    %v3833 = vmul.f32 %v3831, 1.442695
    %v3834 = vpow.pop %v3833
    %v3835 = vmul.f32 %v3832, 1.442695
    %v3836 = vpow.pop %v3835
    %v3837 = vadd.f32 %v3834, 1.0
    %v3838 = vadd.f32 %v3836, 1.0
    %v3839 = vrcp.pop %v3837
    %v3840 = vmul.f32 1.0, %v3839
    %v3841 = vrcp.pop %v3838
    %v3842 = vmul.f32 1.0, %v3841
    %v3843 = vmul.f32 %v3826, %v3499
    %v3844 = vmul.f32 %v3828, %v3500
    %v3845 = vmul.f32 %v3814, %v3829
    %v3846 = vmul.f32 %v3816, %v3830
    %v3847 = vadd.f32 %v3843, %v3845
    %v3848 = vadd.f32 %v3844, %v3846
    %v3849 = vtanh.pop %v3847
    %v3850 = vtanh.pop %v3848
    %v3851 = vmul.f32 %v3840, %v3849
    %v3852 = vmul.f32 %v3842, %v3850
    %v3853 = vld [vmem:[#allocation4 + $0xc0] sm:$0xff]
    %v3854 = vld [vmem:[#allocation4 + $0xc8] sm:$0xff]
    %v3855 = vld [vmem:[#allocation4 + $0xd0] sm:$0xff]
    %v3856 = vld [vmem:[#allocation4 + $0xd8] sm:$0xff]
    %v3857 = vld [vmem:[#allocation4 + $0xe0] sm:$0xff]
    %v3858 = vld [vmem:[#allocation4 + $0xe8] sm:$0xff]
    %v3859 = vld [vmem:[#allocation4 + $0xf0] sm:$0xff]
    %v3860 = vld [vmem:[#allocation4 + $0xf8] sm:$0xff]
    %3861 = vmatprep.subr.mxu0 %v2554
    %3862 = vmatpush1.msra.mxu0 %v2553
    %3863 = vmatprep.subr.mxu0 %v2562
    %3864 = vmatpush1.msra.mxu0 %v2561
    %3865 = vmatprep.subr.mxu0 %v2570
    %3866 = vmatpush1.msra.mxu0 %v2569
    %3867 = vmatprep.subr.mxu0 %v2578
    %3868 = vmatpush1.msra.mxu0 %v2577
    %3869 = vmatprep.subr.mxu0 %v2586
    %3870 = vmatpush1.msra.mxu0 %v2585
    %3871 = vmatprep.subr.mxu0 %v2594
    %3872 = vmatpush1.msra.mxu0 %v2593
    %3873 = vmatprep.subr.mxu0 %v2602
    %3874 = vmatpush1.msra.mxu0 %v2601
    %3875 = vmatprep.subr.mxu0 %v2610
    %3876 = vmatpush1.msra.mxu0 %v2609
    %3877 = vmatprep.subr.mxu0 %v2618
    %3878 = vmatpush1.msra.mxu0 %v2617
    %3879 = vmatprep.subr.mxu0 %v2626
    %3880 = vmatpush1.msra.mxu0 %v2625
    %3881 = vmatprep.subr.mxu0 %v2634
    %3882 = vmatpush1.msra.mxu0 %v2633
    %3883 = vmatprep.subr.mxu0 %v2642
    %3884 = vmatpush1.msra.mxu0 %v2641
    %3885 = vmatprep.subr.mxu0 %v2650
    %3886 = vmatpush1.msra.mxu0 %v2649
    %3887 = vmatprep.subr.mxu0 %v2658
    %3888 = vmatpush1.msra.mxu0 %v2657
    %3889 = vmatprep.subr.mxu0 %v2666
    %3890 = vmatpush1.msra.mxu0 %v2665
    %3891 = vmatprep.subr.mxu0 %v2674
    %3892 = vmatpush1.msra.mxu0 %v2673
    %3893 = vmatprep.subr.mxu0 %v2682
    %3894 = vmatpush1.msra.mxu0 %v2681
    %3895 = vmatprep.subr.mxu0 %v2690
    %3896 = vmatpush1.msra.mxu0 %v2689
    %3897 = vmatprep.subr.mxu0 %v2698
    %3898 = vmatpush1.msra.mxu0 %v2697
    %3899 = vmatprep.subr.mxu0 %v2706
    %3900 = vmatpush1.msra.mxu0 %v2705
    %3901 = vmatprep.subr.mxu0 %v2714
    %3902 = vmatpush1.msra.mxu0 %v2713
    %3903 = vmatprep.subr.mxu0 %v2722
    %3904 = vmatpush1.msra.mxu0 %v2721
    %3905 = vmatprep.subr.mxu0 %v2730
    %3906 = vmatpush1.msra.mxu0 %v2729
    %3907 = vmatprep.subr.mxu0 %v2738
    %3908 = vmatpush1.msra.mxu0 %v2737
    %3909 = vmatprep.subr.mxu0 %v2746
    %3910 = vmatpush1.msra.mxu0 %v2745
    %3911 = vmatprep.subr.mxu0 %v2754
    %3912 = vmatpush1.msra.mxu0 %v2753
    %3913 = vmatprep.subr.mxu0 %v2762
    %3914 = vmatpush1.msra.mxu0 %v2761
    %3915 = vmatprep.subr.mxu0 %v2770
    %3916 = vmatpush1.msra.mxu0 %v2769
    %3917 = vmatprep.subr.mxu0 %v2778
    %3918 = vmatpush1.msra.mxu0 %v2777
    %3919 = vmatprep.subr.mxu0 %v2786
    %3920 = vmatpush1.msra.mxu0 %v2785
    %3921 = vmatprep.subr.mxu0 %v2794
    %3922 = vmatpush1.msra.mxu0 %v2793
    %3923 = vmatprep.subr.mxu0 %v2802
    %3924 = vmatpush1.msra.mxu0 %v2801
    %3925 = vmatprep.mubr.f32.mxu0 %v3852
    %3926 = vmatmul.mubr.f32.gmra.mrb[0].mxu0 %v3851
    %v3927 = vpop.f32.mrb[0].mxu0
    %v3928 = vadd.f32 0.0, %v3927
    %v3929 = vpop.f32.mrb[0].mxu0
    %v3930 = vadd.f32 0.0, %v3929
    %3931 = vdwg.mxu0
    %3932 = vmatprep.subr.mxu0 %v2556
    %3933 = vmatpush1.msra.mxu0 %v2555
    %3934 = vmatprep.subr.mxu0 %v2564
    %3935 = vmatpush1.msra.mxu0 %v2563
    %3936 = vmatprep.subr.mxu0 %v2572
    %3937 = vmatpush1.msra.mxu0 %v2571
    %3938 = vmatprep.subr.mxu0 %v2580
    %3939 = vmatpush1.msra.mxu0 %v2579
    %3940 = vmatprep.subr.mxu0 %v2588
    %3941 = vmatpush1.msra.mxu0 %v2587
    %3942 = vmatprep.subr.mxu0 %v2596
    %3943 = vmatpush1.msra.mxu0 %v2595
    %3944 = vmatprep.subr.mxu0 %v2604
    %3945 = vmatpush1.msra.mxu0 %v2603
    %3946 = vmatprep.subr.mxu0 %v2612
    %3947 = vmatpush1.msra.mxu0 %v2611
    %3948 = vmatprep.subr.mxu0 %v2620
    %3949 = vmatpush1.msra.mxu0 %v2619
    %3950 = vmatprep.subr.mxu0 %v2628
    %3951 = vmatpush1.msra.mxu0 %v2627
    %3952 = vmatprep.subr.mxu0 %v2636
    %3953 = vmatpush1.msra.mxu0 %v2635
    %3954 = vmatprep.subr.mxu0 %v2644
    %3955 = vmatpush1.msra.mxu0 %v2643
    %3956 = vmatprep.subr.mxu0 %v2652
    %3957 = vmatpush1.msra.mxu0 %v2651
    %3958 = vmatprep.subr.mxu0 %v2660
    %3959 = vmatpush1.msra.mxu0 %v2659
    %3960 = vmatprep.subr.mxu0 %v2668
    %3961 = vmatpush1.msra.mxu0 %v2667
    %3962 = vmatprep.subr.mxu0 %v2676
    %3963 = vmatpush1.msra.mxu0 %v2675
    %3964 = vmatprep.subr.mxu0 %v2684
    %3965 = vmatpush1.msra.mxu0 %v2683
    %3966 = vmatprep.subr.mxu0 %v2692
    %3967 = vmatpush1.msra.mxu0 %v2691
    %3968 = vmatprep.subr.mxu0 %v2700
    %3969 = vmatpush1.msra.mxu0 %v2699
    %3970 = vmatprep.subr.mxu0 %v2708
    %3971 = vmatpush1.msra.mxu0 %v2707
    %3972 = vmatprep.subr.mxu0 %v2716
    %3973 = vmatpush1.msra.mxu0 %v2715
    %3974 = vmatprep.subr.mxu0 %v2724
    %3975 = vmatpush1.msra.mxu0 %v2723
    %3976 = vmatprep.subr.mxu0 %v2732
    %3977 = vmatpush1.msra.mxu0 %v2731
    %3978 = vmatprep.subr.mxu0 %v2740
    %3979 = vmatpush1.msra.mxu0 %v2739
    %3980 = vmatprep.subr.mxu0 %v2748
    %3981 = vmatpush1.msra.mxu0 %v2747
    %3982 = vmatprep.subr.mxu0 %v2756
    %3983 = vmatpush1.msra.mxu0 %v2755
    %3984 = vmatprep.subr.mxu0 %v2764
    %3985 = vmatpush1.msra.mxu0 %v2763
    %3986 = vmatprep.subr.mxu0 %v2772
    %3987 = vmatpush1.msra.mxu0 %v2771
    %3988 = vmatprep.subr.mxu0 %v2780
    %3989 = vmatpush1.msra.mxu0 %v2779
    %3990 = vmatprep.subr.mxu0 %v2788
    %3991 = vmatpush1.msra.mxu0 %v2787
    %3992 = vmatprep.subr.mxu0 %v2796
    %3993 = vmatpush1.msra.mxu0 %v2795
    %3994 = vmatprep.subr.mxu0 %v2804
    %3995 = vmatpush1.msra.mxu0 %v2803
    %3996 = vmatprep.mubr.f32.mxu0 %v3852
    %3997 = vmatmul.mubr.f32.gmra.mrb[0].mxu0 %v3851
    %v3998 = vpop.f32.mrb[0].mxu0
    %v3999 = vadd.f32 0.0, %v3998
    %v4000 = vpop.f32.mrb[0].mxu0
    %v4001 = vadd.f32 0.0, %v4000
    %4002 = vdwg.mxu0
    %4003 = vmatprep.subr.mxu0 %v2558
    %4004 = vmatpush1.msra.mxu0 %v2557
    %4005 = vmatprep.subr.mxu0 %v2566
    %4006 = vmatpush1.msra.mxu0 %v2565
    %4007 = vmatprep.subr.mxu0 %v2574
    %4008 = vmatpush1.msra.mxu0 %v2573
    %4009 = vmatprep.subr.mxu0 %v2582
    %4010 = vmatpush1.msra.mxu0 %v2581
    %4011 = vmatprep.subr.mxu0 %v2590
    %4012 = vmatpush1.msra.mxu0 %v2589
    %4013 = vmatprep.subr.mxu0 %v2598
    %4014 = vmatpush1.msra.mxu0 %v2597
    %4015 = vmatprep.subr.mxu0 %v2606
    %4016 = vmatpush1.msra.mxu0 %v2605
    %4017 = vmatprep.subr.mxu0 %v2614
    %4018 = vmatpush1.msra.mxu0 %v2613
    %4019 = vmatprep.subr.mxu0 %v2622
    %4020 = vmatpush1.msra.mxu0 %v2621
    %4021 = vmatprep.subr.mxu0 %v2630
    %4022 = vmatpush1.msra.mxu0 %v2629
    %4023 = vmatprep.subr.mxu0 %v2638
    %4024 = vmatpush1.msra.mxu0 %v2637
    %4025 = vmatprep.subr.mxu0 %v2646
    %4026 = vmatpush1.msra.mxu0 %v2645
    %4027 = vmatprep.subr.mxu0 %v2654
    %4028 = vmatpush1.msra.mxu0 %v2653
    %4029 = vmatprep.subr.mxu0 %v2662
    %4030 = vmatpush1.msra.mxu0 %v2661
    %4031 = vmatprep.subr.mxu0 %v2670
    %4032 = vmatpush1.msra.mxu0 %v2669
    %4033 = vmatprep.subr.mxu0 %v2678
    %4034 = vmatpush1.msra.mxu0 %v2677
    %4035 = vmatprep.subr.mxu0 %v2686
    %4036 = vmatpush1.msra.mxu0 %v2685
    %4037 = vmatprep.subr.mxu0 %v2694
    %4038 = vmatpush1.msra.mxu0 %v2693
    %4039 = vmatprep.subr.mxu0 %v2702
    %4040 = vmatpush1.msra.mxu0 %v2701
    %4041 = vmatprep.subr.mxu0 %v2710
    %4042 = vmatpush1.msra.mxu0 %v2709
    %4043 = vmatprep.subr.mxu0 %v2718
    %4044 = vmatpush1.msra.mxu0 %v2717
    %4045 = vmatprep.subr.mxu0 %v2726
    %4046 = vmatpush1.msra.mxu0 %v2725
    %4047 = vmatprep.subr.mxu0 %v2734
    %4048 = vmatpush1.msra.mxu0 %v2733
    %4049 = vmatprep.subr.mxu0 %v2742
    %4050 = vmatpush1.msra.mxu0 %v2741
    %4051 = vmatprep.subr.mxu0 %v2750
    %4052 = vmatpush1.msra.mxu0 %v2749
    %4053 = vmatprep.subr.mxu0 %v2758
    %4054 = vmatpush1.msra.mxu0 %v2757
    %4055 = vmatprep.subr.mxu0 %v2766
    %4056 = vmatpush1.msra.mxu0 %v2765
    %4057 = vmatprep.subr.mxu0 %v2774
    %4058 = vmatpush1.msra.mxu0 %v2773
    %4059 = vmatprep.subr.mxu0 %v2782
    %4060 = vmatpush1.msra.mxu0 %v2781
    %4061 = vmatprep.subr.mxu0 %v2790
    %4062 = vmatpush1.msra.mxu0 %v2789
    %4063 = vmatprep.subr.mxu0 %v2798
    %4064 = vmatpush1.msra.mxu0 %v2797
    %4065 = vmatprep.subr.mxu0 %v2806
    %4066 = vmatpush1.msra.mxu0 %v2805
    %4067 = vmatprep.mubr.f32.mxu0 %v3852
    %4068 = vmatmul.mubr.f32.gmra.mrb[0].mxu0 %v3851
    %v4069 = vpop.f32.mrb[0].mxu0
    %v4070 = vadd.f32 0.0, %v4069
    %v4071 = vpop.f32.mrb[0].mxu0
    %v4072 = vadd.f32 0.0, %v4071
    %4073 = vdwg.mxu0
    %4074 = vmatprep.subr.mxu0 %v2560
    %4075 = vmatpush1.msra.mxu0 %v2559
    %4076 = vmatprep.subr.mxu0 %v2568
    %4077 = vmatpush1.msra.mxu0 %v2567
    %4078 = vmatprep.subr.mxu0 %v2576
    %4079 = vmatpush1.msra.mxu0 %v2575
    %4080 = vmatprep.subr.mxu0 %v2584
    %4081 = vmatpush1.msra.mxu0 %v2583
    %4082 = vmatprep.subr.mxu0 %v2592
    %4083 = vmatpush1.msra.mxu0 %v2591
    %4084 = vmatprep.subr.mxu0 %v2600
    %4085 = vmatpush1.msra.mxu0 %v2599
    %4086 = vmatprep.subr.mxu0 %v2608
    %4087 = vmatpush1.msra.mxu0 %v2607
    %4088 = vmatprep.subr.mxu0 %v2616
    %4089 = vmatpush1.msra.mxu0 %v2615
    %4090 = vmatprep.subr.mxu0 %v2624
    %4091 = vmatpush1.msra.mxu0 %v2623
    %4092 = vmatprep.subr.mxu0 %v2632
    %4093 = vmatpush1.msra.mxu0 %v2631
    %4094 = vmatprep.subr.mxu0 %v2640
    %4095 = vmatpush1.msra.mxu0 %v2639
    %4096 = vmatprep.subr.mxu0 %v2648
    %4097 = vmatpush1.msra.mxu0 %v2647
    %4098 = vmatprep.subr.mxu0 %v2656
    %4099 = vmatpush1.msra.mxu0 %v2655
    %4100 = vmatprep.subr.mxu0 %v2664
    %4101 = vmatpush1.msra.mxu0 %v2663
    %4102 = vmatprep.subr.mxu0 %v2672
    %4103 = vmatpush1.msra.mxu0 %v2671
    %4104 = vmatprep.subr.mxu0 %v2680
    %4105 = vmatpush1.msra.mxu0 %v2679
    %4106 = vmatprep.subr.mxu0 %v2688
    %4107 = vmatpush1.msra.mxu0 %v2687
    %4108 = vmatprep.subr.mxu0 %v2696
    %4109 = vmatpush1.msra.mxu0 %v2695
    %4110 = vmatprep.subr.mxu0 %v2704
    %4111 = vmatpush1.msra.mxu0 %v2703
    %4112 = vmatprep.subr.mxu0 %v2712
    %4113 = vmatpush1.msra.mxu0 %v2711
    %4114 = vmatprep.subr.mxu0 %v2720
    %4115 = vmatpush1.msra.mxu0 %v2719
    %4116 = vmatprep.subr.mxu0 %v2728
    %4117 = vmatpush1.msra.mxu0 %v2727
    %4118 = vmatprep.subr.mxu0 %v2736
    %4119 = vmatpush1.msra.mxu0 %v2735
    %4120 = vmatprep.subr.mxu0 %v2744
    %4121 = vmatpush1.msra.mxu0 %v2743
    %4122 = vmatprep.subr.mxu0 %v2752
    %4123 = vmatpush1.msra.mxu0 %v2751
    %4124 = vmatprep.subr.mxu0 %v2760
    %4125 = vmatpush1.msra.mxu0 %v2759
    %4126 = vmatprep.subr.mxu0 %v2768
    %4127 = vmatpush1.msra.mxu0 %v2767
    %4128 = vmatprep.subr.mxu0 %v2776
    %4129 = vmatpush1.msra.mxu0 %v2775
    %4130 = vmatprep.subr.mxu0 %v2784
    %4131 = vmatpush1.msra.mxu0 %v2783
    %4132 = vmatprep.subr.mxu0 %v2792
    %4133 = vmatpush1.msra.mxu0 %v2791
    %4134 = vmatprep.subr.mxu0 %v2800
    %4135 = vmatpush1.msra.mxu0 %v2799
    %4136 = vmatprep.subr.mxu0 %v2808
    %4137 = vmatpush1.msra.mxu0 %v2807
    %4138 = vmatprep.mubr.f32.mxu0 %v3852
    %4139 = vmatmul.mubr.f32.gmra.mrb[0].mxu0 %v3851
    %v4140 = vpop.f32.mrb[0].mxu0
    %v4141 = vadd.f32 0.0, %v4140
    %v4142 = vpop.f32.mrb[0].mxu0
    %v4143 = vadd.f32 0.0, %v4142
    %4144 = vdwg.mxu0
    %v4145 = vadd.f32 %v3853, %v3928
    %v4146 = vadd.f32 %v3854, %v3930
    %v4147 = vadd.f32 %v3855, %v3999
    %v4148 = vadd.f32 %v3856, %v4001
    %v4149 = vadd.f32 %v3857, %v4070
    %v4150 = vadd.f32 %v3858, %v4072
    %v4151 = vadd.f32 %v3859, %v4141
    %v4152 = vadd.f32 %v3860, %v4143
    %v4153 = vxor.u32 %v4145, 2147483648
    %v4154 = vxor.u32 %v4146, 2147483648
    %v4155 = vmul.f32 %v4153, 1.442695
    %v4156 = vpow.pop %v4155
    %v4157 = vmul.f32 %v4154, 1.442695
    %v4158 = vpow.pop %v4157
    %v4159 = vadd.f32 %v4156, 1.0
    %v4160 = vadd.f32 %v4158, 1.0
    %v4161 = vrcp.pop %v4159
    %v4162 = vmul.f32 1.0, %v4161
    %v4163 = vrcp.pop %v4160
    %v4164 = vmul.f32 1.0, %v4163
    %v4165 = vxor.u32 %v4147, 2147483648
    %v4166 = vxor.u32 %v4148, 2147483648
    %v4167 = vmul.f32 %v4165, 1.442695
    %v4168 = vpow.pop %v4167
    %v4169 = vmul.f32 %v4166, 1.442695
    %v4170 = vpow.pop %v4169
    %v4171 = vadd.f32 %v4168, 1.0
    %v4172 = vadd.f32 %v4170, 1.0
    %v4173 = vrcp.pop %v4171
    %v4174 = vmul.f32 1.0, %v4173
    %v4175 = vrcp.pop %v4172
    %v4176 = vmul.f32 1.0, %v4175
    %v4177 = vtanh.pop %v4149
    %v4178 = vtanh.pop %v4150
    %v4179 = vxor.u32 %v4151, 2147483648
    %v4180 = vxor.u32 %v4152, 2147483648
    %v4181 = vmul.f32 %v4179, 1.442695
    %v4182 = vpow.pop %v4181
    %v4183 = vmul.f32 %v4180, 1.442695
    %v4184 = vpow.pop %v4183
    %v4185 = vadd.f32 %v4182, 1.0
    %v4186 = vadd.f32 %v4184, 1.0
    %v4187 = vrcp.pop %v4185
    %v4188 = vmul.f32 1.0, %v4187
    %v4189 = vrcp.pop %v4186
    %v4190 = vmul.f32 1.0, %v4189
    %v4191 = vmul.f32 %v4174, %v3847
    %v4192 = vmul.f32 %v4176, %v3848
    %v4193 = vmul.f32 %v4162, %v4177
    %v4194 = vmul.f32 %v4164, %v4178
    %v4195 = vadd.f32 %v4191, %v4193
    %v4196 = vadd.f32 %v4192, %v4194
    %v4197 = vtanh.pop %v4195
    %v4198 = vtanh.pop %v4196
    %v4199 = vmul.f32 %v4188, %v4197
    %v4200 = vmul.f32 %v4190, %v4198
    %v4201 = vld [vmem:[#allocation4 + $0x100] sm:$0xff]
    %v4202 = vld [vmem:[#allocation4 + $0x108] sm:$0xff]
    %v4203 = vld [vmem:[#allocation4 + $0x110] sm:$0xff]
    %v4204 = vld [vmem:[#allocation4 + $0x118] sm:$0xff]
    %v4205 = vld [vmem:[#allocation4 + $0x120] sm:$0xff]
    %v4206 = vld [vmem:[#allocation4 + $0x128] sm:$0xff]
    %v4207 = vld [vmem:[#allocation4 + $0x130] sm:$0xff]
    %v4208 = vld [vmem:[#allocation4 + $0x138] sm:$0xff]
    %4209 = vmatprep.subr.mxu0 %v2554
    %4210 = vmatpush1.msra.mxu0 %v2553
    %4211 = vmatprep.subr.mxu0 %v2562
    %4212 = vmatpush1.msra.mxu0 %v2561
    %4213 = vmatprep.subr.mxu0 %v2570
    %4214 = vmatpush1.msra.mxu0 %v2569
    %4215 = vmatprep.subr.mxu0 %v2578
    %4216 = vmatpush1.msra.mxu0 %v2577
    %4217 = vmatprep.subr.mxu0 %v2586
    %4218 = vmatpush1.msra.mxu0 %v2585
    %4219 = vmatprep.subr.mxu0 %v2594
    %4220 = vmatpush1.msra.mxu0 %v2593
    %4221 = vmatprep.subr.mxu0 %v2602
    %4222 = vmatpush1.msra.mxu0 %v2601
    %4223 = vmatprep.subr.mxu0 %v2610
    %4224 = vmatpush1.msra.mxu0 %v2609
    %4225 = vmatprep.subr.mxu0 %v2618
    %4226 = vmatpush1.msra.mxu0 %v2617
    %4227 = vmatprep.subr.mxu0 %v2626
    %4228 = vmatpush1.msra.mxu0 %v2625
    %4229 = vmatprep.subr.mxu0 %v2634
    %4230 = vmatpush1.msra.mxu0 %v2633
    %4231 = vmatprep.subr.mxu0 %v2642
    %4232 = vmatpush1.msra.mxu0 %v2641
    %4233 = vmatprep.subr.mxu0 %v2650
    %4234 = vmatpush1.msra.mxu0 %v2649
    %4235 = vmatprep.subr.mxu0 %v2658
    %4236 = vmatpush1.msra.mxu0 %v2657
    %4237 = vmatprep.subr.mxu0 %v2666
    %4238 = vmatpush1.msra.mxu0 %v2665
    %4239 = vmatprep.subr.mxu0 %v2674
    %4240 = vmatpush1.msra.mxu0 %v2673
    %4241 = vmatprep.subr.mxu0 %v2682
    %4242 = vmatpush1.msra.mxu0 %v2681
    %4243 = vmatprep.subr.mxu0 %v2690
    %4244 = vmatpush1.msra.mxu0 %v2689
    %4245 = vmatprep.subr.mxu0 %v2698
    %4246 = vmatpush1.msra.mxu0 %v2697
    %4247 = vmatprep.subr.mxu0 %v2706
    %4248 = vmatpush1.msra.mxu0 %v2705
    %4249 = vmatprep.subr.mxu0 %v2714
    %4250 = vmatpush1.msra.mxu0 %v2713
    %4251 = vmatprep.subr.mxu0 %v2722
    %4252 = vmatpush1.msra.mxu0 %v2721
    %4253 = vmatprep.subr.mxu0 %v2730
    %4254 = vmatpush1.msra.mxu0 %v2729
    %4255 = vmatprep.subr.mxu0 %v2738
    %4256 = vmatpush1.msra.mxu0 %v2737
    %4257 = vmatprep.subr.mxu0 %v2746
    %4258 = vmatpush1.msra.mxu0 %v2745
    %4259 = vmatprep.subr.mxu0 %v2754
    %4260 = vmatpush1.msra.mxu0 %v2753
    %4261 = vmatprep.subr.mxu0 %v2762
    %4262 = vmatpush1.msra.mxu0 %v2761
    %4263 = vmatprep.subr.mxu0 %v2770
    %4264 = vmatpush1.msra.mxu0 %v2769
    %4265 = vmatprep.subr.mxu0 %v2778
    %4266 = vmatpush1.msra.mxu0 %v2777
    %4267 = vmatprep.subr.mxu0 %v2786
    %4268 = vmatpush1.msra.mxu0 %v2785
    %4269 = vmatprep.subr.mxu0 %v2794
    %4270 = vmatpush1.msra.mxu0 %v2793
    %4271 = vmatprep.subr.mxu0 %v2802
    %4272 = vmatpush1.msra.mxu0 %v2801
    %4273 = vmatprep.mubr.f32.mxu0 %v4200
    %4274 = vmatmul.mubr.f32.gmra.mrb[0].mxu0 %v4199
    %v4275 = vpop.f32.mrb[0].mxu0
    %v4276 = vadd.f32 0.0, %v4275
    %v4277 = vpop.f32.mrb[0].mxu0
    %v4278 = vadd.f32 0.0, %v4277
    %4279 = vdwg.mxu0
    %4280 = vmatprep.subr.mxu0 %v2556
    %4281 = vmatpush1.msra.mxu0 %v2555
    %4282 = vmatprep.subr.mxu0 %v2564
    %4283 = vmatpush1.msra.mxu0 %v2563
    %4284 = vmatprep.subr.mxu0 %v2572
    %4285 = vmatpush1.msra.mxu0 %v2571
    %4286 = vmatprep.subr.mxu0 %v2580
    %4287 = vmatpush1.msra.mxu0 %v2579
    %4288 = vmatprep.subr.mxu0 %v2588
    %4289 = vmatpush1.msra.mxu0 %v2587
    %4290 = vmatprep.subr.mxu0 %v2596
    %4291 = vmatpush1.msra.mxu0 %v2595
    %4292 = vmatprep.subr.mxu0 %v2604
    %4293 = vmatpush1.msra.mxu0 %v2603
    %4294 = vmatprep.subr.mxu0 %v2612
    %4295 = vmatpush1.msra.mxu0 %v2611
    %4296 = vmatprep.subr.mxu0 %v2620
    %4297 = vmatpush1.msra.mxu0 %v2619
    %4298 = vmatprep.subr.mxu0 %v2628
    %4299 = vmatpush1.msra.mxu0 %v2627
    %4300 = vmatprep.subr.mxu0 %v2636
    %4301 = vmatpush1.msra.mxu0 %v2635
    %4302 = vmatprep.subr.mxu0 %v2644
    %4303 = vmatpush1.msra.mxu0 %v2643
    %4304 = vmatprep.subr.mxu0 %v2652
    %4305 = vmatpush1.msra.mxu0 %v2651
    %4306 = vmatprep.subr.mxu0 %v2660
    %4307 = vmatpush1.msra.mxu0 %v2659
    %4308 = vmatprep.subr.mxu0 %v2668
    %4309 = vmatpush1.msra.mxu0 %v2667
    %4310 = vmatprep.subr.mxu0 %v2676
    %4311 = vmatpush1.msra.mxu0 %v2675
    %4312 = vmatprep.subr.mxu0 %v2684
    %4313 = vmatpush1.msra.mxu0 %v2683
    %4314 = vmatprep.subr.mxu0 %v2692
    %4315 = vmatpush1.msra.mxu0 %v2691
    %4316 = vmatprep.subr.mxu0 %v2700
    %4317 = vmatpush1.msra.mxu0 %v2699
    %4318 = vmatprep.subr.mxu0 %v2708
    %4319 = vmatpush1.msra.mxu0 %v2707
    %4320 = vmatprep.subr.mxu0 %v2716
    %4321 = vmatpush1.msra.mxu0 %v2715
    %4322 = vmatprep.subr.mxu0 %v2724
    %4323 = vmatpush1.msra.mxu0 %v2723
    %4324 = vmatprep.subr.mxu0 %v2732
    %4325 = vmatpush1.msra.mxu0 %v2731
    %4326 = vmatprep.subr.mxu0 %v2740
    %4327 = vmatpush1.msra.mxu0 %v2739
    %4328 = vmatprep.subr.mxu0 %v2748
    %4329 = vmatpush1.msra.mxu0 %v2747
    %4330 = vmatprep.subr.mxu0 %v2756
    %4331 = vmatpush1.msra.mxu0 %v2755
    %4332 = vmatprep.subr.mxu0 %v2764
    %4333 = vmatpush1.msra.mxu0 %v2763
    %4334 = vmatprep.subr.mxu0 %v2772
    %4335 = vmatpush1.msra.mxu0 %v2771
    %4336 = vmatprep.subr.mxu0 %v2780
    %4337 = vmatpush1.msra.mxu0 %v2779
    %4338 = vmatprep.subr.mxu0 %v2788
    %4339 = vmatpush1.msra.mxu0 %v2787
    %4340 = vmatprep.subr.mxu0 %v2796
    %4341 = vmatpush1.msra.mxu0 %v2795
    %4342 = vmatprep.subr.mxu0 %v2804
    %4343 = vmatpush1.msra.mxu0 %v2803
    %4344 = vmatprep.mubr.f32.mxu0 %v4200
    %4345 = vmatmul.mubr.f32.gmra.mrb[0].mxu0 %v4199
    %v4346 = vpop.f32.mrb[0].mxu0
    %v4347 = vadd.f32 0.0, %v4346
    %v4348 = vpop.f32.mrb[0].mxu0
    %v4349 = vadd.f32 0.0, %v4348
    %4350 = vdwg.mxu0
    %4351 = vmatprep.subr.mxu0 %v2558
    %4352 = vmatpush1.msra.mxu0 %v2557
    %4353 = vmatprep.subr.mxu0 %v2566
    %4354 = vmatpush1.msra.mxu0 %v2565
    %4355 = vmatprep.subr.mxu0 %v2574
    %4356 = vmatpush1.msra.mxu0 %v2573
    %4357 = vmatprep.subr.mxu0 %v2582
    %4358 = vmatpush1.msra.mxu0 %v2581
    %4359 = vmatprep.subr.mxu0 %v2590
    %4360 = vmatpush1.msra.mxu0 %v2589
    %4361 = vmatprep.subr.mxu0 %v2598
    %4362 = vmatpush1.msra.mxu0 %v2597
    %4363 = vmatprep.subr.mxu0 %v2606
    %4364 = vmatpush1.msra.mxu0 %v2605
    %4365 = vmatprep.subr.mxu0 %v2614
    %4366 = vmatpush1.msra.mxu0 %v2613
    %4367 = vmatprep.subr.mxu0 %v2622
    %4368 = vmatpush1.msra.mxu0 %v2621
    %4369 = vmatprep.subr.mxu0 %v2630
    %4370 = vmatpush1.msra.mxu0 %v2629
    %4371 = vmatprep.subr.mxu0 %v2638
    %4372 = vmatpush1.msra.mxu0 %v2637
    %4373 = vmatprep.subr.mxu0 %v2646
    %4374 = vmatpush1.msra.mxu0 %v2645
    %4375 = vmatprep.subr.mxu0 %v2654
    %4376 = vmatpush1.msra.mxu0 %v2653
    %4377 = vmatprep.subr.mxu0 %v2662
    %4378 = vmatpush1.msra.mxu0 %v2661
    %4379 = vmatprep.subr.mxu0 %v2670
    %4380 = vmatpush1.msra.mxu0 %v2669
    %4381 = vmatprep.subr.mxu0 %v2678
    %4382 = vmatpush1.msra.mxu0 %v2677
    %4383 = vmatprep.subr.mxu0 %v2686
    %4384 = vmatpush1.msra.mxu0 %v2685
    %4385 = vmatprep.subr.mxu0 %v2694
    %4386 = vmatpush1.msra.mxu0 %v2693
    %4387 = vmatprep.subr.mxu0 %v2702
    %4388 = vmatpush1.msra.mxu0 %v2701
    %4389 = vmatprep.subr.mxu0 %v2710
    %4390 = vmatpush1.msra.mxu0 %v2709
    %4391 = vmatprep.subr.mxu0 %v2718
    %4392 = vmatpush1.msra.mxu0 %v2717
    %4393 = vmatprep.subr.mxu0 %v2726
    %4394 = vmatpush1.msra.mxu0 %v2725
    %4395 = vmatprep.subr.mxu0 %v2734
    %4396 = vmatpush1.msra.mxu0 %v2733
    %4397 = vmatprep.subr.mxu0 %v2742
    %4398 = vmatpush1.msra.mxu0 %v2741
    %4399 = vmatprep.subr.mxu0 %v2750
    %4400 = vmatpush1.msra.mxu0 %v2749
    %4401 = vmatprep.subr.mxu0 %v2758
    %4402 = vmatpush1.msra.mxu0 %v2757
    %4403 = vmatprep.subr.mxu0 %v2766
    %4404 = vmatpush1.msra.mxu0 %v2765
    %4405 = vmatprep.subr.mxu0 %v2774
    %4406 = vmatpush1.msra.mxu0 %v2773
    %4407 = vmatprep.subr.mxu0 %v2782
    %4408 = vmatpush1.msra.mxu0 %v2781
    %4409 = vmatprep.subr.mxu0 %v2790
    %4410 = vmatpush1.msra.mxu0 %v2789
    %4411 = vmatprep.subr.mxu0 %v2798
    %4412 = vmatpush1.msra.mxu0 %v2797
    %4413 = vmatprep.subr.mxu0 %v2806
    %4414 = vmatpush1.msra.mxu0 %v2805
    %4415 = vmatprep.mubr.f32.mxu0 %v4200
    %4416 = vmatmul.mubr.f32.gmra.mrb[0].mxu0 %v4199
    %v4417 = vpop.f32.mrb[0].mxu0
    %v4418 = vadd.f32 0.0, %v4417
    %v4419 = vpop.f32.mrb[0].mxu0
    %v4420 = vadd.f32 0.0, %v4419
    %4421 = vdwg.mxu0
    %4422 = vmatprep.subr.mxu0 %v2560
    %4423 = vmatpush1.msra.mxu0 %v2559
    %4424 = vmatprep.subr.mxu0 %v2568
    %4425 = vmatpush1.msra.mxu0 %v2567
    %4426 = vmatprep.subr.mxu0 %v2576
    %4427 = vmatpush1.msra.mxu0 %v2575
    %4428 = vmatprep.subr.mxu0 %v2584
    %4429 = vmatpush1.msra.mxu0 %v2583
    %4430 = vmatprep.subr.mxu0 %v2592
    %4431 = vmatpush1.msra.mxu0 %v2591
    %4432 = vmatprep.subr.mxu0 %v2600
    %4433 = vmatpush1.msra.mxu0 %v2599
    %4434 = vmatprep.subr.mxu0 %v2608
    %4435 = vmatpush1.msra.mxu0 %v2607
    %4436 = vmatprep.subr.mxu0 %v2616
    %4437 = vmatpush1.msra.mxu0 %v2615
    %4438 = vmatprep.subr.mxu0 %v2624
    %4439 = vmatpush1.msra.mxu0 %v2623
    %4440 = vmatprep.subr.mxu0 %v2632
    %4441 = vmatpush1.msra.mxu0 %v2631
    %4442 = vmatprep.subr.mxu0 %v2640
    %4443 = vmatpush1.msra.mxu0 %v2639
    %4444 = vmatprep.subr.mxu0 %v2648
    %4445 = vmatpush1.msra.mxu0 %v2647
    %4446 = vmatprep.subr.mxu0 %v2656
    %4447 = vmatpush1.msra.mxu0 %v2655
    %4448 = vmatprep.subr.mxu0 %v2664
    %4449 = vmatpush1.msra.mxu0 %v2663
    %4450 = vmatprep.subr.mxu0 %v2672
    %4451 = vmatpush1.msra.mxu0 %v2671
    %4452 = vmatprep.subr.mxu0 %v2680
    %4453 = vmatpush1.msra.mxu0 %v2679
    %4454 = vmatprep.subr.mxu0 %v2688
    %4455 = vmatpush1.msra.mxu0 %v2687
    %4456 = vmatprep.subr.mxu0 %v2696
    %4457 = vmatpush1.msra.mxu0 %v2695
    %4458 = vmatprep.subr.mxu0 %v2704
    %4459 = vmatpush1.msra.mxu0 %v2703
    %4460 = vmatprep.subr.mxu0 %v2712
    %4461 = vmatpush1.msra.mxu0 %v2711
    %4462 = vmatprep.subr.mxu0 %v2720
    %4463 = vmatpush1.msra.mxu0 %v2719
    %4464 = vmatprep.subr.mxu0 %v2728
    %4465 = vmatpush1.msra.mxu0 %v2727
    %4466 = vmatprep.subr.mxu0 %v2736
    %4467 = vmatpush1.msra.mxu0 %v2735
    %4468 = vmatprep.subr.mxu0 %v2744
    %4469 = vmatpush1.msra.mxu0 %v2743
    %4470 = vmatprep.subr.mxu0 %v2752
    %4471 = vmatpush1.msra.mxu0 %v2751
    %4472 = vmatprep.subr.mxu0 %v2760
    %4473 = vmatpush1.msra.mxu0 %v2759
    %4474 = vmatprep.subr.mxu0 %v2768
    %4475 = vmatpush1.msra.mxu0 %v2767
    %4476 = vmatprep.subr.mxu0 %v2776
    %4477 = vmatpush1.msra.mxu0 %v2775
    %4478 = vmatprep.subr.mxu0 %v2784
    %4479 = vmatpush1.msra.mxu0 %v2783
    %4480 = vmatprep.subr.mxu0 %v2792
    %4481 = vmatpush1.msra.mxu0 %v2791
    %4482 = vmatprep.subr.mxu0 %v2800
    %4483 = vmatpush1.msra.mxu0 %v2799
    %4484 = vmatprep.subr.mxu0 %v2808
    %4485 = vmatpush1.msra.mxu0 %v2807
    %4486 = vmatprep.mubr.f32.mxu0 %v4200
    %4487 = vmatmul.mubr.f32.gmra.mrb[0].mxu0 %v4199
    %v4488 = vpop.f32.mrb[0].mxu0
    %v4489 = vadd.f32 0.0, %v4488
    %v4490 = vpop.f32.mrb[0].mxu0
    %v4491 = vadd.f32 0.0, %v4490
    %4492 = vdwg.mxu0
    %v4493 = vadd.f32 %v4201, %v4276
    %v4494 = vadd.f32 %v4202, %v4278
    %v4495 = vadd.f32 %v4203, %v4347
    %v4496 = vadd.f32 %v4204, %v4349
    %v4497 = vadd.f32 %v4205, %v4418
    %v4498 = vadd.f32 %v4206, %v4420
    %v4499 = vadd.f32 %v4207, %v4489
    %v4500 = vadd.f32 %v4208, %v4491
    %v4501 = vxor.u32 %v4493, 2147483648
    %v4502 = vxor.u32 %v4494, 2147483648
    %v4503 = vmul.f32 %v4501, 1.442695
    %v4504 = vpow.pop %v4503
    %v4505 = vmul.f32 %v4502, 1.442695
    %v4506 = vpow.pop %v4505
    %v4507 = vadd.f32 %v4504, 1.0
    %v4508 = vadd.f32 %v4506, 1.0
    %v4509 = vrcp.pop %v4507
    %v4510 = vmul.f32 1.0, %v4509
    %v4511 = vrcp.pop %v4508
    %v4512 = vmul.f32 1.0, %v4511
    %v4513 = vxor.u32 %v4495, 2147483648
    %v4514 = vxor.u32 %v4496, 2147483648
    %v4515 = vmul.f32 %v4513, 1.442695
    %v4516 = vpow.pop %v4515
    %v4517 = vmul.f32 %v4514, 1.442695
    %v4518 = vpow.pop %v4517
    %v4519 = vadd.f32 %v4516, 1.0
    %v4520 = vadd.f32 %v4518, 1.0
    %v4521 = vrcp.pop %v4519
    %v4522 = vmul.f32 1.0, %v4521
    %v4523 = vrcp.pop %v4520
    %v4524 = vmul.f32 1.0, %v4523
    %v4525 = vtanh.pop %v4497
    %v4526 = vtanh.pop %v4498
    %v4527 = vxor.u32 %v4499, 2147483648
    %v4528 = vxor.u32 %v4500, 2147483648
    %v4529 = vmul.f32 %v4527, 1.442695
    %v4530 = vpow.pop %v4529
    %v4531 = vmul.f32 %v4528, 1.442695
    %v4532 = vpow.pop %v4531
    %v4533 = vadd.f32 %v4530, 1.0
    %v4534 = vadd.f32 %v4532, 1.0
    %v4535 = vrcp.pop %v4533
    %v4536 = vmul.f32 1.0, %v4535
    %v4537 = vrcp.pop %v4534
    %v4538 = vmul.f32 1.0, %v4537
    %v4539 = vmul.f32 %v4522, %v4195
    %v4540 = vmul.f32 %v4524, %v4196
    %v4541 = vmul.f32 %v4510, %v4525
    %v4542 = vmul.f32 %v4512, %v4526
    %v4543 = vadd.f32 %v4539, %v4541
    %v4544 = vadd.f32 %v4540, %v4542
    %v4545 = vtanh.pop %v4543
    %v4546 = vtanh.pop %v4544
    %v4547 = vmul.f32 %v4536, %v4545
    %v4548 = vmul.f32 %v4538, %v4546
    %v4549 = vld [vmem:[#allocation4 + $0x140] sm:$0xff]
    %v4550 = vld [vmem:[#allocation4 + $0x148] sm:$0xff]
    %v4551 = vld [vmem:[#allocation4 + $0x150] sm:$0xff]
    %v4552 = vld [vmem:[#allocation4 + $0x158] sm:$0xff]
    %v4553 = vld [vmem:[#allocation4 + $0x160] sm:$0xff]
    %v4554 = vld [vmem:[#allocation4 + $0x168] sm:$0xff]
    %v4555 = vld [vmem:[#allocation4 + $0x170] sm:$0xff]
    %v4556 = vld [vmem:[#allocation4 + $0x178] sm:$0xff]
    %4557 = vmatprep.subr.mxu0 %v2554
    %4558 = vmatpush1.msra.mxu0 %v2553
    %4559 = vmatprep.subr.mxu0 %v2562
    %4560 = vmatpush1.msra.mxu0 %v2561
    %4561 = vmatprep.subr.mxu0 %v2570
    %4562 = vmatpush1.msra.mxu0 %v2569
    %4563 = vmatprep.subr.mxu0 %v2578
    %4564 = vmatpush1.msra.mxu0 %v2577
    %4565 = vmatprep.subr.mxu0 %v2586
    %4566 = vmatpush1.msra.mxu0 %v2585
    %4567 = vmatprep.subr.mxu0 %v2594
    %4568 = vmatpush1.msra.mxu0 %v2593
    %4569 = vmatprep.subr.mxu0 %v2602
    %4570 = vmatpush1.msra.mxu0 %v2601
    %4571 = vmatprep.subr.mxu0 %v2610
    %4572 = vmatpush1.msra.mxu0 %v2609
    %4573 = vmatprep.subr.mxu0 %v2618
    %4574 = vmatpush1.msra.mxu0 %v2617
    %4575 = vmatprep.subr.mxu0 %v2626
    %4576 = vmatpush1.msra.mxu0 %v2625
    %4577 = vmatprep.subr.mxu0 %v2634
    %4578 = vmatpush1.msra.mxu0 %v2633
    %4579 = vmatprep.subr.mxu0 %v2642
    %4580 = vmatpush1.msra.mxu0 %v2641
    %4581 = vmatprep.subr.mxu0 %v2650
    %4582 = vmatpush1.msra.mxu0 %v2649
    %4583 = vmatprep.subr.mxu0 %v2658
    %4584 = vmatpush1.msra.mxu0 %v2657
    %4585 = vmatprep.subr.mxu0 %v2666
    %4586 = vmatpush1.msra.mxu0 %v2665
    %4587 = vmatprep.subr.mxu0 %v2674
    %4588 = vmatpush1.msra.mxu0 %v2673
    %4589 = vmatprep.subr.mxu0 %v2682
    %4590 = vmatpush1.msra.mxu0 %v2681
    %4591 = vmatprep.subr.mxu0 %v2690
    %4592 = vmatpush1.msra.mxu0 %v2689
    %4593 = vmatprep.subr.mxu0 %v2698
    %4594 = vmatpush1.msra.mxu0 %v2697
    %4595 = vmatprep.subr.mxu0 %v2706
    %4596 = vmatpush1.msra.mxu0 %v2705
    %4597 = vmatprep.subr.mxu0 %v2714
    %4598 = vmatpush1.msra.mxu0 %v2713
    %4599 = vmatprep.subr.mxu0 %v2722
    %4600 = vmatpush1.msra.mxu0 %v2721
    %4601 = vmatprep.subr.mxu0 %v2730
    %4602 = vmatpush1.msra.mxu0 %v2729
    %4603 = vmatprep.subr.mxu0 %v2738
    %4604 = vmatpush1.msra.mxu0 %v2737
    %4605 = vmatprep.subr.mxu0 %v2746
    %4606 = vmatpush1.msra.mxu0 %v2745
    %4607 = vmatprep.subr.mxu0 %v2754
    %4608 = vmatpush1.msra.mxu0 %v2753
    %4609 = vmatprep.subr.mxu0 %v2762
    %4610 = vmatpush1.msra.mxu0 %v2761
    %4611 = vmatprep.subr.mxu0 %v2770
    %4612 = vmatpush1.msra.mxu0 %v2769
    %4613 = vmatprep.subr.mxu0 %v2778
    %4614 = vmatpush1.msra.mxu0 %v2777
    %4615 = vmatprep.subr.mxu0 %v2786
    %4616 = vmatpush1.msra.mxu0 %v2785
    %4617 = vmatprep.subr.mxu0 %v2794
    %4618 = vmatpush1.msra.mxu0 %v2793
    %4619 = vmatprep.subr.mxu0 %v2802
    %4620 = vmatpush1.msra.mxu0 %v2801
    %4621 = vmatprep.mubr.f32.mxu0 %v4548
    %4622 = vmatmul.mubr.f32.gmra.mrb[0].mxu0 %v4547
    %v4623 = vpop.f32.mrb[0].mxu0
    %v4624 = vadd.f32 0.0, %v4623
    %v4625 = vpop.f32.mrb[0].mxu0
    %v4626 = vadd.f32 0.0, %v4625
    %4627 = vdwg.mxu0
    %4628 = vmatprep.subr.mxu0 %v2556
    %4629 = vmatpush1.msra.mxu0 %v2555
    %4630 = vmatprep.subr.mxu0 %v2564
    %4631 = vmatpush1.msra.mxu0 %v2563
    %4632 = vmatprep.subr.mxu0 %v2572
    %4633 = vmatpush1.msra.mxu0 %v2571
    %4634 = vmatprep.subr.mxu0 %v2580
    %4635 = vmatpush1.msra.mxu0 %v2579
    %4636 = vmatprep.subr.mxu0 %v2588
    %4637 = vmatpush1.msra.mxu0 %v2587
    %4638 = vmatprep.subr.mxu0 %v2596
    %4639 = vmatpush1.msra.mxu0 %v2595
    %4640 = vmatprep.subr.mxu0 %v2604
    %4641 = vmatpush1.msra.mxu0 %v2603
    %4642 = vmatprep.subr.mxu0 %v2612
    %4643 = vmatpush1.msra.mxu0 %v2611
    %4644 = vmatprep.subr.mxu0 %v2620
    %4645 = vmatpush1.msra.mxu0 %v2619
    %4646 = vmatprep.subr.mxu0 %v2628
    %4647 = vmatpush1.msra.mxu0 %v2627
    %4648 = vmatprep.subr.mxu0 %v2636
    %4649 = vmatpush1.msra.mxu0 %v2635
    %4650 = vmatprep.subr.mxu0 %v2644
    %4651 = vmatpush1.msra.mxu0 %v2643
    %4652 = vmatprep.subr.mxu0 %v2652
    %4653 = vmatpush1.msra.mxu0 %v2651
    %4654 = vmatprep.subr.mxu0 %v2660
    %4655 = vmatpush1.msra.mxu0 %v2659
    %4656 = vmatprep.subr.mxu0 %v2668
    %4657 = vmatpush1.msra.mxu0 %v2667
    %4658 = vmatprep.subr.mxu0 %v2676
    %4659 = vmatpush1.msra.mxu0 %v2675
    %4660 = vmatprep.subr.mxu0 %v2684
    %4661 = vmatpush1.msra.mxu0 %v2683
    %4662 = vmatprep.subr.mxu0 %v2692
    %4663 = vmatpush1.msra.mxu0 %v2691
    %4664 = vmatprep.subr.mxu0 %v2700
    %4665 = vmatpush1.msra.mxu0 %v2699
    %4666 = vmatprep.subr.mxu0 %v2708
    %4667 = vmatpush1.msra.mxu0 %v2707
    %4668 = vmatprep.subr.mxu0 %v2716
    %4669 = vmatpush1.msra.mxu0 %v2715
    %4670 = vmatprep.subr.mxu0 %v2724
    %4671 = vmatpush1.msra.mxu0 %v2723
    %4672 = vmatprep.subr.mxu0 %v2732
    %4673 = vmatpush1.msra.mxu0 %v2731
    %4674 = vmatprep.subr.mxu0 %v2740
    %4675 = vmatpush1.msra.mxu0 %v2739
    %4676 = vmatprep.subr.mxu0 %v2748
    %4677 = vmatpush1.msra.mxu0 %v2747
    %4678 = vmatprep.subr.mxu0 %v2756
    %4679 = vmatpush1.msra.mxu0 %v2755
    %4680 = vmatprep.subr.mxu0 %v2764
    %4681 = vmatpush1.msra.mxu0 %v2763
    %4682 = vmatprep.subr.mxu0 %v2772
    %4683 = vmatpush1.msra.mxu0 %v2771
    %4684 = vmatprep.subr.mxu0 %v2780
    %4685 = vmatpush1.msra.mxu0 %v2779
    %4686 = vmatprep.subr.mxu0 %v2788
    %4687 = vmatpush1.msra.mxu0 %v2787
    %4688 = vmatprep.subr.mxu0 %v2796
    %4689 = vmatpush1.msra.mxu0 %v2795
    %4690 = vmatprep.subr.mxu0 %v2804
    %4691 = vmatpush1.msra.mxu0 %v2803
    %4692 = vmatprep.mubr.f32.mxu0 %v4548
    %4693 = vmatmul.mubr.f32.gmra.mrb[0].mxu0 %v4547
    %v4694 = vpop.f32.mrb[0].mxu0
    %v4695 = vadd.f32 0.0, %v4694
    %v4696 = vpop.f32.mrb[0].mxu0
    %v4697 = vadd.f32 0.0, %v4696
    %4698 = vdwg.mxu0
    %4699 = vmatprep.subr.mxu0 %v2558
    %4700 = vmatpush1.msra.mxu0 %v2557
    %4701 = vmatprep.subr.mxu0 %v2566
    %4702 = vmatpush1.msra.mxu0 %v2565
    %4703 = vmatprep.subr.mxu0 %v2574
    %4704 = vmatpush1.msra.mxu0 %v2573
    %4705 = vmatprep.subr.mxu0 %v2582
    %4706 = vmatpush1.msra.mxu0 %v2581
    %4707 = vmatprep.subr.mxu0 %v2590
    %4708 = vmatpush1.msra.mxu0 %v2589
    %4709 = vmatprep.subr.mxu0 %v2598
    %4710 = vmatpush1.msra.mxu0 %v2597
    %4711 = vmatprep.subr.mxu0 %v2606
    %4712 = vmatpush1.msra.mxu0 %v2605
    %4713 = vmatprep.subr.mxu0 %v2614
    %4714 = vmatpush1.msra.mxu0 %v2613
    %4715 = vmatprep.subr.mxu0 %v2622
    %4716 = vmatpush1.msra.mxu0 %v2621
    %4717 = vmatprep.subr.mxu0 %v2630
    %4718 = vmatpush1.msra.mxu0 %v2629
    %4719 = vmatprep.subr.mxu0 %v2638
    %4720 = vmatpush1.msra.mxu0 %v2637
    %4721 = vmatprep.subr.mxu0 %v2646
    %4722 = vmatpush1.msra.mxu0 %v2645
    %4723 = vmatprep.subr.mxu0 %v2654
    %4724 = vmatpush1.msra.mxu0 %v2653
    %4725 = vmatprep.subr.mxu0 %v2662
    %4726 = vmatpush1.msra.mxu0 %v2661
    %4727 = vmatprep.subr.mxu0 %v2670
    %4728 = vmatpush1.msra.mxu0 %v2669
    %4729 = vmatprep.subr.mxu0 %v2678
    %4730 = vmatpush1.msra.mxu0 %v2677
    %4731 = vmatprep.subr.mxu0 %v2686
    %4732 = vmatpush1.msra.mxu0 %v2685
    %4733 = vmatprep.subr.mxu0 %v2694
    %4734 = vmatpush1.msra.mxu0 %v2693
    %4735 = vmatprep.subr.mxu0 %v2702
    %4736 = vmatpush1.msra.mxu0 %v2701
    %4737 = vmatprep.subr.mxu0 %v2710
    %4738 = vmatpush1.msra.mxu0 %v2709
    %4739 = vmatprep.subr.mxu0 %v2718
    %4740 = vmatpush1.msra.mxu0 %v2717
    %4741 = vmatprep.subr.mxu0 %v2726
    %4742 = vmatpush1.msra.mxu0 %v2725
    %4743 = vmatprep.subr.mxu0 %v2734
    %4744 = vmatpush1.msra.mxu0 %v2733
    %4745 = vmatprep.subr.mxu0 %v2742
    %4746 = vmatpush1.msra.mxu0 %v2741
    %4747 = vmatprep.subr.mxu0 %v2750
    %4748 = vmatpush1.msra.mxu0 %v2749
    %4749 = vmatprep.subr.mxu0 %v2758
    %4750 = vmatpush1.msra.mxu0 %v2757
    %4751 = vmatprep.subr.mxu0 %v2766
    %4752 = vmatpush1.msra.mxu0 %v2765
    %4753 = vmatprep.subr.mxu0 %v2774
    %4754 = vmatpush1.msra.mxu0 %v2773
    %4755 = vmatprep.subr.mxu0 %v2782
    %4756 = vmatpush1.msra.mxu0 %v2781
    %4757 = vmatprep.subr.mxu0 %v2790
    %4758 = vmatpush1.msra.mxu0 %v2789
    %4759 = vmatprep.subr.mxu0 %v2798
    %4760 = vmatpush1.msra.mxu0 %v2797
    %4761 = vmatprep.subr.mxu0 %v2806
    %4762 = vmatpush1.msra.mxu0 %v2805
    %4763 = vmatprep.mubr.f32.mxu0 %v4548
    %4764 = vmatmul.mubr.f32.gmra.mrb[0].mxu0 %v4547
    %v4765 = vpop.f32.mrb[0].mxu0
    %v4766 = vadd.f32 0.0, %v4765
    %v4767 = vpop.f32.mrb[0].mxu0
    %v4768 = vadd.f32 0.0, %v4767
    %4769 = vdwg.mxu0
    %4770 = vmatprep.subr.mxu0 %v2560
    %4771 = vmatpush1.msra.mxu0 %v2559
    %4772 = vmatprep.subr.mxu0 %v2568
    %4773 = vmatpush1.msra.mxu0 %v2567
    %4774 = vmatprep.subr.mxu0 %v2576
    %4775 = vmatpush1.msra.mxu0 %v2575
    %4776 = vmatprep.subr.mxu0 %v2584
    %4777 = vmatpush1.msra.mxu0 %v2583
    %4778 = vmatprep.subr.mxu0 %v2592
    %4779 = vmatpush1.msra.mxu0 %v2591
    %4780 = vmatprep.subr.mxu0 %v2600
    %4781 = vmatpush1.msra.mxu0 %v2599
    %4782 = vmatprep.subr.mxu0 %v2608
    %4783 = vmatpush1.msra.mxu0 %v2607
    %4784 = vmatprep.subr.mxu0 %v2616
    %4785 = vmatpush1.msra.mxu0 %v2615
    %4786 = vmatprep.subr.mxu0 %v2624
    %4787 = vmatpush1.msra.mxu0 %v2623
    %4788 = vmatprep.subr.mxu0 %v2632
    %4789 = vmatpush1.msra.mxu0 %v2631
    %4790 = vmatprep.subr.mxu0 %v2640
    %4791 = vmatpush1.msra.mxu0 %v2639
    %4792 = vmatprep.subr.mxu0 %v2648
    %4793 = vmatpush1.msra.mxu0 %v2647
    %4794 = vmatprep.subr.mxu0 %v2656
    %4795 = vmatpush1.msra.mxu0 %v2655
    %4796 = vmatprep.subr.mxu0 %v2664
    %4797 = vmatpush1.msra.mxu0 %v2663
    %4798 = vmatprep.subr.mxu0 %v2672
    %4799 = vmatpush1.msra.mxu0 %v2671
    %4800 = vmatprep.subr.mxu0 %v2680
    %4801 = vmatpush1.msra.mxu0 %v2679
    %4802 = vmatprep.subr.mxu0 %v2688
    %4803 = vmatpush1.msra.mxu0 %v2687
    %4804 = vmatprep.subr.mxu0 %v2696
    %4805 = vmatpush1.msra.mxu0 %v2695
    %4806 = vmatprep.subr.mxu0 %v2704
    %4807 = vmatpush1.msra.mxu0 %v2703
    %4808 = vmatprep.subr.mxu0 %v2712
    %4809 = vmatpush1.msra.mxu0 %v2711
    %4810 = vmatprep.subr.mxu0 %v2720
    %4811 = vmatpush1.msra.mxu0 %v2719
    %4812 = vmatprep.subr.mxu0 %v2728
    %4813 = vmatpush1.msra.mxu0 %v2727
    %4814 = vmatprep.subr.mxu0 %v2736
    %4815 = vmatpush1.msra.mxu0 %v2735
    %4816 = vmatprep.subr.mxu0 %v2744
    %4817 = vmatpush1.msra.mxu0 %v2743
    %4818 = vmatprep.subr.mxu0 %v2752
    %4819 = vmatpush1.msra.mxu0 %v2751
    %4820 = vmatprep.subr.mxu0 %v2760
    %4821 = vmatpush1.msra.mxu0 %v2759
    %4822 = vmatprep.subr.mxu0 %v2768
    %4823 = vmatpush1.msra.mxu0 %v2767
    %4824 = vmatprep.subr.mxu0 %v2776
    %4825 = vmatpush1.msra.mxu0 %v2775
    %4826 = vmatprep.subr.mxu0 %v2784
    %4827 = vmatpush1.msra.mxu0 %v2783
    %4828 = vmatprep.subr.mxu0 %v2792
    %4829 = vmatpush1.msra.mxu0 %v2791
    %4830 = vmatprep.subr.mxu0 %v2800
    %4831 = vmatpush1.msra.mxu0 %v2799
    %4832 = vmatprep.subr.mxu0 %v2808
    %4833 = vmatpush1.msra.mxu0 %v2807
    %4834 = vmatprep.mubr.f32.mxu0 %v4548
    %4835 = vmatmul.mubr.f32.gmra.mrb[0].mxu0 %v4547
    %v4836 = vpop.f32.mrb[0].mxu0
    %v4837 = vadd.f32 0.0, %v4836
    %v4838 = vpop.f32.mrb[0].mxu0
    %v4839 = vadd.f32 0.0, %v4838
    %4840 = vdwg.mxu0
    %v4841 = vadd.f32 %v4549, %v4624
    %v4842 = vadd.f32 %v4550, %v4626
    %v4843 = vadd.f32 %v4551, %v4695
    %v4844 = vadd.f32 %v4552, %v4697
    %v4845 = vadd.f32 %v4553, %v4766
    %v4846 = vadd.f32 %v4554, %v4768
    %v4847 = vadd.f32 %v4555, %v4837
    %v4848 = vadd.f32 %v4556, %v4839
    %v4849 = vxor.u32 %v4841, 2147483648
    %v4850 = vxor.u32 %v4842, 2147483648
    %v4851 = vmul.f32 %v4849, 1.442695
    %v4852 = vpow.pop %v4851
    %v4853 = vmul.f32 %v4850, 1.442695
    %v4854 = vpow.pop %v4853
    %v4855 = vadd.f32 %v4852, 1.0
    %v4856 = vadd.f32 %v4854, 1.0
    %v4857 = vrcp.pop %v4855
    %v4858 = vmul.f32 1.0, %v4857
    %v4859 = vrcp.pop %v4856
    %v4860 = vmul.f32 1.0, %v4859
    %v4861 = vxor.u32 %v4843, 2147483648
    %v4862 = vxor.u32 %v4844, 2147483648
    %v4863 = vmul.f32 %v4861, 1.442695
    %v4864 = vpow.pop %v4863
    %v4865 = vmul.f32 %v4862, 1.442695
    %v4866 = vpow.pop %v4865
    %v4867 = vadd.f32 %v4864, 1.0
    %v4868 = vadd.f32 %v4866, 1.0
    %v4869 = vrcp.pop %v4867
    %v4870 = vmul.f32 1.0, %v4869
    %v4871 = vrcp.pop %v4868
    %v4872 = vmul.f32 1.0, %v4871
    %v4873 = vtanh.pop %v4845
    %v4874 = vtanh.pop %v4846
    %v4875 = vxor.u32 %v4847, 2147483648
    %v4876 = vxor.u32 %v4848, 2147483648
    %v4877 = vmul.f32 %v4875, 1.442695
    %v4878 = vpow.pop %v4877
    %v4879 = vmul.f32 %v4876, 1.442695
    %v4880 = vpow.pop %v4879
    %v4881 = vadd.f32 %v4878, 1.0
    %v4882 = vadd.f32 %v4880, 1.0
    %v4883 = vrcp.pop %v4881
    %v4884 = vmul.f32 1.0, %v4883
    %v4885 = vrcp.pop %v4882
    %v4886 = vmul.f32 1.0, %v4885
    %v4887 = vmul.f32 %v4870, %v4543
    %v4888 = vmul.f32 %v4872, %v4544
    %v4889 = vmul.f32 %v4858, %v4873
    %v4890 = vmul.f32 %v4860, %v4874
    %v4891 = vadd.f32 %v4887, %v4889
    %v4892 = vadd.f32 %v4888, %v4890
    %v4893 = vtanh.pop %v4891
    %v4894 = vtanh.pop %v4892
    %v4895 = vmul.f32 %v4884, %v4893
    %v4896 = vmul.f32 %v4886, %v4894
    %v4897 = vld [vmem:[#allocation4 + $0x180] sm:$0xff]
    %v4898 = vld [vmem:[#allocation4 + $0x188] sm:$0xff]
    %v4899 = vld [vmem:[#allocation4 + $0x190] sm:$0xff]
    %v4900 = vld [vmem:[#allocation4 + $0x198] sm:$0xff]
    %v4901 = vld [vmem:[#allocation4 + $0x1a0] sm:$0xff]
    %v4902 = vld [vmem:[#allocation4 + $0x1a8] sm:$0xff]
    %v4903 = vld [vmem:[#allocation4 + $0x1b0] sm:$0xff]
    %v4904 = vld [vmem:[#allocation4 + $0x1b8] sm:$0xff]
    %4905 = vmatprep.subr.mxu0 %v2554
    %4906 = vmatpush1.msra.mxu0 %v2553
    %4907 = vmatprep.subr.mxu0 %v2562
    %4908 = vmatpush1.msra.mxu0 %v2561
    %4909 = vmatprep.subr.mxu0 %v2570
    %4910 = vmatpush1.msra.mxu0 %v2569
    %4911 = vmatprep.subr.mxu0 %v2578
    %4912 = vmatpush1.msra.mxu0 %v2577
    %4913 = vmatprep.subr.mxu0 %v2586
    %4914 = vmatpush1.msra.mxu0 %v2585
    %4915 = vmatprep.subr.mxu0 %v2594
    %4916 = vmatpush1.msra.mxu0 %v2593
    %4917 = vmatprep.subr.mxu0 %v2602
    %4918 = vmatpush1.msra.mxu0 %v2601
    %4919 = vmatprep.subr.mxu0 %v2610
    %4920 = vmatpush1.msra.mxu0 %v2609
    %4921 = vmatprep.subr.mxu0 %v2618
    %4922 = vmatpush1.msra.mxu0 %v2617
    %4923 = vmatprep.subr.mxu0 %v2626
    %4924 = vmatpush1.msra.mxu0 %v2625
    %4925 = vmatprep.subr.mxu0 %v2634
    %4926 = vmatpush1.msra.mxu0 %v2633
    %4927 = vmatprep.subr.mxu0 %v2642
    %4928 = vmatpush1.msra.mxu0 %v2641
    %4929 = vmatprep.subr.mxu0 %v2650
    %4930 = vmatpush1.msra.mxu0 %v2649
    %4931 = vmatprep.subr.mxu0 %v2658
    %4932 = vmatpush1.msra.mxu0 %v2657
    %4933 = vmatprep.subr.mxu0 %v2666
    %4934 = vmatpush1.msra.mxu0 %v2665
    %4935 = vmatprep.subr.mxu0 %v2674
    %4936 = vmatpush1.msra.mxu0 %v2673
    %4937 = vmatprep.subr.mxu0 %v2682
    %4938 = vmatpush1.msra.mxu0 %v2681
    %4939 = vmatprep.subr.mxu0 %v2690
    %4940 = vmatpush1.msra.mxu0 %v2689
    %4941 = vmatprep.subr.mxu0 %v2698
    %4942 = vmatpush1.msra.mxu0 %v2697
    %4943 = vmatprep.subr.mxu0 %v2706
    %4944 = vmatpush1.msra.mxu0 %v2705
    %4945 = vmatprep.subr.mxu0 %v2714
    %4946 = vmatpush1.msra.mxu0 %v2713
    %4947 = vmatprep.subr.mxu0 %v2722
    %4948 = vmatpush1.msra.mxu0 %v2721
    %4949 = vmatprep.subr.mxu0 %v2730
    %4950 = vmatpush1.msra.mxu0 %v2729
    %4951 = vmatprep.subr.mxu0 %v2738
    %4952 = vmatpush1.msra.mxu0 %v2737
    %4953 = vmatprep.subr.mxu0 %v2746
    %4954 = vmatpush1.msra.mxu0 %v2745
    %4955 = vmatprep.subr.mxu0 %v2754
    %4956 = vmatpush1.msra.mxu0 %v2753
    %4957 = vmatprep.subr.mxu0 %v2762
    %4958 = vmatpush1.msra.mxu0 %v2761
    %4959 = vmatprep.subr.mxu0 %v2770
    %4960 = vmatpush1.msra.mxu0 %v2769
    %4961 = vmatprep.subr.mxu0 %v2778
    %4962 = vmatpush1.msra.mxu0 %v2777
    %4963 = vmatprep.subr.mxu0 %v2786
    %4964 = vmatpush1.msra.mxu0 %v2785
    %4965 = vmatprep.subr.mxu0 %v2794
    %4966 = vmatpush1.msra.mxu0 %v2793
    %4967 = vmatprep.subr.mxu0 %v2802
    %4968 = vmatpush1.msra.mxu0 %v2801
    %4969 = vmatprep.mubr.f32.mxu0 %v4896
    %4970 = vmatmul.mubr.f32.gmra.mrb[0].mxu0 %v4895
    %v4971 = vpop.f32.mrb[0].mxu0
    %v4972 = vadd.f32 0.0, %v4971
    %v4973 = vpop.f32.mrb[0].mxu0
    %v4974 = vadd.f32 0.0, %v4973
    %4975 = vdwg.mxu0
    %4976 = vmatprep.subr.mxu0 %v2556
    %4977 = vmatpush1.msra.mxu0 %v2555
    %4978 = vmatprep.subr.mxu0 %v2564
    %4979 = vmatpush1.msra.mxu0 %v2563
    %4980 = vmatprep.subr.mxu0 %v2572
    %4981 = vmatpush1.msra.mxu0 %v2571
    %4982 = vmatprep.subr.mxu0 %v2580
    %4983 = vmatpush1.msra.mxu0 %v2579
    %4984 = vmatprep.subr.mxu0 %v2588
    %4985 = vmatpush1.msra.mxu0 %v2587
    %4986 = vmatprep.subr.mxu0 %v2596
    %4987 = vmatpush1.msra.mxu0 %v2595
    %4988 = vmatprep.subr.mxu0 %v2604
    %4989 = vmatpush1.msra.mxu0 %v2603
    %4990 = vmatprep.subr.mxu0 %v2612
    %4991 = vmatpush1.msra.mxu0 %v2611
    %4992 = vmatprep.subr.mxu0 %v2620
    %4993 = vmatpush1.msra.mxu0 %v2619
    %4994 = vmatprep.subr.mxu0 %v2628
    %4995 = vmatpush1.msra.mxu0 %v2627
    %4996 = vmatprep.subr.mxu0 %v2636
    %4997 = vmatpush1.msra.mxu0 %v2635
    %4998 = vmatprep.subr.mxu0 %v2644
    %4999 = vmatpush1.msra.mxu0 %v2643
    %5000 = vmatprep.subr.mxu0 %v2652
    %5001 = vmatpush1.msra.mxu0 %v2651
    %5002 = vmatprep.subr.mxu0 %v2660
    %5003 = vmatpush1.msra.mxu0 %v2659
    %5004 = vmatprep.subr.mxu0 %v2668
    %5005 = vmatpush1.msra.mxu0 %v2667
    %5006 = vmatprep.subr.mxu0 %v2676
    %5007 = vmatpush1.msra.mxu0 %v2675
    %5008 = vmatprep.subr.mxu0 %v2684
    %5009 = vmatpush1.msra.mxu0 %v2683
    %5010 = vmatprep.subr.mxu0 %v2692
    %5011 = vmatpush1.msra.mxu0 %v2691
    %5012 = vmatprep.subr.mxu0 %v2700
    %5013 = vmatpush1.msra.mxu0 %v2699
    %5014 = vmatprep.subr.mxu0 %v2708
    %5015 = vmatpush1.msra.mxu0 %v2707
    %5016 = vmatprep.subr.mxu0 %v2716
    %5017 = vmatpush1.msra.mxu0 %v2715
    %5018 = vmatprep.subr.mxu0 %v2724
    %5019 = vmatpush1.msra.mxu0 %v2723
    %5020 = vmatprep.subr.mxu0 %v2732
    %5021 = vmatpush1.msra.mxu0 %v2731
    %5022 = vmatprep.subr.mxu0 %v2740
    %5023 = vmatpush1.msra.mxu0 %v2739
    %5024 = vmatprep.subr.mxu0 %v2748
    %5025 = vmatpush1.msra.mxu0 %v2747
    %5026 = vmatprep.subr.mxu0 %v2756
    %5027 = vmatpush1.msra.mxu0 %v2755
    %5028 = vmatprep.subr.mxu0 %v2764
    %5029 = vmatpush1.msra.mxu0 %v2763
    %5030 = vmatprep.subr.mxu0 %v2772
    %5031 = vmatpush1.msra.mxu0 %v2771
    %5032 = vmatprep.subr.mxu0 %v2780
    %5033 = vmatpush1.msra.mxu0 %v2779
    %5034 = vmatprep.subr.mxu0 %v2788
    %5035 = vmatpush1.msra.mxu0 %v2787
    %5036 = vmatprep.subr.mxu0 %v2796
    %5037 = vmatpush1.msra.mxu0 %v2795
    %5038 = vmatprep.subr.mxu0 %v2804
    %5039 = vmatpush1.msra.mxu0 %v2803
    %5040 = vmatprep.mubr.f32.mxu0 %v4896
    %5041 = vmatmul.mubr.f32.gmra.mrb[0].mxu0 %v4895
    %v5042 = vpop.f32.mrb[0].mxu0
    %v5043 = vadd.f32 0.0, %v5042
    %v5044 = vpop.f32.mrb[0].mxu0
    %v5045 = vadd.f32 0.0, %v5044
    %5046 = vdwg.mxu0
    %5047 = vmatprep.subr.mxu0 %v2558
    %5048 = vmatpush1.msra.mxu0 %v2557
    %5049 = vmatprep.subr.mxu0 %v2566
    %5050 = vmatpush1.msra.mxu0 %v2565
    %5051 = vmatprep.subr.mxu0 %v2574
    %5052 = vmatpush1.msra.mxu0 %v2573
    %5053 = vmatprep.subr.mxu0 %v2582
    %5054 = vmatpush1.msra.mxu0 %v2581
    %5055 = vmatprep.subr.mxu0 %v2590
    %5056 = vmatpush1.msra.mxu0 %v2589
    %5057 = vmatprep.subr.mxu0 %v2598
    %5058 = vmatpush1.msra.mxu0 %v2597
    %5059 = vmatprep.subr.mxu0 %v2606
    %5060 = vmatpush1.msra.mxu0 %v2605
    %5061 = vmatprep.subr.mxu0 %v2614
    %5062 = vmatpush1.msra.mxu0 %v2613
    %5063 = vmatprep.subr.mxu0 %v2622
    %5064 = vmatpush1.msra.mxu0 %v2621
    %5065 = vmatprep.subr.mxu0 %v2630
    %5066 = vmatpush1.msra.mxu0 %v2629
    %5067 = vmatprep.subr.mxu0 %v2638
    %5068 = vmatpush1.msra.mxu0 %v2637
    %5069 = vmatprep.subr.mxu0 %v2646
    %5070 = vmatpush1.msra.mxu0 %v2645
    %5071 = vmatprep.subr.mxu0 %v2654
    %5072 = vmatpush1.msra.mxu0 %v2653
    %5073 = vmatprep.subr.mxu0 %v2662
    %5074 = vmatpush1.msra.mxu0 %v2661
    %5075 = vmatprep.subr.mxu0 %v2670
    %5076 = vmatpush1.msra.mxu0 %v2669
    %5077 = vmatprep.subr.mxu0 %v2678
    %5078 = vmatpush1.msra.mxu0 %v2677
    %5079 = vmatprep.subr.mxu0 %v2686
    %5080 = vmatpush1.msra.mxu0 %v2685
    %5081 = vmatprep.subr.mxu0 %v2694
    %5082 = vmatpush1.msra.mxu0 %v2693
    %5083 = vmatprep.subr.mxu0 %v2702
    %5084 = vmatpush1.msra.mxu0 %v2701
    %5085 = vmatprep.subr.mxu0 %v2710
    %5086 = vmatpush1.msra.mxu0 %v2709
    %5087 = vmatprep.subr.mxu0 %v2718
    %5088 = vmatpush1.msra.mxu0 %v2717
    %5089 = vmatprep.subr.mxu0 %v2726
    %5090 = vmatpush1.msra.mxu0 %v2725
    %5091 = vmatprep.subr.mxu0 %v2734
    %5092 = vmatpush1.msra.mxu0 %v2733
    %5093 = vmatprep.subr.mxu0 %v2742
    %5094 = vmatpush1.msra.mxu0 %v2741
    %5095 = vmatprep.subr.mxu0 %v2750
    %5096 = vmatpush1.msra.mxu0 %v2749
    %5097 = vmatprep.subr.mxu0 %v2758
    %5098 = vmatpush1.msra.mxu0 %v2757
    %5099 = vmatprep.subr.mxu0 %v2766
    %5100 = vmatpush1.msra.mxu0 %v2765
    %5101 = vmatprep.subr.mxu0 %v2774
    %5102 = vmatpush1.msra.mxu0 %v2773
    %5103 = vmatprep.subr.mxu0 %v2782
    %5104 = vmatpush1.msra.mxu0 %v2781
    %5105 = vmatprep.subr.mxu0 %v2790
    %5106 = vmatpush1.msra.mxu0 %v2789
    %5107 = vmatprep.subr.mxu0 %v2798
    %5108 = vmatpush1.msra.mxu0 %v2797
    %5109 = vmatprep.subr.mxu0 %v2806
    %5110 = vmatpush1.msra.mxu0 %v2805
    %5111 = vmatprep.mubr.f32.mxu0 %v4896
    %5112 = vmatmul.mubr.f32.gmra.mrb[0].mxu0 %v4895
    %v5113 = vpop.f32.mrb[0].mxu0
    %v5114 = vadd.f32 0.0, %v5113
    %v5115 = vpop.f32.mrb[0].mxu0
    %v5116 = vadd.f32 0.0, %v5115
    %5117 = vdwg.mxu0
    %5118 = vmatprep.subr.mxu0 %v2560
    %5119 = vmatpush1.msra.mxu0 %v2559
    %5120 = vmatprep.subr.mxu0 %v2568
    %5121 = vmatpush1.msra.mxu0 %v2567
    %5122 = vmatprep.subr.mxu0 %v2576
    %5123 = vmatpush1.msra.mxu0 %v2575
    %5124 = vmatprep.subr.mxu0 %v2584
    %5125 = vmatpush1.msra.mxu0 %v2583
    %5126 = vmatprep.subr.mxu0 %v2592
    %5127 = vmatpush1.msra.mxu0 %v2591
    %5128 = vmatprep.subr.mxu0 %v2600
    %5129 = vmatpush1.msra.mxu0 %v2599
    %5130 = vmatprep.subr.mxu0 %v2608
    %5131 = vmatpush1.msra.mxu0 %v2607
    %5132 = vmatprep.subr.mxu0 %v2616
    %5133 = vmatpush1.msra.mxu0 %v2615
    %5134 = vmatprep.subr.mxu0 %v2624
    %5135 = vmatpush1.msra.mxu0 %v2623
    %5136 = vmatprep.subr.mxu0 %v2632
    %5137 = vmatpush1.msra.mxu0 %v2631
    %5138 = vmatprep.subr.mxu0 %v2640
    %5139 = vmatpush1.msra.mxu0 %v2639
    %5140 = vmatprep.subr.mxu0 %v2648
    %5141 = vmatpush1.msra.mxu0 %v2647
    %5142 = vmatprep.subr.mxu0 %v2656
    %5143 = vmatpush1.msra.mxu0 %v2655
    %5144 = vmatprep.subr.mxu0 %v2664
    %5145 = vmatpush1.msra.mxu0 %v2663
    %5146 = vmatprep.subr.mxu0 %v2672
    %5147 = vmatpush1.msra.mxu0 %v2671
    %5148 = vmatprep.subr.mxu0 %v2680
    %5149 = vmatpush1.msra.mxu0 %v2679
    %5150 = vmatprep.subr.mxu0 %v2688
    %5151 = vmatpush1.msra.mxu0 %v2687
    %5152 = vmatprep.subr.mxu0 %v2696
    %5153 = vmatpush1.msra.mxu0 %v2695
    %5154 = vmatprep.subr.mxu0 %v2704
    %5155 = vmatpush1.msra.mxu0 %v2703
    %5156 = vmatprep.subr.mxu0 %v2712
    %5157 = vmatpush1.msra.mxu0 %v2711
    %5158 = vmatprep.subr.mxu0 %v2720
    %5159 = vmatpush1.msra.mxu0 %v2719
    %5160 = vmatprep.subr.mxu0 %v2728
    %5161 = vmatpush1.msra.mxu0 %v2727
    %5162 = vmatprep.subr.mxu0 %v2736
    %5163 = vmatpush1.msra.mxu0 %v2735
    %5164 = vmatprep.subr.mxu0 %v2744
    %5165 = vmatpush1.msra.mxu0 %v2743
    %5166 = vmatprep.subr.mxu0 %v2752
    %5167 = vmatpush1.msra.mxu0 %v2751
    %5168 = vmatprep.subr.mxu0 %v2760
    %5169 = vmatpush1.msra.mxu0 %v2759
    %5170 = vmatprep.subr.mxu0 %v2768
    %5171 = vmatpush1.msra.mxu0 %v2767
    %5172 = vmatprep.subr.mxu0 %v2776
    %5173 = vmatpush1.msra.mxu0 %v2775
    %5174 = vmatprep.subr.mxu0 %v2784
    %5175 = vmatpush1.msra.mxu0 %v2783
    %5176 = vmatprep.subr.mxu0 %v2792
    %5177 = vmatpush1.msra.mxu0 %v2791
    %5178 = vmatprep.subr.mxu0 %v2800
    %5179 = vmatpush1.msra.mxu0 %v2799
    %5180 = vmatprep.subr.mxu0 %v2808
    %5181 = vmatpush1.msra.mxu0 %v2807
    %5182 = vmatprep.mubr.f32.mxu0 %v4896
    %5183 = vmatmul.mubr.f32.gmra.mrb[0].mxu0 %v4895
    %v5184 = vpop.f32.mrb[0].mxu0
    %v5185 = vadd.f32 0.0, %v5184
    %v5186 = vpop.f32.mrb[0].mxu0
    %v5187 = vadd.f32 0.0, %v5186
    %5188 = vdwg.mxu0
    %v5189 = vadd.f32 %v4897, %v4972
    %v5190 = vadd.f32 %v4898, %v4974
    %v5191 = vadd.f32 %v4899, %v5043
    %v5192 = vadd.f32 %v4900, %v5045
    %v5193 = vadd.f32 %v4901, %v5114
    %v5194 = vadd.f32 %v4902, %v5116
    %v5195 = vadd.f32 %v4903, %v5185
    %v5196 = vadd.f32 %v4904, %v5187
    %v5197 = vxor.u32 %v5189, 2147483648
    %v5198 = vxor.u32 %v5190, 2147483648
    %v5199 = vmul.f32 %v5197, 1.442695
    %v5200 = vpow.pop %v5199
    %v5201 = vmul.f32 %v5198, 1.442695
    %v5202 = vpow.pop %v5201
    %v5203 = vadd.f32 %v5200, 1.0
    %v5204 = vadd.f32 %v5202, 1.0
    %v5205 = vrcp.pop %v5203
    %v5206 = vmul.f32 1.0, %v5205
    %v5207 = vrcp.pop %v5204
    %v5208 = vmul.f32 1.0, %v5207
    %v5209 = vxor.u32 %v5191, 2147483648
    %v5210 = vxor.u32 %v5192, 2147483648
    %v5211 = vmul.f32 %v5209, 1.442695
    %v5212 = vpow.pop %v5211
    %v5213 = vmul.f32 %v5210, 1.442695
    %v5214 = vpow.pop %v5213
    %v5215 = vadd.f32 %v5212, 1.0
    %v5216 = vadd.f32 %v5214, 1.0
    %v5217 = vrcp.pop %v5215
    %v5218 = vmul.f32 1.0, %v5217
    %v5219 = vrcp.pop %v5216
    %v5220 = vmul.f32 1.0, %v5219
    %v5221 = vtanh.pop %v5193
    %v5222 = vtanh.pop %v5194
    %v5223 = vxor.u32 %v5195, 2147483648
    %v5224 = vxor.u32 %v5196, 2147483648
    %v5225 = vmul.f32 %v5223, 1.442695
    %v5226 = vpow.pop %v5225
    %v5227 = vmul.f32 %v5224, 1.442695
    %v5228 = vpow.pop %v5227
    %v5229 = vadd.f32 %v5226, 1.0
    %v5230 = vadd.f32 %v5228, 1.0
    %v5231 = vrcp.pop %v5229
    %v5232 = vmul.f32 1.0, %v5231
    %v5233 = vrcp.pop %v5230
    %v5234 = vmul.f32 1.0, %v5233
    %v5235 = vmul.f32 %v5218, %v4891
    %v5236 = vmul.f32 %v5220, %v4892
    %v5237 = vmul.f32 %v5206, %v5221
    %v5238 = vmul.f32 %v5208, %v5222
    %v5239 = vadd.f32 %v5235, %v5237
    %v5240 = vadd.f32 %v5236, %v5238
    %v5241 = vtanh.pop %v5239
    %v5242 = vtanh.pop %v5240
    %v5243 = vmul.f32 %v5232, %v5241
    %v5244 = vmul.f32 %v5234, %v5242
    %v5245 = vld [vmem:[#allocation4 + $0x1c0] sm:$0xff]
    %v5246 = vld [vmem:[#allocation4 + $0x1c8] sm:$0xff]
    %v5247 = vld [vmem:[#allocation4 + $0x1d0] sm:$0xff]
    %v5248 = vld [vmem:[#allocation4 + $0x1d8] sm:$0xff]
    %v5249 = vld [vmem:[#allocation4 + $0x1e0] sm:$0xff]
    %v5250 = vld [vmem:[#allocation4 + $0x1e8] sm:$0xff]
    %v5251 = vld [vmem:[#allocation4 + $0x1f0] sm:$0xff]
    %v5252 = vld [vmem:[#allocation4 + $0x1f8] sm:$0xff]
    %5253 = vmatprep.subr.mxu0 %v2554
    %5254 = vmatpush1.msra.mxu0 %v2553
    %5255 = vmatprep.subr.mxu0 %v2562
    %5256 = vmatpush1.msra.mxu0 %v2561
    %5257 = vmatprep.subr.mxu0 %v2570
    %5258 = vmatpush1.msra.mxu0 %v2569
    %5259 = vmatprep.subr.mxu0 %v2578
    %5260 = vmatpush1.msra.mxu0 %v2577
    %5261 = vmatprep.subr.mxu0 %v2586
    %5262 = vmatpush1.msra.mxu0 %v2585
    %5263 = vmatprep.subr.mxu0 %v2594
    %5264 = vmatpush1.msra.mxu0 %v2593
    %5265 = vmatprep.subr.mxu0 %v2602
    %5266 = vmatpush1.msra.mxu0 %v2601
    %5267 = vmatprep.subr.mxu0 %v2610
    %5268 = vmatpush1.msra.mxu0 %v2609
    %5269 = vmatprep.subr.mxu0 %v2618
    %5270 = vmatpush1.msra.mxu0 %v2617
    %5271 = vmatprep.subr.mxu0 %v2626
    %5272 = vmatpush1.msra.mxu0 %v2625
    %5273 = vmatprep.subr.mxu0 %v2634
    %5274 = vmatpush1.msra.mxu0 %v2633
    %5275 = vmatprep.subr.mxu0 %v2642
    %5276 = vmatpush1.msra.mxu0 %v2641
    %5277 = vmatprep.subr.mxu0 %v2650
    %5278 = vmatpush1.msra.mxu0 %v2649
    %5279 = vmatprep.subr.mxu0 %v2658
    %5280 = vmatpush1.msra.mxu0 %v2657
    %5281 = vmatprep.subr.mxu0 %v2666
    %5282 = vmatpush1.msra.mxu0 %v2665
    %5283 = vmatprep.subr.mxu0 %v2674
    %5284 = vmatpush1.msra.mxu0 %v2673
    %5285 = vmatprep.subr.mxu0 %v2682
    %5286 = vmatpush1.msra.mxu0 %v2681
    %5287 = vmatprep.subr.mxu0 %v2690
    %5288 = vmatpush1.msra.mxu0 %v2689
    %5289 = vmatprep.subr.mxu0 %v2698
    %5290 = vmatpush1.msra.mxu0 %v2697
    %5291 = vmatprep.subr.mxu0 %v2706
    %5292 = vmatpush1.msra.mxu0 %v2705
    %5293 = vmatprep.subr.mxu0 %v2714
    %5294 = vmatpush1.msra.mxu0 %v2713
    %5295 = vmatprep.subr.mxu0 %v2722
    %5296 = vmatpush1.msra.mxu0 %v2721
    %5297 = vmatprep.subr.mxu0 %v2730
    %5298 = vmatpush1.msra.mxu0 %v2729
    %5299 = vmatprep.subr.mxu0 %v2738
    %5300 = vmatpush1.msra.mxu0 %v2737
    %5301 = vmatprep.subr.mxu0 %v2746
    %5302 = vmatpush1.msra.mxu0 %v2745
    %5303 = vmatprep.subr.mxu0 %v2754
    %5304 = vmatpush1.msra.mxu0 %v2753
    %5305 = vmatprep.subr.mxu0 %v2762
    %5306 = vmatpush1.msra.mxu0 %v2761
    %5307 = vmatprep.subr.mxu0 %v2770
    %5308 = vmatpush1.msra.mxu0 %v2769
    %5309 = vmatprep.subr.mxu0 %v2778
    %5310 = vmatpush1.msra.mxu0 %v2777
    %5311 = vmatprep.subr.mxu0 %v2786
    %5312 = vmatpush1.msra.mxu0 %v2785
    %5313 = vmatprep.subr.mxu0 %v2794
    %5314 = vmatpush1.msra.mxu0 %v2793
    %5315 = vmatprep.subr.mxu0 %v2802
    %5316 = vmatpush1.msra.mxu0 %v2801
    %5317 = vmatprep.mubr.f32.mxu0 %v5244
    %5318 = vmatmul.mubr.f32.gmra.mrb[0].mxu0 %v5243
    %v5319 = vpop.f32.mrb[0].mxu0
    %v5320 = vadd.f32 0.0, %v5319
    %v5321 = vpop.f32.mrb[0].mxu0
    %v5322 = vadd.f32 0.0, %v5321
    %5323 = vdwg.mxu0
    %5324 = vmatprep.subr.mxu0 %v2556
    %5325 = vmatpush1.msra.mxu0 %v2555
    %5326 = vmatprep.subr.mxu0 %v2564
    %5327 = vmatpush1.msra.mxu0 %v2563
    %5328 = vmatprep.subr.mxu0 %v2572
    %5329 = vmatpush1.msra.mxu0 %v2571
    %5330 = vmatprep.subr.mxu0 %v2580
    %5331 = vmatpush1.msra.mxu0 %v2579
    %5332 = vmatprep.subr.mxu0 %v2588
    %5333 = vmatpush1.msra.mxu0 %v2587
    %5334 = vmatprep.subr.mxu0 %v2596
    %5335 = vmatpush1.msra.mxu0 %v2595
    %5336 = vmatprep.subr.mxu0 %v2604
    %5337 = vmatpush1.msra.mxu0 %v2603
    %5338 = vmatprep.subr.mxu0 %v2612
    %5339 = vmatpush1.msra.mxu0 %v2611
    %5340 = vmatprep.subr.mxu0 %v2620
    %5341 = vmatpush1.msra.mxu0 %v2619
    %5342 = vmatprep.subr.mxu0 %v2628
    %5343 = vmatpush1.msra.mxu0 %v2627
    %5344 = vmatprep.subr.mxu0 %v2636
    %5345 = vmatpush1.msra.mxu0 %v2635
    %5346 = vmatprep.subr.mxu0 %v2644
    %5347 = vmatpush1.msra.mxu0 %v2643
    %5348 = vmatprep.subr.mxu0 %v2652
    %5349 = vmatpush1.msra.mxu0 %v2651
    %5350 = vmatprep.subr.mxu0 %v2660
    %5351 = vmatpush1.msra.mxu0 %v2659
    %5352 = vmatprep.subr.mxu0 %v2668
    %5353 = vmatpush1.msra.mxu0 %v2667
    %5354 = vmatprep.subr.mxu0 %v2676
    %5355 = vmatpush1.msra.mxu0 %v2675
    %5356 = vmatprep.subr.mxu0 %v2684
    %5357 = vmatpush1.msra.mxu0 %v2683
    %5358 = vmatprep.subr.mxu0 %v2692
    %5359 = vmatpush1.msra.mxu0 %v2691
    %5360 = vmatprep.subr.mxu0 %v2700
    %5361 = vmatpush1.msra.mxu0 %v2699
    %5362 = vmatprep.subr.mxu0 %v2708
    %5363 = vmatpush1.msra.mxu0 %v2707
    %5364 = vmatprep.subr.mxu0 %v2716
    %5365 = vmatpush1.msra.mxu0 %v2715
    %5366 = vmatprep.subr.mxu0 %v2724
    %5367 = vmatpush1.msra.mxu0 %v2723
    %5368 = vmatprep.subr.mxu0 %v2732
    %5369 = vmatpush1.msra.mxu0 %v2731
    %5370 = vmatprep.subr.mxu0 %v2740
    %5371 = vmatpush1.msra.mxu0 %v2739
    %5372 = vmatprep.subr.mxu0 %v2748
    %5373 = vmatpush1.msra.mxu0 %v2747
    %5374 = vmatprep.subr.mxu0 %v2756
    %5375 = vmatpush1.msra.mxu0 %v2755
    %5376 = vmatprep.subr.mxu0 %v2764
    %5377 = vmatpush1.msra.mxu0 %v2763
    %5378 = vmatprep.subr.mxu0 %v2772
    %5379 = vmatpush1.msra.mxu0 %v2771
    %5380 = vmatprep.subr.mxu0 %v2780
    %5381 = vmatpush1.msra.mxu0 %v2779
    %5382 = vmatprep.subr.mxu0 %v2788
    %5383 = vmatpush1.msra.mxu0 %v2787
    %5384 = vmatprep.subr.mxu0 %v2796
    %5385 = vmatpush1.msra.mxu0 %v2795
    %5386 = vmatprep.subr.mxu0 %v2804
    %5387 = vmatpush1.msra.mxu0 %v2803
    %5388 = vmatprep.mubr.f32.mxu0 %v5244
    %5389 = vmatmul.mubr.f32.gmra.mrb[0].mxu0 %v5243
    %v5390 = vpop.f32.mrb[0].mxu0
    %v5391 = vadd.f32 0.0, %v5390
    %v5392 = vpop.f32.mrb[0].mxu0
    %v5393 = vadd.f32 0.0, %v5392
    %5394 = vdwg.mxu0
    %5395 = vmatprep.subr.mxu0 %v2558
    %5396 = vmatpush1.msra.mxu0 %v2557
    %5397 = vmatprep.subr.mxu0 %v2566
    %5398 = vmatpush1.msra.mxu0 %v2565
    %5399 = vmatprep.subr.mxu0 %v2574
    %5400 = vmatpush1.msra.mxu0 %v2573
    %5401 = vmatprep.subr.mxu0 %v2582
    %5402 = vmatpush1.msra.mxu0 %v2581
    %5403 = vmatprep.subr.mxu0 %v2590
    %5404 = vmatpush1.msra.mxu0 %v2589
    %5405 = vmatprep.subr.mxu0 %v2598
    %5406 = vmatpush1.msra.mxu0 %v2597
    %5407 = vmatprep.subr.mxu0 %v2606
    %5408 = vmatpush1.msra.mxu0 %v2605
    %5409 = vmatprep.subr.mxu0 %v2614
    %5410 = vmatpush1.msra.mxu0 %v2613
    %5411 = vmatprep.subr.mxu0 %v2622
    %5412 = vmatpush1.msra.mxu0 %v2621
    %5413 = vmatprep.subr.mxu0 %v2630
    %5414 = vmatpush1.msra.mxu0 %v2629
    %5415 = vmatprep.subr.mxu0 %v2638
    %5416 = vmatpush1.msra.mxu0 %v2637
    %5417 = vmatprep.subr.mxu0 %v2646
    %5418 = vmatpush1.msra.mxu0 %v2645
    %5419 = vmatprep.subr.mxu0 %v2654
    %5420 = vmatpush1.msra.mxu0 %v2653
    %5421 = vmatprep.subr.mxu0 %v2662
    %5422 = vmatpush1.msra.mxu0 %v2661
    %5423 = vmatprep.subr.mxu0 %v2670
    %5424 = vmatpush1.msra.mxu0 %v2669
    %5425 = vmatprep.subr.mxu0 %v2678
    %5426 = vmatpush1.msra.mxu0 %v2677
    %5427 = vmatprep.subr.mxu0 %v2686
    %5428 = vmatpush1.msra.mxu0 %v2685
    %5429 = vmatprep.subr.mxu0 %v2694
    %5430 = vmatpush1.msra.mxu0 %v2693
    %5431 = vmatprep.subr.mxu0 %v2702
    %5432 = vmatpush1.msra.mxu0 %v2701
    %5433 = vmatprep.subr.mxu0 %v2710
    %5434 = vmatpush1.msra.mxu0 %v2709
    %5435 = vmatprep.subr.mxu0 %v2718
    %5436 = vmatpush1.msra.mxu0 %v2717
    %5437 = vmatprep.subr.mxu0 %v2726
    %5438 = vmatpush1.msra.mxu0 %v2725
    %5439 = vmatprep.subr.mxu0 %v2734
    %5440 = vmatpush1.msra.mxu0 %v2733
    %5441 = vmatprep.subr.mxu0 %v2742
    %5442 = vmatpush1.msra.mxu0 %v2741
    %5443 = vmatprep.subr.mxu0 %v2750
    %5444 = vmatpush1.msra.mxu0 %v2749
    %5445 = vmatprep.subr.mxu0 %v2758
    %5446 = vmatpush1.msra.mxu0 %v2757
    %5447 = vmatprep.subr.mxu0 %v2766
    %5448 = vmatpush1.msra.mxu0 %v2765
    %5449 = vmatprep.subr.mxu0 %v2774
    %5450 = vmatpush1.msra.mxu0 %v2773
    %5451 = vmatprep.subr.mxu0 %v2782
    %5452 = vmatpush1.msra.mxu0 %v2781
    %5453 = vmatprep.subr.mxu0 %v2790
    %5454 = vmatpush1.msra.mxu0 %v2789
    %5455 = vmatprep.subr.mxu0 %v2798
    %5456 = vmatpush1.msra.mxu0 %v2797
    %5457 = vmatprep.subr.mxu0 %v2806
    %5458 = vmatpush1.msra.mxu0 %v2805
    %5459 = vmatprep.mubr.f32.mxu0 %v5244
    %5460 = vmatmul.mubr.f32.gmra.mrb[0].mxu0 %v5243
    %v5461 = vpop.f32.mrb[0].mxu0
    %v5462 = vadd.f32 0.0, %v5461
    %v5463 = vpop.f32.mrb[0].mxu0
    %v5464 = vadd.f32 0.0, %v5463
    %5465 = vdwg.mxu0
    %5466 = vmatprep.subr.mxu0 %v2560
    %5467 = vmatpush1.msra.mxu0 %v2559
    %5468 = vmatprep.subr.mxu0 %v2568
    %5469 = vmatpush1.msra.mxu0 %v2567
    %5470 = vmatprep.subr.mxu0 %v2576
    %5471 = vmatpush1.msra.mxu0 %v2575
    %5472 = vmatprep.subr.mxu0 %v2584
    %5473 = vmatpush1.msra.mxu0 %v2583
    %5474 = vmatprep.subr.mxu0 %v2592
    %5475 = vmatpush1.msra.mxu0 %v2591
    %5476 = vmatprep.subr.mxu0 %v2600
    %5477 = vmatpush1.msra.mxu0 %v2599
    %5478 = vmatprep.subr.mxu0 %v2608
    %5479 = vmatpush1.msra.mxu0 %v2607
    %5480 = vmatprep.subr.mxu0 %v2616
    %5481 = vmatpush1.msra.mxu0 %v2615
    %5482 = vmatprep.subr.mxu0 %v2624
    %5483 = vmatpush1.msra.mxu0 %v2623
    %5484 = vmatprep.subr.mxu0 %v2632
    %5485 = vmatpush1.msra.mxu0 %v2631
    %5486 = vmatprep.subr.mxu0 %v2640
    %5487 = vmatpush1.msra.mxu0 %v2639
    %5488 = vmatprep.subr.mxu0 %v2648
    %5489 = vmatpush1.msra.mxu0 %v2647
    %5490 = vmatprep.subr.mxu0 %v2656
    %5491 = vmatpush1.msra.mxu0 %v2655
    %5492 = vmatprep.subr.mxu0 %v2664
    %5493 = vmatpush1.msra.mxu0 %v2663
    %5494 = vmatprep.subr.mxu0 %v2672
    %5495 = vmatpush1.msra.mxu0 %v2671
    %5496 = vmatprep.subr.mxu0 %v2680
    %5497 = vmatpush1.msra.mxu0 %v2679
    %5498 = vmatprep.subr.mxu0 %v2688
    %5499 = vmatpush1.msra.mxu0 %v2687
    %5500 = vmatprep.subr.mxu0 %v2696
    %5501 = vmatpush1.msra.mxu0 %v2695
    %5502 = vmatprep.subr.mxu0 %v2704
    %5503 = vmatpush1.msra.mxu0 %v2703
    %5504 = vmatprep.subr.mxu0 %v2712
    %5505 = vmatpush1.msra.mxu0 %v2711
    %5506 = vmatprep.subr.mxu0 %v2720
    %5507 = vmatpush1.msra.mxu0 %v2719
    %5508 = vmatprep.subr.mxu0 %v2728
    %5509 = vmatpush1.msra.mxu0 %v2727
    %5510 = vmatprep.subr.mxu0 %v2736
    %5511 = vmatpush1.msra.mxu0 %v2735
    %5512 = vmatprep.subr.mxu0 %v2744
    %5513 = vmatpush1.msra.mxu0 %v2743
    %5514 = vmatprep.subr.mxu0 %v2752
    %5515 = vmatpush1.msra.mxu0 %v2751
    %5516 = vmatprep.subr.mxu0 %v2760
    %5517 = vmatpush1.msra.mxu0 %v2759
    %5518 = vmatprep.subr.mxu0 %v2768
    %5519 = vmatpush1.msra.mxu0 %v2767
    %5520 = vmatprep.subr.mxu0 %v2776
    %5521 = vmatpush1.msra.mxu0 %v2775
    %5522 = vmatprep.subr.mxu0 %v2784
    %5523 = vmatpush1.msra.mxu0 %v2783
    %5524 = vmatprep.subr.mxu0 %v2792
    %5525 = vmatpush1.msra.mxu0 %v2791
    %5526 = vmatprep.subr.mxu0 %v2800
    %5527 = vmatpush1.msra.mxu0 %v2799
    %5528 = vmatprep.subr.mxu0 %v2808
    %5529 = vmatpush1.msra.mxu0 %v2807
    %5530 = vmatprep.mubr.f32.mxu0 %v5244
    %5531 = vmatmul.mubr.f32.gmra.mrb[0].mxu0 %v5243
    %v5532 = vpop.f32.mrb[0].mxu0
    %v5533 = vadd.f32 0.0, %v5532
    %v5534 = vpop.f32.mrb[0].mxu0
    %v5535 = vadd.f32 0.0, %v5534
    %5536 = vdwg.mxu0
    %v5537 = vadd.f32 %v5245, %v5320
    %v5538 = vadd.f32 %v5246, %v5322
    %v5539 = vadd.f32 %v5247, %v5391
    %v5540 = vadd.f32 %v5248, %v5393
    %v5541 = vadd.f32 %v5249, %v5462
    %v5542 = vadd.f32 %v5250, %v5464
    %v5543 = vadd.f32 %v5251, %v5533
    %v5544 = vadd.f32 %v5252, %v5535
    %v5545 = vxor.u32 %v5537, 2147483648
    %v5546 = vxor.u32 %v5538, 2147483648
    %v5547 = vmul.f32 %v5545, 1.442695
    %v5548 = vpow.pop %v5547
    %v5549 = vmul.f32 %v5546, 1.442695
    %v5550 = vpow.pop %v5549
    %v5551 = vadd.f32 %v5548, 1.0
    %v5552 = vadd.f32 %v5550, 1.0
    %v5553 = vrcp.pop %v5551
    %v5554 = vmul.f32 1.0, %v5553
    %v5555 = vrcp.pop %v5552
    %v5556 = vmul.f32 1.0, %v5555
    %v5557 = vxor.u32 %v5539, 2147483648
    %v5558 = vxor.u32 %v5540, 2147483648
    %v5559 = vmul.f32 %v5557, 1.442695
    %v5560 = vpow.pop %v5559
    %v5561 = vmul.f32 %v5558, 1.442695
    %v5562 = vpow.pop %v5561
    %v5563 = vadd.f32 %v5560, 1.0
    %v5564 = vadd.f32 %v5562, 1.0
    %v5565 = vrcp.pop %v5563
    %v5566 = vmul.f32 1.0, %v5565
    %v5567 = vrcp.pop %v5564
    %v5568 = vmul.f32 1.0, %v5567
    %v5569 = vtanh.pop %v5541
    %v5570 = vtanh.pop %v5542
    %v5571 = vxor.u32 %v5543, 2147483648
    %v5572 = vxor.u32 %v5544, 2147483648
    %v5573 = vmul.f32 %v5571, 1.442695
    %v5574 = vpow.pop %v5573
    %v5575 = vmul.f32 %v5572, 1.442695
    %v5576 = vpow.pop %v5575
    %v5577 = vadd.f32 %v5574, 1.0
    %v5578 = vadd.f32 %v5576, 1.0
    %v5579 = vrcp.pop %v5577
    %v5580 = vmul.f32 1.0, %v5579
    %v5581 = vrcp.pop %v5578
    %v5582 = vmul.f32 1.0, %v5581
    %v5583 = vmul.f32 %v5566, %v5239
    %v5584 = vmul.f32 %v5568, %v5240
    %v5585 = vmul.f32 %v5554, %v5569
    %v5586 = vmul.f32 %v5556, %v5570
    %v5587 = vadd.f32 %v5583, %v5585
    %v5588 = vadd.f32 %v5584, %v5586
    %v5589 = vtanh.pop %v5587
    %v5590 = vtanh.pop %v5588
    %v5591 = vmul.f32 %v5580, %v5589
    %v5592 = vmul.f32 %v5582, %v5590
    %v5593 = vld [vmem:[%s7] sm:$0xff]
    %v5594 = vld [vmem:[%s7 + $0x8] sm:$0xff]
    %v5595 = vld [vmem:[%s7 + $0x10] sm:$0xff]
    %v5596 = vld [vmem:[%s7 + $0x18] sm:$0xff]
    %v5597 = vld [vmem:[%s7 + $0x20] sm:$0xff]
    %v5598 = vld [vmem:[%s7 + $0x28] sm:$0xff]
    %v5599 = vld [vmem:[%s7 + $0x30] sm:$0xff]
    %v5600 = vld [vmem:[%s7 + $0x38] sm:$0xff]
    %v5601 = vld [vmem:[%s7 + $0x40] sm:$0xff]
    %v5602 = vld [vmem:[%s7 + $0x48] sm:$0xff]
    %v5603 = vld [vmem:[%s7 + $0x50] sm:$0xff]
    %v5604 = vld [vmem:[%s7 + $0x58] sm:$0xff]
    %v5605 = vld [vmem:[%s7 + $0x60] sm:$0xff]
    %v5606 = vld [vmem:[%s7 + $0x68] sm:$0xff]
    %v5607 = vld [vmem:[%s7 + $0x70] sm:$0xff]
    %v5608 = vld [vmem:[%s7 + $0x78] sm:$0xff]
    %v5609 = vld [vmem:[%s7 + $0x80] sm:$0xff]
    %v5610 = vld [vmem:[%s7 + $0x88] sm:$0xff]
    %v5611 = vld [vmem:[%s7 + $0x90] sm:$0xff]
    %v5612 = vld [vmem:[%s7 + $0x98] sm:$0xff]
    %v5613 = vld [vmem:[%s7 + $0xa0] sm:$0xff]
    %v5614 = vld [vmem:[%s7 + $0xa8] sm:$0xff]
    %v5615 = vld [vmem:[%s7 + $0xb0] sm:$0xff]
    %v5616 = vld [vmem:[%s7 + $0xb8] sm:$0xff]
    %v5617 = vld [vmem:[%s7 + $0xc0] sm:$0xff]
    %v5618 = vld [vmem:[%s7 + $0xc8] sm:$0xff]
    %v5619 = vld [vmem:[%s7 + $0xd0] sm:$0xff]
    %v5620 = vld [vmem:[%s7 + $0xd8] sm:$0xff]
    %v5621 = vld [vmem:[%s7 + $0xe0] sm:$0xff]
    %v5622 = vld [vmem:[%s7 + $0xe8] sm:$0xff]
    %v5623 = vld [vmem:[%s7 + $0xf0] sm:$0xff]
    %v5624 = vld [vmem:[%s7 + $0xf8] sm:$0xff]
    %v5625 = vld [vmem:[#allocation5] sm:$0x1]
    %v5627 = vlaneseq
    %v5628 = vshrl.u32 %v5627, 7
    %v5629 = vsub.s32 0, %v5628
    %v5630 = vrot.slane %v5625, %v5629
    %5632 = vmatprep.subr.mxu0 0.0
    %5633 = vmatpush1.msra.mxu0 %v5593
    %5634 = vmatprep.subr.mxu0 0.0
    %5635 = vmatpush1.msra.mxu0 %v5594
    %5636 = vmatprep.subr.mxu0 0.0
    %5637 = vmatpush1.msra.mxu0 %v5595
    %5638 = vmatprep.subr.mxu0 0.0
    %5639 = vmatpush1.msra.mxu0 %v5596
    %5640 = vmatprep.subr.mxu0 0.0
    %5641 = vmatpush1.msra.mxu0 %v5597
    %5642 = vmatprep.subr.mxu0 0.0
    %5643 = vmatpush1.msra.mxu0 %v5598
    %5644 = vmatprep.subr.mxu0 0.0
    %5645 = vmatpush1.msra.mxu0 %v5599
    %5646 = vmatprep.subr.mxu0 0.0
    %5647 = vmatpush1.msra.mxu0 %v5600
    %5648 = vmatprep.subr.mxu0 0.0
    %5649 = vmatpush1.msra.mxu0 %v5601
    %5650 = vmatprep.subr.mxu0 0.0
    %5651 = vmatpush1.msra.mxu0 %v5602
    %5652 = vmatprep.subr.mxu0 0.0
    %5653 = vmatpush1.msra.mxu0 %v5603
    %5654 = vmatprep.subr.mxu0 0.0
    %5655 = vmatpush1.msra.mxu0 %v5604
    %5656 = vmatprep.subr.mxu0 0.0
    %5657 = vmatpush1.msra.mxu0 %v5605
    %5658 = vmatprep.subr.mxu0 0.0
    %5659 = vmatpush1.msra.mxu0 %v5606
    %5660 = vmatprep.subr.mxu0 0.0
    %5661 = vmatpush1.msra.mxu0 %v5607
    %5662 = vmatprep.subr.mxu0 0.0
    %5663 = vmatpush1.msra.mxu0 %v5608
    %5664 = vmatprep.subr.mxu0 0.0
    %5665 = vmatpush1.msra.mxu0 %v5609
    %5666 = vmatprep.subr.mxu0 0.0
    %5667 = vmatpush1.msra.mxu0 %v5610
    %5668 = vmatprep.subr.mxu0 0.0
    %5669 = vmatpush1.msra.mxu0 %v5611
    %5670 = vmatprep.subr.mxu0 0.0
    %5671 = vmatpush1.msra.mxu0 %v5612
    %5672 = vmatprep.subr.mxu0 0.0
    %5673 = vmatpush1.msra.mxu0 %v5613
    %5674 = vmatprep.subr.mxu0 0.0
    %5675 = vmatpush1.msra.mxu0 %v5614
    %5676 = vmatprep.subr.mxu0 0.0
    %5677 = vmatpush1.msra.mxu0 %v5615
    %5678 = vmatprep.subr.mxu0 0.0
    %5679 = vmatpush1.msra.mxu0 %v5616
    %5680 = vmatprep.subr.mxu0 0.0
    %5681 = vmatpush1.msra.mxu0 %v5617
    %5682 = vmatprep.subr.mxu0 0.0
    %5683 = vmatpush1.msra.mxu0 %v5618
    %5684 = vmatprep.subr.mxu0 0.0
    %5685 = vmatpush1.msra.mxu0 %v5619
    %5686 = vmatprep.subr.mxu0 0.0
    %5687 = vmatpush1.msra.mxu0 %v5620
    %5688 = vmatprep.subr.mxu0 0.0
    %5689 = vmatpush1.msra.mxu0 %v5621
    %5690 = vmatprep.subr.mxu0 0.0
    %5691 = vmatpush1.msra.mxu0 %v5622
    %5692 = vmatprep.subr.mxu0 0.0
    %5693 = vmatpush1.msra.mxu0 %v5623
    %5694 = vmatprep.subr.mxu0 0.0
    %5695 = vmatpush1.msra.mxu0 %v5624
    %5696 = vmatprep.mubr.f32.mxu0 %v5592
    %5697 = vmatmul.mubr.f32.gmra.mrb[0].mxu0 %v5591
    %v5698 = vpop.f32.mrb[0].mxu0
    %v5699 = vadd.f32 %v5630, %v5698
    %v5700 = vpop.f32.mrb[0].mxu0
    %5701 = vdwg.mxu0
    %vm5702 = vcmask 7168
    %5703 = vst.msk [vmem:[%s9] sm:$0xff] %vm5702, %v5699
    %5704 = vst [vmem:[%s10] sm:$0xff] %v5591
    %5705 = vst [vmem:[%s10 + $0x8] sm:$0xff] %v5592
    %5706 = vst [vmem:[%s11] sm:$0xff] %v5587
    %5707 = vst [vmem:[%s11 + $0x8] sm:$0xff] %v5588
    // Predicated region
    $region50: #{encoder_forward.1} parent=1 // pred_check
      _
    $region51: #{encoder_forward.1} parent=1 // pred_check_branch
      %5709 = sbr.rel (0) target = $region53
    $region52: #{encoder_forward.1} parent=1 // pred_region
      _
    $region53: #{encoder_forward.1} parent=1 // pred_fallthru
      _
    // Predicated region
    $region54: #{encoder_forward.1} parent=1 // pred_check
      _
    $region55: #{encoder_forward.1} parent=1 // pred_check_branch
      %5711 = sbr.rel (0) target = $region57
    $region56: #{encoder_forward.1} parent=1 // pred_region
      _
    $region57: #{encoder_forward.1} parent=1 // pred_fallthru
      _
    // Predicated region
    $region58: #{encoder_forward.1} parent=1 // pred_check
      _
    $region59: #{encoder_forward.1} parent=1 // pred_check_branch
      %5713 = sbr.rel (0) target = $region61
    $region60: #{encoder_forward.1} parent=1 // pred_region
      _
    $region61: #{encoder_forward.1} parent=1 // pred_fallthru
      _
    // Predicated region
    $region62: #{encoder_forward.1} parent=1 // pred_check
      _
    $region63: #{encoder_forward.1} parent=1 // pred_check_branch
      %5715 = sbr.rel (0) target = $region65
    $region64: #{encoder_forward.1} parent=1 // pred_region
      _
    $region65: #{encoder_forward.1} parent=1 // pred_fallthru
      _
    // Predicated region
    $region66: #{encoder_forward.1} parent=1 // pred_check
      _
    $region67: #{encoder_forward.1} parent=1 // pred_check_branch
      %5717 = sbr.rel (0) target = $region69
    $region68: #{encoder_forward.1} parent=1 // pred_region
      _
    $region69: #{encoder_forward.1} parent=1 // pred_fallthru
      _
    // Predicated region
    $region70: #{encoder_forward.1} parent=1 // pred_check
      _
    $region71: #{encoder_forward.1} parent=1 // pred_check_branch
      %5719 = sbr.rel (0) target = $region73
    $region72: #{encoder_forward.1} parent=1 // pred_region
      _
    $region73: #{encoder_forward.1} parent=1 // pred_fallthru
      _
    %5720 = vsyncpa [#allocation7], 1
    %5721 = vsyncpa [#allocation9], 1

</llo_original>
